<compile_context>
chip_gen: v7x
topology: tpu7x:2x2x1
jax: 0.10.0
libtpu: 0.0.40
codegen_flags: <defaults>
</compile_context>

<pallas_src>
import functools

import jax
import jax.numpy as jnp
from jax.experimental import pallas as pl
from jax.experimental.pallas import tpu as pltpu

# "masked" score: large-negative (not -inf) so exp(m_old - m_new) never becomes NaN and
# masked positions underflow to exactly 0 once a real edge sets the running max.
_NEG_BIG = -1e30


def _spgat_kernel(adj_ref, hk_ref, f1_ref, f2_ref, o_ref,
                  m_ref, l_ref, acc_ref, *, alpha, heads, f_out, mean_heads):
    """One (q-tile, k-tile) step for all heads; k axis is the grid reduction."""
    ki = pl.program_id(1)

    @pl.when(ki == 0)
    def _():
        m_ref[...] = jnp.full(m_ref.shape, _NEG_BIG, m_ref.dtype)
        l_ref[...] = jnp.zeros(l_ref.shape, l_ref.dtype)
        acc_ref[...] = jnp.zeros(acc_ref.shape, acc_ref.dtype)

    # Edge mask materialized once per (q,k) step and shared by all heads.
    edge = adj_ref[...] != 0                                        # [TQ, TK] bool

    for h in range(heads):                                          # unrolled
        s = f1_ref[h] + f2_ref[h]                                   # [TQ,1]+[1,TK] -> [TQ,TK]
        # -leakyrelu(s) == -max(s, alpha*s); non-edges get a large-negative score
        # (single select pass over the tile).
        neg = jnp.where(edge, -jnp.maximum(s, alpha * s), _NEG_BIG)

        # Flash-style running max (cancels exactly in the final normalization).
        m_old = m_ref[h]                                            # [TQ, 1]
        m_new = jnp.maximum(m_old, jnp.max(neg, axis=1, keepdims=True))
        corr = jnp.exp(m_old - m_new)
        p = jnp.exp(neg - m_new)                                    # non-edges underflow to 0
        l_ref[h] = corr * l_ref[h] + jnp.sum(p, axis=1, keepdims=True)
        acc_ref[h] = corr * acc_ref[h] + jnp.dot(
            p.astype(jnp.bfloat16), hk_ref[h],
            preferred_element_type=jnp.float32)                     # [TQ, F_out] f32 acc
        m_ref[h] = m_new

    @pl.when(ki == pl.num_programs(1) - 1)
    def _():
        # Epilogue runs once per q-tile: exact divides are off the hot path.
        if mean_heads:
            # Layer 2: mean over heads -> F.elu -> log_softmax(dim=1), fused.
            acc_sum = None
            for h in range(heads):
                nh = acc_ref[h] / jnp.maximum(l_ref[h], 1e-12)
                acc_sum = nh if acc_sum is None else acc_sum + nh
            out = acc_sum * (1.0 / heads)
            out = jnp.where(out > 0.0, out, jnp.exp(out) - 1.0)     # F.elu
            mx = jnp.max(out, axis=1, keepdims=True)
            z = out - mx
            lse = jnp.log(jnp.sum(jnp.exp(z), axis=1, keepdims=True))
            o_ref[...] = (z - lse).astype(o_ref.dtype)
        else:
            # Layer 1: per-head ELU, written directly in concat layout [TQ, H*F_out].
            for h in range(heads):
                nh = acc_ref[h] / jnp.maximum(l_ref[h], 1e-12)
                nh = jnp.where(nh > 0.0, nh, jnp.exp(nh) - 1.0)     # F.elu (concat=True)
                o_ref[:, h * f_out:(h + 1) * f_out] = nh.astype(o_ref.dtype)


def _round_up(x, m):
    return ((x + m - 1) // m) * m


def gat_layer(x, adj_mask, w, a, *, alpha, mean_heads, tq=512, tk=512):
    """One multi-head SpGraphAttentionLayer.

    mean_heads=False: returns [N, heads*F_out] (per-head ELU, concat layout)   -- layer 1
    mean_heads=True : returns [N, F_out] = log_softmax(elu(mean over heads))   -- layer 2
    """
    heads, f_in, f_out = w.shape
    n = x.shape[0]
    assert adj_mask.shape == (n, n)

    # Clamp tiles for small graphs, keep them (8,128)-aligned.
    tq = max(128, min(tq, _round_up(n, 128)))
    tk = max(128, min(tk, _round_up(n, 128)))
    nq = _round_up(n, tq)
    nk = _round_up(n, tk)

    # Hoisted projections: one batched einsum per layer; the kernel never touches W/a.
    hp = jnp.einsum("nf,hfo->hno", x, w)                            # [H, N, F_out] f32
    f1 = jnp.einsum("hno,ho->hn", hp, a[:, 0, :])                   # [H, N]
    f2 = jnp.einsum("hno,ho->hn", hp, a[:, 1, :])                   # [H, N]

    hp = jnp.pad(hp, ((0, 0), (0, nk - n), (0, 0))).astype(jnp.bfloat16)
    f1 = jnp.pad(f1, ((0, 0), (0, nq - n)))[:, :, None]             # [H, nq, 1]
    f2 = jnp.pad(f2, ((0, 0), (0, nk - n)))[:, None, :]             # [H, 1, nk]
    adj_p = adj_mask
    if (nq, nk) != adj_mask.shape:                                  # padded cols stay masked
        adj_p = jnp.pad(adj_mask, ((0, nq - n), (0, nk - n)))

    grid = (nq // tq, nk // tk)                                     # (q-tile, k-tile reduction)

    in_specs = [
        pl.BlockSpec((tq, tk), lambda qi, ki: (qi, ki)),              # adjacency mask (int8)
        pl.BlockSpec((heads, tk, f_out), lambda qi, ki: (0, ki, 0)),  # projected keys (bf16)
        pl.BlockSpec((heads, tq, 1), lambda qi, ki: (0, qi, 0)),      # query-side logits f1
        pl.BlockSpec((heads, 1, tk), lambda qi, ki: (0, 0, ki)),      # key-side logits f2
    ]
    out_w = f_out if mean_heads else heads * f_out
    out_specs = pl.BlockSpec((tq, out_w), lambda qi, ki: (qi, 0))
    out_shape = jax.ShapeDtypeStruct((nq, out_w), jnp.float32)
    scratch = [
        pltpu.VMEM((heads, tq, 1), jnp.float32),                    # running max m
        pltpu.VMEM((heads, tq, 1), jnp.float32),                    # rowsum l
        pltpu.VMEM((heads, tq, f_out), jnp.float32),                # per-head accumulator
    ]

    kernel = functools.partial(_spgat_kernel, alpha=alpha, heads=heads,
                               f_out=f_out, mean_heads=mean_heads)

    out = pl.pallas_call(
        kernel,
        out_shape=out_shape,
        grid=grid,
        in_specs=in_specs,
        out_specs=out_specs,
        scratch_shapes=scratch,
        compiler_params=pltpu.CompilerParams(
            dimension_semantics=("parallel", "arbitrary"),
            vmem_limit_bytes=32 * 1024 * 1024),
    )(adj_p, hp, f1, f2)

    return out[:n]


def make_edge_mask(adj):
    """int8 edge mask; compute ONCE per graph and reuse across forwards/layers."""
    return (adj != 0).astype(jnp.int8)


def spagat_forward(x, adj_mask, params, *, alpha, tq=512, tk=512):
    # F.dropout: identity (eval mode).
    # Layer 1 already produces the torch.cat([head0 | head1 | ...], dim=1) layout.
    x1 = gat_layer(x, adj_mask, params["w1"], params["a1"], alpha=alpha,
                   mean_heads=False, tq=tq, tk=tk)                  # [N, heads0*nhid]
    # Layer 2: head mean + F.elu + log_softmax fused into the kernel epilogue.
    return gat_layer(x1, adj_mask, params["w2"], params["a2"], alpha=alpha,
                     mean_heads=True, tq=tq, tk=tk)                 # [N, nclass]


def init_params(key, nfeat, nhid, nclass, nheads):
    k1, k2, k3, k4 = jax.random.split(key, 4)

    def glorot(k, shape):
        fan_in, fan_out = shape[-2], shape[-1]
        lim = (6.0 / (fan_in + fan_out)) ** 0.5
        return jax.random.uniform(k, shape, jnp.float32, -lim, lim)

    return {
        "w1": glorot(k1, (nheads[0], nfeat, nhid)),
        "a1": glorot(k2, (nheads[0], 2, nhid)),
        "w2": glorot(k3, (nheads[1], nhid * nheads[0], nclass)),
        "a2": glorot(k4, (nheads[1], 2, nclass)),
    }


# TODO(synk): pathM / pathlens / genPath path-matrix generation branches of
# SpGraphAttentionLayer are bookkeeping paths not exercised for mode='GAT',
# pathM=None; they are not implemented here.

if __name__ == "__main__":
    N, NFEAT, NHID, NCLASS = 256, 32, 16, 8
    NHEADS = (2, 2)
    ALPHA = 0.2
    TQ = TK = 128        # multi-tile grid even at this small demo size

    key = jax.random.PRNGKey(0)
    kx, kadj, kp = jax.random.split(key, 3)

    x = jax.random.normal(kx, (N, NFEAT), jnp.float32)
    # random sparse-ish adjacency with self-loops (rows never empty)
    adj = (jax.random.uniform(kadj, (N, N)) < 0.05).astype(jnp.float32)
    adj = jnp.clip(adj + jnp.eye(N, dtype=jnp.float32), 0.0, 1.0)

    params = init_params(kp, NFEAT, NHID, NCLASS, NHEADS)

    # Edge mask hoisted out of the forward pass (once per graph).
    adj_mask = make_edge_mask(adj)

    fwd = jax.jit(functools.partial(spagat_forward, alpha=ALPHA, tq=TQ, tk=TK))
    out = fwd(x, adj_mask, params)
    jax.block_until_ready(out)

    assert out.shape == (N, NCLASS)
    assert bool(jnp.all(jnp.isfinite(out)))
    print("KERNEL_OK")
</pallas_src>

<mosaic_0001>
module attributes {stable_mosaic.version = 11 : i64} {
  func.func @_spgat_kernel(%arg0: i32, %arg1: i32, %arg2: memref<128x128xi8, #tpu.memory_space<vmem>>, %arg3: memref<2x128x16xbf16, #tpu.memory_space<vmem>>, %arg4: memref<2x128x1xf32, #tpu.memory_space<vmem>>, %arg5: memref<2x1x128xf32, #tpu.memory_space<vmem>>, %arg6: memref<128x32xf32, #tpu.memory_space<vmem>>, %arg7: memref<2x128x1xf32, #tpu.memory_space<vmem>>, %arg8: memref<2x128x1xf32, #tpu.memory_space<vmem>>, %arg9: memref<2x128x16xf32, #tpu.memory_space<vmem>>) attributes {dimension_semantics = [#tpu.dimension_semantics<parallel>, #tpu.dimension_semantics<arbitrary>], iteration_bounds = array<i64: 2, 2>, scalar_prefetch = 0 : i64, scratch_operands = 3 : i64, tpu.core_type = #tpu.core_type<tc>, window_params = [{transform_indices = @transform_0, window_bounds = array<i64: 128, 128>}, {transform_indices = @transform_1, window_bounds = array<i64: 2, 128, 16>}, {transform_indices = @transform_2, window_bounds = array<i64: 2, 128, 1>}, {transform_indices = @transform_3, window_bounds = array<i64: 2, 1, 128>}, {transform_indices = @transform_4, window_bounds = array<i64: 128, 32>}]} {
    %c0_i32 = arith.constant 0 : i32
    %0 = arith.cmpi eq, %arg1, %c0_i32 : i32
    %1 = arith.extui %0 : i1 to i32
    %c0_i32_0 = arith.constant 0 : i32
    %2 = arith.cmpi ne, %1, %c0_i32_0 : i32
    scf.if %2 {
      %cst_67 = arith.constant -1.000000e+30 : f32
      %105 = vector.broadcast %cst_67 : f32 to vector<2x128x1xf32>
      %c0_68 = arith.constant 0 : index
      %c0_69 = arith.constant 0 : index
      %c0_70 = arith.constant 0 : index
      %106 = vector.load %arg7[%c0_68, %c0_69, %c0_70] : memref<2x128x1xf32, #tpu.memory_space<vmem>>, vector<2x128x1xf32>
      tpu.vector_store %arg7[%c0_68, %c0_69, %c0_70], %105 {strides = array<i32>} : memref<2x128x1xf32, #tpu.memory_space<vmem>>, vector<2x128x1xf32>,
      %cst_71 = arith.constant 0.000000e+00 : f32
      %107 = vector.broadcast %cst_71 : f32 to vector<2x128x1xf32>
      %c0_72 = arith.constant 0 : index
      %c0_73 = arith.constant 0 : index
      %c0_74 = arith.constant 0 : index
      %108 = vector.load %arg8[%c0_72, %c0_73, %c0_74] : memref<2x128x1xf32, #tpu.memory_space<vmem>>, vector<2x128x1xf32>
      tpu.vector_store %arg8[%c0_72, %c0_73, %c0_74], %107 {strides = array<i32>} : memref<2x128x1xf32, #tpu.memory_space<vmem>>, vector<2x128x1xf32>,
      %cst_75 = arith.constant 0.000000e+00 : f32
      %109 = vector.broadcast %cst_75 : f32 to vector<2x128x16xf32>
      %c0_76 = arith.constant 0 : index
      %c0_77 = arith.constant 0 : index
      %c0_78 = arith.constant 0 : index
      %110 = vector.load %arg9[%c0_76, %c0_77, %c0_78] : memref<2x128x16xf32, #tpu.memory_space<vmem>>, vector<2x128x16xf32>
      tpu.vector_store %arg9[%c0_76, %c0_77, %c0_78], %109 {strides = array<i32>} : memref<2x128x16xf32, #tpu.memory_space<vmem>>, vector<2x128x16xf32>,
    } else {
    }
    %c0 = arith.constant 0 : index
    %c0_1 = arith.constant 0 : index
    %3 = vector.load %arg2[%c0, %c0_1] : memref<128x128xi8, #tpu.memory_space<vmem>>, vector<128x128xi8>
    %c0_i8 = arith.constant 0 : i8
    %4 = vector.broadcast %c0_i8 : i8 to vector<128x128xi8>
    %5 = arith.cmpi ne, %3, %4 : vector<128x128xi8>
    %c0_2 = arith.constant 0 : index
    %c0_3 = arith.constant 0 : index
    %c0_4 = arith.constant 0 : index
    %6 = vector.load %arg4[%c0_2, %c0_3, %c0_4] : memref<2x128x1xf32, #tpu.memory_space<vmem>>, vector<1x128x1xf32>
    %7 = vector.shape_cast %6 : vector<1x128x1xf32> to vector<128x1xf32>
    %c0_5 = arith.constant 0 : index
    %c0_6 = arith.constant 0 : index
    %c0_7 = arith.constant 0 : index
    %8 = vector.load %arg5[%c0_5, %c0_6, %c0_7] : memref<2x1x128xf32, #tpu.memory_space<vmem>>, vector<1x1x128xf32>
    %9 = vector.shape_cast %8 : vector<1x1x128xf32> to vector<1x128xf32>
    %10 = vector.broadcast %7 : vector<128x1xf32> to vector<128x128xf32>
    %11 = vector.broadcast %9 : vector<1x128xf32> to vector<128x128xf32>
    %12 = arith.addf %10, %11 : vector<128x128xf32>
    %cst = arith.constant 2.000000e-01 : f32
    %13 = vector.broadcast %cst : f32 to vector<128x128xf32>
    %14 = arith.mulf %13, %12 : vector<128x128xf32>
    %15 = arith.maximumf %12, %14 : vector<128x128xf32>
    %cst_8 = arith.constant 0.000000e+00 : f32
    %16 = vector.broadcast %cst_8 : f32 to vector<128x128xf32>
    %17 = arith.subf %16, %15 : vector<128x128xf32>
    %cst_9 = arith.constant -1.000000e+30 : f32
    %18 = vector.broadcast %cst_9 : f32 to vector<128x128xf32>
    %19 = arith.select %5, %17, %18 : vector<128x128xi1>, vector<128x128xf32>
    %c0_10 = arith.constant 0 : index
    %c0_11 = arith.constant 0 : index
    %c0_12 = arith.constant 0 : index
    %20 = vector.load %arg7[%c0_10, %c0_11, %c0_12] : memref<2x128x1xf32, #tpu.memory_space<vmem>>, vector<1x128x1xf32>
    %21 = vector.shape_cast %20 : vector<1x128x1xf32> to vector<128x1xf32>
    %cst_13 = arith.constant dense<0xFF800000> : vector<128xf32>
    %22 = vector.multi_reduction <maximumf>, %19, %cst_13 [1] : vector<128x128xf32> to vector<128xf32>
    %23 = vector.shape_cast %22 : vector<128xf32> to vector<128x1xf32>
    %24 = arith.maximumf %21, %23 : vector<128x1xf32>
    %25 = arith.subf %21, %24 : vector<128x1xf32>
    %26 = math.exp %25 : vector<128x1xf32>
    %27 = vector.broadcast %24 : vector<128x1xf32> to vector<128x128xf32>
    %28 = arith.subf %19, %27 : vector<128x128xf32>
    %29 = math.exp %28 : vector<128x128xf32>
    %c0_14 = arith.constant 0 : index
    %c0_15 = arith.constant 0 : index
    %c0_16 = arith.constant 0 : index
    %30 = vector.load %arg8[%c0_14, %c0_15, %c0_16] : memref<2x128x1xf32, #tpu.memory_space<vmem>>, vector<1x128x1xf32>
    %31 = vector.shape_cast %30 : vector<1x128x1xf32> to vector<128x1xf32>
    %32 = arith.mulf %26, %31 : vector<128x1xf32>
    %cst_17 = arith.constant dense<0.000000e+00> : vector<128xf32>
    %33 = vector.multi_reduction <add>, %29, %cst_17 [1] : vector<128x128xf32> to vector<128xf32>
    %34 = vector.shape_cast %33 : vector<128xf32> to vector<128x1xf32>
    %35 = arith.addf %32, %34 : vector<128x1xf32>
    %c0_18 = arith.constant 0 : index
    %c0_19 = arith.constant 0 : index
    %c0_20 = arith.constant 0 : index
    %36 = vector.load %arg8[%c0_18, %c0_19, %c0_20] : memref<2x128x1xf32, #tpu.memory_space<vmem>>, vector<1x128x1xf32>
    %37 = vector.shape_cast %36 : vector<1x128x1xf32> to vector<128x1xf32>
    %38 = vector.shape_cast %35 : vector<128x1xf32> to vector<1x128x1xf32>
    tpu.vector_store %arg8[%c0_18, %c0_19, %c0_20], %38 {strides = array<i32>} : memref<2x128x1xf32, #tpu.memory_space<vmem>>, vector<1x128x1xf32>,
    %c0_21 = arith.constant 0 : index
    %c0_22 = arith.constant 0 : index
    %c0_23 = arith.constant 0 : index
    %39 = vector.load %arg9[%c0_21, %c0_22, %c0_23] : memref<2x128x16xf32, #tpu.memory_space<vmem>>, vector<1x128x16xf32>
    %40 = vector.shape_cast %39 : vector<1x128x16xf32> to vector<128x16xf32>
    %41 = vector.broadcast %26 : vector<128x1xf32> to vector<128x16xf32>
    %42 = arith.mulf %41, %40 : vector<128x16xf32>
    %43 = arith.truncf %29 : vector<128x128xf32> to vector<128x128xbf16>
    %c0_24 = arith.constant 0 : index
    %c0_25 = arith.constant 0 : index
    %c0_26 = arith.constant 0 : index
    %44 = vector.load %arg3[%c0_24, %c0_25, %c0_26] : memref<2x128x16xbf16, #tpu.memory_space<vmem>>, vector<1x128x16xbf16>
    %45 = vector.shape_cast %44 : vector<1x128x16xbf16> to vector<128x16xbf16>
    %cst_27 = arith.constant dense<0.000000e+00> : vector<128x16xf32>
    %46 = tpu.matmul %43, %45, %cst_27 {dimension_numbers = #tpu.dot_dimension_numbers<[1], [0], [0], [1], [0, 0, 1, 1], [], []>} : vector<128x128xbf16>, vector<128x16xbf16>, vector<128x16xf32> -> vector<128x16xf32>
    %47 = arith.addf %42, %46 : vector<128x16xf32>
    %c0_28 = arith.constant 0 : index
    %c0_29 = arith.constant 0 : index
    %c0_30 = arith.constant 0 : index
    %48 = vector.load %arg9[%c0_28, %c0_29, %c0_30] : memref<2x128x16xf32, #tpu.memory_space<vmem>>, vector<1x128x16xf32>
    %49 = vector.shape_cast %48 : vector<1x128x16xf32> to vector<128x16xf32>
    %50 = vector.shape_cast %47 : vector<128x16xf32> to vector<1x128x16xf32>
    tpu.vector_store %arg9[%c0_28, %c0_29, %c0_30], %50 {strides = array<i32>} : memref<2x128x16xf32, #tpu.memory_space<vmem>>, vector<1x128x16xf32>,
    %c0_31 = arith.constant 0 : index
    %c0_32 = arith.constant 0 : index
    %c0_33 = arith.constant 0 : index
    %51 = vector.load %arg7[%c0_31, %c0_32, %c0_33] : memref<2x128x1xf32, #tpu.memory_space<vmem>>, vector<1x128x1xf32>
    %52 = vector.shape_cast %51 : vector<1x128x1xf32> to vector<128x1xf32>
    %53 = vector.shape_cast %24 : vector<128x1xf32> to vector<1x128x1xf32>
    tpu.vector_store %arg7[%c0_31, %c0_32, %c0_33], %53 {strides = array<i32>} : memref<2x128x1xf32, #tpu.memory_space<vmem>>, vector<1x128x1xf32>,
    %c1 = arith.constant 1 : index
    %c0_34 = arith.constant 0 : index
    %c0_35 = arith.constant 0 : index
    %54 = vector.load %arg4[%c1, %c0_34, %c0_35] : memref<2x128x1xf32, #tpu.memory_space<vmem>>, vector<1x128x1xf32>
    %55 = vector.shape_cast %54 : vector<1x128x1xf32> to vector<128x1xf32>
    %c1_36 = arith.constant 1 : index
    %c0_37 = arith.constant 0 : index
    %c0_38 = arith.constant 0 : index
    %56 = vector.load %arg5[%c1_36, %c0_37, %c0_38] : memref<2x1x128xf32, #tpu.memory_space<vmem>>, vector<1x1x128xf32>
    %57 = vector.shape_cast %56 : vector<1x1x128xf32> to vector<1x128xf32>
    %58 = vector.broadcast %55 : vector<128x1xf32> to vector<128x128xf32>
    %59 = vector.broadcast %57 : vector<1x128xf32> to vector<128x128xf32>
    %60 = arith.addf %58, %59 : vector<128x128xf32>
    %cst_39 = arith.constant 2.000000e-01 : f32
    %61 = vector.broadcast %cst_39 : f32 to vector<128x128xf32>
    %62 = arith.mulf %61, %60 : vector<128x128xf32>
    %63 = arith.maximumf %60, %62 : vector<128x128xf32>
    %cst_40 = arith.constant 0.000000e+00 : f32
    %64 = vector.broadcast %cst_40 : f32 to vector<128x128xf32>
    %65 = arith.subf %64, %63 : vector<128x128xf32>
    %cst_41 = arith.constant -1.000000e+30 : f32
    %66 = vector.broadcast %cst_41 : f32 to vector<128x128xf32>
    %67 = arith.select %5, %65, %66 : vector<128x128xi1>, vector<128x128xf32>
    %c1_42 = arith.constant 1 : index
    %c0_43 = arith.constant 0 : index
    %c0_44 = arith.constant 0 : index
    %68 = vector.load %arg7[%c1_42, %c0_43, %c0_44] : memref<2x128x1xf32, #tpu.memory_space<vmem>>, vector<1x128x1xf32>
    %69 = vector.shape_cast %68 : vector<1x128x1xf32> to vector<128x1xf32>
    %cst_45 = arith.constant dense<0xFF800000> : vector<128xf32>
    %70 = vector.multi_reduction <maximumf>, %67, %cst_45 [1] : vector<128x128xf32> to vector<128xf32>
    %71 = vector.shape_cast %70 : vector<128xf32> to vector<128x1xf32>
    %72 = arith.maximumf %69, %71 : vector<128x1xf32>
    %73 = arith.subf %69, %72 : vector<128x1xf32>
    %74 = math.exp %73 : vector<128x1xf32>
    %75 = vector.broadcast %72 : vector<128x1xf32> to vector<128x128xf32>
    %76 = arith.subf %67, %75 : vector<128x128xf32>
    %77 = math.exp %76 : vector<128x128xf32>
    %c1_46 = arith.constant 1 : index
    %c0_47 = arith.constant 0 : index
    %c0_48 = arith.constant 0 : index
    %78 = vector.load %arg8[%c1_46, %c0_47, %c0_48] : memref<2x128x1xf32, #tpu.memory_space<vmem>>, vector<1x128x1xf32>
    %79 = vector.shape_cast %78 : vector<1x128x1xf32> to vector<128x1xf32>
    %80 = arith.mulf %74, %79 : vector<128x1xf32>
    %cst_49 = arith.constant dense<0.000000e+00> : vector<128xf32>
    %81 = vector.multi_reduction <add>, %77, %cst_49 [1] : vector<128x128xf32> to vector<128xf32>
    %82 = vector.shape_cast %81 : vector<128xf32> to vector<128x1xf32>
    %83 = arith.addf %80, %82 : vector<128x1xf32>
    %c1_50 = arith.constant 1 : index
    %c0_51 = arith.constant 0 : index
    %c0_52 = arith.constant 0 : index
    %84 = vector.load %arg8[%c1_50, %c0_51, %c0_52] : memref<2x128x1xf32, #tpu.memory_space<vmem>>, vector<1x128x1xf32>
    %85 = vector.shape_cast %84 : vector<1x128x1xf32> to vector<128x1xf32>
    %86 = vector.shape_cast %83 : vector<128x1xf32> to vector<1x128x1xf32>
    tpu.vector_store %arg8[%c1_50, %c0_51, %c0_52], %86 {strides = array<i32>} : memref<2x128x1xf32, #tpu.memory_space<vmem>>, vector<1x128x1xf32>,
    %c1_53 = arith.constant 1 : index
    %c0_54 = arith.constant 0 : index
    %c0_55 = arith.constant 0 : index
    %87 = vector.load %arg9[%c1_53, %c0_54, %c0_55] : memref<2x128x16xf32, #tpu.memory_space<vmem>>, vector<1x128x16xf32>
    %88 = vector.shape_cast %87 : vector<1x128x16xf32> to vector<128x16xf32>
    %89 = vector.broadcast %74 : vector<128x1xf32> to vector<128x16xf32>
    %90 = arith.mulf %89, %88 : vector<128x16xf32>
    %91 = arith.truncf %77 : vector<128x128xf32> to vector<128x128xbf16>
    %c1_56 = arith.constant 1 : index
    %c0_57 = arith.constant 0 : index
    %c0_58 = arith.constant 0 : index
    %92 = vector.load %arg3[%c1_56, %c0_57, %c0_58] : memref<2x128x16xbf16, #tpu.memory_space<vmem>>, vector<1x128x16xbf16>
    %93 = vector.shape_cast %92 : vector<1x128x16xbf16> to vector<128x16xbf16>
    %cst_59 = arith.constant dense<0.000000e+00> : vector<128x16xf32>
    %94 = tpu.matmul %91, %93, %cst_59 {dimension_numbers = #tpu.dot_dimension_numbers<[1], [0], [0], [1], [0, 0, 1, 1], [], []>} : vector<128x128xbf16>, vector<128x16xbf16>, vector<128x16xf32> -> vector<128x16xf32>
    %95 = arith.addf %90, %94 : vector<128x16xf32>
    %c1_60 = arith.constant 1 : index
    %c0_61 = arith.constant 0 : index
    %c0_62 = arith.constant 0 : index
    %96 = vector.load %arg9[%c1_60, %c0_61, %c0_62] : memref<2x128x16xf32, #tpu.memory_space<vmem>>, vector<1x128x16xf32>
    %97 = vector.shape_cast %96 : vector<1x128x16xf32> to vector<128x16xf32>
    %98 = vector.shape_cast %95 : vector<128x16xf32> to vector<1x128x16xf32>
    tpu.vector_store %arg9[%c1_60, %c0_61, %c0_62], %98 {strides = array<i32>} : memref<2x128x16xf32, #tpu.memory_space<vmem>>, vector<1x128x16xf32>,
    %c1_63 = arith.constant 1 : index
    %c0_64 = arith.constant 0 : index
    %c0_65 = arith.constant 0 : index
    %99 = vector.load %arg7[%c1_63, %c0_64, %c0_65] : memref<2x128x1xf32, #tpu.memory_space<vmem>>, vector<1x128x1xf32>
    %100 = vector.shape_cast %99 : vector<1x128x1xf32> to vector<128x1xf32>
    %101 = vector.shape_cast %72 : vector<128x1xf32> to vector<1x128x1xf32>
    tpu.vector_store %arg7[%c1_63, %c0_64, %c0_65], %101 {strides = array<i32>} : memref<2x128x1xf32, #tpu.memory_space<vmem>>, vector<1x128x1xf32>,
    %c1_i32 = arith.constant 1 : i32
    %102 = arith.cmpi eq, %arg1, %c1_i32 : i32
    %103 = arith.extui %102 : i1 to i32
    %c0_i32_66 = arith.constant 0 : i32
    %104 = arith.cmpi ne, %103, %c0_i32_66 : i32
    scf.if %104 {
      %c0_67 = arith.constant 0 : index
      %c0_68 = arith.constant 0 : index
      %c0_69 = arith.constant 0 : index
      %105 = vector.load %arg9[%c0_67, %c0_68, %c0_69] : memref<2x128x16xf32, #tpu.memory_space<vmem>>, vector<1x128x16xf32>
      %106 = vector.shape_cast %105 : vector<1x128x16xf32> to vector<128x16xf32>
      %c0_70 = arith.constant 0 : index
      %c0_71 = arith.constant 0 : index
      %c0_72 = arith.constant 0 : index
      %107 = vector.load %arg8[%c0_70, %c0_71, %c0_72] : memref<2x128x1xf32, #tpu.memory_space<vmem>>, vector<1x128x1xf32>
      %108 = vector.shape_cast %107 : vector<1x128x1xf32> to vector<128x1xf32>
      %cst_73 = arith.constant 9.99999996E-13 : f32
      %109 = vector.broadcast %cst_73 : f32 to vector<128x1xf32>
      %110 = arith.maximumf %108, %109 : vector<128x1xf32>
      %111 = vector.broadcast %110 : vector<128x1xf32> to vector<128x16xf32>
      %112 = arith.divf %106, %111 : vector<128x16xf32>
      %cst_74 = arith.constant 0.000000e+00 : f32
      %113 = vector.broadcast %cst_74 : f32 to vector<128x16xf32>
      %114 = arith.cmpf ogt, %112, %113 : vector<128x16xf32>
      %115 = math.exp %112 : vector<128x16xf32>
      %cst_75 = arith.constant 1.000000e+00 : f32
      %116 = vector.broadcast %cst_75 : f32 to vector<128x16xf32>
      %117 = arith.subf %115, %116 : vector<128x16xf32>
      %118 = arith.select %114, %112, %117 : vector<128x16xi1>, vector<128x16xf32>
      %c0_76 = arith.constant 0 : index
      %c0_77 = arith.constant 0 : index
      %119 = vector.load %arg6[%c0_76, %c0_77] : memref<128x32xf32, #tpu.memory_space<vmem>>, vector<128x16xf32>
      tpu.vector_store %arg6[%c0_76, %c0_77], %118 {strides = array<i32>} : memref<128x32xf32, #tpu.memory_space<vmem>>, vector<128x16xf32>,
      %c1_78 = arith.constant 1 : index
      %c0_79 = arith.constant 0 : index
      %c0_80 = arith.constant 0 : index
      %120 = vector.load %arg9[%c1_78, %c0_79, %c0_80] : memref<2x128x16xf32, #tpu.memory_space<vmem>>, vector<1x128x16xf32>
      %121 = vector.shape_cast %120 : vector<1x128x16xf32> to vector<128x16xf32>
      %c1_81 = arith.constant 1 : index
      %c0_82 = arith.constant 0 : index
      %c0_83 = arith.constant 0 : index
      %122 = vector.load %arg8[%c1_81, %c0_82, %c0_83] : memref<2x128x1xf32, #tpu.memory_space<vmem>>, vector<1x128x1xf32>
      %123 = vector.shape_cast %122 : vector<1x128x1xf32> to vector<128x1xf32>
      %cst_84 = arith.constant 9.99999996E-13 : f32
      %124 = vector.broadcast %cst_84 : f32 to vector<128x1xf32>
      %125 = arith.maximumf %123, %124 : vector<128x1xf32>
      %126 = vector.broadcast %125 : vector<128x1xf32> to vector<128x16xf32>
      %127 = arith.divf %121, %126 : vector<128x16xf32>
      %cst_85 = arith.constant 0.000000e+00 : f32
      %128 = vector.broadcast %cst_85 : f32 to vector<128x16xf32>
      %129 = arith.cmpf ogt, %127, %128 : vector<128x16xf32>
      %130 = math.exp %127 : vector<128x16xf32>
      %cst_86 = arith.constant 1.000000e+00 : f32
      %131 = vector.broadcast %cst_86 : f32 to vector<128x16xf32>
      %132 = arith.subf %130, %131 : vector<128x16xf32>
      %133 = arith.select %129, %127, %132 : vector<128x16xi1>, vector<128x16xf32>
      %c0_87 = arith.constant 0 : index
      %c16 = arith.constant 16 : index
      %134 = vector.load %arg6[%c0_87, %c16] : memref<128x32xf32, #tpu.memory_space<vmem>>, vector<128x16xf32>
      tpu.vector_store %arg6[%c0_87, %c16], %133 {strides = array<i32>} : memref<128x32xf32, #tpu.memory_space<vmem>>, vector<128x16xf32>,
    } else {
    }
    return
  }
  func.func @transform_0(%arg0: i32, %arg1: i32) -> (i32, i32) {
    %c0_i32 = arith.constant 0 : i32
    return %arg0, %arg1 : i32, i32
  }
  func.func @transform_1(%arg0: i32, %arg1: i32) -> (i32, i32, i32) {
    %c0_i32 = arith.constant 0 : i32
    %c0_i32_0 = arith.constant 0 : i32
    %c0_i32_1 = arith.constant 0 : i32
    return %c0_i32, %arg1, %c0_i32_0 : i32, i32, i32
  }
  func.func @transform_2(%arg0: i32, %arg1: i32) -> (i32, i32, i32) {
    %c0_i32 = arith.constant 0 : i32
    %c0_i32_0 = arith.constant 0 : i32
    %c0_i32_1 = arith.constant 0 : i32
    return %c0_i32, %arg0, %c0_i32_0 : i32, i32, i32
  }
  func.func @transform_3(%arg0: i32, %arg1: i32) -> (i32, i32, i32) {
    %c0_i32 = arith.constant 0 : i32
    %c0_i32_0 = arith.constant 0 : i32
    %c0_i32_1 = arith.constant 0 : i32
    return %c0_i32, %c0_i32_0, %arg1 : i32, i32, i32
  }
  func.func @transform_4(%arg0: i32, %arg1: i32) -> (i32, i32) {
    %c0_i32 = arith.constant 0 : i32
    %c0_i32_0 = arith.constant 0 : i32
    return %arg0, %c0_i32 : i32, i32
  }
}

module attributes {stable_mosaic.version = 11 : i64} {
  func.func @_spgat_kernel(%arg0: i32, %arg1: i32, %arg2: memref<128x128xi8, #tpu.memory_space<vmem>>, %arg3: memref<2x128x8xbf16, #tpu.memory_space<vmem>>, %arg4: memref<2x128x1xf32, #tpu.memory_space<vmem>>, %arg5: memref<2x1x128xf32, #tpu.memory_space<vmem>>, %arg6: memref<128x8xf32, #tpu.memory_space<vmem>>, %arg7: memref<2x128x1xf32, #tpu.memory_space<vmem>>, %arg8: memref<2x128x1xf32, #tpu.memory_space<vmem>>, %arg9: memref<2x128x8xf32, #tpu.memory_space<vmem>>) attributes {dimension_semantics = [#tpu.dimension_semantics<parallel>, #tpu.dimension_semantics<arbitrary>], iteration_bounds = array<i64: 2, 2>, scalar_prefetch = 0 : i64, scratch_operands = 3 : i64, tpu.core_type = #tpu.core_type<tc>, window_params = [{transform_indices = @transform_0, window_bounds = array<i64: 128, 128>}, {transform_indices = @transform_1, window_bounds = array<i64: 2, 128, 8>}, {transform_indices = @transform_2, window_bounds = array<i64: 2, 128, 1>}, {transform_indices = @transform_3, window_bounds = array<i64: 2, 1, 128>}, {transform_indices = @transform_4, window_bounds = array<i64: 128, 8>}]} {
    %c0_i32 = arith.constant 0 : i32
    %0 = arith.cmpi eq, %arg1, %c0_i32 : i32
    %1 = arith.extui %0 : i1 to i32
    %c0_i32_0 = arith.constant 0 : i32
    %2 = arith.cmpi ne, %1, %c0_i32_0 : i32
    scf.if %2 {
      %cst_67 = arith.constant -1.000000e+30 : f32
      %105 = vector.broadcast %cst_67 : f32 to vector<2x128x1xf32>
      %c0_68 = arith.constant 0 : index
      %c0_69 = arith.constant 0 : index
      %c0_70 = arith.constant 0 : index
      %106 = vector.load %arg7[%c0_68, %c0_69, %c0_70] : memref<2x128x1xf32, #tpu.memory_space<vmem>>, vector<2x128x1xf32>
      tpu.vector_store %arg7[%c0_68, %c0_69, %c0_70], %105 {strides = array<i32>} : memref<2x128x1xf32, #tpu.memory_space<vmem>>, vector<2x128x1xf32>,
      %cst_71 = arith.constant 0.000000e+00 : f32
      %107 = vector.broadcast %cst_71 : f32 to vector<2x128x1xf32>
      %c0_72 = arith.constant 0 : index
      %c0_73 = arith.constant 0 : index
      %c0_74 = arith.constant 0 : index
      %108 = vector.load %arg8[%c0_72, %c0_73, %c0_74] : memref<2x128x1xf32, #tpu.memory_space<vmem>>, vector<2x128x1xf32>
      tpu.vector_store %arg8[%c0_72, %c0_73, %c0_74], %107 {strides = array<i32>} : memref<2x128x1xf32, #tpu.memory_space<vmem>>, vector<2x128x1xf32>,
      %cst_75 = arith.constant 0.000000e+00 : f32
      %109 = vector.broadcast %cst_75 : f32 to vector<2x128x8xf32>
      %c0_76 = arith.constant 0 : index
      %c0_77 = arith.constant 0 : index
      %c0_78 = arith.constant 0 : index
      %110 = vector.load %arg9[%c0_76, %c0_77, %c0_78] : memref<2x128x8xf32, #tpu.memory_space<vmem>>, vector<2x128x8xf32>
      tpu.vector_store %arg9[%c0_76, %c0_77, %c0_78], %109 {strides = array<i32>} : memref<2x128x8xf32, #tpu.memory_space<vmem>>, vector<2x128x8xf32>,
    } else {
    }
    %c0 = arith.constant 0 : index
    %c0_1 = arith.constant 0 : index
    %3 = vector.load %arg2[%c0, %c0_1] : memref<128x128xi8, #tpu.memory_space<vmem>>, vector<128x128xi8>
    %c0_i8 = arith.constant 0 : i8
    %4 = vector.broadcast %c0_i8 : i8 to vector<128x128xi8>
    %5 = arith.cmpi ne, %3, %4 : vector<128x128xi8>
    %c0_2 = arith.constant 0 : index
    %c0_3 = arith.constant 0 : index
    %c0_4 = arith.constant 0 : index
    %6 = vector.load %arg4[%c0_2, %c0_3, %c0_4] : memref<2x128x1xf32, #tpu.memory_space<vmem>>, vector<1x128x1xf32>
    %7 = vector.shape_cast %6 : vector<1x128x1xf32> to vector<128x1xf32>
    %c0_5 = arith.constant 0 : index
    %c0_6 = arith.constant 0 : index
    %c0_7 = arith.constant 0 : index
    %8 = vector.load %arg5[%c0_5, %c0_6, %c0_7] : memref<2x1x128xf32, #tpu.memory_space<vmem>>, vector<1x1x128xf32>
    %9 = vector.shape_cast %8 : vector<1x1x128xf32> to vector<1x128xf32>
    %10 = vector.broadcast %7 : vector<128x1xf32> to vector<128x128xf32>
    %11 = vector.broadcast %9 : vector<1x128xf32> to vector<128x128xf32>
    %12 = arith.addf %10, %11 : vector<128x128xf32>
    %cst = arith.constant 2.000000e-01 : f32
    %13 = vector.broadcast %cst : f32 to vector<128x128xf32>
    %14 = arith.mulf %13, %12 : vector<128x128xf32>
    %15 = arith.maximumf %12, %14 : vector<128x128xf32>
    %cst_8 = arith.constant 0.000000e+00 : f32
    %16 = vector.broadcast %cst_8 : f32 to vector<128x128xf32>
    %17 = arith.subf %16, %15 : vector<128x128xf32>
    %cst_9 = arith.constant -1.000000e+30 : f32
    %18 = vector.broadcast %cst_9 : f32 to vector<128x128xf32>
    %19 = arith.select %5, %17, %18 : vector<128x128xi1>, vector<128x128xf32>
    %c0_10 = arith.constant 0 : index
    %c0_11 = arith.constant 0 : index
    %c0_12 = arith.constant 0 : index
    %20 = vector.load %arg7[%c0_10, %c0_11, %c0_12] : memref<2x128x1xf32, #tpu.memory_space<vmem>>, vector<1x128x1xf32>
    %21 = vector.shape_cast %20 : vector<1x128x1xf32> to vector<128x1xf32>
    %cst_13 = arith.constant dense<0xFF800000> : vector<128xf32>
    %22 = vector.multi_reduction <maximumf>, %19, %cst_13 [1] : vector<128x128xf32> to vector<128xf32>
    %23 = vector.shape_cast %22 : vector<128xf32> to vector<128x1xf32>
    %24 = arith.maximumf %21, %23 : vector<128x1xf32>
    %25 = arith.subf %21, %24 : vector<128x1xf32>
    %26 = math.exp %25 : vector<128x1xf32>
    %27 = vector.broadcast %24 : vector<128x1xf32> to vector<128x128xf32>
    %28 = arith.subf %19, %27 : vector<128x128xf32>
    %29 = math.exp %28 : vector<128x128xf32>
    %c0_14 = arith.constant 0 : index
    %c0_15 = arith.constant 0 : index
    %c0_16 = arith.constant 0 : index
    %30 = vector.load %arg8[%c0_14, %c0_15, %c0_16] : memref<2x128x1xf32, #tpu.memory_space<vmem>>, vector<1x128x1xf32>
    %31 = vector.shape_cast %30 : vector<1x128x1xf32> to vector<128x1xf32>
    %32 = arith.mulf %26, %31 : vector<128x1xf32>
    %cst_17 = arith.constant dense<0.000000e+00> : vector<128xf32>
    %33 = vector.multi_reduction <add>, %29, %cst_17 [1] : vector<128x128xf32> to vector<128xf32>
    %34 = vector.shape_cast %33 : vector<128xf32> to vector<128x1xf32>
    %35 = arith.addf %32, %34 : vector<128x1xf32>
    %c0_18 = arith.constant 0 : index
    %c0_19 = arith.constant 0 : index
    %c0_20 = arith.constant 0 : index
    %36 = vector.load %arg8[%c0_18, %c0_19, %c0_20] : memref<2x128x1xf32, #tpu.memory_space<vmem>>, vector<1x128x1xf32>
    %37 = vector.shape_cast %36 : vector<1x128x1xf32> to vector<128x1xf32>
    %38 = vector.shape_cast %35 : vector<128x1xf32> to vector<1x128x1xf32>
    tpu.vector_store %arg8[%c0_18, %c0_19, %c0_20], %38 {strides = array<i32>} : memref<2x128x1xf32, #tpu.memory_space<vmem>>, vector<1x128x1xf32>,
    %c0_21 = arith.constant 0 : index
    %c0_22 = arith.constant 0 : index
    %c0_23 = arith.constant 0 : index
    %39 = vector.load %arg9[%c0_21, %c0_22, %c0_23] : memref<2x128x8xf32, #tpu.memory_space<vmem>>, vector<1x128x8xf32>
    %40 = vector.shape_cast %39 : vector<1x128x8xf32> to vector<128x8xf32>
    %41 = vector.broadcast %26 : vector<128x1xf32> to vector<128x8xf32>
    %42 = arith.mulf %41, %40 : vector<128x8xf32>
    %43 = arith.truncf %29 : vector<128x128xf32> to vector<128x128xbf16>
    %c0_24 = arith.constant 0 : index
    %c0_25 = arith.constant 0 : index
    %c0_26 = arith.constant 0 : index
    %44 = vector.load %arg3[%c0_24, %c0_25, %c0_26] : memref<2x128x8xbf16, #tpu.memory_space<vmem>>, vector<1x128x8xbf16>
    %45 = vector.shape_cast %44 : vector<1x128x8xbf16> to vector<128x8xbf16>
    %cst_27 = arith.constant dense<0.000000e+00> : vector<128x8xf32>
    %46 = tpu.matmul %43, %45, %cst_27 {dimension_numbers = #tpu.dot_dimension_numbers<[1], [0], [0], [1], [0, 0, 1, 1], [], []>} : vector<128x128xbf16>, vector<128x8xbf16>, vector<128x8xf32> -> vector<128x8xf32>
    %47 = arith.addf %42, %46 : vector<128x8xf32>
    %c0_28 = arith.constant 0 : index
    %c0_29 = arith.constant 0 : index
    %c0_30 = arith.constant 0 : index
    %48 = vector.load %arg9[%c0_28, %c0_29, %c0_30] : memref<2x128x8xf32, #tpu.memory_space<vmem>>, vector<1x128x8xf32>
    %49 = vector.shape_cast %48 : vector<1x128x8xf32> to vector<128x8xf32>
    %50 = vector.shape_cast %47 : vector<128x8xf32> to vector<1x128x8xf32>
    tpu.vector_store %arg9[%c0_28, %c0_29, %c0_30], %50 {strides = array<i32>} : memref<2x128x8xf32, #tpu.memory_space<vmem>>, vector<1x128x8xf32>,
    %c0_31 = arith.constant 0 : index
    %c0_32 = arith.constant 0 : index
    %c0_33 = arith.constant 0 : index
    %51 = vector.load %arg7[%c0_31, %c0_32, %c0_33] : memref<2x128x1xf32, #tpu.memory_space<vmem>>, vector<1x128x1xf32>
    %52 = vector.shape_cast %51 : vector<1x128x1xf32> to vector<128x1xf32>
    %53 = vector.shape_cast %24 : vector<128x1xf32> to vector<1x128x1xf32>
    tpu.vector_store %arg7[%c0_31, %c0_32, %c0_33], %53 {strides = array<i32>} : memref<2x128x1xf32, #tpu.memory_space<vmem>>, vector<1x128x1xf32>,
    %c1 = arith.constant 1 : index
    %c0_34 = arith.constant 0 : index
    %c0_35 = arith.constant 0 : index
    %54 = vector.load %arg4[%c1, %c0_34, %c0_35] : memref<2x128x1xf32, #tpu.memory_space<vmem>>, vector<1x128x1xf32>
    %55 = vector.shape_cast %54 : vector<1x128x1xf32> to vector<128x1xf32>
    %c1_36 = arith.constant 1 : index
    %c0_37 = arith.constant 0 : index
    %c0_38 = arith.constant 0 : index
    %56 = vector.load %arg5[%c1_36, %c0_37, %c0_38] : memref<2x1x128xf32, #tpu.memory_space<vmem>>, vector<1x1x128xf32>
    %57 = vector.shape_cast %56 : vector<1x1x128xf32> to vector<1x128xf32>
    %58 = vector.broadcast %55 : vector<128x1xf32> to vector<128x128xf32>
    %59 = vector.broadcast %57 : vector<1x128xf32> to vector<128x128xf32>
    %60 = arith.addf %58, %59 : vector<128x128xf32>
    %cst_39 = arith.constant 2.000000e-01 : f32
    %61 = vector.broadcast %cst_39 : f32 to vector<128x128xf32>
    %62 = arith.mulf %61, %60 : vector<128x128xf32>
    %63 = arith.maximumf %60, %62 : vector<128x128xf32>
    %cst_40 = arith.constant 0.000000e+00 : f32
    %64 = vector.broadcast %cst_40 : f32 to vector<128x128xf32>
    %65 = arith.subf %64, %63 : vector<128x128xf32>
    %cst_41 = arith.constant -1.000000e+30 : f32
    %66 = vector.broadcast %cst_41 : f32 to vector<128x128xf32>
    %67 = arith.select %5, %65, %66 : vector<128x128xi1>, vector<128x128xf32>
    %c1_42 = arith.constant 1 : index
    %c0_43 = arith.constant 0 : index
    %c0_44 = arith.constant 0 : index
    %68 = vector.load %arg7[%c1_42, %c0_43, %c0_44] : memref<2x128x1xf32, #tpu.memory_space<vmem>>, vector<1x128x1xf32>
    %69 = vector.shape_cast %68 : vector<1x128x1xf32> to vector<128x1xf32>
    %cst_45 = arith.constant dense<0xFF800000> : vector<128xf32>
    %70 = vector.multi_reduction <maximumf>, %67, %cst_45 [1] : vector<128x128xf32> to vector<128xf32>
    %71 = vector.shape_cast %70 : vector<128xf32> to vector<128x1xf32>
    %72 = arith.maximumf %69, %71 : vector<128x1xf32>
    %73 = arith.subf %69, %72 : vector<128x1xf32>
    %74 = math.exp %73 : vector<128x1xf32>
    %75 = vector.broadcast %72 : vector<128x1xf32> to vector<128x128xf32>
    %76 = arith.subf %67, %75 : vector<128x128xf32>
    %77 = math.exp %76 : vector<128x128xf32>
    %c1_46 = arith.constant 1 : index
    %c0_47 = arith.constant 0 : index
    %c0_48 = arith.constant 0 : index
    %78 = vector.load %arg8[%c1_46, %c0_47, %c0_48] : memref<2x128x1xf32, #tpu.memory_space<vmem>>, vector<1x128x1xf32>
    %79 = vector.shape_cast %78 : vector<1x128x1xf32> to vector<128x1xf32>
    %80 = arith.mulf %74, %79 : vector<128x1xf32>
    %cst_49 = arith.constant dense<0.000000e+00> : vector<128xf32>
    %81 = vector.multi_reduction <add>, %77, %cst_49 [1] : vector<128x128xf32> to vector<128xf32>
    %82 = vector.shape_cast %81 : vector<128xf32> to vector<128x1xf32>
    %83 = arith.addf %80, %82 : vector<128x1xf32>
    %c1_50 = arith.constant 1 : index
    %c0_51 = arith.constant 0 : index
    %c0_52 = arith.constant 0 : index
    %84 = vector.load %arg8[%c1_50, %c0_51, %c0_52] : memref<2x128x1xf32, #tpu.memory_space<vmem>>, vector<1x128x1xf32>
    %85 = vector.shape_cast %84 : vector<1x128x1xf32> to vector<128x1xf32>
    %86 = vector.shape_cast %83 : vector<128x1xf32> to vector<1x128x1xf32>
    tpu.vector_store %arg8[%c1_50, %c0_51, %c0_52], %86 {strides = array<i32>} : memref<2x128x1xf32, #tpu.memory_space<vmem>>, vector<1x128x1xf32>,
    %c1_53 = arith.constant 1 : index
    %c0_54 = arith.constant 0 : index
    %c0_55 = arith.constant 0 : index
    %87 = vector.load %arg9[%c1_53, %c0_54, %c0_55] : memref<2x128x8xf32, #tpu.memory_space<vmem>>, vector<1x128x8xf32>
    %88 = vector.shape_cast %87 : vector<1x128x8xf32> to vector<128x8xf32>
    %89 = vector.broadcast %74 : vector<128x1xf32> to vector<128x8xf32>
    %90 = arith.mulf %89, %88 : vector<128x8xf32>
    %91 = arith.truncf %77 : vector<128x128xf32> to vector<128x128xbf16>
    %c1_56 = arith.constant 1 : index
    %c0_57 = arith.constant 0 : index
    %c0_58 = arith.constant 0 : index
    %92 = vector.load %arg3[%c1_56, %c0_57, %c0_58] : memref<2x128x8xbf16, #tpu.memory_space<vmem>>, vector<1x128x8xbf16>
    %93 = vector.shape_cast %92 : vector<1x128x8xbf16> to vector<128x8xbf16>
    %cst_59 = arith.constant dense<0.000000e+00> : vector<128x8xf32>
    %94 = tpu.matmul %91, %93, %cst_59 {dimension_numbers = #tpu.dot_dimension_numbers<[1], [0], [0], [1], [0, 0, 1, 1], [], []>} : vector<128x128xbf16>, vector<128x8xbf16>, vector<128x8xf32> -> vector<128x8xf32>
    %95 = arith.addf %90, %94 : vector<128x8xf32>
    %c1_60 = arith.constant 1 : index
    %c0_61 = arith.constant 0 : index
    %c0_62 = arith.constant 0 : index
    %96 = vector.load %arg9[%c1_60, %c0_61, %c0_62] : memref<2x128x8xf32, #tpu.memory_space<vmem>>, vector<1x128x8xf32>
    %97 = vector.shape_cast %96 : vector<1x128x8xf32> to vector<128x8xf32>
    %98 = vector.shape_cast %95 : vector<128x8xf32> to vector<1x128x8xf32>
    tpu.vector_store %arg9[%c1_60, %c0_61, %c0_62], %98 {strides = array<i32>} : memref<2x128x8xf32, #tpu.memory_space<vmem>>, vector<1x128x8xf32>,
    %c1_63 = arith.constant 1 : index
    %c0_64 = arith.constant 0 : index
    %c0_65 = arith.constant 0 : index
    %99 = vector.load %arg7[%c1_63, %c0_64, %c0_65] : memref<2x128x1xf32, #tpu.memory_space<vmem>>, vector<1x128x1xf32>
    %100 = vector.shape_cast %99 : vector<1x128x1xf32> to vector<128x1xf32>
    %101 = vector.shape_cast %72 : vector<128x1xf32> to vector<1x128x1xf32>
    tpu.vector_store %arg7[%c1_63, %c0_64, %c0_65], %101 {strides = array<i32>} : memref<2x128x1xf32, #tpu.memory_space<vmem>>, vector<1x128x1xf32>,
    %c1_i32 = arith.constant 1 : i32
    %102 = arith.cmpi eq, %arg1, %c1_i32 : i32
    %103 = arith.extui %102 : i1 to i32
    %c0_i32_66 = arith.constant 0 : i32
    %104 = arith.cmpi ne, %103, %c0_i32_66 : i32
    scf.if %104 {
      %c0_67 = arith.constant 0 : index
      %c0_68 = arith.constant 0 : index
      %c0_69 = arith.constant 0 : index
      %105 = vector.load %arg9[%c0_67, %c0_68, %c0_69] : memref<2x128x8xf32, #tpu.memory_space<vmem>>, vector<1x128x8xf32>
      %106 = vector.shape_cast %105 : vector<1x128x8xf32> to vector<128x8xf32>
      %c0_70 = arith.constant 0 : index
      %c0_71 = arith.constant 0 : index
      %c0_72 = arith.constant 0 : index
      %107 = vector.load %arg8[%c0_70, %c0_71, %c0_72] : memref<2x128x1xf32, #tpu.memory_space<vmem>>, vector<1x128x1xf32>
      %108 = vector.shape_cast %107 : vector<1x128x1xf32> to vector<128x1xf32>
      %cst_73 = arith.constant 9.99999996E-13 : f32
      %109 = vector.broadcast %cst_73 : f32 to vector<128x1xf32>
      %110 = arith.maximumf %108, %109 : vector<128x1xf32>
      %111 = vector.broadcast %110 : vector<128x1xf32> to vector<128x8xf32>
      %112 = arith.divf %106, %111 : vector<128x8xf32>
      %c1_74 = arith.constant 1 : index
      %c0_75 = arith.constant 0 : index
      %c0_76 = arith.constant 0 : index
      %113 = vector.load %arg9[%c1_74, %c0_75, %c0_76] : memref<2x128x8xf32, #tpu.memory_space<vmem>>, vector<1x128x8xf32>
      %114 = vector.shape_cast %113 : vector<1x128x8xf32> to vector<128x8xf32>
      %c1_77 = arith.constant 1 : index
      %c0_78 = arith.constant 0 : index
      %c0_79 = arith.constant 0 : index
      %115 = vector.load %arg8[%c1_77, %c0_78, %c0_79] : memref<2x128x1xf32, #tpu.memory_space<vmem>>, vector<1x128x1xf32>
      %116 = vector.shape_cast %115 : vector<1x128x1xf32> to vector<128x1xf32>
      %cst_80 = arith.constant 9.99999996E-13 : f32
      %117 = vector.broadcast %cst_80 : f32 to vector<128x1xf32>
      %118 = arith.maximumf %116, %117 : vector<128x1xf32>
      %119 = vector.broadcast %118 : vector<128x1xf32> to vector<128x8xf32>
      %120 = arith.divf %114, %119 : vector<128x8xf32>
      %121 = arith.addf %112, %120 : vector<128x8xf32>
      %cst_81 = arith.constant 5.000000e-01 : f32
      %122 = vector.broadcast %cst_81 : f32 to vector<128x8xf32>
      %123 = arith.mulf %121, %122 : vector<128x8xf32>
      %cst_82 = arith.constant 0.000000e+00 : f32
      %124 = vector.broadcast %cst_82 : f32 to vector<128x8xf32>
      %125 = arith.cmpf ogt, %123, %124 : vector<128x8xf32>
      %126 = math.exp %123 : vector<128x8xf32>
      %cst_83 = arith.constant 1.000000e+00 : f32
      %127 = vector.broadcast %cst_83 : f32 to vector<128x8xf32>
      %128 = arith.subf %126, %127 : vector<128x8xf32>
      %129 = arith.select %125, %123, %128 : vector<128x8xi1>, vector<128x8xf32>
      %cst_84 = arith.constant dense<0xFF800000> : vector<128xf32>
      %130 = vector.multi_reduction <maximumf>, %129, %cst_84 [1] : vector<128x8xf32> to vector<128xf32>
      %131 = vector.shape_cast %130 : vector<128xf32> to vector<128x1xf32>
      %132 = vector.broadcast %131 : vector<128x1xf32> to vector<128x8xf32>
      %133 = arith.subf %129, %132 : vector<128x8xf32>
      %134 = math.exp %133 : vector<128x8xf32>
      %cst_85 = arith.constant dense<0.000000e+00> : vector<128xf32>
      %135 = vector.multi_reduction <add>, %134, %cst_85 [1] : vector<128x8xf32> to vector<128xf32>
      %136 = vector.shape_cast %135 : vector<128xf32> to vector<128x1xf32>
      %137 = math.log %136 : vector<128x1xf32>
      %138 = vector.broadcast %137 : vector<128x1xf32> to vector<128x8xf32>
      %139 = arith.subf %133, %138 : vector<128x8xf32>
      %c0_86 = arith.constant 0 : index
      %c0_87 = arith.constant 0 : index
      %140 = vector.load %arg6[%c0_86, %c0_87] : memref<128x8xf32, #tpu.memory_space<vmem>>, vector<128x8xf32>
      tpu.vector_store %arg6[%c0_86, %c0_87], %139 {strides = array<i32>} : memref<128x8xf32, #tpu.memory_space<vmem>>, vector<128x8xf32>,
    } else {
    }
    return
  }
  func.func @transform_0(%arg0: i32, %arg1: i32) -> (i32, i32) {
    %c0_i32 = arith.constant 0 : i32
    return %arg0, %arg1 : i32, i32
  }
  func.func @transform_1(%arg0: i32, %arg1: i32) -> (i32, i32, i32) {
    %c0_i32 = arith.constant 0 : i32
    %c0_i32_0 = arith.constant 0 : i32
    %c0_i32_1 = arith.constant 0 : i32
    return %c0_i32, %arg1, %c0_i32_0 : i32, i32, i32
  }
  func.func @transform_2(%arg0: i32, %arg1: i32) -> (i32, i32, i32) {
    %c0_i32 = arith.constant 0 : i32
    %c0_i32_0 = arith.constant 0 : i32
    %c0_i32_1 = arith.constant 0 : i32
    return %c0_i32, %arg0, %c0_i32_0 : i32, i32, i32
  }
  func.func @transform_3(%arg0: i32, %arg1: i32) -> (i32, i32, i32) {
    %c0_i32 = arith.constant 0 : i32
    %c0_i32_0 = arith.constant 0 : i32
    %c0_i32_1 = arith.constant 0 : i32
    return %c0_i32, %c0_i32_0, %arg1 : i32, i32, i32
  }
  func.func @transform_4(%arg0: i32, %arg1: i32) -> (i32, i32) {
    %c0_i32 = arith.constant 0 : i32
    %c0_i32_0 = arith.constant 0 : i32
    return %arg0, %c0_i32 : i32, i32
  }
}

</mosaic_0001>

<llo_original>
// kernel: spagat_forward.3
$region0: #{spagat_forward.3}
  #allocation0 [shape = 'u32[]', space=smem, size = 0x4, offset = 0x4, fixed_abs, tag = 'smem constant byte address 0x4 - core index']
  #allocation1 [shape = 'u32[144,128]{1,0:T(1,128)}', space=vmem, size = 0x12000, scoped, tag = 'internal scratch']
  #allocation2 [shape = 'f32[2,128,1]{2,1,0:T(8,128)}', space=vmem, size = 0x20000, scoped, tag = 'scratch operand']
  #allocation3 [shape = 'f32[2,128,1]{2,1,0:T(8,128)}', space=vmem, size = 0x20000, scoped, tag = 'scratch operand']
  #allocation4 [shape = 'f32[2,128,8]{2,1,0:T(8,128)}', space=vmem, size = 0x20000, scoped, tag = 'scratch operand']
  %s0 = inlined_call_operand.vmem [shape: s8[256,256], index: 0, kind: input, shape index: {}]
  %s1 = inlined_call_operand.vmem [shape: bf16[2,256,8], index: 1, kind: input, shape index: {}]
  %s2 = inlined_call_operand.vmem [shape: f32[2,256,1], index: 2, kind: input, shape index: {}]
  %s3 = inlined_call_operand.vmem [shape: f32[2,1,256], index: 3, kind: input, shape index: {}]
  %s4 = inlined_call_operand.vmem [shape: f32[256,8], index: 4, kind: output, shape index: {}]
  %s5 = sld [smem:[#allocation0]]
  $region208: #{spagat_forward.3} parent=0
    _
  %s7 = ssub.s32 1, %s5
  %s8 = scalar_select 0, %s7, %s5
  $region1: #{spagat_forward.3} parent=0
    #allocation5 [shape = 'u8[32768]{0}', space=vmem, size = 0x8000, scoped, tag = 'input window, operand 0']
    #allocation6 [shape = 'u8[131072]{0}', space=vmem, size = 0x20000, scoped, tag = 'input window, operand 1']
    #allocation7 [shape = 'u8[262144]{0}', space=vmem, size = 0x40000, scoped, tag = 'input window, operand 2']
    #allocation8 [shape = 'u8[2048]{0}', space=vmem, size = 0x800, scoped, tag = 'input window, operand 3']
    loop: start=0, step=1, limit=6
    $region2: #{spagat_forward.3} parent=1 // loop_pre_header
      _
    $region3: #{spagat_forward.3} parent=1 // loop_header
      %s10 = sphi 0, %s14
      %p11 = scmp.ge.s32.totalorder %s10, 6
      %s17 = sphi 0, %s29
      %s18 = sphi 0, %s25
      %s19 = sphi 0, %s17
      %s20 = sphi 0, %s18
      %s21 = sphi 0, %s19
      %s22 = sphi 0, %s20
      %s34 = sphi 0, %s36
      %s37 = sphi 0, %s34
      %s38 = sphi 0, %s37
      %s54 = sphi 0, %s38
      %s60 = sphi 0, %s62
      %s63 = sphi 0, %s60
      %s64 = sphi 0, %s63
      %s80 = sphi 0, %s64
      %s86 = sphi 0, %s88
      %s89 = sphi 0, %s86
      %s90 = sphi 0, %s89
      %s106 = sphi 0, %s90
      %s112 = sphi 0, %s114
      %s115 = sphi 0, %s112
      %s116 = sphi 0, %s115
      %s132 = sphi 0, %s116
      %s138 = sphi 0, %s140
      %s141 = sphi 0, %s138
      %s142 = sphi 0, %s141
      %s158 = sphi 0, %s142
    $region4: #{spagat_forward.3} parent=1 // loop_header_branch
      %13 = sbr.rel (%p11) target = $region8
    $region5: #{spagat_forward.3} parent=1 // loop_body
      %s15 = ssub.s32 %s10, 1
      %s16 = ssub.s32 %s10, 2
      %s23 = sadd.s32 1, %s18
      %p24 = scmp.ge.s32.totalorder %s23, 2
      %s25 = scalar_select %p24, 0, %s23
      %s26 = sadd.s32 1, %s17
      %s27 = scalar_select %p24, %s26, %s17
      %p28 = scmp.ge.s32.totalorder %s27, 2
      %s29 = scalar_select %p28, 0, %s27
      %s30 = ssub.s32 %s17, %s29
      %s31 = ssub.s32 %s18, %s25
      %s32 = sor.u32 %s30, %s31
      %p33 = scmp.eq.s32.totalorder %s32, 0
      %s35 = sadd.s32 %s34, 1
      %s36 = scalar_select %p33, %s34, %s35
      %p39 = pneg %p33
      %p40 = scmp.eq.s32.totalorder %s10, 3
      %p41 = por %p39, %p40
      %p42 = scmp.ne.s32.totalorder %s34, %s37
      %p43 = scmp.eq.s32.totalorder %s10, 0
      %p44 = por %p42, %p43
      %p45 = scmp.ne.s32.totalorder %s34, %s37
      %p46 = scmp.eq.s32.totalorder %s15, 3
      %p47 = por %p45, %p46
      %p48 = scmp.ne.s32.totalorder %s37, %s38
      %p49 = scmp.eq.s32.totalorder %s15, 0
      %p50 = por %p48, %p49
      %p51 = scmp.ne.s32.totalorder %s37, %s38
      %p52 = scmp.eq.s32.totalorder %s16, 3
      %p53 = por %p51, %p52
      %p55 = scmp.ne.s32.totalorder %s38, %s54
      %p56 = scmp.eq.s32.totalorder %s16, 0
      %p57 = por %p55, %p56
      %s58 = ssub.s32 %s18, %s25
      %p59 = scmp.eq.s32.totalorder %s58, 0
      %s61 = sadd.s32 %s60, 1
      %s62 = scalar_select %p59, %s60, %s61
      %p65 = pneg %p59
      %p66 = scmp.eq.s32.totalorder %s10, 3
      %p67 = por %p65, %p66
      %p68 = scmp.ne.s32.totalorder %s60, %s63
      %p69 = scmp.eq.s32.totalorder %s10, 0
      %p70 = por %p68, %p69
      %p71 = scmp.ne.s32.totalorder %s60, %s63
      %p72 = scmp.eq.s32.totalorder %s15, 3
      %p73 = por %p71, %p72
      %p74 = scmp.ne.s32.totalorder %s63, %s64
      %p75 = scmp.eq.s32.totalorder %s15, 0
      %p76 = por %p74, %p75
      %p77 = scmp.ne.s32.totalorder %s63, %s64
      %p78 = scmp.eq.s32.totalorder %s16, 3
      %p79 = por %p77, %p78
      %p81 = scmp.ne.s32.totalorder %s64, %s80
      %p82 = scmp.eq.s32.totalorder %s16, 0
      %p83 = por %p81, %p82
      %s84 = ssub.s32 %s17, %s29
      %p85 = scmp.eq.s32.totalorder %s84, 0
      %s87 = sadd.s32 %s86, 1
      %s88 = scalar_select %p85, %s86, %s87
      %p91 = pneg %p85
      %p92 = scmp.eq.s32.totalorder %s10, 3
      %p93 = por %p91, %p92
      %p94 = scmp.ne.s32.totalorder %s86, %s89
      %p95 = scmp.eq.s32.totalorder %s10, 0
      %p96 = por %p94, %p95
      %p97 = scmp.ne.s32.totalorder %s86, %s89
      %p98 = scmp.eq.s32.totalorder %s15, 3
      %p99 = por %p97, %p98
      %p100 = scmp.ne.s32.totalorder %s89, %s90
      %p101 = scmp.eq.s32.totalorder %s15, 0
      %p102 = por %p100, %p101
      %p103 = scmp.ne.s32.totalorder %s89, %s90
      %p104 = scmp.eq.s32.totalorder %s16, 3
      %p105 = por %p103, %p104
      %p107 = scmp.ne.s32.totalorder %s90, %s106
      %p108 = scmp.eq.s32.totalorder %s16, 0
      %p109 = por %p107, %p108
      %s110 = ssub.s32 %s18, %s25
      %p111 = scmp.eq.s32.totalorder %s110, 0
      %s113 = sadd.s32 %s112, 1
      %s114 = scalar_select %p111, %s112, %s113
      %p117 = pneg %p111
      %p118 = scmp.eq.s32.totalorder %s10, 3
      %p119 = por %p117, %p118
      %p120 = scmp.ne.s32.totalorder %s112, %s115
      %p121 = scmp.eq.s32.totalorder %s10, 0
      %p122 = por %p120, %p121
      %p123 = scmp.ne.s32.totalorder %s112, %s115
      %p124 = scmp.eq.s32.totalorder %s15, 3
      %p125 = por %p123, %p124
      %p126 = scmp.ne.s32.totalorder %s115, %s116
      %p127 = scmp.eq.s32.totalorder %s15, 0
      %p128 = por %p126, %p127
      %p129 = scmp.ne.s32.totalorder %s115, %s116
      %p130 = scmp.eq.s32.totalorder %s16, 3
      %p131 = por %p129, %p130
      %p133 = scmp.ne.s32.totalorder %s116, %s132
      %p134 = scmp.eq.s32.totalorder %s16, 0
      %p135 = por %p133, %p134
      %s136 = ssub.s32 %s17, %s29
      %p137 = scmp.eq.s32.totalorder %s136, 0
      %s139 = sadd.s32 %s138, 1
      %s140 = scalar_select %p137, %s138, %s139
      %p143 = pneg %p137
      %p144 = scmp.eq.s32.totalorder %s10, 3
      %p145 = por %p143, %p144
      %p146 = scmp.ne.s32.totalorder %s138, %s141
      %p147 = scmp.eq.s32.totalorder %s10, 0
      %p148 = por %p146, %p147
      %p149 = scmp.ne.s32.totalorder %s138, %s141
      %p150 = scmp.eq.s32.totalorder %s15, 3
      %p151 = por %p149, %p150
      %p152 = scmp.ne.s32.totalorder %s141, %s142
      %p153 = scmp.eq.s32.totalorder %s15, 0
      %p154 = por %p152, %p153
      %p155 = scmp.ne.s32.totalorder %s141, %s142
      %p156 = scmp.eq.s32.totalorder %s16, 3
      %p157 = por %p155, %p156
      %p159 = scmp.ne.s32.totalorder %s142, %s158
      %p160 = scmp.eq.s32.totalorder %s16, 0
      %p161 = por %p159, %p160
      %p162 = scmp.le.s32.totalorder 1, %s10
      %p163 = scmp.lt.s32.totalorder %s10, 5
      %p164 = pnand %p162, %p163
      %p165 = pneg %p164
      // Predicated region
      $region9: #{spagat_forward.3} parent=5 // pred_check
        _
      $region10: #{spagat_forward.3} parent=5 // pred_check_branch
        %167 = sbr.rel (%p164) target = $region12
      $region11: #{spagat_forward.3} parent=5 // pred_region
        %s168 = ssub.s32 %s10, 1
      $region12: #{spagat_forward.3} parent=5 // pred_fallthru
        _
      %p169 = scmp.lt.s32.totalorder %s10, 4
      // Predicated region
      $region13: #{spagat_forward.3} parent=5 // pred_check
        %p170 = pneg %p169
      $region14: #{spagat_forward.3} parent=5 // pred_check_branch
        %172 = sbr.rel (%p170) target = $region16
      $region15: #{spagat_forward.3} parent=5 // pred_region
        // Predicated region
        $region17: #{spagat_forward.3} parent=15 // pred_check
          %p173 = pneg %p44
        $region18: #{spagat_forward.3} parent=15 // pred_check_branch
          %175 = sbr.rel (%p173) target = $region20
        $region19: #{spagat_forward.3} parent=15 // pred_region
          %s176 = sand.u32 %s34, 1
          %s177 = sand.u32 %s34, 1
          %s178 = smul.addr %s177, 32
          %s179 = scalar_lea.vmem [#allocation5], %s178
          %s180 = smul.u32 4, %s17
          %s181 = smul.addr %s180, 2
          %s182 = sadd.s32 %s18, %s181
          %s183 = smul.addr %s182, 8
          %s184 = scalar_lea.vmem %s0, %s183
          // Predicated region
          $region21: #{spagat_forward.3} parent=19 // pred_check
            _
          $region22: #{spagat_forward.3} parent=19 // pred_check_branch
            %186 = sbr.rel (0) target = $region24
          $region23: #{spagat_forward.3} parent=19 // pred_region
            // Predicated region
            $region25: #{spagat_forward.3} parent=23 // pred_check
              _
            $region26: #{spagat_forward.3} parent=23 // pred_check_branch
              %188 = sbr.rel (0) target = $region28
            $region27: #{spagat_forward.3} parent=23 // pred_region
              // Predicated region
              $region40: #{spagat_forward.3} parent=27 // pred_check
                _
              $region41: #{spagat_forward.3} parent=27 // pred_check_branch
                %209 = sbr.rel (0) target = $region43
              $region42: #{spagat_forward.3} parent=27 // pred_region
                loop: start=0, step=1, limit=1
                $region44: #{spagat_forward.3} parent=42 // loop_pre_header
                  _
                $region45: #{spagat_forward.3} parent=42 // loop_header
                  %s211 = sphi 0, %s215
                  %p212 = scmp.ge.s32.totalorder %s211, 1
                  %s216 = sphi %s184, %s184
                  %s217 = sphi %s179, %s179
                $region46: #{spagat_forward.3} parent=42 // loop_header_branch
                  %214 = sbr.rel (%p212) target = $region50
                $region47: #{spagat_forward.3} parent=42 // loop_body
                  %v218 = vld [vmem:[%s216] sm:$0xff]
                  %219 = vst [vmem:[%s217] sm:$0xff] %v218
                  %v220 = vld [vmem:[%s216 + $0x10] sm:$0xff]
                  %221 = vst [vmem:[%s217 + $0x8] sm:$0xff] %v220
                  %v222 = vld [vmem:[%s216 + $0x20] sm:$0xff]
                  %223 = vst [vmem:[%s217 + $0x10] sm:$0xff] %v222
                  %v224 = vld [vmem:[%s216 + $0x30] sm:$0xff]
                  %225 = vst [vmem:[%s217 + $0x18] sm:$0xff] %v224
                $region48: #{spagat_forward.3} parent=42 // loop_footer
                  %s215 = sadd.s32 1, %s211
                $region49: #{spagat_forward.3} parent=42 // loop_footer_branch
                  %210 = sbr.rel target = $region45
                $region50: #{spagat_forward.3} parent=42 // loop_exit
                  _
              $region43: #{spagat_forward.3} parent=27 // pred_fallthru
                _
              // Predicated region
              $region51: #{spagat_forward.3} parent=27 // pred_check
                _
              $region52: #{spagat_forward.3} parent=27 // pred_check_branch
                %227 = sbr.rel target = $region54
              $region53: #{spagat_forward.3} parent=27 // pred_region
                _
              $region54: #{spagat_forward.3} parent=27 // pred_fallthru
                _
            $region28: #{spagat_forward.3} parent=23 // pred_fallthru
              _
            // Predicated region
            $region29: #{spagat_forward.3} parent=23 // pred_check
              _
            $region30: #{spagat_forward.3} parent=23 // pred_check_branch
              %190 = sbr.rel target = $region32
            $region31: #{spagat_forward.3} parent=23 // pred_region
              loop: start=0, step=1, limit=1
              $region33: #{spagat_forward.3} parent=31 // loop_pre_header
                _
              $region34: #{spagat_forward.3} parent=31 // loop_header
                %s193 = sphi 0, %s197
                %p194 = scmp.ge.s32.totalorder %s193, 1
                %s198 = sphi %s184, %s184
                %s199 = sphi %s179, %s179
              $region35: #{spagat_forward.3} parent=31 // loop_header_branch
                %196 = sbr.rel (%p194) target = $region39
              $region36: #{spagat_forward.3} parent=31 // loop_body
                %v200 = vld [vmem:[%s198] sm:$0xff]
                %201 = vst [vmem:[%s199] sm:$0xff] %v200
                %v202 = vld [vmem:[%s198 + $0x10] sm:$0xff]
                %203 = vst [vmem:[%s199 + $0x8] sm:$0xff] %v202
                %v204 = vld [vmem:[%s198 + $0x20] sm:$0xff]
                %205 = vst [vmem:[%s199 + $0x10] sm:$0xff] %v204
                %v206 = vld [vmem:[%s198 + $0x30] sm:$0xff]
                %207 = vst [vmem:[%s199 + $0x18] sm:$0xff] %v206
              $region37: #{spagat_forward.3} parent=31 // loop_footer
                %s197 = sadd.s32 1, %s193
              $region38: #{spagat_forward.3} parent=31 // loop_footer_branch
                %192 = sbr.rel target = $region34
              $region39: #{spagat_forward.3} parent=31 // loop_exit
                _
            $region32: #{spagat_forward.3} parent=23 // pred_fallthru
              _
          $region24: #{spagat_forward.3} parent=19 // pred_fallthru
            _
          %228 = vnop
        $region20: #{spagat_forward.3} parent=15 // pred_fallthru
          _
        // Predicated region
        $region55: #{spagat_forward.3} parent=15 // pred_check
          %p229 = pneg %p70
        $region56: #{spagat_forward.3} parent=15 // pred_check_branch
          %231 = sbr.rel (%p229) target = $region58
        $region57: #{spagat_forward.3} parent=15 // pred_region
          %s232 = sand.u32 %s60, 1
          %s233 = sand.u32 %s60, 1
          %s234 = smul.addr %s233, 128
          %s235 = scalar_lea.vmem [#allocation6], %s234
          %s236 = smul.u32 16, %s18
          %s237 = smul.addr %s236, 4
          %s238 = scalar_lea.vmem %s1, %s237
          // Predicated region
          $region59: #{spagat_forward.3} parent=57 // pred_check
            _
          $region60: #{spagat_forward.3} parent=57 // pred_check_branch
            %240 = sbr.rel (0) target = $region62
          $region61: #{spagat_forward.3} parent=57 // pred_region
            // Predicated region
            $region63: #{spagat_forward.3} parent=61 // pred_check
              _
            $region64: #{spagat_forward.3} parent=61 // pred_check_branch
              %242 = sbr.rel target = $region66
            $region65: #{spagat_forward.3} parent=61 // pred_region
              // Predicated region
              $region78: #{spagat_forward.3} parent=65 // pred_check
                _
              $region79: #{spagat_forward.3} parent=65 // pred_check_branch
                %319 = sbr.rel (0) target = $region81
              $region80: #{spagat_forward.3} parent=65 // pred_region
                loop: start=0, step=1, limit=1
                $region82: #{spagat_forward.3} parent=80 // loop_pre_header
                  _
                $region83: #{spagat_forward.3} parent=80 // loop_header
                  %s321 = sphi 0, %s325
                  %p322 = scmp.ge.s32.totalorder %s321, 1
                  %s326 = sphi %s238, %s238
                  %s327 = sphi %s235, %s235
                $region84: #{spagat_forward.3} parent=80 // loop_header_branch
                  %324 = sbr.rel (%p322) target = $region88
                $region85: #{spagat_forward.3} parent=80 // loop_body
                  _
                $region86: #{spagat_forward.3} parent=80 // loop_footer
                  %s325 = sadd.s32 1, %s321
                $region87: #{spagat_forward.3} parent=80 // loop_footer_branch
                  %320 = sbr.rel target = $region83
                $region88: #{spagat_forward.3} parent=80 // loop_exit
                  _
                loop: start=0, step=1, limit=1
                $region89: #{spagat_forward.3} parent=80 // loop_pre_header
                  _
                $region90: #{spagat_forward.3} parent=80 // loop_header
                  %s330 = sphi 0, %s334
                  %p331 = scmp.ge.s32.totalorder %s330, 1
                  %s335 = sphi %s238, %s238
                  %s336 = sphi %s235, %s235
                $region91: #{spagat_forward.3} parent=80 // loop_header_branch
                  %333 = sbr.rel (%p331) target = $region95
                $region92: #{spagat_forward.3} parent=80 // loop_body
                  %v337 = vld [vmem:[%s335] sm:$0xf]
                  %338 = vst [vmem:[%s336] sm:$0xf] %v337
                  %v339 = vld [vmem:[%s335 + $0x4] sm:$0xf]
                  %340 = vst [vmem:[%s336 + $0x4] sm:$0xf] %v339
                  %v341 = vld [vmem:[%s335 + $0x8] sm:$0xf]
                  %342 = vst [vmem:[%s336 + $0x8] sm:$0xf] %v341
                  %v343 = vld [vmem:[%s335 + $0xc] sm:$0xf]
                  %344 = vst [vmem:[%s336 + $0xc] sm:$0xf] %v343
                  %v345 = vld [vmem:[%s335 + $0x10] sm:$0xf]
                  %346 = vst [vmem:[%s336 + $0x10] sm:$0xf] %v345
                  %v347 = vld [vmem:[%s335 + $0x14] sm:$0xf]
                  %348 = vst [vmem:[%s336 + $0x14] sm:$0xf] %v347
                  %v349 = vld [vmem:[%s335 + $0x18] sm:$0xf]
                  %350 = vst [vmem:[%s336 + $0x18] sm:$0xf] %v349
                  %v351 = vld [vmem:[%s335 + $0x1c] sm:$0xf]
                  %352 = vst [vmem:[%s336 + $0x1c] sm:$0xf] %v351
                  %v353 = vld [vmem:[%s335 + $0x20] sm:$0xf]
                  %354 = vst [vmem:[%s336 + $0x20] sm:$0xf] %v353
                  %v355 = vld [vmem:[%s335 + $0x24] sm:$0xf]
                  %356 = vst [vmem:[%s336 + $0x24] sm:$0xf] %v355
                  %v357 = vld [vmem:[%s335 + $0x28] sm:$0xf]
                  %358 = vst [vmem:[%s336 + $0x28] sm:$0xf] %v357
                  %v359 = vld [vmem:[%s335 + $0x2c] sm:$0xf]
                  %360 = vst [vmem:[%s336 + $0x2c] sm:$0xf] %v359
                  %v361 = vld [vmem:[%s335 + $0x30] sm:$0xf]
                  %362 = vst [vmem:[%s336 + $0x30] sm:$0xf] %v361
                  %v363 = vld [vmem:[%s335 + $0x34] sm:$0xf]
                  %364 = vst [vmem:[%s336 + $0x34] sm:$0xf] %v363
                  %v365 = vld [vmem:[%s335 + $0x38] sm:$0xf]
                  %366 = vst [vmem:[%s336 + $0x38] sm:$0xf] %v365
                  %v367 = vld [vmem:[%s335 + $0x3c] sm:$0xf]
                  %368 = vst [vmem:[%s336 + $0x3c] sm:$0xf] %v367
                  %v369 = vld [vmem:[%s335 + $0x80] sm:$0xf]
                  %370 = vst [vmem:[%s336 + $0x40] sm:$0xf] %v369
                  %v371 = vld [vmem:[%s335 + $0x84] sm:$0xf]
                  %372 = vst [vmem:[%s336 + $0x44] sm:$0xf] %v371
                  %v373 = vld [vmem:[%s335 + $0x88] sm:$0xf]
                  %374 = vst [vmem:[%s336 + $0x48] sm:$0xf] %v373
                  %v375 = vld [vmem:[%s335 + $0x8c] sm:$0xf]
                  %376 = vst [vmem:[%s336 + $0x4c] sm:$0xf] %v375
                  %v377 = vld [vmem:[%s335 + $0x90] sm:$0xf]
                  %378 = vst [vmem:[%s336 + $0x50] sm:$0xf] %v377
                  %v379 = vld [vmem:[%s335 + $0x94] sm:$0xf]
                  %380 = vst [vmem:[%s336 + $0x54] sm:$0xf] %v379
                  %v381 = vld [vmem:[%s335 + $0x98] sm:$0xf]
                  %382 = vst [vmem:[%s336 + $0x58] sm:$0xf] %v381
                  %v383 = vld [vmem:[%s335 + $0x9c] sm:$0xf]
                  %384 = vst [vmem:[%s336 + $0x5c] sm:$0xf] %v383
                  %v385 = vld [vmem:[%s335 + $0xa0] sm:$0xf]
                  %386 = vst [vmem:[%s336 + $0x60] sm:$0xf] %v385
                  %v387 = vld [vmem:[%s335 + $0xa4] sm:$0xf]
                  %388 = vst [vmem:[%s336 + $0x64] sm:$0xf] %v387
                  %v389 = vld [vmem:[%s335 + $0xa8] sm:$0xf]
                  %390 = vst [vmem:[%s336 + $0x68] sm:$0xf] %v389
                  %v391 = vld [vmem:[%s335 + $0xac] sm:$0xf]
                  %392 = vst [vmem:[%s336 + $0x6c] sm:$0xf] %v391
                  %v393 = vld [vmem:[%s335 + $0xb0] sm:$0xf]
                  %394 = vst [vmem:[%s336 + $0x70] sm:$0xf] %v393
                  %v395 = vld [vmem:[%s335 + $0xb4] sm:$0xf]
                  %396 = vst [vmem:[%s336 + $0x74] sm:$0xf] %v395
                  %v397 = vld [vmem:[%s335 + $0xb8] sm:$0xf]
                  %398 = vst [vmem:[%s336 + $0x78] sm:$0xf] %v397
                  %v399 = vld [vmem:[%s335 + $0xbc] sm:$0xf]
                  %400 = vst [vmem:[%s336 + $0x7c] sm:$0xf] %v399
                $region93: #{spagat_forward.3} parent=80 // loop_footer
                  %s334 = sadd.s32 1, %s330
                $region94: #{spagat_forward.3} parent=80 // loop_footer_branch
                  %329 = sbr.rel target = $region90
                $region95: #{spagat_forward.3} parent=80 // loop_exit
                  _
              $region81: #{spagat_forward.3} parent=65 // pred_fallthru
                _
            $region66: #{spagat_forward.3} parent=61 // pred_fallthru
              _
            // Predicated region
            $region67: #{spagat_forward.3} parent=61 // pred_check
              _
            $region68: #{spagat_forward.3} parent=61 // pred_check_branch
              %244 = sbr.rel (0) target = $region70
            $region69: #{spagat_forward.3} parent=61 // pred_region
              loop: start=0, step=1, limit=1
              $region71: #{spagat_forward.3} parent=69 // loop_pre_header
                _
              $region72: #{spagat_forward.3} parent=69 // loop_header
                %s247 = sphi 0, %s251
                %p248 = scmp.ge.s32.totalorder %s247, 1
                %s252 = sphi %s238, %s238
                %s253 = sphi %s235, %s235
              $region73: #{spagat_forward.3} parent=69 // loop_header_branch
                %250 = sbr.rel (%p248) target = $region77
              $region74: #{spagat_forward.3} parent=69 // loop_body
                %v254 = vld [vmem:[%s252] sm:$0xf]
                %255 = vst [vmem:[%s253] sm:$0xf] %v254
                %v256 = vld [vmem:[%s252 + $0x4] sm:$0xf]
                %257 = vst [vmem:[%s253 + $0x4] sm:$0xf] %v256
                %v258 = vld [vmem:[%s252 + $0x8] sm:$0xf]
                %259 = vst [vmem:[%s253 + $0x8] sm:$0xf] %v258
                %v260 = vld [vmem:[%s252 + $0xc] sm:$0xf]
                %261 = vst [vmem:[%s253 + $0xc] sm:$0xf] %v260
                %v262 = vld [vmem:[%s252 + $0x10] sm:$0xf]
                %263 = vst [vmem:[%s253 + $0x10] sm:$0xf] %v262
                %v264 = vld [vmem:[%s252 + $0x14] sm:$0xf]
                %265 = vst [vmem:[%s253 + $0x14] sm:$0xf] %v264
                %v266 = vld [vmem:[%s252 + $0x18] sm:$0xf]
                %267 = vst [vmem:[%s253 + $0x18] sm:$0xf] %v266
                %v268 = vld [vmem:[%s252 + $0x1c] sm:$0xf]
                %269 = vst [vmem:[%s253 + $0x1c] sm:$0xf] %v268
                %v270 = vld [vmem:[%s252 + $0x20] sm:$0xf]
                %271 = vst [vmem:[%s253 + $0x20] sm:$0xf] %v270
                %v272 = vld [vmem:[%s252 + $0x24] sm:$0xf]
                %273 = vst [vmem:[%s253 + $0x24] sm:$0xf] %v272
                %v274 = vld [vmem:[%s252 + $0x28] sm:$0xf]
                %275 = vst [vmem:[%s253 + $0x28] sm:$0xf] %v274
                %v276 = vld [vmem:[%s252 + $0x2c] sm:$0xf]
                %277 = vst [vmem:[%s253 + $0x2c] sm:$0xf] %v276
                %v278 = vld [vmem:[%s252 + $0x30] sm:$0xf]
                %279 = vst [vmem:[%s253 + $0x30] sm:$0xf] %v278
                %v280 = vld [vmem:[%s252 + $0x34] sm:$0xf]
                %281 = vst [vmem:[%s253 + $0x34] sm:$0xf] %v280
                %v282 = vld [vmem:[%s252 + $0x38] sm:$0xf]
                %283 = vst [vmem:[%s253 + $0x38] sm:$0xf] %v282
                %v284 = vld [vmem:[%s252 + $0x3c] sm:$0xf]
                %285 = vst [vmem:[%s253 + $0x3c] sm:$0xf] %v284
                %v286 = vld [vmem:[%s252 + $0x80] sm:$0xf]
                %287 = vst [vmem:[%s253 + $0x40] sm:$0xf] %v286
                %v288 = vld [vmem:[%s252 + $0x84] sm:$0xf]
                %289 = vst [vmem:[%s253 + $0x44] sm:$0xf] %v288
                %v290 = vld [vmem:[%s252 + $0x88] sm:$0xf]
                %291 = vst [vmem:[%s253 + $0x48] sm:$0xf] %v290
                %v292 = vld [vmem:[%s252 + $0x8c] sm:$0xf]
                %293 = vst [vmem:[%s253 + $0x4c] sm:$0xf] %v292
                %v294 = vld [vmem:[%s252 + $0x90] sm:$0xf]
                %295 = vst [vmem:[%s253 + $0x50] sm:$0xf] %v294
                %v296 = vld [vmem:[%s252 + $0x94] sm:$0xf]
                %297 = vst [vmem:[%s253 + $0x54] sm:$0xf] %v296
                %v298 = vld [vmem:[%s252 + $0x98] sm:$0xf]
                %299 = vst [vmem:[%s253 + $0x58] sm:$0xf] %v298
                %v300 = vld [vmem:[%s252 + $0x9c] sm:$0xf]
                %301 = vst [vmem:[%s253 + $0x5c] sm:$0xf] %v300
                %v302 = vld [vmem:[%s252 + $0xa0] sm:$0xf]
                %303 = vst [vmem:[%s253 + $0x60] sm:$0xf] %v302
                %v304 = vld [vmem:[%s252 + $0xa4] sm:$0xf]
                %305 = vst [vmem:[%s253 + $0x64] sm:$0xf] %v304
                %v306 = vld [vmem:[%s252 + $0xa8] sm:$0xf]
                %307 = vst [vmem:[%s253 + $0x68] sm:$0xf] %v306
                %v308 = vld [vmem:[%s252 + $0xac] sm:$0xf]
                %309 = vst [vmem:[%s253 + $0x6c] sm:$0xf] %v308
                %v310 = vld [vmem:[%s252 + $0xb0] sm:$0xf]
                %311 = vst [vmem:[%s253 + $0x70] sm:$0xf] %v310
                %v312 = vld [vmem:[%s252 + $0xb4] sm:$0xf]
                %313 = vst [vmem:[%s253 + $0x74] sm:$0xf] %v312
                %v314 = vld [vmem:[%s252 + $0xb8] sm:$0xf]
                %315 = vst [vmem:[%s253 + $0x78] sm:$0xf] %v314
                %v316 = vld [vmem:[%s252 + $0xbc] sm:$0xf]
                %317 = vst [vmem:[%s253 + $0x7c] sm:$0xf] %v316
              $region75: #{spagat_forward.3} parent=69 // loop_footer
                %s251 = sadd.s32 1, %s247
              $region76: #{spagat_forward.3} parent=69 // loop_footer_branch
                %246 = sbr.rel target = $region72
              $region77: #{spagat_forward.3} parent=69 // loop_exit
                _
            $region70: #{spagat_forward.3} parent=61 // pred_fallthru
              _
          $region62: #{spagat_forward.3} parent=57 // pred_fallthru
            _
          %401 = vnop
        $region58: #{spagat_forward.3} parent=15 // pred_fallthru
          _
        // Predicated region
        $region96: #{spagat_forward.3} parent=15 // pred_check
          %p402 = pneg %p96
        $region97: #{spagat_forward.3} parent=15 // pred_check_branch
          %404 = sbr.rel (%p402) target = $region99
        $region98: #{spagat_forward.3} parent=15 // pred_region
          %s405 = sand.u32 %s86, 1
          %s406 = sand.u32 %s86, 1
          %s407 = smul.addr %s406, 256
          %s408 = scalar_lea.vmem [#allocation7], %s407
          %s409 = smul.u32 16, %s17
          %s410 = smul.addr %s409, 8
          %s411 = scalar_lea.vmem %s2, %s410
          // Predicated region
          $region100: #{spagat_forward.3} parent=98 // pred_check
            _
          $region101: #{spagat_forward.3} parent=98 // pred_check_branch
            %413 = sbr.rel (0) target = $region103
          $region102: #{spagat_forward.3} parent=98 // pred_region
            // Predicated region
            $region104: #{spagat_forward.3} parent=102 // pred_check
              _
            $region105: #{spagat_forward.3} parent=102 // pred_check_branch
              %415 = sbr.rel (0) target = $region107
            $region106: #{spagat_forward.3} parent=102 // pred_region
              // Predicated region
              $region119: #{spagat_forward.3} parent=106 // pred_check
                _
              $region120: #{spagat_forward.3} parent=106 // pred_check_branch
                %492 = sbr.rel (0) target = $region122
              $region121: #{spagat_forward.3} parent=106 // pred_region
                loop: start=0, step=1, limit=1
                $region123: #{spagat_forward.3} parent=121 // loop_pre_header
                  _
                $region124: #{spagat_forward.3} parent=121 // loop_header
                  %s494 = sphi 0, %s498
                  %p495 = scmp.ge.s32.totalorder %s494, 1
                  %s499 = sphi %s411, %s411
                  %s500 = sphi %s408, %s408
                $region125: #{spagat_forward.3} parent=121 // loop_header_branch
                  %497 = sbr.rel (%p495) target = $region129
                $region126: #{spagat_forward.3} parent=121 // loop_body
                  %v501 = vld [vmem:[%s499] sm:$0xff]
                  %502 = vst [vmem:[%s500] sm:$0xff] %v501
                  %v503 = vld [vmem:[%s499 + $0x8] sm:$0xff]
                  %504 = vst [vmem:[%s500 + $0x8] sm:$0xff] %v503
                  %v505 = vld [vmem:[%s499 + $0x10] sm:$0xff]
                  %506 = vst [vmem:[%s500 + $0x10] sm:$0xff] %v505
                  %v507 = vld [vmem:[%s499 + $0x18] sm:$0xff]
                  %508 = vst [vmem:[%s500 + $0x18] sm:$0xff] %v507
                  %v509 = vld [vmem:[%s499 + $0x20] sm:$0xff]
                  %510 = vst [vmem:[%s500 + $0x20] sm:$0xff] %v509
                  %v511 = vld [vmem:[%s499 + $0x28] sm:$0xff]
                  %512 = vst [vmem:[%s500 + $0x28] sm:$0xff] %v511
                  %v513 = vld [vmem:[%s499 + $0x30] sm:$0xff]
                  %514 = vst [vmem:[%s500 + $0x30] sm:$0xff] %v513
                  %v515 = vld [vmem:[%s499 + $0x38] sm:$0xff]
                  %516 = vst [vmem:[%s500 + $0x38] sm:$0xff] %v515
                  %v517 = vld [vmem:[%s499 + $0x40] sm:$0xff]
                  %518 = vst [vmem:[%s500 + $0x40] sm:$0xff] %v517
                  %v519 = vld [vmem:[%s499 + $0x48] sm:$0xff]
                  %520 = vst [vmem:[%s500 + $0x48] sm:$0xff] %v519
                  %v521 = vld [vmem:[%s499 + $0x50] sm:$0xff]
                  %522 = vst [vmem:[%s500 + $0x50] sm:$0xff] %v521
                  %v523 = vld [vmem:[%s499 + $0x58] sm:$0xff]
                  %524 = vst [vmem:[%s500 + $0x58] sm:$0xff] %v523
                  %v525 = vld [vmem:[%s499 + $0x60] sm:$0xff]
                  %526 = vst [vmem:[%s500 + $0x60] sm:$0xff] %v525
                  %v527 = vld [vmem:[%s499 + $0x68] sm:$0xff]
                  %528 = vst [vmem:[%s500 + $0x68] sm:$0xff] %v527
                  %v529 = vld [vmem:[%s499 + $0x70] sm:$0xff]
                  %530 = vst [vmem:[%s500 + $0x70] sm:$0xff] %v529
                  %v531 = vld [vmem:[%s499 + $0x78] sm:$0xff]
                  %532 = vst [vmem:[%s500 + $0x78] sm:$0xff] %v531
                  %v533 = vld [vmem:[%s499 + $0x100] sm:$0xff]
                  %534 = vst [vmem:[%s500 + $0x80] sm:$0xff] %v533
                  %v535 = vld [vmem:[%s499 + $0x108] sm:$0xff]
                  %536 = vst [vmem:[%s500 + $0x88] sm:$0xff] %v535
                  %v537 = vld [vmem:[%s499 + $0x110] sm:$0xff]
                  %538 = vst [vmem:[%s500 + $0x90] sm:$0xff] %v537
                  %v539 = vld [vmem:[%s499 + $0x118] sm:$0xff]
                  %540 = vst [vmem:[%s500 + $0x98] sm:$0xff] %v539
                  %v541 = vld [vmem:[%s499 + $0x120] sm:$0xff]
                  %542 = vst [vmem:[%s500 + $0xa0] sm:$0xff] %v541
                  %v543 = vld [vmem:[%s499 + $0x128] sm:$0xff]
                  %544 = vst [vmem:[%s500 + $0xa8] sm:$0xff] %v543
                  %v545 = vld [vmem:[%s499 + $0x130] sm:$0xff]
                  %546 = vst [vmem:[%s500 + $0xb0] sm:$0xff] %v545
                  %v547 = vld [vmem:[%s499 + $0x138] sm:$0xff]
                  %548 = vst [vmem:[%s500 + $0xb8] sm:$0xff] %v547
                  %v549 = vld [vmem:[%s499 + $0x140] sm:$0xff]
                  %550 = vst [vmem:[%s500 + $0xc0] sm:$0xff] %v549
                  %v551 = vld [vmem:[%s499 + $0x148] sm:$0xff]
                  %552 = vst [vmem:[%s500 + $0xc8] sm:$0xff] %v551
                  %v553 = vld [vmem:[%s499 + $0x150] sm:$0xff]
                  %554 = vst [vmem:[%s500 + $0xd0] sm:$0xff] %v553
                  %v555 = vld [vmem:[%s499 + $0x158] sm:$0xff]
                  %556 = vst [vmem:[%s500 + $0xd8] sm:$0xff] %v555
                  %v557 = vld [vmem:[%s499 + $0x160] sm:$0xff]
                  %558 = vst [vmem:[%s500 + $0xe0] sm:$0xff] %v557
                  %v559 = vld [vmem:[%s499 + $0x168] sm:$0xff]
                  %560 = vst [vmem:[%s500 + $0xe8] sm:$0xff] %v559
                  %v561 = vld [vmem:[%s499 + $0x170] sm:$0xff]
                  %562 = vst [vmem:[%s500 + $0xf0] sm:$0xff] %v561
                  %v563 = vld [vmem:[%s499 + $0x178] sm:$0xff]
                  %564 = vst [vmem:[%s500 + $0xf8] sm:$0xff] %v563
                $region127: #{spagat_forward.3} parent=121 // loop_footer
                  %s498 = sadd.s32 1, %s494
                $region128: #{spagat_forward.3} parent=121 // loop_footer_branch
                  %493 = sbr.rel target = $region124
                $region129: #{spagat_forward.3} parent=121 // loop_exit
                  _
              $region122: #{spagat_forward.3} parent=106 // pred_fallthru
                _
              // Predicated region
              $region130: #{spagat_forward.3} parent=106 // pred_check
                _
              $region131: #{spagat_forward.3} parent=106 // pred_check_branch
                %566 = sbr.rel target = $region133
              $region132: #{spagat_forward.3} parent=106 // pred_region
                _
              $region133: #{spagat_forward.3} parent=106 // pred_fallthru
                _
            $region107: #{spagat_forward.3} parent=102 // pred_fallthru
              _
            // Predicated region
            $region108: #{spagat_forward.3} parent=102 // pred_check
              _
            $region109: #{spagat_forward.3} parent=102 // pred_check_branch
              %417 = sbr.rel target = $region111
            $region110: #{spagat_forward.3} parent=102 // pred_region
              loop: start=0, step=1, limit=1
              $region112: #{spagat_forward.3} parent=110 // loop_pre_header
                _
              $region113: #{spagat_forward.3} parent=110 // loop_header
                %s420 = sphi 0, %s424
                %p421 = scmp.ge.s32.totalorder %s420, 1
                %s425 = sphi %s411, %s411
                %s426 = sphi %s408, %s408
              $region114: #{spagat_forward.3} parent=110 // loop_header_branch
                %423 = sbr.rel (%p421) target = $region118
              $region115: #{spagat_forward.3} parent=110 // loop_body
                %v427 = vld [vmem:[%s425] sm:$0xff]
                %428 = vst [vmem:[%s426] sm:$0xff] %v427
                %v429 = vld [vmem:[%s425 + $0x8] sm:$0xff]
                %430 = vst [vmem:[%s426 + $0x8] sm:$0xff] %v429
                %v431 = vld [vmem:[%s425 + $0x10] sm:$0xff]
                %432 = vst [vmem:[%s426 + $0x10] sm:$0xff] %v431
                %v433 = vld [vmem:[%s425 + $0x18] sm:$0xff]
                %434 = vst [vmem:[%s426 + $0x18] sm:$0xff] %v433
                %v435 = vld [vmem:[%s425 + $0x20] sm:$0xff]
                %436 = vst [vmem:[%s426 + $0x20] sm:$0xff] %v435
                %v437 = vld [vmem:[%s425 + $0x28] sm:$0xff]
                %438 = vst [vmem:[%s426 + $0x28] sm:$0xff] %v437
                %v439 = vld [vmem:[%s425 + $0x30] sm:$0xff]
                %440 = vst [vmem:[%s426 + $0x30] sm:$0xff] %v439
                %v441 = vld [vmem:[%s425 + $0x38] sm:$0xff]
                %442 = vst [vmem:[%s426 + $0x38] sm:$0xff] %v441
                %v443 = vld [vmem:[%s425 + $0x40] sm:$0xff]
                %444 = vst [vmem:[%s426 + $0x40] sm:$0xff] %v443
                %v445 = vld [vmem:[%s425 + $0x48] sm:$0xff]
                %446 = vst [vmem:[%s426 + $0x48] sm:$0xff] %v445
                %v447 = vld [vmem:[%s425 + $0x50] sm:$0xff]
                %448 = vst [vmem:[%s426 + $0x50] sm:$0xff] %v447
                %v449 = vld [vmem:[%s425 + $0x58] sm:$0xff]
                %450 = vst [vmem:[%s426 + $0x58] sm:$0xff] %v449
                %v451 = vld [vmem:[%s425 + $0x60] sm:$0xff]
                %452 = vst [vmem:[%s426 + $0x60] sm:$0xff] %v451
                %v453 = vld [vmem:[%s425 + $0x68] sm:$0xff]
                %454 = vst [vmem:[%s426 + $0x68] sm:$0xff] %v453
                %v455 = vld [vmem:[%s425 + $0x70] sm:$0xff]
                %456 = vst [vmem:[%s426 + $0x70] sm:$0xff] %v455
                %v457 = vld [vmem:[%s425 + $0x78] sm:$0xff]
                %458 = vst [vmem:[%s426 + $0x78] sm:$0xff] %v457
                %v459 = vld [vmem:[%s425 + $0x100] sm:$0xff]
                %460 = vst [vmem:[%s426 + $0x80] sm:$0xff] %v459
                %v461 = vld [vmem:[%s425 + $0x108] sm:$0xff]
                %462 = vst [vmem:[%s426 + $0x88] sm:$0xff] %v461
                %v463 = vld [vmem:[%s425 + $0x110] sm:$0xff]
                %464 = vst [vmem:[%s426 + $0x90] sm:$0xff] %v463
                %v465 = vld [vmem:[%s425 + $0x118] sm:$0xff]
                %466 = vst [vmem:[%s426 + $0x98] sm:$0xff] %v465
                %v467 = vld [vmem:[%s425 + $0x120] sm:$0xff]
                %468 = vst [vmem:[%s426 + $0xa0] sm:$0xff] %v467
                %v469 = vld [vmem:[%s425 + $0x128] sm:$0xff]
                %470 = vst [vmem:[%s426 + $0xa8] sm:$0xff] %v469
                %v471 = vld [vmem:[%s425 + $0x130] sm:$0xff]
                %472 = vst [vmem:[%s426 + $0xb0] sm:$0xff] %v471
                %v473 = vld [vmem:[%s425 + $0x138] sm:$0xff]
                %474 = vst [vmem:[%s426 + $0xb8] sm:$0xff] %v473
                %v475 = vld [vmem:[%s425 + $0x140] sm:$0xff]
                %476 = vst [vmem:[%s426 + $0xc0] sm:$0xff] %v475
                %v477 = vld [vmem:[%s425 + $0x148] sm:$0xff]
                %478 = vst [vmem:[%s426 + $0xc8] sm:$0xff] %v477
                %v479 = vld [vmem:[%s425 + $0x150] sm:$0xff]
                %480 = vst [vmem:[%s426 + $0xd0] sm:$0xff] %v479
                %v481 = vld [vmem:[%s425 + $0x158] sm:$0xff]
                %482 = vst [vmem:[%s426 + $0xd8] sm:$0xff] %v481
                %v483 = vld [vmem:[%s425 + $0x160] sm:$0xff]
                %484 = vst [vmem:[%s426 + $0xe0] sm:$0xff] %v483
                %v485 = vld [vmem:[%s425 + $0x168] sm:$0xff]
                %486 = vst [vmem:[%s426 + $0xe8] sm:$0xff] %v485
                %v487 = vld [vmem:[%s425 + $0x170] sm:$0xff]
                %488 = vst [vmem:[%s426 + $0xf0] sm:$0xff] %v487
                %v489 = vld [vmem:[%s425 + $0x178] sm:$0xff]
                %490 = vst [vmem:[%s426 + $0xf8] sm:$0xff] %v489
              $region116: #{spagat_forward.3} parent=110 // loop_footer
                %s424 = sadd.s32 1, %s420
              $region117: #{spagat_forward.3} parent=110 // loop_footer_branch
                %419 = sbr.rel target = $region113
              $region118: #{spagat_forward.3} parent=110 // loop_exit
                _
            $region111: #{spagat_forward.3} parent=102 // pred_fallthru
              _
          $region103: #{spagat_forward.3} parent=98 // pred_fallthru
            _
          %567 = vnop
        $region99: #{spagat_forward.3} parent=15 // pred_fallthru
          _
        // Predicated region
        $region134: #{spagat_forward.3} parent=15 // pred_check
          %p568 = pneg %p122
        $region135: #{spagat_forward.3} parent=15 // pred_check_branch
          %570 = sbr.rel (%p568) target = $region137
        $region136: #{spagat_forward.3} parent=15 // pred_region
          %s571 = sand.u32 %s112, 1
          %s572 = sand.u32 %s112, 1
          %s573 = smul.addr %s572, 2
          %s574 = scalar_lea.vmem [#allocation8], %s573
          %s575 = scalar_lea.vmem %s3, %s18
          // Predicated region
          $region138: #{spagat_forward.3} parent=136 // pred_check
            _
          $region139: #{spagat_forward.3} parent=136 // pred_check_branch
            %577 = sbr.rel (0) target = $region141
          $region140: #{spagat_forward.3} parent=136 // pred_region
            // Predicated region
            $region142: #{spagat_forward.3} parent=140 // pred_check
              _
            $region143: #{spagat_forward.3} parent=140 // pred_check_branch
              %579 = sbr.rel target = $region145
            $region144: #{spagat_forward.3} parent=140 // pred_region
              // Predicated region
              $region157: #{spagat_forward.3} parent=144 // pred_check
                _
              $region158: #{spagat_forward.3} parent=144 // pred_check_branch
                %596 = sbr.rel (0) target = $region160
              $region159: #{spagat_forward.3} parent=144 // pred_region
                loop: start=0, step=1, limit=1
                $region161: #{spagat_forward.3} parent=159 // loop_pre_header
                  _
                $region162: #{spagat_forward.3} parent=159 // loop_header
                  %s599 = sphi 0, %s603
                  %p600 = scmp.ge.s32.totalorder %s599, 1
                  %s604 = sphi %s575, %s575
                  %s605 = sphi %s574, %s574
                $region163: #{spagat_forward.3} parent=159 // loop_header_branch
                  %602 = sbr.rel (%p600) target = $region167
                $region164: #{spagat_forward.3} parent=159 // loop_body
                  %v606 = vld [vmem:[%s604] sm:$0x1]
                  %607 = vst [vmem:[%s605] sm:$0x1] %v606
                  %v608 = vld [vmem:[%s604 + $0x2] sm:$0x1]
                  %609 = vst [vmem:[%s605 + $0x1] sm:$0x1] %v608
                $region165: #{spagat_forward.3} parent=159 // loop_footer
                  %s603 = sadd.s32 1, %s599
                $region166: #{spagat_forward.3} parent=159 // loop_footer_branch
                  %598 = sbr.rel target = $region162
                $region167: #{spagat_forward.3} parent=159 // loop_exit
                  _
              $region160: #{spagat_forward.3} parent=144 // pred_fallthru
                _
            $region145: #{spagat_forward.3} parent=140 // pred_fallthru
              _
            // Predicated region
            $region146: #{spagat_forward.3} parent=140 // pred_check
              _
            $region147: #{spagat_forward.3} parent=140 // pred_check_branch
              %581 = sbr.rel (0) target = $region149
            $region148: #{spagat_forward.3} parent=140 // pred_region
              loop: start=0, step=1, limit=1
              $region150: #{spagat_forward.3} parent=148 // loop_pre_header
                _
              $region151: #{spagat_forward.3} parent=148 // loop_header
                %s584 = sphi 0, %s588
                %p585 = scmp.ge.s32.totalorder %s584, 1
                %s589 = sphi %s575, %s575
                %s590 = sphi %s574, %s574
              $region152: #{spagat_forward.3} parent=148 // loop_header_branch
                %587 = sbr.rel (%p585) target = $region156
              $region153: #{spagat_forward.3} parent=148 // loop_body
                %v591 = vld [vmem:[%s589] sm:$0x1]
                %592 = vst [vmem:[%s590] sm:$0x1] %v591
                %v593 = vld [vmem:[%s589 + $0x2] sm:$0x1]
                %594 = vst [vmem:[%s590 + $0x1] sm:$0x1] %v593
              $region154: #{spagat_forward.3} parent=148 // loop_footer
                %s588 = sadd.s32 1, %s584
              $region155: #{spagat_forward.3} parent=148 // loop_footer_branch
                %583 = sbr.rel target = $region151
              $region156: #{spagat_forward.3} parent=148 // loop_exit
                _
            $region149: #{spagat_forward.3} parent=140 // pred_fallthru
              _
          $region141: #{spagat_forward.3} parent=136 // pred_fallthru
            _
          %610 = vnop
        $region137: #{spagat_forward.3} parent=15 // pred_fallthru
          _
      $region16: #{spagat_forward.3} parent=5 // pred_fallthru
        _
      %p611 = scmp.le.s32.totalorder 1, %s10
      %p612 = scmp.lt.s32.totalorder %s10, 5
      %p613 = pnand %p611, %p612
      %p614 = pneg %p613
      // Predicated region
      $region168: #{spagat_forward.3} parent=5 // pred_check
        _
      $region169: #{spagat_forward.3} parent=5 // pred_check_branch
        %616 = sbr.rel (%p613) target = $region171
      $region170: #{spagat_forward.3} parent=5 // pred_region
        %s617 = ssub.s32 %s10, 1
        %s618 = sand.u32 %s37, 1
        %s619 = sand.u32 %s37, 1
        %s620 = smul.addr %s619, 32
        %s621 = scalar_lea.vmem [#allocation5], %s620
        // Predicated region
        $region172: #{spagat_forward.3} parent=170 // pred_check
          %p622 = pneg %p50
        $region173: #{spagat_forward.3} parent=170 // pred_check_branch
          %624 = sbr.rel (%p622) target = $region175
        $region174: #{spagat_forward.3} parent=170 // pred_region
          _
        $region175: #{spagat_forward.3} parent=170 // pred_fallthru
          _
        %s625 = sand.u32 %s63, 1
        %s626 = sand.u32 %s63, 1
        %s627 = smul.addr %s626, 128
        %s628 = scalar_lea.vmem [#allocation6], %s627
        // Predicated region
        $region176: #{spagat_forward.3} parent=170 // pred_check
          %p629 = pneg %p76
        $region177: #{spagat_forward.3} parent=170 // pred_check_branch
          %631 = sbr.rel (%p629) target = $region179
        $region178: #{spagat_forward.3} parent=170 // pred_region
          _
        $region179: #{spagat_forward.3} parent=170 // pred_fallthru
          _
        %s632 = sand.u32 %s89, 1
        %s633 = sand.u32 %s89, 1
        %s634 = smul.addr %s633, 256
        %s635 = scalar_lea.vmem [#allocation7], %s634
        // Predicated region
        $region180: #{spagat_forward.3} parent=170 // pred_check
          %p636 = pneg %p102
        $region181: #{spagat_forward.3} parent=170 // pred_check_branch
          %638 = sbr.rel (%p636) target = $region183
        $region182: #{spagat_forward.3} parent=170 // pred_region
          _
        $region183: #{spagat_forward.3} parent=170 // pred_fallthru
          _
        %s639 = sand.u32 %s115, 1
        %s640 = sand.u32 %s115, 1
        %s641 = smul.addr %s640, 2
        %s642 = scalar_lea.vmem [#allocation8], %s641
        // Predicated region
        $region184: #{spagat_forward.3} parent=170 // pred_check
          %p643 = pneg %p128
        $region185: #{spagat_forward.3} parent=170 // pred_check_branch
          %645 = sbr.rel (%p643) target = $region187
        $region186: #{spagat_forward.3} parent=170 // pred_region
          _
        $region187: #{spagat_forward.3} parent=170 // pred_fallthru
          _
        %s646 = sand.u32 %s37, 1
        %s647 = sand.u32 %s37, 1
        %s648 = smul.addr %s647, 32
        %s649 = scalar_lea.vmem [#allocation5], %s648
        %p650 = pneg %p50
        %p651 = pneg %p47
        %s652 = sand.u32 %s63, 1
        %s653 = sand.u32 %s63, 1
        %s654 = smul.addr %s653, 128
        %s655 = scalar_lea.vmem [#allocation6], %s654
        %p656 = pneg %p76
        %p657 = pneg %p73
        %s658 = sand.u32 %s89, 1
        %s659 = sand.u32 %s89, 1
        %s660 = smul.addr %s659, 256
        %s661 = scalar_lea.vmem [#allocation7], %s660
        %p662 = pneg %p102
        %p663 = pneg %p99
        %s664 = sand.u32 %s115, 1
        %s665 = sand.u32 %s115, 1
        %s666 = smul.addr %s665, 2
        %s667 = scalar_lea.vmem [#allocation8], %s666
        %p668 = pneg %p128
        %p669 = pneg %p125
        %p670 = pneg %p154
        %p671 = pneg %p151
        %s672 = smul.u32 16, %s19
        %p673 = scmp.lt.s32.totalorder %s672, 31
        %s674 = scalar_select %p673, %s672, 31
        %s675 = smul.addr %s674, 8
        %s676 = scalar_lea.vmem %s4, %s675
        %s677 = smul.u32 4, %s19
        %s678 = smul.u32 16, %s20
        %s679 = smul.u32 16, %s19
        %s680 = smul.u32 16, %s19
        %p681 = scmp.lt.s32.totalorder %s680, 31
        %s682 = scalar_select %p681, %s680, 31
        %s683 = smul.addr %s682, 8
        %s684 = scalar_lea.vmem %s4, %s683
        %s685 = smul.u32 16, %s19
        %p689 = scmp.eq.s32.totalorder %s20, 0
        // Predicated region
        $region188: #{spagat_forward.3} parent=170 // pred_check
          %p690 = pneg %p689
        $region189: #{spagat_forward.3} parent=170 // pred_check_branch
          %692 = sbr.rel (%p690) target = $region191
        $region190: #{spagat_forward.3} parent=170 // pred_region
          %vm693 = vcmask 7168
          %694 = vst.msk [vmem:[#allocation2] sm:$0xff] %vm693, -1e+30
          %695 = vst.msk [vmem:[#allocation2 + $0x8] sm:$0xff] %vm693, -1e+30
          %696 = vst.msk [vmem:[#allocation2 + $0x10] sm:$0xff] %vm693, -1e+30
          %697 = vst.msk [vmem:[#allocation2 + $0x18] sm:$0xff] %vm693, -1e+30
          %698 = vst.msk [vmem:[#allocation2 + $0x20] sm:$0xff] %vm693, -1e+30
          %699 = vst.msk [vmem:[#allocation2 + $0x28] sm:$0xff] %vm693, -1e+30
          %700 = vst.msk [vmem:[#allocation2 + $0x30] sm:$0xff] %vm693, -1e+30
          %701 = vst.msk [vmem:[#allocation2 + $0x38] sm:$0xff] %vm693, -1e+30
          %702 = vst.msk [vmem:[#allocation2 + $0x40] sm:$0xff] %vm693, -1e+30
          %703 = vst.msk [vmem:[#allocation2 + $0x48] sm:$0xff] %vm693, -1e+30
          %704 = vst.msk [vmem:[#allocation2 + $0x50] sm:$0xff] %vm693, -1e+30
          %705 = vst.msk [vmem:[#allocation2 + $0x58] sm:$0xff] %vm693, -1e+30
          %706 = vst.msk [vmem:[#allocation2 + $0x60] sm:$0xff] %vm693, -1e+30
          %707 = vst.msk [vmem:[#allocation2 + $0x68] sm:$0xff] %vm693, -1e+30
          %708 = vst.msk [vmem:[#allocation2 + $0x70] sm:$0xff] %vm693, -1e+30
          %709 = vst.msk [vmem:[#allocation2 + $0x78] sm:$0xff] %vm693, -1e+30
          %710 = vst.msk [vmem:[#allocation2 + $0x80] sm:$0xff] %vm693, -1e+30
          %711 = vst.msk [vmem:[#allocation2 + $0x88] sm:$0xff] %vm693, -1e+30
          %712 = vst.msk [vmem:[#allocation2 + $0x90] sm:$0xff] %vm693, -1e+30
          %713 = vst.msk [vmem:[#allocation2 + $0x98] sm:$0xff] %vm693, -1e+30
          %714 = vst.msk [vmem:[#allocation2 + $0xa0] sm:$0xff] %vm693, -1e+30
          %715 = vst.msk [vmem:[#allocation2 + $0xa8] sm:$0xff] %vm693, -1e+30
          %716 = vst.msk [vmem:[#allocation2 + $0xb0] sm:$0xff] %vm693, -1e+30
          %717 = vst.msk [vmem:[#allocation2 + $0xb8] sm:$0xff] %vm693, -1e+30
          %718 = vst.msk [vmem:[#allocation2 + $0xc0] sm:$0xff] %vm693, -1e+30
          %719 = vst.msk [vmem:[#allocation2 + $0xc8] sm:$0xff] %vm693, -1e+30
          %720 = vst.msk [vmem:[#allocation2 + $0xd0] sm:$0xff] %vm693, -1e+30
          %721 = vst.msk [vmem:[#allocation2 + $0xd8] sm:$0xff] %vm693, -1e+30
          %722 = vst.msk [vmem:[#allocation2 + $0xe0] sm:$0xff] %vm693, -1e+30
          %723 = vst.msk [vmem:[#allocation2 + $0xe8] sm:$0xff] %vm693, -1e+30
          %724 = vst.msk [vmem:[#allocation2 + $0xf0] sm:$0xff] %vm693, -1e+30
          %725 = vst.msk [vmem:[#allocation2 + $0xf8] sm:$0xff] %vm693, -1e+30
          %726 = vst.msk [vmem:[#allocation3] sm:$0xff] %vm693, 0.0
          %727 = vst.msk [vmem:[#allocation3 + $0x8] sm:$0xff] %vm693, 0.0
          %728 = vst.msk [vmem:[#allocation3 + $0x10] sm:$0xff] %vm693, 0.0
          %729 = vst.msk [vmem:[#allocation3 + $0x18] sm:$0xff] %vm693, 0.0
          %730 = vst.msk [vmem:[#allocation3 + $0x20] sm:$0xff] %vm693, 0.0
          %731 = vst.msk [vmem:[#allocation3 + $0x28] sm:$0xff] %vm693, 0.0
          %732 = vst.msk [vmem:[#allocation3 + $0x30] sm:$0xff] %vm693, 0.0
          %733 = vst.msk [vmem:[#allocation3 + $0x38] sm:$0xff] %vm693, 0.0
          %734 = vst.msk [vmem:[#allocation3 + $0x40] sm:$0xff] %vm693, 0.0
          %735 = vst.msk [vmem:[#allocation3 + $0x48] sm:$0xff] %vm693, 0.0
          %736 = vst.msk [vmem:[#allocation3 + $0x50] sm:$0xff] %vm693, 0.0
          %737 = vst.msk [vmem:[#allocation3 + $0x58] sm:$0xff] %vm693, 0.0
          %738 = vst.msk [vmem:[#allocation3 + $0x60] sm:$0xff] %vm693, 0.0
          %739 = vst.msk [vmem:[#allocation3 + $0x68] sm:$0xff] %vm693, 0.0
          %740 = vst.msk [vmem:[#allocation3 + $0x70] sm:$0xff] %vm693, 0.0
          %741 = vst.msk [vmem:[#allocation3 + $0x78] sm:$0xff] %vm693, 0.0
          %742 = vst.msk [vmem:[#allocation3 + $0x80] sm:$0xff] %vm693, 0.0
          %743 = vst.msk [vmem:[#allocation3 + $0x88] sm:$0xff] %vm693, 0.0
          %744 = vst.msk [vmem:[#allocation3 + $0x90] sm:$0xff] %vm693, 0.0
          %745 = vst.msk [vmem:[#allocation3 + $0x98] sm:$0xff] %vm693, 0.0
          %746 = vst.msk [vmem:[#allocation3 + $0xa0] sm:$0xff] %vm693, 0.0
          %747 = vst.msk [vmem:[#allocation3 + $0xa8] sm:$0xff] %vm693, 0.0
          %748 = vst.msk [vmem:[#allocation3 + $0xb0] sm:$0xff] %vm693, 0.0
          %749 = vst.msk [vmem:[#allocation3 + $0xb8] sm:$0xff] %vm693, 0.0
          %750 = vst.msk [vmem:[#allocation3 + $0xc0] sm:$0xff] %vm693, 0.0
          %751 = vst.msk [vmem:[#allocation3 + $0xc8] sm:$0xff] %vm693, 0.0
          %752 = vst.msk [vmem:[#allocation3 + $0xd0] sm:$0xff] %vm693, 0.0
          %753 = vst.msk [vmem:[#allocation3 + $0xd8] sm:$0xff] %vm693, 0.0
          %754 = vst.msk [vmem:[#allocation3 + $0xe0] sm:$0xff] %vm693, 0.0
          %755 = vst.msk [vmem:[#allocation3 + $0xe8] sm:$0xff] %vm693, 0.0
          %756 = vst.msk [vmem:[#allocation3 + $0xf0] sm:$0xff] %vm693, 0.0
          %757 = vst.msk [vmem:[#allocation3 + $0xf8] sm:$0xff] %vm693, 0.0
          %vm758 = vcmask 64512
          %759 = vst.msk [vmem:[#allocation4] sm:$0xff] %vm758, 0.0
          %760 = vst.msk [vmem:[#allocation4 + $0x8] sm:$0xff] %vm758, 0.0
          %761 = vst.msk [vmem:[#allocation4 + $0x10] sm:$0xff] %vm758, 0.0
          %762 = vst.msk [vmem:[#allocation4 + $0x18] sm:$0xff] %vm758, 0.0
          %763 = vst.msk [vmem:[#allocation4 + $0x20] sm:$0xff] %vm758, 0.0
          %764 = vst.msk [vmem:[#allocation4 + $0x28] sm:$0xff] %vm758, 0.0
          %765 = vst.msk [vmem:[#allocation4 + $0x30] sm:$0xff] %vm758, 0.0
          %766 = vst.msk [vmem:[#allocation4 + $0x38] sm:$0xff] %vm758, 0.0
          %767 = vst.msk [vmem:[#allocation4 + $0x40] sm:$0xff] %vm758, 0.0
          %768 = vst.msk [vmem:[#allocation4 + $0x48] sm:$0xff] %vm758, 0.0
          %769 = vst.msk [vmem:[#allocation4 + $0x50] sm:$0xff] %vm758, 0.0
          %770 = vst.msk [vmem:[#allocation4 + $0x58] sm:$0xff] %vm758, 0.0
          %771 = vst.msk [vmem:[#allocation4 + $0x60] sm:$0xff] %vm758, 0.0
          %772 = vst.msk [vmem:[#allocation4 + $0x68] sm:$0xff] %vm758, 0.0
          %773 = vst.msk [vmem:[#allocation4 + $0x70] sm:$0xff] %vm758, 0.0
          %774 = vst.msk [vmem:[#allocation4 + $0x78] sm:$0xff] %vm758, 0.0
          %775 = vst.msk [vmem:[#allocation4 + $0x80] sm:$0xff] %vm758, 0.0
          %776 = vst.msk [vmem:[#allocation4 + $0x88] sm:$0xff] %vm758, 0.0
          %777 = vst.msk [vmem:[#allocation4 + $0x90] sm:$0xff] %vm758, 0.0
          %778 = vst.msk [vmem:[#allocation4 + $0x98] sm:$0xff] %vm758, 0.0
          %779 = vst.msk [vmem:[#allocation4 + $0xa0] sm:$0xff] %vm758, 0.0
          %780 = vst.msk [vmem:[#allocation4 + $0xa8] sm:$0xff] %vm758, 0.0
          %781 = vst.msk [vmem:[#allocation4 + $0xb0] sm:$0xff] %vm758, 0.0
          %782 = vst.msk [vmem:[#allocation4 + $0xb8] sm:$0xff] %vm758, 0.0
          %783 = vst.msk [vmem:[#allocation4 + $0xc0] sm:$0xff] %vm758, 0.0
          %784 = vst.msk [vmem:[#allocation4 + $0xc8] sm:$0xff] %vm758, 0.0
          %785 = vst.msk [vmem:[#allocation4 + $0xd0] sm:$0xff] %vm758, 0.0
          %786 = vst.msk [vmem:[#allocation4 + $0xd8] sm:$0xff] %vm758, 0.0
          %787 = vst.msk [vmem:[#allocation4 + $0xe0] sm:$0xff] %vm758, 0.0
          %788 = vst.msk [vmem:[#allocation4 + $0xe8] sm:$0xff] %vm758, 0.0
          %789 = vst.msk [vmem:[#allocation4 + $0xf0] sm:$0xff] %vm758, 0.0
          %790 = vst.msk [vmem:[#allocation4 + $0xf8] sm:$0xff] %vm758, 0.0
        $region191: #{spagat_forward.3} parent=170 // pred_fallthru
          _
        %v791 = vld [vmem:[%s621] sm:$0xff]
        %v792 = vld [vmem:[%s621 + $0x8] sm:$0xff]
        %v793 = vld [vmem:[%s621 + $0x10] sm:$0xff]
        %v794 = vld [vmem:[%s621 + $0x18] sm:$0xff]
        %vm795 = vnez %v791
        %vm796 = vnez %v792
        %vm797 = vnez %v793
        %vm798 = vnez %v794
        %v799 = vld [vmem:[%s635] sm:$0xff]
        %v800 = vld [vmem:[%s635 + $0x8] sm:$0xff]
        %v801 = vld [vmem:[%s635 + $0x10] sm:$0xff]
        %v802 = vld [vmem:[%s635 + $0x18] sm:$0xff]
        %v803 = vld [vmem:[%s635 + $0x20] sm:$0xff]
        %v804 = vld [vmem:[%s635 + $0x28] sm:$0xff]
        %v805 = vld [vmem:[%s635 + $0x30] sm:$0xff]
        %v806 = vld [vmem:[%s635 + $0x38] sm:$0xff]
        %v807 = vld [vmem:[%s635 + $0x40] sm:$0xff]
        %v808 = vld [vmem:[%s635 + $0x48] sm:$0xff]
        %v809 = vld [vmem:[%s635 + $0x50] sm:$0xff]
        %v810 = vld [vmem:[%s635 + $0x58] sm:$0xff]
        %v811 = vld [vmem:[%s635 + $0x60] sm:$0xff]
        %v812 = vld [vmem:[%s635 + $0x68] sm:$0xff]
        %v813 = vld [vmem:[%s635 + $0x70] sm:$0xff]
        %v814 = vld [vmem:[%s635 + $0x78] sm:$0xff]
        %v815 = vld [vmem:[%s642] sm:$0x1]
        %817 = vset.pattern.permute.xlu0 0
        %818 = vperm.xlu0 %817, %v799
        %v819 = vpop.permute.xlu0 %818
        %822 = vset.pattern.permute.xlu0 0
        %823 = vperm.xlu0 %822, %v800
        %v824 = vpop.permute.xlu0 %823
        %827 = vset.pattern.permute.xlu0 0
        %828 = vperm.xlu0 %827, %v801
        %v829 = vpop.permute.xlu0 %828
        %832 = vset.pattern.permute.xlu0 0
        %833 = vperm.xlu0 %832, %v802
        %v834 = vpop.permute.xlu0 %833
        %837 = vset.pattern.permute.xlu0 0
        %838 = vperm.xlu0 %837, %v803
        %v839 = vpop.permute.xlu0 %838
        %842 = vset.pattern.permute.xlu0 0
        %843 = vperm.xlu0 %842, %v804
        %v844 = vpop.permute.xlu0 %843
        %847 = vset.pattern.permute.xlu0 0
        %848 = vperm.xlu0 %847, %v805
        %v849 = vpop.permute.xlu0 %848
        %852 = vset.pattern.permute.xlu0 0
        %853 = vperm.xlu0 %852, %v806
        %v854 = vpop.permute.xlu0 %853
        %857 = vset.pattern.permute.xlu0 0
        %858 = vperm.xlu0 %857, %v807
        %v859 = vpop.permute.xlu0 %858
        %862 = vset.pattern.permute.xlu0 0
        %863 = vperm.xlu0 %862, %v808
        %v864 = vpop.permute.xlu0 %863
        %867 = vset.pattern.permute.xlu0 0
        %868 = vperm.xlu0 %867, %v809
        %v869 = vpop.permute.xlu0 %868
        %872 = vset.pattern.permute.xlu0 0
        %873 = vperm.xlu0 %872, %v810
        %v874 = vpop.permute.xlu0 %873
        %877 = vset.pattern.permute.xlu0 0
        %878 = vperm.xlu0 %877, %v811
        %v879 = vpop.permute.xlu0 %878
        %882 = vset.pattern.permute.xlu0 0
        %883 = vperm.xlu0 %882, %v812
        %v884 = vpop.permute.xlu0 %883
        %887 = vset.pattern.permute.xlu0 0
        %888 = vperm.xlu0 %887, %v813
        %v889 = vpop.permute.xlu0 %888
        %892 = vset.pattern.permute.xlu0 0
        %893 = vperm.xlu0 %892, %v814
        %v894 = vpop.permute.xlu0 %893
        %v897 = vlaneseq
        %v898 = vshrl.u32 %v897, 7
        %v899 = vsub.s32 0, %v898
        %v900 = vrot.slane %v815, %v899
        %v902 = vadd.f32 %v819, %v900
        %v903 = vadd.f32 %v824, %v900
        %v904 = vadd.f32 %v829, %v900
        %v905 = vadd.f32 %v834, %v900
        %v906 = vadd.f32 %v839, %v900
        %v907 = vadd.f32 %v844, %v900
        %v908 = vadd.f32 %v849, %v900
        %v909 = vadd.f32 %v854, %v900
        %v910 = vadd.f32 %v859, %v900
        %v911 = vadd.f32 %v864, %v900
        %v912 = vadd.f32 %v869, %v900
        %v913 = vadd.f32 %v874, %v900
        %v914 = vadd.f32 %v879, %v900
        %v915 = vadd.f32 %v884, %v900
        %v916 = vadd.f32 %v889, %v900
        %v917 = vadd.f32 %v894, %v900
        %v918 = vmul.f32 %v902, 0.2
        %v919 = vmul.f32 %v903, 0.2
        %v920 = vmul.f32 %v904, 0.2
        %v921 = vmul.f32 %v905, 0.2
        %v922 = vmul.f32 %v906, 0.2
        %v923 = vmul.f32 %v907, 0.2
        %v924 = vmul.f32 %v908, 0.2
        %v925 = vmul.f32 %v909, 0.2
        %v926 = vmul.f32 %v910, 0.2
        %v927 = vmul.f32 %v911, 0.2
        %v928 = vmul.f32 %v912, 0.2
        %v929 = vmul.f32 %v913, 0.2
        %v930 = vmul.f32 %v914, 0.2
        %v931 = vmul.f32 %v915, 0.2
        %v932 = vmul.f32 %v916, 0.2
        %v933 = vmul.f32 %v917, 0.2
        %v934 = vmax.f32 %v902, %v918
        %v935 = vmax.f32 %v903, %v919
        %v936 = vmax.f32 %v904, %v920
        %v937 = vmax.f32 %v905, %v921
        %v938 = vmax.f32 %v906, %v922
        %v939 = vmax.f32 %v907, %v923
        %v940 = vmax.f32 %v908, %v924
        %v941 = vmax.f32 %v909, %v925
        %v942 = vmax.f32 %v910, %v926
        %v943 = vmax.f32 %v911, %v927
        %v944 = vmax.f32 %v912, %v928
        %v945 = vmax.f32 %v913, %v929
        %v946 = vmax.f32 %v914, %v930
        %v947 = vmax.f32 %v915, %v931
        %v948 = vmax.f32 %v916, %v932
        %v949 = vmax.f32 %v917, %v933
        %v950 = vsub.f32 0.0, %v934
        %v951 = vsub.f32 0.0, %v935
        %v952 = vsub.f32 0.0, %v936
        %v953 = vsub.f32 0.0, %v937
        %v954 = vsub.f32 0.0, %v938
        %v955 = vsub.f32 0.0, %v939
        %v956 = vsub.f32 0.0, %v940
        %v957 = vsub.f32 0.0, %v941
        %v958 = vsub.f32 0.0, %v942
        %v959 = vsub.f32 0.0, %v943
        %v960 = vsub.f32 0.0, %v944
        %v961 = vsub.f32 0.0, %v945
        %v962 = vsub.f32 0.0, %v946
        %v963 = vsub.f32 0.0, %v947
        %v964 = vsub.f32 0.0, %v948
        %v965 = vsub.f32 0.0, %v949
        %v966 = vsel %vm795, 16843009, 0
        %v967 = vsel %vm796, 16843009, 0
        %v968 = vsel %vm797, 16843009, 0
        %v969 = vsel %vm798, 16843009, 0
        %v970 = vunpack.c.0.s8 %v966
        %v971 = vunpack.c.1.s8 %v966
        %v972 = vunpack.c.2.s8 %v966
        %v973 = vunpack.c.3.s8 %v966
        %v974 = vunpack.c.0.s8 %v967
        %v975 = vunpack.c.1.s8 %v967
        %v976 = vunpack.c.2.s8 %v967
        %v977 = vunpack.c.3.s8 %v967
        %v978 = vunpack.c.0.s8 %v968
        %v979 = vunpack.c.1.s8 %v968
        %v980 = vunpack.c.2.s8 %v968
        %v981 = vunpack.c.3.s8 %v968
        %v982 = vunpack.c.0.s8 %v969
        %v983 = vunpack.c.1.s8 %v969
        %v984 = vunpack.c.2.s8 %v969
        %v985 = vunpack.c.3.s8 %v969
        %v986 = vpack.c.b16 %v970, %v970
        %v987 = vpack.c.b8 %v986, %v986
        %v988 = vpack.c.b16 %v971, %v971
        %v989 = vpack.c.b8 %v988, %v988
        %v990 = vpack.c.b16 %v972, %v972
        %v991 = vpack.c.b8 %v990, %v990
        %v992 = vpack.c.b16 %v973, %v973
        %v993 = vpack.c.b8 %v992, %v992
        %v994 = vpack.c.b16 %v974, %v974
        %v995 = vpack.c.b8 %v994, %v994
        %v996 = vpack.c.b16 %v975, %v975
        %v997 = vpack.c.b8 %v996, %v996
        %v998 = vpack.c.b16 %v976, %v976
        %v999 = vpack.c.b8 %v998, %v998
        %v1000 = vpack.c.b16 %v977, %v977
        %v1001 = vpack.c.b8 %v1000, %v1000
        %v1002 = vpack.c.b16 %v978, %v978
        %v1003 = vpack.c.b8 %v1002, %v1002
        %v1004 = vpack.c.b16 %v979, %v979
        %v1005 = vpack.c.b8 %v1004, %v1004
        %v1006 = vpack.c.b16 %v980, %v980
        %v1007 = vpack.c.b8 %v1006, %v1006
        %v1008 = vpack.c.b16 %v981, %v981
        %v1009 = vpack.c.b8 %v1008, %v1008
        %v1010 = vpack.c.b16 %v982, %v982
        %v1011 = vpack.c.b8 %v1010, %v1010
        %v1012 = vpack.c.b16 %v983, %v983
        %v1013 = vpack.c.b8 %v1012, %v1012
        %v1014 = vpack.c.b16 %v984, %v984
        %v1015 = vpack.c.b8 %v1014, %v1014
        %v1016 = vpack.c.b16 %v985, %v985
        %v1017 = vpack.c.b8 %v1016, %v1016
        %vm1018 = vnez %v987
        %vm1019 = vnez %v989
        %vm1020 = vnez %v991
        %vm1021 = vnez %v993
        %vm1022 = vnez %v995
        %vm1023 = vnez %v997
        %vm1024 = vnez %v999
        %vm1025 = vnez %v1001
        %vm1026 = vnez %v1003
        %vm1027 = vnez %v1005
        %vm1028 = vnez %v1007
        %vm1029 = vnez %v1009
        %vm1030 = vnez %v1011
        %vm1031 = vnez %v1013
        %vm1032 = vnez %v1015
        %vm1033 = vnez %v1017
        %v1034 = vsel %vm1018, 16843009, 0
        %v1035 = vsel %vm1019, 16843009, 0
        %v1036 = vsel %vm1020, 16843009, 0
        %v1037 = vsel %vm1021, 16843009, 0
        %v1038 = vsel %vm1022, 16843009, 0
        %v1039 = vsel %vm1023, 16843009, 0
        %v1040 = vsel %vm1024, 16843009, 0
        %v1041 = vsel %vm1025, 16843009, 0
        %v1042 = vsel %vm1026, 16843009, 0
        %v1043 = vsel %vm1027, 16843009, 0
        %v1044 = vsel %vm1028, 16843009, 0
        %v1045 = vsel %vm1029, 16843009, 0
        %v1046 = vsel %vm1030, 16843009, 0
        %v1047 = vsel %vm1031, 16843009, 0
        %v1048 = vsel %vm1032, 16843009, 0
        %v1049 = vsel %vm1033, 16843009, 0
        %v1050 = vunpack.c.0.s8 %v1034
        %v1051 = vunpack.c.0.s8 %v1035
        %v1052 = vunpack.c.0.s8 %v1036
        %v1053 = vunpack.c.0.s8 %v1037
        %v1054 = vunpack.c.0.s8 %v1038
        %v1055 = vunpack.c.0.s8 %v1039
        %v1056 = vunpack.c.0.s8 %v1040
        %v1057 = vunpack.c.0.s8 %v1041
        %v1058 = vunpack.c.0.s8 %v1042
        %v1059 = vunpack.c.0.s8 %v1043
        %v1060 = vunpack.c.0.s8 %v1044
        %v1061 = vunpack.c.0.s8 %v1045
        %v1062 = vunpack.c.0.s8 %v1046
        %v1063 = vunpack.c.0.s8 %v1047
        %v1064 = vunpack.c.0.s8 %v1048
        %v1065 = vunpack.c.0.s8 %v1049
        %vm1066 = vcmp.ne.s32.totalorder %v1050, 0
        %vm1067 = vcmp.ne.s32.totalorder %v1051, 0
        %vm1068 = vcmp.ne.s32.totalorder %v1052, 0
        %vm1069 = vcmp.ne.s32.totalorder %v1053, 0
        %vm1070 = vcmp.ne.s32.totalorder %v1054, 0
        %vm1071 = vcmp.ne.s32.totalorder %v1055, 0
        %vm1072 = vcmp.ne.s32.totalorder %v1056, 0
        %vm1073 = vcmp.ne.s32.totalorder %v1057, 0
        %vm1074 = vcmp.ne.s32.totalorder %v1058, 0
        %vm1075 = vcmp.ne.s32.totalorder %v1059, 0
        %vm1076 = vcmp.ne.s32.totalorder %v1060, 0
        %vm1077 = vcmp.ne.s32.totalorder %v1061, 0
        %vm1078 = vcmp.ne.s32.totalorder %v1062, 0
        %vm1079 = vcmp.ne.s32.totalorder %v1063, 0
        %vm1080 = vcmp.ne.s32.totalorder %v1064, 0
        %vm1081 = vcmp.ne.s32.totalorder %v1065, 0
        %v1082 = vsel %vm1066, %v950, -1e+30
        %v1083 = vsel %vm1067, %v951, -1e+30
        %v1084 = vsel %vm1068, %v952, -1e+30
        %v1085 = vsel %vm1069, %v953, -1e+30
        %v1086 = vsel %vm1070, %v954, -1e+30
        %v1087 = vsel %vm1071, %v955, -1e+30
        %v1088 = vsel %vm1072, %v956, -1e+30
        %v1089 = vsel %vm1073, %v957, -1e+30
        %v1090 = vsel %vm1074, %v958, -1e+30
        %v1091 = vsel %vm1075, %v959, -1e+30
        %v1092 = vsel %vm1076, %v960, -1e+30
        %v1093 = vsel %vm1077, %v961, -1e+30
        %v1094 = vsel %vm1078, %v962, -1e+30
        %v1095 = vsel %vm1079, %v963, -1e+30
        %v1096 = vsel %vm1080, %v964, -1e+30
        %v1097 = vsel %vm1081, %v965, -1e+30
        %v1098 = vld [vmem:[#allocation2] sm:$0xff]
        %v1099 = vld [vmem:[#allocation2 + $0x8] sm:$0xff]
        %v1100 = vld [vmem:[#allocation2 + $0x10] sm:$0xff]
        %v1101 = vld [vmem:[#allocation2 + $0x18] sm:$0xff]
        %v1102 = vld [vmem:[#allocation2 + $0x20] sm:$0xff]
        %v1103 = vld [vmem:[#allocation2 + $0x28] sm:$0xff]
        %v1104 = vld [vmem:[#allocation2 + $0x30] sm:$0xff]
        %v1105 = vld [vmem:[#allocation2 + $0x38] sm:$0xff]
        %v1106 = vld [vmem:[#allocation2 + $0x40] sm:$0xff]
        %v1107 = vld [vmem:[#allocation2 + $0x48] sm:$0xff]
        %v1108 = vld [vmem:[#allocation2 + $0x50] sm:$0xff]
        %v1109 = vld [vmem:[#allocation2 + $0x58] sm:$0xff]
        %v1110 = vld [vmem:[#allocation2 + $0x60] sm:$0xff]
        %v1111 = vld [vmem:[#allocation2 + $0x68] sm:$0xff]
        %v1112 = vld [vmem:[#allocation2 + $0x70] sm:$0xff]
        %v1113 = vld [vmem:[#allocation2 + $0x78] sm:$0xff]
        %1114 = vmax.xlane.f32.xlu0 %v1082
        %v1115 = vpop.xlane.xlu0 %1114
        %1116 = vmax.xlane.f32.xlu0 %v1083
        %v1117 = vpop.xlane.xlu0 %1116
        %1118 = vmax.xlane.f32.xlu0 %v1084
        %v1119 = vpop.xlane.xlu0 %1118
        %1120 = vmax.xlane.f32.xlu0 %v1085
        %v1121 = vpop.xlane.xlu0 %1120
        %1122 = vmax.xlane.f32.xlu0 %v1086
        %v1123 = vpop.xlane.xlu0 %1122
        %1124 = vmax.xlane.f32.xlu0 %v1087
        %v1125 = vpop.xlane.xlu0 %1124
        %1126 = vmax.xlane.f32.xlu0 %v1088
        %v1127 = vpop.xlane.xlu0 %1126
        %1128 = vmax.xlane.f32.xlu0 %v1089
        %v1129 = vpop.xlane.xlu0 %1128
        %1130 = vmax.xlane.f32.xlu0 %v1090
        %v1131 = vpop.xlane.xlu0 %1130
        %1132 = vmax.xlane.f32.xlu0 %v1091
        %v1133 = vpop.xlane.xlu0 %1132
        %1134 = vmax.xlane.f32.xlu0 %v1092
        %v1135 = vpop.xlane.xlu0 %1134
        %1136 = vmax.xlane.f32.xlu0 %v1093
        %v1137 = vpop.xlane.xlu0 %1136
        %1138 = vmax.xlane.f32.xlu0 %v1094
        %v1139 = vpop.xlane.xlu0 %1138
        %1140 = vmax.xlane.f32.xlu0 %v1095
        %v1141 = vpop.xlane.xlu0 %1140
        %1142 = vmax.xlane.f32.xlu0 %v1096
        %v1143 = vpop.xlane.xlu0 %1142
        %1144 = vmax.xlane.f32.xlu0 %v1097
        %v1145 = vpop.xlane.xlu0 %1144
        %v1146 = vmax.f32 %v1098, %v1115
        %v1147 = vmax.f32 %v1099, %v1117
        %v1148 = vmax.f32 %v1100, %v1119
        %v1149 = vmax.f32 %v1101, %v1121
        %v1150 = vmax.f32 %v1102, %v1123
        %v1151 = vmax.f32 %v1103, %v1125
        %v1152 = vmax.f32 %v1104, %v1127
        %v1153 = vmax.f32 %v1105, %v1129
        %v1154 = vmax.f32 %v1106, %v1131
        %v1155 = vmax.f32 %v1107, %v1133
        %v1156 = vmax.f32 %v1108, %v1135
        %v1157 = vmax.f32 %v1109, %v1137
        %v1158 = vmax.f32 %v1110, %v1139
        %v1159 = vmax.f32 %v1111, %v1141
        %v1160 = vmax.f32 %v1112, %v1143
        %v1161 = vmax.f32 %v1113, %v1145
        %v1162 = vsub.f32 %v1098, %v1146
        %v1163 = vsub.f32 %v1099, %v1147
        %v1164 = vsub.f32 %v1100, %v1148
        %v1165 = vsub.f32 %v1101, %v1149
        %v1166 = vsub.f32 %v1102, %v1150
        %v1167 = vsub.f32 %v1103, %v1151
        %v1168 = vsub.f32 %v1104, %v1152
        %v1169 = vsub.f32 %v1105, %v1153
        %v1170 = vsub.f32 %v1106, %v1154
        %v1171 = vsub.f32 %v1107, %v1155
        %v1172 = vsub.f32 %v1108, %v1156
        %v1173 = vsub.f32 %v1109, %v1157
        %v1174 = vsub.f32 %v1110, %v1158
        %v1175 = vsub.f32 %v1111, %v1159
        %v1176 = vsub.f32 %v1112, %v1160
        %v1177 = vsub.f32 %v1113, %v1161
        %v1178 = vmul.f32 %v1162, 1.442695
        %v1179 = vpow.pop %v1178
        %v1180 = vmul.f32 %v1163, 1.442695
        %v1181 = vpow.pop %v1180
        %v1182 = vmul.f32 %v1164, 1.442695
        %v1183 = vpow.pop %v1182
        %v1184 = vmul.f32 %v1165, 1.442695
        %v1185 = vpow.pop %v1184
        %v1186 = vmul.f32 %v1166, 1.442695
        %v1187 = vpow.pop %v1186
        %v1188 = vmul.f32 %v1167, 1.442695
        %v1189 = vpow.pop %v1188
        %v1190 = vmul.f32 %v1168, 1.442695
        %v1191 = vpow.pop %v1190
        %v1192 = vmul.f32 %v1169, 1.442695
        %v1193 = vpow.pop %v1192
        %v1194 = vmul.f32 %v1170, 1.442695
        %v1195 = vpow.pop %v1194
        %v1196 = vmul.f32 %v1171, 1.442695
        %v1197 = vpow.pop %v1196
        %v1198 = vmul.f32 %v1172, 1.442695
        %v1199 = vpow.pop %v1198
        %v1200 = vmul.f32 %v1173, 1.442695
        %v1201 = vpow.pop %v1200
        %v1202 = vmul.f32 %v1174, 1.442695
        %v1203 = vpow.pop %v1202
        %v1204 = vmul.f32 %v1175, 1.442695
        %v1205 = vpow.pop %v1204
        %v1206 = vmul.f32 %v1176, 1.442695
        %v1207 = vpow.pop %v1206
        %v1208 = vmul.f32 %v1177, 1.442695
        %v1209 = vpow.pop %v1208
        %1211 = vset.pattern.permute.xlu0 0
        %1212 = vperm.xlu0 %1211, %v1146
        %v1213 = vpop.permute.xlu0 %1212
        %1216 = vset.pattern.permute.xlu0 0
        %1217 = vperm.xlu0 %1216, %v1147
        %v1218 = vpop.permute.xlu0 %1217
        %1221 = vset.pattern.permute.xlu0 0
        %1222 = vperm.xlu0 %1221, %v1148
        %v1223 = vpop.permute.xlu0 %1222
        %1226 = vset.pattern.permute.xlu0 0
        %1227 = vperm.xlu0 %1226, %v1149
        %v1228 = vpop.permute.xlu0 %1227
        %1231 = vset.pattern.permute.xlu0 0
        %1232 = vperm.xlu0 %1231, %v1150
        %v1233 = vpop.permute.xlu0 %1232
        %1236 = vset.pattern.permute.xlu0 0
        %1237 = vperm.xlu0 %1236, %v1151
        %v1238 = vpop.permute.xlu0 %1237
        %1241 = vset.pattern.permute.xlu0 0
        %1242 = vperm.xlu0 %1241, %v1152
        %v1243 = vpop.permute.xlu0 %1242
        %1246 = vset.pattern.permute.xlu0 0
        %1247 = vperm.xlu0 %1246, %v1153
        %v1248 = vpop.permute.xlu0 %1247
        %1251 = vset.pattern.permute.xlu0 0
        %1252 = vperm.xlu0 %1251, %v1154
        %v1253 = vpop.permute.xlu0 %1252
        %1256 = vset.pattern.permute.xlu0 0
        %1257 = vperm.xlu0 %1256, %v1155
        %v1258 = vpop.permute.xlu0 %1257
        %1261 = vset.pattern.permute.xlu0 0
        %1262 = vperm.xlu0 %1261, %v1156
        %v1263 = vpop.permute.xlu0 %1262
        %1266 = vset.pattern.permute.xlu0 0
        %1267 = vperm.xlu0 %1266, %v1157
        %v1268 = vpop.permute.xlu0 %1267
        %1271 = vset.pattern.permute.xlu0 0
        %1272 = vperm.xlu0 %1271, %v1158
        %v1273 = vpop.permute.xlu0 %1272
        %1276 = vset.pattern.permute.xlu0 0
        %1277 = vperm.xlu0 %1276, %v1159
        %v1278 = vpop.permute.xlu0 %1277
        %1281 = vset.pattern.permute.xlu0 0
        %1282 = vperm.xlu0 %1281, %v1160
        %v1283 = vpop.permute.xlu0 %1282
        %1286 = vset.pattern.permute.xlu0 0
        %1287 = vperm.xlu0 %1286, %v1161
        %v1288 = vpop.permute.xlu0 %1287
        %v1290 = vsub.f32 %v1082, %v1213
        %v1291 = vsub.f32 %v1083, %v1218
        %v1292 = vsub.f32 %v1084, %v1223
        %v1293 = vsub.f32 %v1085, %v1228
        %v1294 = vsub.f32 %v1086, %v1233
        %v1295 = vsub.f32 %v1087, %v1238
        %v1296 = vsub.f32 %v1088, %v1243
        %v1297 = vsub.f32 %v1089, %v1248
        %v1298 = vsub.f32 %v1090, %v1253
        %v1299 = vsub.f32 %v1091, %v1258
        %v1300 = vsub.f32 %v1092, %v1263
        %v1301 = vsub.f32 %v1093, %v1268
        %v1302 = vsub.f32 %v1094, %v1273
        %v1303 = vsub.f32 %v1095, %v1278
        %v1304 = vsub.f32 %v1096, %v1283
        %v1305 = vsub.f32 %v1097, %v1288
        %v1306 = vmul.f32 %v1290, 1.442695
        %v1307 = vpow.pop %v1306
        %v1308 = vmul.f32 %v1291, 1.442695
        %v1309 = vpow.pop %v1308
        %v1310 = vmul.f32 %v1292, 1.442695
        %v1311 = vpow.pop %v1310
        %v1312 = vmul.f32 %v1293, 1.442695
        %v1313 = vpow.pop %v1312
        %v1314 = vmul.f32 %v1294, 1.442695
        %v1315 = vpow.pop %v1314
        %v1316 = vmul.f32 %v1295, 1.442695
        %v1317 = vpow.pop %v1316
        %v1318 = vmul.f32 %v1296, 1.442695
        %v1319 = vpow.pop %v1318
        %v1320 = vmul.f32 %v1297, 1.442695
        %v1321 = vpow.pop %v1320
        %v1322 = vmul.f32 %v1298, 1.442695
        %v1323 = vpow.pop %v1322
        %v1324 = vmul.f32 %v1299, 1.442695
        %v1325 = vpow.pop %v1324
        %v1326 = vmul.f32 %v1300, 1.442695
        %v1327 = vpow.pop %v1326
        %v1328 = vmul.f32 %v1301, 1.442695
        %v1329 = vpow.pop %v1328
        %v1330 = vmul.f32 %v1302, 1.442695
        %v1331 = vpow.pop %v1330
        %v1332 = vmul.f32 %v1303, 1.442695
        %v1333 = vpow.pop %v1332
        %v1334 = vmul.f32 %v1304, 1.442695
        %v1335 = vpow.pop %v1334
        %v1336 = vmul.f32 %v1305, 1.442695
        %v1337 = vpow.pop %v1336
        %v1338 = vld [vmem:[#allocation3] sm:$0xff]
        %v1339 = vld [vmem:[#allocation3 + $0x8] sm:$0xff]
        %v1340 = vld [vmem:[#allocation3 + $0x10] sm:$0xff]
        %v1341 = vld [vmem:[#allocation3 + $0x18] sm:$0xff]
        %v1342 = vld [vmem:[#allocation3 + $0x20] sm:$0xff]
        %v1343 = vld [vmem:[#allocation3 + $0x28] sm:$0xff]
        %v1344 = vld [vmem:[#allocation3 + $0x30] sm:$0xff]
        %v1345 = vld [vmem:[#allocation3 + $0x38] sm:$0xff]
        %v1346 = vld [vmem:[#allocation3 + $0x40] sm:$0xff]
        %v1347 = vld [vmem:[#allocation3 + $0x48] sm:$0xff]
        %v1348 = vld [vmem:[#allocation3 + $0x50] sm:$0xff]
        %v1349 = vld [vmem:[#allocation3 + $0x58] sm:$0xff]
        %v1350 = vld [vmem:[#allocation3 + $0x60] sm:$0xff]
        %v1351 = vld [vmem:[#allocation3 + $0x68] sm:$0xff]
        %v1352 = vld [vmem:[#allocation3 + $0x70] sm:$0xff]
        %v1353 = vld [vmem:[#allocation3 + $0x78] sm:$0xff]
        %v1354 = vmul.f32 %v1179, %v1338
        %v1355 = vmul.f32 %v1181, %v1339
        %v1356 = vmul.f32 %v1183, %v1340
        %v1357 = vmul.f32 %v1185, %v1341
        %v1358 = vmul.f32 %v1187, %v1342
        %v1359 = vmul.f32 %v1189, %v1343
        %v1360 = vmul.f32 %v1191, %v1344
        %v1361 = vmul.f32 %v1193, %v1345
        %v1362 = vmul.f32 %v1195, %v1346
        %v1363 = vmul.f32 %v1197, %v1347
        %v1364 = vmul.f32 %v1199, %v1348
        %v1365 = vmul.f32 %v1201, %v1349
        %v1366 = vmul.f32 %v1203, %v1350
        %v1367 = vmul.f32 %v1205, %v1351
        %v1368 = vmul.f32 %v1207, %v1352
        %v1369 = vmul.f32 %v1209, %v1353
        %1370 = vadd.xlane.f32.xlu0 %v1307
        %v1371 = vpop.xlane.xlu0 %1370
        %1372 = vadd.xlane.f32.xlu0 %v1309
        %v1373 = vpop.xlane.xlu0 %1372
        %1374 = vadd.xlane.f32.xlu0 %v1311
        %v1375 = vpop.xlane.xlu0 %1374
        %1376 = vadd.xlane.f32.xlu0 %v1313
        %v1377 = vpop.xlane.xlu0 %1376
        %1378 = vadd.xlane.f32.xlu0 %v1315
        %v1379 = vpop.xlane.xlu0 %1378
        %1380 = vadd.xlane.f32.xlu0 %v1317
        %v1381 = vpop.xlane.xlu0 %1380
        %1382 = vadd.xlane.f32.xlu0 %v1319
        %v1383 = vpop.xlane.xlu0 %1382
        %1384 = vadd.xlane.f32.xlu0 %v1321
        %v1385 = vpop.xlane.xlu0 %1384
        %1386 = vadd.xlane.f32.xlu0 %v1323
        %v1387 = vpop.xlane.xlu0 %1386
        %1388 = vadd.xlane.f32.xlu0 %v1325
        %v1389 = vpop.xlane.xlu0 %1388
        %1390 = vadd.xlane.f32.xlu0 %v1327
        %v1391 = vpop.xlane.xlu0 %1390
        %1392 = vadd.xlane.f32.xlu0 %v1329
        %v1393 = vpop.xlane.xlu0 %1392
        %1394 = vadd.xlane.f32.xlu0 %v1331
        %v1395 = vpop.xlane.xlu0 %1394
        %1396 = vadd.xlane.f32.xlu0 %v1333
        %v1397 = vpop.xlane.xlu0 %1396
        %1398 = vadd.xlane.f32.xlu0 %v1335
        %v1399 = vpop.xlane.xlu0 %1398
        %1400 = vadd.xlane.f32.xlu0 %v1337
        %v1401 = vpop.xlane.xlu0 %1400
        %v1402 = vadd.f32 %v1354, %v1371
        %v1403 = vadd.f32 %v1355, %v1373
        %v1404 = vadd.f32 %v1356, %v1375
        %v1405 = vadd.f32 %v1357, %v1377
        %v1406 = vadd.f32 %v1358, %v1379
        %v1407 = vadd.f32 %v1359, %v1381
        %v1408 = vadd.f32 %v1360, %v1383
        %v1409 = vadd.f32 %v1361, %v1385
        %v1410 = vadd.f32 %v1362, %v1387
        %v1411 = vadd.f32 %v1363, %v1389
        %v1412 = vadd.f32 %v1364, %v1391
        %v1413 = vadd.f32 %v1365, %v1393
        %v1414 = vadd.f32 %v1366, %v1395
        %v1415 = vadd.f32 %v1367, %v1397
        %v1416 = vadd.f32 %v1368, %v1399
        %v1417 = vadd.f32 %v1369, %v1401
        %vm1418 = vcmask 7168
        %1419 = vst.msk [vmem:[#allocation3] sm:$0xff] %vm1418, %v1402
        %1420 = vst.msk [vmem:[#allocation3 + $0x8] sm:$0xff] %vm1418, %v1403
        %1421 = vst.msk [vmem:[#allocation3 + $0x10] sm:$0xff] %vm1418, %v1404
        %1422 = vst.msk [vmem:[#allocation3 + $0x18] sm:$0xff] %vm1418, %v1405
        %1423 = vst.msk [vmem:[#allocation3 + $0x20] sm:$0xff] %vm1418, %v1406
        %1424 = vst.msk [vmem:[#allocation3 + $0x28] sm:$0xff] %vm1418, %v1407
        %1425 = vst.msk [vmem:[#allocation3 + $0x30] sm:$0xff] %vm1418, %v1408
        %1426 = vst.msk [vmem:[#allocation3 + $0x38] sm:$0xff] %vm1418, %v1409
        %1427 = vst.msk [vmem:[#allocation3 + $0x40] sm:$0xff] %vm1418, %v1410
        %1428 = vst.msk [vmem:[#allocation3 + $0x48] sm:$0xff] %vm1418, %v1411
        %1429 = vst.msk [vmem:[#allocation3 + $0x50] sm:$0xff] %vm1418, %v1412
        %1430 = vst.msk [vmem:[#allocation3 + $0x58] sm:$0xff] %vm1418, %v1413
        %1431 = vst.msk [vmem:[#allocation3 + $0x60] sm:$0xff] %vm1418, %v1414
        %1432 = vst.msk [vmem:[#allocation3 + $0x68] sm:$0xff] %vm1418, %v1415
        %1433 = vst.msk [vmem:[#allocation3 + $0x70] sm:$0xff] %vm1418, %v1416
        %1434 = vst.msk [vmem:[#allocation3 + $0x78] sm:$0xff] %vm1418, %v1417
        %v1435 = vld [vmem:[#allocation4] sm:$0xff]
        %v1436 = vld [vmem:[#allocation4 + $0x8] sm:$0xff]
        %v1437 = vld [vmem:[#allocation4 + $0x10] sm:$0xff]
        %v1438 = vld [vmem:[#allocation4 + $0x18] sm:$0xff]
        %v1439 = vld [vmem:[#allocation4 + $0x20] sm:$0xff]
        %v1440 = vld [vmem:[#allocation4 + $0x28] sm:$0xff]
        %v1441 = vld [vmem:[#allocation4 + $0x30] sm:$0xff]
        %v1442 = vld [vmem:[#allocation4 + $0x38] sm:$0xff]
        %v1443 = vld [vmem:[#allocation4 + $0x40] sm:$0xff]
        %v1444 = vld [vmem:[#allocation4 + $0x48] sm:$0xff]
        %v1445 = vld [vmem:[#allocation4 + $0x50] sm:$0xff]
        %v1446 = vld [vmem:[#allocation4 + $0x58] sm:$0xff]
        %v1447 = vld [vmem:[#allocation4 + $0x60] sm:$0xff]
        %v1448 = vld [vmem:[#allocation4 + $0x68] sm:$0xff]
        %v1449 = vld [vmem:[#allocation4 + $0x70] sm:$0xff]
        %v1450 = vld [vmem:[#allocation4 + $0x78] sm:$0xff]
        %1452 = vset.pattern.permute.xlu0 0
        %1453 = vperm.xlu0 %1452, %v1179
        %v1454 = vpop.permute.xlu0 %1453
        %1457 = vset.pattern.permute.xlu0 0
        %1458 = vperm.xlu0 %1457, %v1181
        %v1459 = vpop.permute.xlu0 %1458
        %1462 = vset.pattern.permute.xlu0 0
        %1463 = vperm.xlu0 %1462, %v1183
        %v1464 = vpop.permute.xlu0 %1463
        %1467 = vset.pattern.permute.xlu0 0
        %1468 = vperm.xlu0 %1467, %v1185
        %v1469 = vpop.permute.xlu0 %1468
        %1472 = vset.pattern.permute.xlu0 0
        %1473 = vperm.xlu0 %1472, %v1187
        %v1474 = vpop.permute.xlu0 %1473
        %1477 = vset.pattern.permute.xlu0 0
        %1478 = vperm.xlu0 %1477, %v1189
        %v1479 = vpop.permute.xlu0 %1478
        %1482 = vset.pattern.permute.xlu0 0
        %1483 = vperm.xlu0 %1482, %v1191
        %v1484 = vpop.permute.xlu0 %1483
        %1487 = vset.pattern.permute.xlu0 0
        %1488 = vperm.xlu0 %1487, %v1193
        %v1489 = vpop.permute.xlu0 %1488
        %1492 = vset.pattern.permute.xlu0 0
        %1493 = vperm.xlu0 %1492, %v1195
        %v1494 = vpop.permute.xlu0 %1493
        %1497 = vset.pattern.permute.xlu0 0
        %1498 = vperm.xlu0 %1497, %v1197
        %v1499 = vpop.permute.xlu0 %1498
        %1502 = vset.pattern.permute.xlu0 0
        %1503 = vperm.xlu0 %1502, %v1199
        %v1504 = vpop.permute.xlu0 %1503
        %1507 = vset.pattern.permute.xlu0 0
        %1508 = vperm.xlu0 %1507, %v1201
        %v1509 = vpop.permute.xlu0 %1508
        %1512 = vset.pattern.permute.xlu0 0
        %1513 = vperm.xlu0 %1512, %v1203
        %v1514 = vpop.permute.xlu0 %1513
        %1517 = vset.pattern.permute.xlu0 0
        %1518 = vperm.xlu0 %1517, %v1205
        %v1519 = vpop.permute.xlu0 %1518
        %1522 = vset.pattern.permute.xlu0 0
        %1523 = vperm.xlu0 %1522, %v1207
        %v1524 = vpop.permute.xlu0 %1523
        %1527 = vset.pattern.permute.xlu0 0
        %1528 = vperm.xlu0 %1527, %v1209
        %v1529 = vpop.permute.xlu0 %1528
        %v1531 = vmul.f32 %v1454, %v1435
        %v1532 = vmul.f32 %v1459, %v1436
        %v1533 = vmul.f32 %v1464, %v1437
        %v1534 = vmul.f32 %v1469, %v1438
        %v1535 = vmul.f32 %v1474, %v1439
        %v1536 = vmul.f32 %v1479, %v1440
        %v1537 = vmul.f32 %v1484, %v1441
        %v1538 = vmul.f32 %v1489, %v1442
        %v1539 = vmul.f32 %v1494, %v1443
        %v1540 = vmul.f32 %v1499, %v1444
        %v1541 = vmul.f32 %v1504, %v1445
        %v1542 = vmul.f32 %v1509, %v1446
        %v1543 = vmul.f32 %v1514, %v1447
        %v1544 = vmul.f32 %v1519, %v1448
        %v1545 = vmul.f32 %v1524, %v1449
        %v1546 = vmul.f32 %v1529, %v1450
        %v1547 = vpack.c.bf16 %v1309, %v1307
        %v1548 = vpack.c.bf16 %v1313, %v1311
        %v1549 = vpack.c.bf16 %v1317, %v1315
        %v1550 = vpack.c.bf16 %v1321, %v1319
        %v1551 = vpack.c.bf16 %v1325, %v1323
        %v1552 = vpack.c.bf16 %v1329, %v1327
        %v1553 = vpack.c.bf16 %v1333, %v1331
        %v1554 = vpack.c.bf16 %v1337, %v1335
        %v1555 = vld [vmem:[%s628] sm:$0xf]
        %v1556 = vld [vmem:[%s628 + $0x4] sm:$0xf]
        %v1557 = vld [vmem:[%s628 + $0x8] sm:$0xf]
        %v1558 = vld [vmem:[%s628 + $0xc] sm:$0xf]
        %v1559 = vld [vmem:[%s628 + $0x10] sm:$0xf]
        %v1560 = vld [vmem:[%s628 + $0x14] sm:$0xf]
        %v1561 = vld [vmem:[%s628 + $0x18] sm:$0xf]
        %v1562 = vld [vmem:[%s628 + $0x1c] sm:$0xf]
        %v1563 = vld [vmem:[%s628 + $0x20] sm:$0xf]
        %v1564 = vld [vmem:[%s628 + $0x24] sm:$0xf]
        %v1565 = vld [vmem:[%s628 + $0x28] sm:$0xf]
        %v1566 = vld [vmem:[%s628 + $0x2c] sm:$0xf]
        %v1567 = vld [vmem:[%s628 + $0x30] sm:$0xf]
        %v1568 = vld [vmem:[%s628 + $0x34] sm:$0xf]
        %v1569 = vld [vmem:[%s628 + $0x38] sm:$0xf]
        %v1570 = vld [vmem:[%s628 + $0x3c] sm:$0xf]
        %v1587 = vunpack.c.l.b16 %v1555
        %v1588 = vunpack.c.l.b16 %v1556
        %v1589 = vunpack.c.l.b16 %v1557
        %v1590 = vunpack.c.l.b16 %v1558
        %v1591 = vunpack.c.l.b16 %v1559
        %v1592 = vunpack.c.l.b16 %v1560
        %v1593 = vunpack.c.l.b16 %v1561
        %v1594 = vunpack.c.l.b16 %v1562
        %v1595 = vunpack.c.l.b16 %v1563
        %v1596 = vunpack.c.l.b16 %v1564
        %v1597 = vunpack.c.l.b16 %v1565
        %v1598 = vunpack.c.l.b16 %v1566
        %v1599 = vunpack.c.l.b16 %v1567
        %v1600 = vunpack.c.l.b16 %v1568
        %v1601 = vunpack.c.l.b16 %v1569
        %v1602 = vunpack.c.l.b16 %v1570
        %v1603 = vpack.c.b16 %v1588, %v1587
        %v1604 = vpack.c.b16 %v1590, %v1589
        %v1605 = vpack.c.b16 %v1592, %v1591
        %v1606 = vpack.c.b16 %v1594, %v1593
        %v1607 = vpack.c.b16 %v1596, %v1595
        %v1608 = vpack.c.b16 %v1598, %v1597
        %v1609 = vpack.c.b16 %v1600, %v1599
        %v1610 = vpack.c.b16 %v1602, %v1601
        %1619 = vmatprep.subr.bf16.mxu0 0
        %1620 = vmatpush1.bf16.msra.mxu0 %v1603
        %1621 = vmatprep.subr.bf16.mxu0 0
        %1622 = vmatpush1.bf16.msra.mxu0 %v1604
        %1623 = vmatprep.subr.bf16.mxu0 0
        %1624 = vmatpush1.bf16.msra.mxu0 %v1605
        %1625 = vmatprep.subr.bf16.mxu0 0
        %1626 = vmatpush1.bf16.msra.mxu0 %v1606
        %1627 = vmatprep.subr.bf16.mxu0 0
        %1628 = vmatpush1.bf16.msra.mxu0 %v1607
        %1629 = vmatprep.subr.bf16.mxu0 0
        %1630 = vmatpush1.bf16.msra.mxu0 %v1608
        %1631 = vmatprep.subr.bf16.mxu0 0
        %1632 = vmatpush1.bf16.msra.mxu0 %v1609
        %1633 = vmatprep.subr.bf16.mxu0 0
        %1634 = vmatpush1.bf16.msra.mxu0 %v1610
        %1635 = vmatprep.subr.bf16.mxu0 0
        %1636 = vmatpush1.bf16.msra.mxu0 0
        %1637 = vmatprep.subr.bf16.mxu0 0
        %1638 = vmatpush1.bf16.msra.mxu0 0
        %1639 = vmatprep.subr.bf16.mxu0 0
        %1640 = vmatpush1.bf16.msra.mxu0 0
        %1641 = vmatprep.subr.bf16.mxu0 0
        %1642 = vmatpush1.bf16.msra.mxu0 0
        %1643 = vmatprep.subr.bf16.mxu0 0
        %1644 = vmatpush1.bf16.msra.mxu0 0
        %1645 = vmatprep.subr.bf16.mxu0 0
        %1646 = vmatpush1.bf16.msra.mxu0 0
        %1647 = vmatprep.subr.bf16.mxu0 0
        %1648 = vmatpush1.bf16.msra.mxu0 0
        %1649 = vmatprep.subr.bf16.mxu0 0
        %1650 = vmatpush1.bf16.msra.mxu0 0
        %1651 = vmatprep.mubr.bf16.mxu0 0
        %1652 = vmatmul.mubr.bf16.gmra.mrb[0].mxu0 %v1547
        %v1653 = vpop.f32.mrb[0].mxu0
        %v1654 = vadd.f32 0.0, %v1653
        %v1655 = vpop.f32.mrb[0].mxu0
        %v1656 = vpop.f32.mrb[0].mxu0
        %v1657 = vadd.f32 0.0, %v1656
        %v1658 = vpop.f32.mrb[0].mxu0
        %1659 = vmatprep.mubr.bf16.mxu0 0
        %1660 = vmatmul.mubr.bf16.gmra.mrb[0].mxu0 %v1548
        %v1661 = vpop.f32.mrb[0].mxu0
        %v1662 = vadd.f32 0.0, %v1661
        %v1663 = vpop.f32.mrb[0].mxu0
        %v1664 = vpop.f32.mrb[0].mxu0
        %v1665 = vadd.f32 0.0, %v1664
        %v1666 = vpop.f32.mrb[0].mxu0
        %1667 = vmatprep.mubr.bf16.mxu0 0
        %1668 = vmatmul.mubr.bf16.gmra.mrb[0].mxu0 %v1549
        %v1669 = vpop.f32.mrb[0].mxu0
        %v1670 = vadd.f32 0.0, %v1669
        %v1671 = vpop.f32.mrb[0].mxu0
        %v1672 = vpop.f32.mrb[0].mxu0
        %v1673 = vadd.f32 0.0, %v1672
        %v1674 = vpop.f32.mrb[0].mxu0
        %1675 = vmatprep.mubr.bf16.mxu0 0
        %1676 = vmatmul.mubr.bf16.gmra.mrb[0].mxu0 %v1550
        %v1677 = vpop.f32.mrb[0].mxu0
        %v1678 = vadd.f32 0.0, %v1677
        %v1679 = vpop.f32.mrb[0].mxu0
        %v1680 = vpop.f32.mrb[0].mxu0
        %v1681 = vadd.f32 0.0, %v1680
        %v1682 = vpop.f32.mrb[0].mxu0
        %1683 = vmatprep.mubr.bf16.mxu0 0
        %1684 = vmatmul.mubr.bf16.gmra.mrb[0].mxu0 %v1551
        %v1685 = vpop.f32.mrb[0].mxu0
        %v1686 = vadd.f32 0.0, %v1685
        %v1687 = vpop.f32.mrb[0].mxu0
        %v1688 = vpop.f32.mrb[0].mxu0
        %v1689 = vadd.f32 0.0, %v1688
        %v1690 = vpop.f32.mrb[0].mxu0
        %1691 = vmatprep.mubr.bf16.mxu0 0
        %1692 = vmatmul.mubr.bf16.gmra.mrb[0].mxu0 %v1552
        %v1693 = vpop.f32.mrb[0].mxu0
        %v1694 = vadd.f32 0.0, %v1693
        %v1695 = vpop.f32.mrb[0].mxu0
        %v1696 = vpop.f32.mrb[0].mxu0
        %v1697 = vadd.f32 0.0, %v1696
        %v1698 = vpop.f32.mrb[0].mxu0
        %1699 = vmatprep.mubr.bf16.mxu0 0
        %1700 = vmatmul.mubr.bf16.gmra.mrb[0].mxu0 %v1553
        %v1701 = vpop.f32.mrb[0].mxu0
        %v1702 = vadd.f32 0.0, %v1701
        %v1703 = vpop.f32.mrb[0].mxu0
        %v1704 = vpop.f32.mrb[0].mxu0
        %v1705 = vadd.f32 0.0, %v1704
        %v1706 = vpop.f32.mrb[0].mxu0
        %1707 = vmatprep.mubr.bf16.mxu0 0
        %1708 = vmatmul.mubr.bf16.gmra.mrb[0].mxu0 %v1554
        %v1709 = vpop.f32.mrb[0].mxu0
        %v1710 = vadd.f32 0.0, %v1709
        %v1711 = vpop.f32.mrb[0].mxu0
        %v1712 = vpop.f32.mrb[0].mxu0
        %v1713 = vadd.f32 0.0, %v1712
        %v1714 = vpop.f32.mrb[0].mxu0
        %1715 = vdwg.mxu0
        %v1716 = vadd.f32 %v1531, %v1654
        %v1717 = vadd.f32 %v1532, %v1657
        %v1718 = vadd.f32 %v1533, %v1662
        %v1719 = vadd.f32 %v1534, %v1665
        %v1720 = vadd.f32 %v1535, %v1670
        %v1721 = vadd.f32 %v1536, %v1673
        %v1722 = vadd.f32 %v1537, %v1678
        %v1723 = vadd.f32 %v1538, %v1681
        %v1724 = vadd.f32 %v1539, %v1686
        %v1725 = vadd.f32 %v1540, %v1689
        %v1726 = vadd.f32 %v1541, %v1694
        %v1727 = vadd.f32 %v1542, %v1697
        %v1728 = vadd.f32 %v1543, %v1702
        %v1729 = vadd.f32 %v1544, %v1705
        %v1730 = vadd.f32 %v1545, %v1710
        %v1731 = vadd.f32 %v1546, %v1713
        %vm1732 = vcmask 64512
        %1733 = vst.msk [vmem:[#allocation4] sm:$0xff] %vm1732, %v1716
        %1734 = vst.msk [vmem:[#allocation4 + $0x8] sm:$0xff] %vm1732, %v1717
        %1735 = vst.msk [vmem:[#allocation4 + $0x10] sm:$0xff] %vm1732, %v1718
        %1736 = vst.msk [vmem:[#allocation4 + $0x18] sm:$0xff] %vm1732, %v1719
        %1737 = vst.msk [vmem:[#allocation4 + $0x20] sm:$0xff] %vm1732, %v1720
        %1738 = vst.msk [vmem:[#allocation4 + $0x28] sm:$0xff] %vm1732, %v1721
        %1739 = vst.msk [vmem:[#allocation4 + $0x30] sm:$0xff] %vm1732, %v1722
        %1740 = vst.msk [vmem:[#allocation4 + $0x38] sm:$0xff] %vm1732, %v1723
        %1741 = vst.msk [vmem:[#allocation4 + $0x40] sm:$0xff] %vm1732, %v1724
        %1742 = vst.msk [vmem:[#allocation4 + $0x48] sm:$0xff] %vm1732, %v1725
        %1743 = vst.msk [vmem:[#allocation4 + $0x50] sm:$0xff] %vm1732, %v1726
        %1744 = vst.msk [vmem:[#allocation4 + $0x58] sm:$0xff] %vm1732, %v1727
        %1745 = vst.msk [vmem:[#allocation4 + $0x60] sm:$0xff] %vm1732, %v1728
        %1746 = vst.msk [vmem:[#allocation4 + $0x68] sm:$0xff] %vm1732, %v1729
        %1747 = vst.msk [vmem:[#allocation4 + $0x70] sm:$0xff] %vm1732, %v1730
        %1748 = vst.msk [vmem:[#allocation4 + $0x78] sm:$0xff] %vm1732, %v1731
        %1749 = vst.msk [vmem:[#allocation2] sm:$0xff] %vm1418, %v1146
        %1750 = vst.msk [vmem:[#allocation2 + $0x8] sm:$0xff] %vm1418, %v1147
        %1751 = vst.msk [vmem:[#allocation2 + $0x10] sm:$0xff] %vm1418, %v1148
        %1752 = vst.msk [vmem:[#allocation2 + $0x18] sm:$0xff] %vm1418, %v1149
        %1753 = vst.msk [vmem:[#allocation2 + $0x20] sm:$0xff] %vm1418, %v1150
        %1754 = vst.msk [vmem:[#allocation2 + $0x28] sm:$0xff] %vm1418, %v1151
        %1755 = vst.msk [vmem:[#allocation2 + $0x30] sm:$0xff] %vm1418, %v1152
        %1756 = vst.msk [vmem:[#allocation2 + $0x38] sm:$0xff] %vm1418, %v1153
        %1757 = vst.msk [vmem:[#allocation2 + $0x40] sm:$0xff] %vm1418, %v1154
        %1758 = vst.msk [vmem:[#allocation2 + $0x48] sm:$0xff] %vm1418, %v1155
        %1759 = vst.msk [vmem:[#allocation2 + $0x50] sm:$0xff] %vm1418, %v1156
        %1760 = vst.msk [vmem:[#allocation2 + $0x58] sm:$0xff] %vm1418, %v1157
        %1761 = vst.msk [vmem:[#allocation2 + $0x60] sm:$0xff] %vm1418, %v1158
        %1762 = vst.msk [vmem:[#allocation2 + $0x68] sm:$0xff] %vm1418, %v1159
        %1763 = vst.msk [vmem:[#allocation2 + $0x70] sm:$0xff] %vm1418, %v1160
        %1764 = vst.msk [vmem:[#allocation2 + $0x78] sm:$0xff] %vm1418, %v1161
        %s1765 = scalar_lea.vmem %s635, 128 [#allocation7]
        %v1766 = vld [vmem:[%s1765] sm:$0xff]
        %v1767 = vld [vmem:[%s1765 + $0x8] sm:$0xff]
        %v1768 = vld [vmem:[%s1765 + $0x10] sm:$0xff]
        %v1769 = vld [vmem:[%s1765 + $0x18] sm:$0xff]
        %v1770 = vld [vmem:[%s1765 + $0x20] sm:$0xff]
        %v1771 = vld [vmem:[%s1765 + $0x28] sm:$0xff]
        %v1772 = vld [vmem:[%s1765 + $0x30] sm:$0xff]
        %v1773 = vld [vmem:[%s1765 + $0x38] sm:$0xff]
        %v1774 = vld [vmem:[%s1765 + $0x40] sm:$0xff]
        %v1775 = vld [vmem:[%s1765 + $0x48] sm:$0xff]
        %v1776 = vld [vmem:[%s1765 + $0x50] sm:$0xff]
        %v1777 = vld [vmem:[%s1765 + $0x58] sm:$0xff]
        %v1778 = vld [vmem:[%s1765 + $0x60] sm:$0xff]
        %v1779 = vld [vmem:[%s1765 + $0x68] sm:$0xff]
        %v1780 = vld [vmem:[%s1765 + $0x70] sm:$0xff]
        %v1781 = vld [vmem:[%s1765 + $0x78] sm:$0xff]
        %s1782 = scalar_lea.vmem %s642, 1 [#allocation8]
        %v1783 = vld [vmem:[%s1782] sm:$0x1]
        %1785 = vset.pattern.permute.xlu0 0
        %1786 = vperm.xlu0 %1785, %v1766
        %v1787 = vpop.permute.xlu0 %1786
        %1790 = vset.pattern.permute.xlu0 0
        %1791 = vperm.xlu0 %1790, %v1767
        %v1792 = vpop.permute.xlu0 %1791
        %1795 = vset.pattern.permute.xlu0 0
        %1796 = vperm.xlu0 %1795, %v1768
        %v1797 = vpop.permute.xlu0 %1796
        %1800 = vset.pattern.permute.xlu0 0
        %1801 = vperm.xlu0 %1800, %v1769
        %v1802 = vpop.permute.xlu0 %1801
        %1805 = vset.pattern.permute.xlu0 0
        %1806 = vperm.xlu0 %1805, %v1770
        %v1807 = vpop.permute.xlu0 %1806
        %1810 = vset.pattern.permute.xlu0 0
        %1811 = vperm.xlu0 %1810, %v1771
        %v1812 = vpop.permute.xlu0 %1811
        %1815 = vset.pattern.permute.xlu0 0
        %1816 = vperm.xlu0 %1815, %v1772
        %v1817 = vpop.permute.xlu0 %1816
        %1820 = vset.pattern.permute.xlu0 0
        %1821 = vperm.xlu0 %1820, %v1773
        %v1822 = vpop.permute.xlu0 %1821
        %1825 = vset.pattern.permute.xlu0 0
        %1826 = vperm.xlu0 %1825, %v1774
        %v1827 = vpop.permute.xlu0 %1826
        %1830 = vset.pattern.permute.xlu0 0
        %1831 = vperm.xlu0 %1830, %v1775
        %v1832 = vpop.permute.xlu0 %1831
        %1835 = vset.pattern.permute.xlu0 0
        %1836 = vperm.xlu0 %1835, %v1776
        %v1837 = vpop.permute.xlu0 %1836
        %1840 = vset.pattern.permute.xlu0 0
        %1841 = vperm.xlu0 %1840, %v1777
        %v1842 = vpop.permute.xlu0 %1841
        %1845 = vset.pattern.permute.xlu0 0
        %1846 = vperm.xlu0 %1845, %v1778
        %v1847 = vpop.permute.xlu0 %1846
        %1850 = vset.pattern.permute.xlu0 0
        %1851 = vperm.xlu0 %1850, %v1779
        %v1852 = vpop.permute.xlu0 %1851
        %1855 = vset.pattern.permute.xlu0 0
        %1856 = vperm.xlu0 %1855, %v1780
        %v1857 = vpop.permute.xlu0 %1856
        %1860 = vset.pattern.permute.xlu0 0
        %1861 = vperm.xlu0 %1860, %v1781
        %v1862 = vpop.permute.xlu0 %1861
        %v1865 = vlaneseq
        %v1866 = vshrl.u32 %v1865, 7
        %v1867 = vsub.s32 0, %v1866
        %v1868 = vrot.slane %v1783, %v1867
        %v1870 = vadd.f32 %v1787, %v1868
        %v1871 = vadd.f32 %v1792, %v1868
        %v1872 = vadd.f32 %v1797, %v1868
        %v1873 = vadd.f32 %v1802, %v1868
        %v1874 = vadd.f32 %v1807, %v1868
        %v1875 = vadd.f32 %v1812, %v1868
        %v1876 = vadd.f32 %v1817, %v1868
        %v1877 = vadd.f32 %v1822, %v1868
        %v1878 = vadd.f32 %v1827, %v1868
        %v1879 = vadd.f32 %v1832, %v1868
        %v1880 = vadd.f32 %v1837, %v1868
        %v1881 = vadd.f32 %v1842, %v1868
        %v1882 = vadd.f32 %v1847, %v1868
        %v1883 = vadd.f32 %v1852, %v1868
        %v1884 = vadd.f32 %v1857, %v1868
        %v1885 = vadd.f32 %v1862, %v1868
        %v1886 = vmul.f32 %v1870, 0.2
        %v1887 = vmul.f32 %v1871, 0.2
        %v1888 = vmul.f32 %v1872, 0.2
        %v1889 = vmul.f32 %v1873, 0.2
        %v1890 = vmul.f32 %v1874, 0.2
        %v1891 = vmul.f32 %v1875, 0.2
        %v1892 = vmul.f32 %v1876, 0.2
        %v1893 = vmul.f32 %v1877, 0.2
        %v1894 = vmul.f32 %v1878, 0.2
        %v1895 = vmul.f32 %v1879, 0.2
        %v1896 = vmul.f32 %v1880, 0.2
        %v1897 = vmul.f32 %v1881, 0.2
        %v1898 = vmul.f32 %v1882, 0.2
        %v1899 = vmul.f32 %v1883, 0.2
        %v1900 = vmul.f32 %v1884, 0.2
        %v1901 = vmul.f32 %v1885, 0.2
        %v1902 = vmax.f32 %v1870, %v1886
        %v1903 = vmax.f32 %v1871, %v1887
        %v1904 = vmax.f32 %v1872, %v1888
        %v1905 = vmax.f32 %v1873, %v1889
        %v1906 = vmax.f32 %v1874, %v1890
        %v1907 = vmax.f32 %v1875, %v1891
        %v1908 = vmax.f32 %v1876, %v1892
        %v1909 = vmax.f32 %v1877, %v1893
        %v1910 = vmax.f32 %v1878, %v1894
        %v1911 = vmax.f32 %v1879, %v1895
        %v1912 = vmax.f32 %v1880, %v1896
        %v1913 = vmax.f32 %v1881, %v1897
        %v1914 = vmax.f32 %v1882, %v1898
        %v1915 = vmax.f32 %v1883, %v1899
        %v1916 = vmax.f32 %v1884, %v1900
        %v1917 = vmax.f32 %v1885, %v1901
        %v1918 = vsub.f32 0.0, %v1902
        %v1919 = vsub.f32 0.0, %v1903
        %v1920 = vsub.f32 0.0, %v1904
        %v1921 = vsub.f32 0.0, %v1905
        %v1922 = vsub.f32 0.0, %v1906
        %v1923 = vsub.f32 0.0, %v1907
        %v1924 = vsub.f32 0.0, %v1908
        %v1925 = vsub.f32 0.0, %v1909
        %v1926 = vsub.f32 0.0, %v1910
        %v1927 = vsub.f32 0.0, %v1911
        %v1928 = vsub.f32 0.0, %v1912
        %v1929 = vsub.f32 0.0, %v1913
        %v1930 = vsub.f32 0.0, %v1914
        %v1931 = vsub.f32 0.0, %v1915
        %v1932 = vsub.f32 0.0, %v1916
        %v1933 = vsub.f32 0.0, %v1917
        %v1934 = vsel %vm1066, %v1918, -1e+30
        %v1935 = vsel %vm1067, %v1919, -1e+30
        %v1936 = vsel %vm1068, %v1920, -1e+30
        %v1937 = vsel %vm1069, %v1921, -1e+30
        %v1938 = vsel %vm1070, %v1922, -1e+30
        %v1939 = vsel %vm1071, %v1923, -1e+30
        %v1940 = vsel %vm1072, %v1924, -1e+30
        %v1941 = vsel %vm1073, %v1925, -1e+30
        %v1942 = vsel %vm1074, %v1926, -1e+30
        %v1943 = vsel %vm1075, %v1927, -1e+30
        %v1944 = vsel %vm1076, %v1928, -1e+30
        %v1945 = vsel %vm1077, %v1929, -1e+30
        %v1946 = vsel %vm1078, %v1930, -1e+30
        %v1947 = vsel %vm1079, %v1931, -1e+30
        %v1948 = vsel %vm1080, %v1932, -1e+30
        %v1949 = vsel %vm1081, %v1933, -1e+30
        %s1950 = scalar_lea.vmem [#allocation2], 128
        %v1951 = vld [vmem:[%s1950] sm:$0xff]
        %v1952 = vld [vmem:[%s1950 + $0x8] sm:$0xff]
        %v1953 = vld [vmem:[%s1950 + $0x10] sm:$0xff]
        %v1954 = vld [vmem:[%s1950 + $0x18] sm:$0xff]
        %v1955 = vld [vmem:[%s1950 + $0x20] sm:$0xff]
        %v1956 = vld [vmem:[%s1950 + $0x28] sm:$0xff]
        %v1957 = vld [vmem:[%s1950 + $0x30] sm:$0xff]
        %v1958 = vld [vmem:[%s1950 + $0x38] sm:$0xff]
        %v1959 = vld [vmem:[%s1950 + $0x40] sm:$0xff]
        %v1960 = vld [vmem:[%s1950 + $0x48] sm:$0xff]
        %v1961 = vld [vmem:[%s1950 + $0x50] sm:$0xff]
        %v1962 = vld [vmem:[%s1950 + $0x58] sm:$0xff]
        %v1963 = vld [vmem:[%s1950 + $0x60] sm:$0xff]
        %v1964 = vld [vmem:[%s1950 + $0x68] sm:$0xff]
        %v1965 = vld [vmem:[%s1950 + $0x70] sm:$0xff]
        %v1966 = vld [vmem:[%s1950 + $0x78] sm:$0xff]
        %1967 = vmax.xlane.f32.xlu0 %v1934
        %v1968 = vpop.xlane.xlu0 %1967
        %1969 = vmax.xlane.f32.xlu0 %v1935
        %v1970 = vpop.xlane.xlu0 %1969
        %1971 = vmax.xlane.f32.xlu0 %v1936
        %v1972 = vpop.xlane.xlu0 %1971
        %1973 = vmax.xlane.f32.xlu0 %v1937
        %v1974 = vpop.xlane.xlu0 %1973
        %1975 = vmax.xlane.f32.xlu0 %v1938
        %v1976 = vpop.xlane.xlu0 %1975
        %1977 = vmax.xlane.f32.xlu0 %v1939
        %v1978 = vpop.xlane.xlu0 %1977
        %1979 = vmax.xlane.f32.xlu0 %v1940
        %v1980 = vpop.xlane.xlu0 %1979
        %1981 = vmax.xlane.f32.xlu0 %v1941
        %v1982 = vpop.xlane.xlu0 %1981
        %1983 = vmax.xlane.f32.xlu0 %v1942
        %v1984 = vpop.xlane.xlu0 %1983
        %1985 = vmax.xlane.f32.xlu0 %v1943
        %v1986 = vpop.xlane.xlu0 %1985
        %1987 = vmax.xlane.f32.xlu0 %v1944
        %v1988 = vpop.xlane.xlu0 %1987
        %1989 = vmax.xlane.f32.xlu0 %v1945
        %v1990 = vpop.xlane.xlu0 %1989
        %1991 = vmax.xlane.f32.xlu0 %v1946
        %v1992 = vpop.xlane.xlu0 %1991
        %1993 = vmax.xlane.f32.xlu0 %v1947
        %v1994 = vpop.xlane.xlu0 %1993
        %1995 = vmax.xlane.f32.xlu0 %v1948
        %v1996 = vpop.xlane.xlu0 %1995
        %1997 = vmax.xlane.f32.xlu0 %v1949
        %v1998 = vpop.xlane.xlu0 %1997
        %v1999 = vmax.f32 %v1951, %v1968
        %v2000 = vmax.f32 %v1952, %v1970
        %v2001 = vmax.f32 %v1953, %v1972
        %v2002 = vmax.f32 %v1954, %v1974
        %v2003 = vmax.f32 %v1955, %v1976
        %v2004 = vmax.f32 %v1956, %v1978
        %v2005 = vmax.f32 %v1957, %v1980
        %v2006 = vmax.f32 %v1958, %v1982
        %v2007 = vmax.f32 %v1959, %v1984
        %v2008 = vmax.f32 %v1960, %v1986
        %v2009 = vmax.f32 %v1961, %v1988
        %v2010 = vmax.f32 %v1962, %v1990
        %v2011 = vmax.f32 %v1963, %v1992
        %v2012 = vmax.f32 %v1964, %v1994
        %v2013 = vmax.f32 %v1965, %v1996
        %v2014 = vmax.f32 %v1966, %v1998
        %v2015 = vsub.f32 %v1951, %v1999
        %v2016 = vsub.f32 %v1952, %v2000
        %v2017 = vsub.f32 %v1953, %v2001
        %v2018 = vsub.f32 %v1954, %v2002
        %v2019 = vsub.f32 %v1955, %v2003
        %v2020 = vsub.f32 %v1956, %v2004
        %v2021 = vsub.f32 %v1957, %v2005
        %v2022 = vsub.f32 %v1958, %v2006
        %v2023 = vsub.f32 %v1959, %v2007
        %v2024 = vsub.f32 %v1960, %v2008
        %v2025 = vsub.f32 %v1961, %v2009
        %v2026 = vsub.f32 %v1962, %v2010
        %v2027 = vsub.f32 %v1963, %v2011
        %v2028 = vsub.f32 %v1964, %v2012
        %v2029 = vsub.f32 %v1965, %v2013
        %v2030 = vsub.f32 %v1966, %v2014
        %v2031 = vmul.f32 %v2015, 1.442695
        %v2032 = vpow.pop %v2031
        %v2033 = vmul.f32 %v2016, 1.442695
        %v2034 = vpow.pop %v2033
        %v2035 = vmul.f32 %v2017, 1.442695
        %v2036 = vpow.pop %v2035
        %v2037 = vmul.f32 %v2018, 1.442695
        %v2038 = vpow.pop %v2037
        %v2039 = vmul.f32 %v2019, 1.442695
        %v2040 = vpow.pop %v2039
        %v2041 = vmul.f32 %v2020, 1.442695
        %v2042 = vpow.pop %v2041
        %v2043 = vmul.f32 %v2021, 1.442695
        %v2044 = vpow.pop %v2043
        %v2045 = vmul.f32 %v2022, 1.442695
        %v2046 = vpow.pop %v2045
        %v2047 = vmul.f32 %v2023, 1.442695
        %v2048 = vpow.pop %v2047
        %v2049 = vmul.f32 %v2024, 1.442695
        %v2050 = vpow.pop %v2049
        %v2051 = vmul.f32 %v2025, 1.442695
        %v2052 = vpow.pop %v2051
        %v2053 = vmul.f32 %v2026, 1.442695
        %v2054 = vpow.pop %v2053
        %v2055 = vmul.f32 %v2027, 1.442695
        %v2056 = vpow.pop %v2055
        %v2057 = vmul.f32 %v2028, 1.442695
        %v2058 = vpow.pop %v2057
        %v2059 = vmul.f32 %v2029, 1.442695
        %v2060 = vpow.pop %v2059
        %v2061 = vmul.f32 %v2030, 1.442695
        %v2062 = vpow.pop %v2061
        %2064 = vset.pattern.permute.xlu0 0
        %2065 = vperm.xlu0 %2064, %v1999
        %v2066 = vpop.permute.xlu0 %2065
        %2069 = vset.pattern.permute.xlu0 0
        %2070 = vperm.xlu0 %2069, %v2000
        %v2071 = vpop.permute.xlu0 %2070
        %2074 = vset.pattern.permute.xlu0 0
        %2075 = vperm.xlu0 %2074, %v2001
        %v2076 = vpop.permute.xlu0 %2075
        %2079 = vset.pattern.permute.xlu0 0
        %2080 = vperm.xlu0 %2079, %v2002
        %v2081 = vpop.permute.xlu0 %2080
        %2084 = vset.pattern.permute.xlu0 0
        %2085 = vperm.xlu0 %2084, %v2003
        %v2086 = vpop.permute.xlu0 %2085
        %2089 = vset.pattern.permute.xlu0 0
        %2090 = vperm.xlu0 %2089, %v2004
        %v2091 = vpop.permute.xlu0 %2090
        %2094 = vset.pattern.permute.xlu0 0
        %2095 = vperm.xlu0 %2094, %v2005
        %v2096 = vpop.permute.xlu0 %2095
        %2099 = vset.pattern.permute.xlu0 0
        %2100 = vperm.xlu0 %2099, %v2006
        %v2101 = vpop.permute.xlu0 %2100
        %2104 = vset.pattern.permute.xlu0 0
        %2105 = vperm.xlu0 %2104, %v2007
        %v2106 = vpop.permute.xlu0 %2105
        %2109 = vset.pattern.permute.xlu0 0
        %2110 = vperm.xlu0 %2109, %v2008
        %v2111 = vpop.permute.xlu0 %2110
        %2114 = vset.pattern.permute.xlu0 0
        %2115 = vperm.xlu0 %2114, %v2009
        %v2116 = vpop.permute.xlu0 %2115
        %2119 = vset.pattern.permute.xlu0 0
        %2120 = vperm.xlu0 %2119, %v2010
        %v2121 = vpop.permute.xlu0 %2120
        %2124 = vset.pattern.permute.xlu0 0
        %2125 = vperm.xlu0 %2124, %v2011
        %v2126 = vpop.permute.xlu0 %2125
        %2129 = vset.pattern.permute.xlu0 0
        %2130 = vperm.xlu0 %2129, %v2012
        %v2131 = vpop.permute.xlu0 %2130
        %2134 = vset.pattern.permute.xlu0 0
        %2135 = vperm.xlu0 %2134, %v2013
        %v2136 = vpop.permute.xlu0 %2135
        %2139 = vset.pattern.permute.xlu0 0
        %2140 = vperm.xlu0 %2139, %v2014
        %v2141 = vpop.permute.xlu0 %2140
        %v2143 = vsub.f32 %v1934, %v2066
        %v2144 = vsub.f32 %v1935, %v2071
        %v2145 = vsub.f32 %v1936, %v2076
        %v2146 = vsub.f32 %v1937, %v2081
        %v2147 = vsub.f32 %v1938, %v2086
        %v2148 = vsub.f32 %v1939, %v2091
        %v2149 = vsub.f32 %v1940, %v2096
        %v2150 = vsub.f32 %v1941, %v2101
        %v2151 = vsub.f32 %v1942, %v2106
        %v2152 = vsub.f32 %v1943, %v2111
        %v2153 = vsub.f32 %v1944, %v2116
        %v2154 = vsub.f32 %v1945, %v2121
        %v2155 = vsub.f32 %v1946, %v2126
        %v2156 = vsub.f32 %v1947, %v2131
        %v2157 = vsub.f32 %v1948, %v2136
        %v2158 = vsub.f32 %v1949, %v2141
        %v2159 = vmul.f32 %v2143, 1.442695
        %v2160 = vpow.pop %v2159
        %v2161 = vmul.f32 %v2144, 1.442695
        %v2162 = vpow.pop %v2161
        %v2163 = vmul.f32 %v2145, 1.442695
        %v2164 = vpow.pop %v2163
        %v2165 = vmul.f32 %v2146, 1.442695
        %v2166 = vpow.pop %v2165
        %v2167 = vmul.f32 %v2147, 1.442695
        %v2168 = vpow.pop %v2167
        %v2169 = vmul.f32 %v2148, 1.442695
        %v2170 = vpow.pop %v2169
        %v2171 = vmul.f32 %v2149, 1.442695
        %v2172 = vpow.pop %v2171
        %v2173 = vmul.f32 %v2150, 1.442695
        %v2174 = vpow.pop %v2173
        %v2175 = vmul.f32 %v2151, 1.442695
        %v2176 = vpow.pop %v2175
        %v2177 = vmul.f32 %v2152, 1.442695
        %v2178 = vpow.pop %v2177
        %v2179 = vmul.f32 %v2153, 1.442695
        %v2180 = vpow.pop %v2179
        %v2181 = vmul.f32 %v2154, 1.442695
        %v2182 = vpow.pop %v2181
        %v2183 = vmul.f32 %v2155, 1.442695
        %v2184 = vpow.pop %v2183
        %v2185 = vmul.f32 %v2156, 1.442695
        %v2186 = vpow.pop %v2185
        %v2187 = vmul.f32 %v2157, 1.442695
        %v2188 = vpow.pop %v2187
        %v2189 = vmul.f32 %v2158, 1.442695
        %v2190 = vpow.pop %v2189
        %s2191 = scalar_lea.vmem [#allocation3], 128
        %v2192 = vld [vmem:[%s2191] sm:$0xff]
        %v2193 = vld [vmem:[%s2191 + $0x8] sm:$0xff]
        %v2194 = vld [vmem:[%s2191 + $0x10] sm:$0xff]
        %v2195 = vld [vmem:[%s2191 + $0x18] sm:$0xff]
        %v2196 = vld [vmem:[%s2191 + $0x20] sm:$0xff]
        %v2197 = vld [vmem:[%s2191 + $0x28] sm:$0xff]
        %v2198 = vld [vmem:[%s2191 + $0x30] sm:$0xff]
        %v2199 = vld [vmem:[%s2191 + $0x38] sm:$0xff]
        %v2200 = vld [vmem:[%s2191 + $0x40] sm:$0xff]
        %v2201 = vld [vmem:[%s2191 + $0x48] sm:$0xff]
        %v2202 = vld [vmem:[%s2191 + $0x50] sm:$0xff]
        %v2203 = vld [vmem:[%s2191 + $0x58] sm:$0xff]
        %v2204 = vld [vmem:[%s2191 + $0x60] sm:$0xff]
        %v2205 = vld [vmem:[%s2191 + $0x68] sm:$0xff]
        %v2206 = vld [vmem:[%s2191 + $0x70] sm:$0xff]
        %v2207 = vld [vmem:[%s2191 + $0x78] sm:$0xff]
        %v2208 = vmul.f32 %v2032, %v2192
        %v2209 = vmul.f32 %v2034, %v2193
        %v2210 = vmul.f32 %v2036, %v2194
        %v2211 = vmul.f32 %v2038, %v2195
        %v2212 = vmul.f32 %v2040, %v2196
        %v2213 = vmul.f32 %v2042, %v2197
        %v2214 = vmul.f32 %v2044, %v2198
        %v2215 = vmul.f32 %v2046, %v2199
        %v2216 = vmul.f32 %v2048, %v2200
        %v2217 = vmul.f32 %v2050, %v2201
        %v2218 = vmul.f32 %v2052, %v2202
        %v2219 = vmul.f32 %v2054, %v2203
        %v2220 = vmul.f32 %v2056, %v2204
        %v2221 = vmul.f32 %v2058, %v2205
        %v2222 = vmul.f32 %v2060, %v2206
        %v2223 = vmul.f32 %v2062, %v2207
        %2224 = vadd.xlane.f32.xlu0 %v2160
        %v2225 = vpop.xlane.xlu0 %2224
        %2226 = vadd.xlane.f32.xlu0 %v2162
        %v2227 = vpop.xlane.xlu0 %2226
        %2228 = vadd.xlane.f32.xlu0 %v2164
        %v2229 = vpop.xlane.xlu0 %2228
        %2230 = vadd.xlane.f32.xlu0 %v2166
        %v2231 = vpop.xlane.xlu0 %2230
        %2232 = vadd.xlane.f32.xlu0 %v2168
        %v2233 = vpop.xlane.xlu0 %2232
        %2234 = vadd.xlane.f32.xlu0 %v2170
        %v2235 = vpop.xlane.xlu0 %2234
        %2236 = vadd.xlane.f32.xlu0 %v2172
        %v2237 = vpop.xlane.xlu0 %2236
        %2238 = vadd.xlane.f32.xlu0 %v2174
        %v2239 = vpop.xlane.xlu0 %2238
        %2240 = vadd.xlane.f32.xlu0 %v2176
        %v2241 = vpop.xlane.xlu0 %2240
        %2242 = vadd.xlane.f32.xlu0 %v2178
        %v2243 = vpop.xlane.xlu0 %2242
        %2244 = vadd.xlane.f32.xlu0 %v2180
        %v2245 = vpop.xlane.xlu0 %2244
        %2246 = vadd.xlane.f32.xlu0 %v2182
        %v2247 = vpop.xlane.xlu0 %2246
        %2248 = vadd.xlane.f32.xlu0 %v2184
        %v2249 = vpop.xlane.xlu0 %2248
        %2250 = vadd.xlane.f32.xlu0 %v2186
        %v2251 = vpop.xlane.xlu0 %2250
        %2252 = vadd.xlane.f32.xlu0 %v2188
        %v2253 = vpop.xlane.xlu0 %2252
        %2254 = vadd.xlane.f32.xlu0 %v2190
        %v2255 = vpop.xlane.xlu0 %2254
        %v2256 = vadd.f32 %v2208, %v2225
        %v2257 = vadd.f32 %v2209, %v2227
        %v2258 = vadd.f32 %v2210, %v2229
        %v2259 = vadd.f32 %v2211, %v2231
        %v2260 = vadd.f32 %v2212, %v2233
        %v2261 = vadd.f32 %v2213, %v2235
        %v2262 = vadd.f32 %v2214, %v2237
        %v2263 = vadd.f32 %v2215, %v2239
        %v2264 = vadd.f32 %v2216, %v2241
        %v2265 = vadd.f32 %v2217, %v2243
        %v2266 = vadd.f32 %v2218, %v2245
        %v2267 = vadd.f32 %v2219, %v2247
        %v2268 = vadd.f32 %v2220, %v2249
        %v2269 = vadd.f32 %v2221, %v2251
        %v2270 = vadd.f32 %v2222, %v2253
        %v2271 = vadd.f32 %v2223, %v2255
        %2272 = vst.msk [vmem:[%s2191] sm:$0xff] %vm1418, %v2256
        %2273 = vst.msk [vmem:[%s2191 + $0x8] sm:$0xff] %vm1418, %v2257
        %2274 = vst.msk [vmem:[%s2191 + $0x10] sm:$0xff] %vm1418, %v2258
        %2275 = vst.msk [vmem:[%s2191 + $0x18] sm:$0xff] %vm1418, %v2259
        %2276 = vst.msk [vmem:[%s2191 + $0x20] sm:$0xff] %vm1418, %v2260
        %2277 = vst.msk [vmem:[%s2191 + $0x28] sm:$0xff] %vm1418, %v2261
        %2278 = vst.msk [vmem:[%s2191 + $0x30] sm:$0xff] %vm1418, %v2262
        %2279 = vst.msk [vmem:[%s2191 + $0x38] sm:$0xff] %vm1418, %v2263
        %2280 = vst.msk [vmem:[%s2191 + $0x40] sm:$0xff] %vm1418, %v2264
        %2281 = vst.msk [vmem:[%s2191 + $0x48] sm:$0xff] %vm1418, %v2265
        %2282 = vst.msk [vmem:[%s2191 + $0x50] sm:$0xff] %vm1418, %v2266
        %2283 = vst.msk [vmem:[%s2191 + $0x58] sm:$0xff] %vm1418, %v2267
        %2284 = vst.msk [vmem:[%s2191 + $0x60] sm:$0xff] %vm1418, %v2268
        %2285 = vst.msk [vmem:[%s2191 + $0x68] sm:$0xff] %vm1418, %v2269
        %2286 = vst.msk [vmem:[%s2191 + $0x70] sm:$0xff] %vm1418, %v2270
        %2287 = vst.msk [vmem:[%s2191 + $0x78] sm:$0xff] %vm1418, %v2271
        %s2288 = scalar_lea.vmem [#allocation4], 128
        %v2289 = vld [vmem:[%s2288] sm:$0xff]
        %v2290 = vld [vmem:[%s2288 + $0x8] sm:$0xff]
        %v2291 = vld [vmem:[%s2288 + $0x10] sm:$0xff]
        %v2292 = vld [vmem:[%s2288 + $0x18] sm:$0xff]
        %v2293 = vld [vmem:[%s2288 + $0x20] sm:$0xff]
        %v2294 = vld [vmem:[%s2288 + $0x28] sm:$0xff]
        %v2295 = vld [vmem:[%s2288 + $0x30] sm:$0xff]
        %v2296 = vld [vmem:[%s2288 + $0x38] sm:$0xff]
        %v2297 = vld [vmem:[%s2288 + $0x40] sm:$0xff]
        %v2298 = vld [vmem:[%s2288 + $0x48] sm:$0xff]
        %v2299 = vld [vmem:[%s2288 + $0x50] sm:$0xff]
        %v2300 = vld [vmem:[%s2288 + $0x58] sm:$0xff]
        %v2301 = vld [vmem:[%s2288 + $0x60] sm:$0xff]
        %v2302 = vld [vmem:[%s2288 + $0x68] sm:$0xff]
        %v2303 = vld [vmem:[%s2288 + $0x70] sm:$0xff]
        %v2304 = vld [vmem:[%s2288 + $0x78] sm:$0xff]
        %2306 = vset.pattern.permute.xlu0 0
        %2307 = vperm.xlu0 %2306, %v2032
        %v2308 = vpop.permute.xlu0 %2307
        %2311 = vset.pattern.permute.xlu0 0
        %2312 = vperm.xlu0 %2311, %v2034
        %v2313 = vpop.permute.xlu0 %2312
        %2316 = vset.pattern.permute.xlu0 0
        %2317 = vperm.xlu0 %2316, %v2036
        %v2318 = vpop.permute.xlu0 %2317
        %2321 = vset.pattern.permute.xlu0 0
        %2322 = vperm.xlu0 %2321, %v2038
        %v2323 = vpop.permute.xlu0 %2322
        %2326 = vset.pattern.permute.xlu0 0
        %2327 = vperm.xlu0 %2326, %v2040
        %v2328 = vpop.permute.xlu0 %2327
        %2331 = vset.pattern.permute.xlu0 0
        %2332 = vperm.xlu0 %2331, %v2042
        %v2333 = vpop.permute.xlu0 %2332
        %2336 = vset.pattern.permute.xlu0 0
        %2337 = vperm.xlu0 %2336, %v2044
        %v2338 = vpop.permute.xlu0 %2337
        %2341 = vset.pattern.permute.xlu0 0
        %2342 = vperm.xlu0 %2341, %v2046
        %v2343 = vpop.permute.xlu0 %2342
        %2346 = vset.pattern.permute.xlu0 0
        %2347 = vperm.xlu0 %2346, %v2048
        %v2348 = vpop.permute.xlu0 %2347
        %2351 = vset.pattern.permute.xlu0 0
        %2352 = vperm.xlu0 %2351, %v2050
        %v2353 = vpop.permute.xlu0 %2352
        %2356 = vset.pattern.permute.xlu0 0
        %2357 = vperm.xlu0 %2356, %v2052
        %v2358 = vpop.permute.xlu0 %2357
        %2361 = vset.pattern.permute.xlu0 0
        %2362 = vperm.xlu0 %2361, %v2054
        %v2363 = vpop.permute.xlu0 %2362
        %2366 = vset.pattern.permute.xlu0 0
        %2367 = vperm.xlu0 %2366, %v2056
        %v2368 = vpop.permute.xlu0 %2367
        %2371 = vset.pattern.permute.xlu0 0
        %2372 = vperm.xlu0 %2371, %v2058
        %v2373 = vpop.permute.xlu0 %2372
        %2376 = vset.pattern.permute.xlu0 0
        %2377 = vperm.xlu0 %2376, %v2060
        %v2378 = vpop.permute.xlu0 %2377
        %2381 = vset.pattern.permute.xlu0 0
        %2382 = vperm.xlu0 %2381, %v2062
        %v2383 = vpop.permute.xlu0 %2382
        %v2385 = vmul.f32 %v2308, %v2289
        %v2386 = vmul.f32 %v2313, %v2290
        %v2387 = vmul.f32 %v2318, %v2291
        %v2388 = vmul.f32 %v2323, %v2292
        %v2389 = vmul.f32 %v2328, %v2293
        %v2390 = vmul.f32 %v2333, %v2294
        %v2391 = vmul.f32 %v2338, %v2295
        %v2392 = vmul.f32 %v2343, %v2296
        %v2393 = vmul.f32 %v2348, %v2297
        %v2394 = vmul.f32 %v2353, %v2298
        %v2395 = vmul.f32 %v2358, %v2299
        %v2396 = vmul.f32 %v2363, %v2300
        %v2397 = vmul.f32 %v2368, %v2301
        %v2398 = vmul.f32 %v2373, %v2302
        %v2399 = vmul.f32 %v2378, %v2303
        %v2400 = vmul.f32 %v2383, %v2304
        %v2401 = vpack.c.bf16 %v2162, %v2160
        %v2402 = vpack.c.bf16 %v2166, %v2164
        %v2403 = vpack.c.bf16 %v2170, %v2168
        %v2404 = vpack.c.bf16 %v2174, %v2172
        %v2405 = vpack.c.bf16 %v2178, %v2176
        %v2406 = vpack.c.bf16 %v2182, %v2180
        %v2407 = vpack.c.bf16 %v2186, %v2184
        %v2408 = vpack.c.bf16 %v2190, %v2188
        %s2409 = scalar_lea.vmem %s628, 64 [#allocation6]
        %v2410 = vld [vmem:[%s2409] sm:$0xf]
        %v2411 = vld [vmem:[%s2409 + $0x4] sm:$0xf]
        %v2412 = vld [vmem:[%s2409 + $0x8] sm:$0xf]
        %v2413 = vld [vmem:[%s2409 + $0xc] sm:$0xf]
        %v2414 = vld [vmem:[%s2409 + $0x10] sm:$0xf]
        %v2415 = vld [vmem:[%s2409 + $0x14] sm:$0xf]
        %v2416 = vld [vmem:[%s2409 + $0x18] sm:$0xf]
        %v2417 = vld [vmem:[%s2409 + $0x1c] sm:$0xf]
        %v2418 = vld [vmem:[%s2409 + $0x20] sm:$0xf]
        %v2419 = vld [vmem:[%s2409 + $0x24] sm:$0xf]
        %v2420 = vld [vmem:[%s2409 + $0x28] sm:$0xf]
        %v2421 = vld [vmem:[%s2409 + $0x2c] sm:$0xf]
        %v2422 = vld [vmem:[%s2409 + $0x30] sm:$0xf]
        %v2423 = vld [vmem:[%s2409 + $0x34] sm:$0xf]
        %v2424 = vld [vmem:[%s2409 + $0x38] sm:$0xf]
        %v2425 = vld [vmem:[%s2409 + $0x3c] sm:$0xf]
        %v2442 = vunpack.c.l.b16 %v2410
        %v2443 = vunpack.c.l.b16 %v2411
        %v2444 = vunpack.c.l.b16 %v2412
        %v2445 = vunpack.c.l.b16 %v2413
        %v2446 = vunpack.c.l.b16 %v2414
        %v2447 = vunpack.c.l.b16 %v2415
        %v2448 = vunpack.c.l.b16 %v2416
        %v2449 = vunpack.c.l.b16 %v2417
        %v2450 = vunpack.c.l.b16 %v2418
        %v2451 = vunpack.c.l.b16 %v2419
        %v2452 = vunpack.c.l.b16 %v2420
        %v2453 = vunpack.c.l.b16 %v2421
        %v2454 = vunpack.c.l.b16 %v2422
        %v2455 = vunpack.c.l.b16 %v2423
        %v2456 = vunpack.c.l.b16 %v2424
        %v2457 = vunpack.c.l.b16 %v2425
        %v2458 = vpack.c.b16 %v2443, %v2442
        %v2459 = vpack.c.b16 %v2445, %v2444
        %v2460 = vpack.c.b16 %v2447, %v2446
        %v2461 = vpack.c.b16 %v2449, %v2448
        %v2462 = vpack.c.b16 %v2451, %v2450
        %v2463 = vpack.c.b16 %v2453, %v2452
        %v2464 = vpack.c.b16 %v2455, %v2454
        %v2465 = vpack.c.b16 %v2457, %v2456
        %2474 = vmatprep.subr.bf16.mxu0 0
        %2475 = vmatpush1.bf16.msra.mxu0 %v2458
        %2476 = vmatprep.subr.bf16.mxu0 0
        %2477 = vmatpush1.bf16.msra.mxu0 %v2459
        %2478 = vmatprep.subr.bf16.mxu0 0
        %2479 = vmatpush1.bf16.msra.mxu0 %v2460
        %2480 = vmatprep.subr.bf16.mxu0 0
        %2481 = vmatpush1.bf16.msra.mxu0 %v2461
        %2482 = vmatprep.subr.bf16.mxu0 0
        %2483 = vmatpush1.bf16.msra.mxu0 %v2462
        %2484 = vmatprep.subr.bf16.mxu0 0
        %2485 = vmatpush1.bf16.msra.mxu0 %v2463
        %2486 = vmatprep.subr.bf16.mxu0 0
        %2487 = vmatpush1.bf16.msra.mxu0 %v2464
        %2488 = vmatprep.subr.bf16.mxu0 0
        %2489 = vmatpush1.bf16.msra.mxu0 %v2465
        %2490 = vmatprep.subr.bf16.mxu0 0
        %2491 = vmatpush1.bf16.msra.mxu0 0
        %2492 = vmatprep.subr.bf16.mxu0 0
        %2493 = vmatpush1.bf16.msra.mxu0 0
        %2494 = vmatprep.subr.bf16.mxu0 0
        %2495 = vmatpush1.bf16.msra.mxu0 0
        %2496 = vmatprep.subr.bf16.mxu0 0
        %2497 = vmatpush1.bf16.msra.mxu0 0
        %2498 = vmatprep.subr.bf16.mxu0 0
        %2499 = vmatpush1.bf16.msra.mxu0 0
        %2500 = vmatprep.subr.bf16.mxu0 0
        %2501 = vmatpush1.bf16.msra.mxu0 0
        %2502 = vmatprep.subr.bf16.mxu0 0
        %2503 = vmatpush1.bf16.msra.mxu0 0
        %2504 = vmatprep.subr.bf16.mxu0 0
        %2505 = vmatpush1.bf16.msra.mxu0 0
        %2506 = vmatprep.mubr.bf16.mxu0 0
        %2507 = vmatmul.mubr.bf16.gmra.mrb[0].mxu0 %v2401
        %v2508 = vpop.f32.mrb[0].mxu0
        %v2509 = vadd.f32 0.0, %v2508
        %v2510 = vpop.f32.mrb[0].mxu0
        %v2511 = vpop.f32.mrb[0].mxu0
        %v2512 = vadd.f32 0.0, %v2511
        %v2513 = vpop.f32.mrb[0].mxu0
        %2514 = vmatprep.mubr.bf16.mxu0 0
        %2515 = vmatmul.mubr.bf16.gmra.mrb[0].mxu0 %v2402
        %v2516 = vpop.f32.mrb[0].mxu0
        %v2517 = vadd.f32 0.0, %v2516
        %v2518 = vpop.f32.mrb[0].mxu0
        %v2519 = vpop.f32.mrb[0].mxu0
        %v2520 = vadd.f32 0.0, %v2519
        %v2521 = vpop.f32.mrb[0].mxu0
        %2522 = vmatprep.mubr.bf16.mxu0 0
        %2523 = vmatmul.mubr.bf16.gmra.mrb[0].mxu0 %v2403
        %v2524 = vpop.f32.mrb[0].mxu0
        %v2525 = vadd.f32 0.0, %v2524
        %v2526 = vpop.f32.mrb[0].mxu0
        %v2527 = vpop.f32.mrb[0].mxu0
        %v2528 = vadd.f32 0.0, %v2527
        %v2529 = vpop.f32.mrb[0].mxu0
        %2530 = vmatprep.mubr.bf16.mxu0 0
        %2531 = vmatmul.mubr.bf16.gmra.mrb[0].mxu0 %v2404
        %v2532 = vpop.f32.mrb[0].mxu0
        %v2533 = vadd.f32 0.0, %v2532
        %v2534 = vpop.f32.mrb[0].mxu0
        %v2535 = vpop.f32.mrb[0].mxu0
        %v2536 = vadd.f32 0.0, %v2535
        %v2537 = vpop.f32.mrb[0].mxu0
        %2538 = vmatprep.mubr.bf16.mxu0 0
        %2539 = vmatmul.mubr.bf16.gmra.mrb[0].mxu0 %v2405
        %v2540 = vpop.f32.mrb[0].mxu0
        %v2541 = vadd.f32 0.0, %v2540
        %v2542 = vpop.f32.mrb[0].mxu0
        %v2543 = vpop.f32.mrb[0].mxu0
        %v2544 = vadd.f32 0.0, %v2543
        %v2545 = vpop.f32.mrb[0].mxu0
        %2546 = vmatprep.mubr.bf16.mxu0 0
        %2547 = vmatmul.mubr.bf16.gmra.mrb[0].mxu0 %v2406
        %v2548 = vpop.f32.mrb[0].mxu0
        %v2549 = vadd.f32 0.0, %v2548
        %v2550 = vpop.f32.mrb[0].mxu0
        %v2551 = vpop.f32.mrb[0].mxu0
        %v2552 = vadd.f32 0.0, %v2551
        %v2553 = vpop.f32.mrb[0].mxu0
        %2554 = vmatprep.mubr.bf16.mxu0 0
        %2555 = vmatmul.mubr.bf16.gmra.mrb[0].mxu0 %v2407
        %v2556 = vpop.f32.mrb[0].mxu0
        %v2557 = vadd.f32 0.0, %v2556
        %v2558 = vpop.f32.mrb[0].mxu0
        %v2559 = vpop.f32.mrb[0].mxu0
        %v2560 = vadd.f32 0.0, %v2559
        %v2561 = vpop.f32.mrb[0].mxu0
        %2562 = vmatprep.mubr.bf16.mxu0 0
        %2563 = vmatmul.mubr.bf16.gmra.mrb[0].mxu0 %v2408
        %v2564 = vpop.f32.mrb[0].mxu0
        %v2565 = vadd.f32 0.0, %v2564
        %v2566 = vpop.f32.mrb[0].mxu0
        %v2567 = vpop.f32.mrb[0].mxu0
        %v2568 = vadd.f32 0.0, %v2567
        %v2569 = vpop.f32.mrb[0].mxu0
        %2570 = vdwg.mxu0
        %v2571 = vadd.f32 %v2385, %v2509
        %v2572 = vadd.f32 %v2386, %v2512
        %v2573 = vadd.f32 %v2387, %v2517
        %v2574 = vadd.f32 %v2388, %v2520
        %v2575 = vadd.f32 %v2389, %v2525
        %v2576 = vadd.f32 %v2390, %v2528
        %v2577 = vadd.f32 %v2391, %v2533
        %v2578 = vadd.f32 %v2392, %v2536
        %v2579 = vadd.f32 %v2393, %v2541
        %v2580 = vadd.f32 %v2394, %v2544
        %v2581 = vadd.f32 %v2395, %v2549
        %v2582 = vadd.f32 %v2396, %v2552
        %v2583 = vadd.f32 %v2397, %v2557
        %v2584 = vadd.f32 %v2398, %v2560
        %v2585 = vadd.f32 %v2399, %v2565
        %v2586 = vadd.f32 %v2400, %v2568
        %2587 = vst.msk [vmem:[%s2288] sm:$0xff] %vm1732, %v2571
        %2588 = vst.msk [vmem:[%s2288 + $0x8] sm:$0xff] %vm1732, %v2572
        %2589 = vst.msk [vmem:[%s2288 + $0x10] sm:$0xff] %vm1732, %v2573
        %2590 = vst.msk [vmem:[%s2288 + $0x18] sm:$0xff] %vm1732, %v2574
        %2591 = vst.msk [vmem:[%s2288 + $0x20] sm:$0xff] %vm1732, %v2575
        %2592 = vst.msk [vmem:[%s2288 + $0x28] sm:$0xff] %vm1732, %v2576
        %2593 = vst.msk [vmem:[%s2288 + $0x30] sm:$0xff] %vm1732, %v2577
        %2594 = vst.msk [vmem:[%s2288 + $0x38] sm:$0xff] %vm1732, %v2578
        %2595 = vst.msk [vmem:[%s2288 + $0x40] sm:$0xff] %vm1732, %v2579
        %2596 = vst.msk [vmem:[%s2288 + $0x48] sm:$0xff] %vm1732, %v2580
        %2597 = vst.msk [vmem:[%s2288 + $0x50] sm:$0xff] %vm1732, %v2581
        %2598 = vst.msk [vmem:[%s2288 + $0x58] sm:$0xff] %vm1732, %v2582
        %2599 = vst.msk [vmem:[%s2288 + $0x60] sm:$0xff] %vm1732, %v2583
        %2600 = vst.msk [vmem:[%s2288 + $0x68] sm:$0xff] %vm1732, %v2584
        %2601 = vst.msk [vmem:[%s2288 + $0x70] sm:$0xff] %vm1732, %v2585
        %2602 = vst.msk [vmem:[%s2288 + $0x78] sm:$0xff] %vm1732, %v2586
        %2603 = vst.msk [vmem:[%s1950] sm:$0xff] %vm1418, %v1999
        %2604 = vst.msk [vmem:[%s1950 + $0x8] sm:$0xff] %vm1418, %v2000
        %2605 = vst.msk [vmem:[%s1950 + $0x10] sm:$0xff] %vm1418, %v2001
        %2606 = vst.msk [vmem:[%s1950 + $0x18] sm:$0xff] %vm1418, %v2002
        %2607 = vst.msk [vmem:[%s1950 + $0x20] sm:$0xff] %vm1418, %v2003
        %2608 = vst.msk [vmem:[%s1950 + $0x28] sm:$0xff] %vm1418, %v2004
        %2609 = vst.msk [vmem:[%s1950 + $0x30] sm:$0xff] %vm1418, %v2005
        %2610 = vst.msk [vmem:[%s1950 + $0x38] sm:$0xff] %vm1418, %v2006
        %2611 = vst.msk [vmem:[%s1950 + $0x40] sm:$0xff] %vm1418, %v2007
        %2612 = vst.msk [vmem:[%s1950 + $0x48] sm:$0xff] %vm1418, %v2008
        %2613 = vst.msk [vmem:[%s1950 + $0x50] sm:$0xff] %vm1418, %v2009
        %2614 = vst.msk [vmem:[%s1950 + $0x58] sm:$0xff] %vm1418, %v2010
        %2615 = vst.msk [vmem:[%s1950 + $0x60] sm:$0xff] %vm1418, %v2011
        %2616 = vst.msk [vmem:[%s1950 + $0x68] sm:$0xff] %vm1418, %v2012
        %2617 = vst.msk [vmem:[%s1950 + $0x70] sm:$0xff] %vm1418, %v2013
        %2618 = vst.msk [vmem:[%s1950 + $0x78] sm:$0xff] %vm1418, %v2014
        %p2619 = scmp.eq.s32.totalorder %s20, 1
        // Predicated region
        $region192: #{spagat_forward.3} parent=170 // pred_check
          %p2620 = pneg %p2619
        $region193: #{spagat_forward.3} parent=170 // pred_check_branch
          %2622 = sbr.rel (%p2620) target = $region195
        $region194: #{spagat_forward.3} parent=170 // pred_region
          %v2623 = vld [vmem:[#allocation4] sm:$0xff]
          %v2624 = vld [vmem:[#allocation4 + $0x8] sm:$0xff]
          %v2625 = vld [vmem:[#allocation4 + $0x10] sm:$0xff]
          %v2626 = vld [vmem:[#allocation4 + $0x18] sm:$0xff]
          %v2627 = vld [vmem:[#allocation4 + $0x20] sm:$0xff]
          %v2628 = vld [vmem:[#allocation4 + $0x28] sm:$0xff]
          %v2629 = vld [vmem:[#allocation4 + $0x30] sm:$0xff]
          %v2630 = vld [vmem:[#allocation4 + $0x38] sm:$0xff]
          %v2631 = vld [vmem:[#allocation4 + $0x40] sm:$0xff]
          %v2632 = vld [vmem:[#allocation4 + $0x48] sm:$0xff]
          %v2633 = vld [vmem:[#allocation4 + $0x50] sm:$0xff]
          %v2634 = vld [vmem:[#allocation4 + $0x58] sm:$0xff]
          %v2635 = vld [vmem:[#allocation4 + $0x60] sm:$0xff]
          %v2636 = vld [vmem:[#allocation4 + $0x68] sm:$0xff]
          %v2637 = vld [vmem:[#allocation4 + $0x70] sm:$0xff]
          %v2638 = vld [vmem:[#allocation4 + $0x78] sm:$0xff]
          %v2639 = vld [vmem:[#allocation3] sm:$0xff]
          %v2640 = vld [vmem:[#allocation3 + $0x8] sm:$0xff]
          %v2641 = vld [vmem:[#allocation3 + $0x10] sm:$0xff]
          %v2642 = vld [vmem:[#allocation3 + $0x18] sm:$0xff]
          %v2643 = vld [vmem:[#allocation3 + $0x20] sm:$0xff]
          %v2644 = vld [vmem:[#allocation3 + $0x28] sm:$0xff]
          %v2645 = vld [vmem:[#allocation3 + $0x30] sm:$0xff]
          %v2646 = vld [vmem:[#allocation3 + $0x38] sm:$0xff]
          %v2647 = vld [vmem:[#allocation3 + $0x40] sm:$0xff]
          %v2648 = vld [vmem:[#allocation3 + $0x48] sm:$0xff]
          %v2649 = vld [vmem:[#allocation3 + $0x50] sm:$0xff]
          %v2650 = vld [vmem:[#allocation3 + $0x58] sm:$0xff]
          %v2651 = vld [vmem:[#allocation3 + $0x60] sm:$0xff]
          %v2652 = vld [vmem:[#allocation3 + $0x68] sm:$0xff]
          %v2653 = vld [vmem:[#allocation3 + $0x70] sm:$0xff]
          %v2654 = vld [vmem:[#allocation3 + $0x78] sm:$0xff]
          %v2655 = vmax.f32 %v2639, 1e-12
          %v2656 = vmax.f32 %v2640, 1e-12
          %v2657 = vmax.f32 %v2641, 1e-12
          %v2658 = vmax.f32 %v2642, 1e-12
          %v2659 = vmax.f32 %v2643, 1e-12
          %v2660 = vmax.f32 %v2644, 1e-12
          %v2661 = vmax.f32 %v2645, 1e-12
          %v2662 = vmax.f32 %v2646, 1e-12
          %v2663 = vmax.f32 %v2647, 1e-12
          %v2664 = vmax.f32 %v2648, 1e-12
          %v2665 = vmax.f32 %v2649, 1e-12
          %v2666 = vmax.f32 %v2650, 1e-12
          %v2667 = vmax.f32 %v2651, 1e-12
          %v2668 = vmax.f32 %v2652, 1e-12
          %v2669 = vmax.f32 %v2653, 1e-12
          %v2670 = vmax.f32 %v2654, 1e-12
          %2672 = vset.pattern.permute.xlu0 0
          %2673 = vperm.xlu0 %2672, %v2655
          %v2674 = vpop.permute.xlu0 %2673
          %2677 = vset.pattern.permute.xlu0 0
          %2678 = vperm.xlu0 %2677, %v2656
          %v2679 = vpop.permute.xlu0 %2678
          %2682 = vset.pattern.permute.xlu0 0
          %2683 = vperm.xlu0 %2682, %v2657
          %v2684 = vpop.permute.xlu0 %2683
          %2687 = vset.pattern.permute.xlu0 0
          %2688 = vperm.xlu0 %2687, %v2658
          %v2689 = vpop.permute.xlu0 %2688
          %2692 = vset.pattern.permute.xlu0 0
          %2693 = vperm.xlu0 %2692, %v2659
          %v2694 = vpop.permute.xlu0 %2693
          %2697 = vset.pattern.permute.xlu0 0
          %2698 = vperm.xlu0 %2697, %v2660
          %v2699 = vpop.permute.xlu0 %2698
          %2702 = vset.pattern.permute.xlu0 0
          %2703 = vperm.xlu0 %2702, %v2661
          %v2704 = vpop.permute.xlu0 %2703
          %2707 = vset.pattern.permute.xlu0 0
          %2708 = vperm.xlu0 %2707, %v2662
          %v2709 = vpop.permute.xlu0 %2708
          %2712 = vset.pattern.permute.xlu0 0
          %2713 = vperm.xlu0 %2712, %v2663
          %v2714 = vpop.permute.xlu0 %2713
          %2717 = vset.pattern.permute.xlu0 0
          %2718 = vperm.xlu0 %2717, %v2664
          %v2719 = vpop.permute.xlu0 %2718
          %2722 = vset.pattern.permute.xlu0 0
          %2723 = vperm.xlu0 %2722, %v2665
          %v2724 = vpop.permute.xlu0 %2723
          %2727 = vset.pattern.permute.xlu0 0
          %2728 = vperm.xlu0 %2727, %v2666
          %v2729 = vpop.permute.xlu0 %2728
          %2732 = vset.pattern.permute.xlu0 0
          %2733 = vperm.xlu0 %2732, %v2667
          %v2734 = vpop.permute.xlu0 %2733
          %2737 = vset.pattern.permute.xlu0 0
          %2738 = vperm.xlu0 %2737, %v2668
          %v2739 = vpop.permute.xlu0 %2738
          %2742 = vset.pattern.permute.xlu0 0
          %2743 = vperm.xlu0 %2742, %v2669
          %v2744 = vpop.permute.xlu0 %2743
          %2747 = vset.pattern.permute.xlu0 0
          %2748 = vperm.xlu0 %2747, %v2670
          %v2749 = vpop.permute.xlu0 %2748
          %v2751 = vrcp.pop %v2674
          %v2752 = vmul.f32 %v2623, %v2751
          %v2753 = vrcp.pop %v2679
          %v2754 = vmul.f32 %v2624, %v2753
          %v2755 = vrcp.pop %v2684
          %v2756 = vmul.f32 %v2625, %v2755
          %v2757 = vrcp.pop %v2689
          %v2758 = vmul.f32 %v2626, %v2757
          %v2759 = vrcp.pop %v2694
          %v2760 = vmul.f32 %v2627, %v2759
          %v2761 = vrcp.pop %v2699
          %v2762 = vmul.f32 %v2628, %v2761
          %v2763 = vrcp.pop %v2704
          %v2764 = vmul.f32 %v2629, %v2763
          %v2765 = vrcp.pop %v2709
          %v2766 = vmul.f32 %v2630, %v2765
          %v2767 = vrcp.pop %v2714
          %v2768 = vmul.f32 %v2631, %v2767
          %v2769 = vrcp.pop %v2719
          %v2770 = vmul.f32 %v2632, %v2769
          %v2771 = vrcp.pop %v2724
          %v2772 = vmul.f32 %v2633, %v2771
          %v2773 = vrcp.pop %v2729
          %v2774 = vmul.f32 %v2634, %v2773
          %v2775 = vrcp.pop %v2734
          %v2776 = vmul.f32 %v2635, %v2775
          %v2777 = vrcp.pop %v2739
          %v2778 = vmul.f32 %v2636, %v2777
          %v2779 = vrcp.pop %v2744
          %v2780 = vmul.f32 %v2637, %v2779
          %v2781 = vrcp.pop %v2749
          %v2782 = vmul.f32 %v2638, %v2781
          %v2783 = vld [vmem:[%s2288] sm:$0xff]
          %v2784 = vld [vmem:[%s2288 + $0x8] sm:$0xff]
          %v2785 = vld [vmem:[%s2288 + $0x10] sm:$0xff]
          %v2786 = vld [vmem:[%s2288 + $0x18] sm:$0xff]
          %v2787 = vld [vmem:[%s2288 + $0x20] sm:$0xff]
          %v2788 = vld [vmem:[%s2288 + $0x28] sm:$0xff]
          %v2789 = vld [vmem:[%s2288 + $0x30] sm:$0xff]
          %v2790 = vld [vmem:[%s2288 + $0x38] sm:$0xff]
          %v2791 = vld [vmem:[%s2288 + $0x40] sm:$0xff]
          %v2792 = vld [vmem:[%s2288 + $0x48] sm:$0xff]
          %v2793 = vld [vmem:[%s2288 + $0x50] sm:$0xff]
          %v2794 = vld [vmem:[%s2288 + $0x58] sm:$0xff]
          %v2795 = vld [vmem:[%s2288 + $0x60] sm:$0xff]
          %v2796 = vld [vmem:[%s2288 + $0x68] sm:$0xff]
          %v2797 = vld [vmem:[%s2288 + $0x70] sm:$0xff]
          %v2798 = vld [vmem:[%s2288 + $0x78] sm:$0xff]
          %v2799 = vld [vmem:[%s2191] sm:$0xff]
          %v2800 = vld [vmem:[%s2191 + $0x8] sm:$0xff]
          %v2801 = vld [vmem:[%s2191 + $0x10] sm:$0xff]
          %v2802 = vld [vmem:[%s2191 + $0x18] sm:$0xff]
          %v2803 = vld [vmem:[%s2191 + $0x20] sm:$0xff]
          %v2804 = vld [vmem:[%s2191 + $0x28] sm:$0xff]
          %v2805 = vld [vmem:[%s2191 + $0x30] sm:$0xff]
          %v2806 = vld [vmem:[%s2191 + $0x38] sm:$0xff]
          %v2807 = vld [vmem:[%s2191 + $0x40] sm:$0xff]
          %v2808 = vld [vmem:[%s2191 + $0x48] sm:$0xff]
          %v2809 = vld [vmem:[%s2191 + $0x50] sm:$0xff]
          %v2810 = vld [vmem:[%s2191 + $0x58] sm:$0xff]
          %v2811 = vld [vmem:[%s2191 + $0x60] sm:$0xff]
          %v2812 = vld [vmem:[%s2191 + $0x68] sm:$0xff]
          %v2813 = vld [vmem:[%s2191 + $0x70] sm:$0xff]
          %v2814 = vld [vmem:[%s2191 + $0x78] sm:$0xff]
          %v2815 = vmax.f32 %v2799, 1e-12
          %v2816 = vmax.f32 %v2800, 1e-12
          %v2817 = vmax.f32 %v2801, 1e-12
          %v2818 = vmax.f32 %v2802, 1e-12
          %v2819 = vmax.f32 %v2803, 1e-12
          %v2820 = vmax.f32 %v2804, 1e-12
          %v2821 = vmax.f32 %v2805, 1e-12
          %v2822 = vmax.f32 %v2806, 1e-12
          %v2823 = vmax.f32 %v2807, 1e-12
          %v2824 = vmax.f32 %v2808, 1e-12
          %v2825 = vmax.f32 %v2809, 1e-12
          %v2826 = vmax.f32 %v2810, 1e-12
          %v2827 = vmax.f32 %v2811, 1e-12
          %v2828 = vmax.f32 %v2812, 1e-12
          %v2829 = vmax.f32 %v2813, 1e-12
          %v2830 = vmax.f32 %v2814, 1e-12
          %2832 = vset.pattern.permute.xlu0 0
          %2833 = vperm.xlu0 %2832, %v2815
          %v2834 = vpop.permute.xlu0 %2833
          %2837 = vset.pattern.permute.xlu0 0
          %2838 = vperm.xlu0 %2837, %v2816
          %v2839 = vpop.permute.xlu0 %2838
          %2842 = vset.pattern.permute.xlu0 0
          %2843 = vperm.xlu0 %2842, %v2817
          %v2844 = vpop.permute.xlu0 %2843
          %2847 = vset.pattern.permute.xlu0 0
          %2848 = vperm.xlu0 %2847, %v2818
          %v2849 = vpop.permute.xlu0 %2848
          %2852 = vset.pattern.permute.xlu0 0
          %2853 = vperm.xlu0 %2852, %v2819
          %v2854 = vpop.permute.xlu0 %2853
          %2857 = vset.pattern.permute.xlu0 0
          %2858 = vperm.xlu0 %2857, %v2820
          %v2859 = vpop.permute.xlu0 %2858
          %2862 = vset.pattern.permute.xlu0 0
          %2863 = vperm.xlu0 %2862, %v2821
          %v2864 = vpop.permute.xlu0 %2863
          %2867 = vset.pattern.permute.xlu0 0
          %2868 = vperm.xlu0 %2867, %v2822
          %v2869 = vpop.permute.xlu0 %2868
          %2872 = vset.pattern.permute.xlu0 0
          %2873 = vperm.xlu0 %2872, %v2823
          %v2874 = vpop.permute.xlu0 %2873
          %2877 = vset.pattern.permute.xlu0 0
          %2878 = vperm.xlu0 %2877, %v2824
          %v2879 = vpop.permute.xlu0 %2878
          %2882 = vset.pattern.permute.xlu0 0
          %2883 = vperm.xlu0 %2882, %v2825
          %v2884 = vpop.permute.xlu0 %2883
          %2887 = vset.pattern.permute.xlu0 0
          %2888 = vperm.xlu0 %2887, %v2826
          %v2889 = vpop.permute.xlu0 %2888
          %2892 = vset.pattern.permute.xlu0 0
          %2893 = vperm.xlu0 %2892, %v2827
          %v2894 = vpop.permute.xlu0 %2893
          %2897 = vset.pattern.permute.xlu0 0
          %2898 = vperm.xlu0 %2897, %v2828
          %v2899 = vpop.permute.xlu0 %2898
          %2902 = vset.pattern.permute.xlu0 0
          %2903 = vperm.xlu0 %2902, %v2829
          %v2904 = vpop.permute.xlu0 %2903
          %2907 = vset.pattern.permute.xlu0 0
          %2908 = vperm.xlu0 %2907, %v2830
          %v2909 = vpop.permute.xlu0 %2908
          %v2911 = vrcp.pop %v2834
          %v2912 = vmul.f32 %v2783, %v2911
          %v2913 = vrcp.pop %v2839
          %v2914 = vmul.f32 %v2784, %v2913
          %v2915 = vrcp.pop %v2844
          %v2916 = vmul.f32 %v2785, %v2915
          %v2917 = vrcp.pop %v2849
          %v2918 = vmul.f32 %v2786, %v2917
          %v2919 = vrcp.pop %v2854
          %v2920 = vmul.f32 %v2787, %v2919
          %v2921 = vrcp.pop %v2859
          %v2922 = vmul.f32 %v2788, %v2921
          %v2923 = vrcp.pop %v2864
          %v2924 = vmul.f32 %v2789, %v2923
          %v2925 = vrcp.pop %v2869
          %v2926 = vmul.f32 %v2790, %v2925
          %v2927 = vrcp.pop %v2874
          %v2928 = vmul.f32 %v2791, %v2927
          %v2929 = vrcp.pop %v2879
          %v2930 = vmul.f32 %v2792, %v2929
          %v2931 = vrcp.pop %v2884
          %v2932 = vmul.f32 %v2793, %v2931
          %v2933 = vrcp.pop %v2889
          %v2934 = vmul.f32 %v2794, %v2933
          %v2935 = vrcp.pop %v2894
          %v2936 = vmul.f32 %v2795, %v2935
          %v2937 = vrcp.pop %v2899
          %v2938 = vmul.f32 %v2796, %v2937
          %v2939 = vrcp.pop %v2904
          %v2940 = vmul.f32 %v2797, %v2939
          %v2941 = vrcp.pop %v2909
          %v2942 = vmul.f32 %v2798, %v2941
          %v2943 = vadd.f32 %v2752, %v2912
          %v2944 = vadd.f32 %v2754, %v2914
          %v2945 = vadd.f32 %v2756, %v2916
          %v2946 = vadd.f32 %v2758, %v2918
          %v2947 = vadd.f32 %v2760, %v2920
          %v2948 = vadd.f32 %v2762, %v2922
          %v2949 = vadd.f32 %v2764, %v2924
          %v2950 = vadd.f32 %v2766, %v2926
          %v2951 = vadd.f32 %v2768, %v2928
          %v2952 = vadd.f32 %v2770, %v2930
          %v2953 = vadd.f32 %v2772, %v2932
          %v2954 = vadd.f32 %v2774, %v2934
          %v2955 = vadd.f32 %v2776, %v2936
          %v2956 = vadd.f32 %v2778, %v2938
          %v2957 = vadd.f32 %v2780, %v2940
          %v2958 = vadd.f32 %v2782, %v2942
          %v2959 = vmul.f32 %v2943, 0.5
          %v2960 = vmul.f32 %v2944, 0.5
          %v2961 = vmul.f32 %v2945, 0.5
          %v2962 = vmul.f32 %v2946, 0.5
          %v2963 = vmul.f32 %v2947, 0.5
          %v2964 = vmul.f32 %v2948, 0.5
          %v2965 = vmul.f32 %v2949, 0.5
          %v2966 = vmul.f32 %v2950, 0.5
          %v2967 = vmul.f32 %v2951, 0.5
          %v2968 = vmul.f32 %v2952, 0.5
          %v2969 = vmul.f32 %v2953, 0.5
          %v2970 = vmul.f32 %v2954, 0.5
          %v2971 = vmul.f32 %v2955, 0.5
          %v2972 = vmul.f32 %v2956, 0.5
          %v2973 = vmul.f32 %v2957, 0.5
          %v2974 = vmul.f32 %v2958, 0.5
          %vm2975 = vcmp.gt.f32.partialorder %v2959, 0.0
          %vm2976 = vcmp.gt.f32.partialorder %v2960, 0.0
          %vm2977 = vcmp.gt.f32.partialorder %v2961, 0.0
          %vm2978 = vcmp.gt.f32.partialorder %v2962, 0.0
          %vm2979 = vcmp.gt.f32.partialorder %v2963, 0.0
          %vm2980 = vcmp.gt.f32.partialorder %v2964, 0.0
          %vm2981 = vcmp.gt.f32.partialorder %v2965, 0.0
          %vm2982 = vcmp.gt.f32.partialorder %v2966, 0.0
          %vm2983 = vcmp.gt.f32.partialorder %v2967, 0.0
          %vm2984 = vcmp.gt.f32.partialorder %v2968, 0.0
          %vm2985 = vcmp.gt.f32.partialorder %v2969, 0.0
          %vm2986 = vcmp.gt.f32.partialorder %v2970, 0.0
          %vm2987 = vcmp.gt.f32.partialorder %v2971, 0.0
          %vm2988 = vcmp.gt.f32.partialorder %v2972, 0.0
          %vm2989 = vcmp.gt.f32.partialorder %v2973, 0.0
          %vm2990 = vcmp.gt.f32.partialorder %v2974, 0.0
          %v2991 = vmul.f32 %v2959, 1.442695
          %v2992 = vpow.pop %v2991
          %v2993 = vmul.f32 %v2960, 1.442695
          %v2994 = vpow.pop %v2993
          %v2995 = vmul.f32 %v2961, 1.442695
          %v2996 = vpow.pop %v2995
          %v2997 = vmul.f32 %v2962, 1.442695
          %v2998 = vpow.pop %v2997
          %v2999 = vmul.f32 %v2963, 1.442695
          %v3000 = vpow.pop %v2999
          %v3001 = vmul.f32 %v2964, 1.442695
          %v3002 = vpow.pop %v3001
          %v3003 = vmul.f32 %v2965, 1.442695
          %v3004 = vpow.pop %v3003
          %v3005 = vmul.f32 %v2966, 1.442695
          %v3006 = vpow.pop %v3005
          %v3007 = vmul.f32 %v2967, 1.442695
          %v3008 = vpow.pop %v3007
          %v3009 = vmul.f32 %v2968, 1.442695
          %v3010 = vpow.pop %v3009
          %v3011 = vmul.f32 %v2969, 1.442695
          %v3012 = vpow.pop %v3011
          %v3013 = vmul.f32 %v2970, 1.442695
          %v3014 = vpow.pop %v3013
          %v3015 = vmul.f32 %v2971, 1.442695
          %v3016 = vpow.pop %v3015
          %v3017 = vmul.f32 %v2972, 1.442695
          %v3018 = vpow.pop %v3017
          %v3019 = vmul.f32 %v2973, 1.442695
          %v3020 = vpow.pop %v3019
          %v3021 = vmul.f32 %v2974, 1.442695
          %v3022 = vpow.pop %v3021
          %v3023 = vsub.f32 %v2992, 1.0
          %v3024 = vsub.f32 %v2994, 1.0
          %v3025 = vsub.f32 %v2996, 1.0
          %v3026 = vsub.f32 %v2998, 1.0
          %v3027 = vsub.f32 %v3000, 1.0
          %v3028 = vsub.f32 %v3002, 1.0
          %v3029 = vsub.f32 %v3004, 1.0
          %v3030 = vsub.f32 %v3006, 1.0
          %v3031 = vsub.f32 %v3008, 1.0
          %v3032 = vsub.f32 %v3010, 1.0
          %v3033 = vsub.f32 %v3012, 1.0
          %v3034 = vsub.f32 %v3014, 1.0
          %v3035 = vsub.f32 %v3016, 1.0
          %v3036 = vsub.f32 %v3018, 1.0
          %v3037 = vsub.f32 %v3020, 1.0
          %v3038 = vsub.f32 %v3022, 1.0
          %v3039 = vsel %vm2975, %v2959, %v3023
          %v3040 = vsel %vm2976, %v2960, %v3024
          %v3041 = vsel %vm2977, %v2961, %v3025
          %v3042 = vsel %vm2978, %v2962, %v3026
          %v3043 = vsel %vm2979, %v2963, %v3027
          %v3044 = vsel %vm2980, %v2964, %v3028
          %v3045 = vsel %vm2981, %v2965, %v3029
          %v3046 = vsel %vm2982, %v2966, %v3030
          %v3047 = vsel %vm2983, %v2967, %v3031
          %v3048 = vsel %vm2984, %v2968, %v3032
          %v3049 = vsel %vm2985, %v2969, %v3033
          %v3050 = vsel %vm2986, %v2970, %v3034
          %v3051 = vsel %vm2987, %v2971, %v3035
          %v3052 = vsel %vm2988, %v2972, %v3036
          %v3053 = vsel %vm2989, %v2973, %v3037
          %v3054 = vsel %vm2990, %v2974, %v3038
          %v3055 = vsel %vm1732, %v3039, -inf
          %3056 = vmax.xlane.f32.xlu0 %v3055
          %v3057 = vpop.xlane.xlu0 %3056
          %v3058 = vsel %vm1732, %v3040, -inf
          %3059 = vmax.xlane.f32.xlu0 %v3058
          %v3060 = vpop.xlane.xlu0 %3059
          %v3061 = vsel %vm1732, %v3041, -inf
          %3062 = vmax.xlane.f32.xlu0 %v3061
          %v3063 = vpop.xlane.xlu0 %3062
          %v3064 = vsel %vm1732, %v3042, -inf
          %3065 = vmax.xlane.f32.xlu0 %v3064
          %v3066 = vpop.xlane.xlu0 %3065
          %v3067 = vsel %vm1732, %v3043, -inf
          %3068 = vmax.xlane.f32.xlu0 %v3067
          %v3069 = vpop.xlane.xlu0 %3068
          %v3070 = vsel %vm1732, %v3044, -inf
          %3071 = vmax.xlane.f32.xlu0 %v3070
          %v3072 = vpop.xlane.xlu0 %3071
          %v3073 = vsel %vm1732, %v3045, -inf
          %3074 = vmax.xlane.f32.xlu0 %v3073
          %v3075 = vpop.xlane.xlu0 %3074
          %v3076 = vsel %vm1732, %v3046, -inf
          %3077 = vmax.xlane.f32.xlu0 %v3076
          %v3078 = vpop.xlane.xlu0 %3077
          %v3079 = vsel %vm1732, %v3047, -inf
          %3080 = vmax.xlane.f32.xlu0 %v3079
          %v3081 = vpop.xlane.xlu0 %3080
          %v3082 = vsel %vm1732, %v3048, -inf
          %3083 = vmax.xlane.f32.xlu0 %v3082
          %v3084 = vpop.xlane.xlu0 %3083
          %v3085 = vsel %vm1732, %v3049, -inf
          %3086 = vmax.xlane.f32.xlu0 %v3085
          %v3087 = vpop.xlane.xlu0 %3086
          %v3088 = vsel %vm1732, %v3050, -inf
          %3089 = vmax.xlane.f32.xlu0 %v3088
          %v3090 = vpop.xlane.xlu0 %3089
          %v3091 = vsel %vm1732, %v3051, -inf
          %3092 = vmax.xlane.f32.xlu0 %v3091
          %v3093 = vpop.xlane.xlu0 %3092
          %v3094 = vsel %vm1732, %v3052, -inf
          %3095 = vmax.xlane.f32.xlu0 %v3094
          %v3096 = vpop.xlane.xlu0 %3095
          %v3097 = vsel %vm1732, %v3053, -inf
          %3098 = vmax.xlane.f32.xlu0 %v3097
          %v3099 = vpop.xlane.xlu0 %3098
          %v3100 = vsel %vm1732, %v3054, -inf
          %3101 = vmax.xlane.f32.xlu0 %v3100
          %v3102 = vpop.xlane.xlu0 %3101
          %v3103 = vsub.f32 %v3039, %v3057
          %v3104 = vsub.f32 %v3040, %v3060
          %v3105 = vsub.f32 %v3041, %v3063
          %v3106 = vsub.f32 %v3042, %v3066
          %v3107 = vsub.f32 %v3043, %v3069
          %v3108 = vsub.f32 %v3044, %v3072
          %v3109 = vsub.f32 %v3045, %v3075
          %v3110 = vsub.f32 %v3046, %v3078
          %v3111 = vsub.f32 %v3047, %v3081
          %v3112 = vsub.f32 %v3048, %v3084
          %v3113 = vsub.f32 %v3049, %v3087
          %v3114 = vsub.f32 %v3050, %v3090
          %v3115 = vsub.f32 %v3051, %v3093
          %v3116 = vsub.f32 %v3052, %v3096
          %v3117 = vsub.f32 %v3053, %v3099
          %v3118 = vsub.f32 %v3054, %v3102
          %v3119 = vmul.f32 %v3103, 1.442695
          %v3120 = vpow.pop %v3119
          %v3121 = vmul.f32 %v3104, 1.442695
          %v3122 = vpow.pop %v3121
          %v3123 = vmul.f32 %v3105, 1.442695
          %v3124 = vpow.pop %v3123
          %v3125 = vmul.f32 %v3106, 1.442695
          %v3126 = vpow.pop %v3125
          %v3127 = vmul.f32 %v3107, 1.442695
          %v3128 = vpow.pop %v3127
          %v3129 = vmul.f32 %v3108, 1.442695
          %v3130 = vpow.pop %v3129
          %v3131 = vmul.f32 %v3109, 1.442695
          %v3132 = vpow.pop %v3131
          %v3133 = vmul.f32 %v3110, 1.442695
          %v3134 = vpow.pop %v3133
          %v3135 = vmul.f32 %v3111, 1.442695
          %v3136 = vpow.pop %v3135
          %v3137 = vmul.f32 %v3112, 1.442695
          %v3138 = vpow.pop %v3137
          %v3139 = vmul.f32 %v3113, 1.442695
          %v3140 = vpow.pop %v3139
          %v3141 = vmul.f32 %v3114, 1.442695
          %v3142 = vpow.pop %v3141
          %v3143 = vmul.f32 %v3115, 1.442695
          %v3144 = vpow.pop %v3143
          %v3145 = vmul.f32 %v3116, 1.442695
          %v3146 = vpow.pop %v3145
          %v3147 = vmul.f32 %v3117, 1.442695
          %v3148 = vpow.pop %v3147
          %v3149 = vmul.f32 %v3118, 1.442695
          %v3150 = vpow.pop %v3149
          %v3151 = vsel %vm1732, %v3120, 0.0
          %3152 = vadd.xlane.f32.xlu0 %v3151
          %v3153 = vpop.xlane.xlu0 %3152
          %v3154 = vsel %vm1732, %v3122, 0.0
          %3155 = vadd.xlane.f32.xlu0 %v3154
          %v3156 = vpop.xlane.xlu0 %3155
          %v3157 = vsel %vm1732, %v3124, 0.0
          %3158 = vadd.xlane.f32.xlu0 %v3157
          %v3159 = vpop.xlane.xlu0 %3158
          %v3160 = vsel %vm1732, %v3126, 0.0
          %3161 = vadd.xlane.f32.xlu0 %v3160
          %v3162 = vpop.xlane.xlu0 %3161
          %v3163 = vsel %vm1732, %v3128, 0.0
          %3164 = vadd.xlane.f32.xlu0 %v3163
          %v3165 = vpop.xlane.xlu0 %3164
          %v3166 = vsel %vm1732, %v3130, 0.0
          %3167 = vadd.xlane.f32.xlu0 %v3166
          %v3168 = vpop.xlane.xlu0 %3167
          %v3169 = vsel %vm1732, %v3132, 0.0
          %3170 = vadd.xlane.f32.xlu0 %v3169
          %v3171 = vpop.xlane.xlu0 %3170
          %v3172 = vsel %vm1732, %v3134, 0.0
          %3173 = vadd.xlane.f32.xlu0 %v3172
          %v3174 = vpop.xlane.xlu0 %3173
          %v3175 = vsel %vm1732, %v3136, 0.0
          %3176 = vadd.xlane.f32.xlu0 %v3175
          %v3177 = vpop.xlane.xlu0 %3176
          %v3178 = vsel %vm1732, %v3138, 0.0
          %3179 = vadd.xlane.f32.xlu0 %v3178
          %v3180 = vpop.xlane.xlu0 %3179
          %v3181 = vsel %vm1732, %v3140, 0.0
          %3182 = vadd.xlane.f32.xlu0 %v3181
          %v3183 = vpop.xlane.xlu0 %3182
          %v3184 = vsel %vm1732, %v3142, 0.0
          %3185 = vadd.xlane.f32.xlu0 %v3184
          %v3186 = vpop.xlane.xlu0 %3185
          %v3187 = vsel %vm1732, %v3144, 0.0
          %3188 = vadd.xlane.f32.xlu0 %v3187
          %v3189 = vpop.xlane.xlu0 %3188
          %v3190 = vsel %vm1732, %v3146, 0.0
          %3191 = vadd.xlane.f32.xlu0 %v3190
          %v3192 = vpop.xlane.xlu0 %3191
          %v3193 = vsel %vm1732, %v3148, 0.0
          %3194 = vadd.xlane.f32.xlu0 %v3193
          %v3195 = vpop.xlane.xlu0 %3194
          %v3196 = vsel %vm1732, %v3150, 0.0
          %3197 = vadd.xlane.f32.xlu0 %v3196
          %v3198 = vpop.xlane.xlu0 %3197
          %v3199 = vlog2.pop %v3153
          %v3200 = vmul.f32 %v3199, 0.6931472
          %v3201 = vlog2.pop %v3156
          %v3202 = vmul.f32 %v3201, 0.6931472
          %v3203 = vlog2.pop %v3159
          %v3204 = vmul.f32 %v3203, 0.6931472
          %v3205 = vlog2.pop %v3162
          %v3206 = vmul.f32 %v3205, 0.6931472
          %v3207 = vlog2.pop %v3165
          %v3208 = vmul.f32 %v3207, 0.6931472
          %v3209 = vlog2.pop %v3168
          %v3210 = vmul.f32 %v3209, 0.6931472
          %v3211 = vlog2.pop %v3171
          %v3212 = vmul.f32 %v3211, 0.6931472
          %v3213 = vlog2.pop %v3174
          %v3214 = vmul.f32 %v3213, 0.6931472
          %v3215 = vlog2.pop %v3177
          %v3216 = vmul.f32 %v3215, 0.6931472
          %v3217 = vlog2.pop %v3180
          %v3218 = vmul.f32 %v3217, 0.6931472
          %v3219 = vlog2.pop %v3183
          %v3220 = vmul.f32 %v3219, 0.6931472
          %v3221 = vlog2.pop %v3186
          %v3222 = vmul.f32 %v3221, 0.6931472
          %v3223 = vlog2.pop %v3189
          %v3224 = vmul.f32 %v3223, 0.6931472
          %v3225 = vlog2.pop %v3192
          %v3226 = vmul.f32 %v3225, 0.6931472
          %v3227 = vlog2.pop %v3195
          %v3228 = vmul.f32 %v3227, 0.6931472
          %v3229 = vlog2.pop %v3198
          %v3230 = vmul.f32 %v3229, 0.6931472
          %v3231 = vsub.f32 %v3103, %v3200
          %v3232 = vsub.f32 %v3104, %v3202
          %v3233 = vsub.f32 %v3105, %v3204
          %v3234 = vsub.f32 %v3106, %v3206
          %v3235 = vsub.f32 %v3107, %v3208
          %v3236 = vsub.f32 %v3108, %v3210
          %v3237 = vsub.f32 %v3109, %v3212
          %v3238 = vsub.f32 %v3110, %v3214
          %v3239 = vsub.f32 %v3111, %v3216
          %v3240 = vsub.f32 %v3112, %v3218
          %v3241 = vsub.f32 %v3113, %v3220
          %v3242 = vsub.f32 %v3114, %v3222
          %v3243 = vsub.f32 %v3115, %v3224
          %v3244 = vsub.f32 %v3116, %v3226
          %v3245 = vsub.f32 %v3117, %v3228
          %v3246 = vsub.f32 %v3118, %v3230
          %3247 = vst.msk [vmem:[%s684] sm:$0xff] %vm1732, %v3231
          %3248 = vst.msk [vmem:[%s684 + $0x8] sm:$0xff] %vm1732, %v3232
          %3249 = vst.msk [vmem:[%s684 + $0x10] sm:$0xff] %vm1732, %v3233
          %3250 = vst.msk [vmem:[%s684 + $0x18] sm:$0xff] %vm1732, %v3234
          %3251 = vst.msk [vmem:[%s684 + $0x20] sm:$0xff] %vm1732, %v3235
          %3252 = vst.msk [vmem:[%s684 + $0x28] sm:$0xff] %vm1732, %v3236
          %3253 = vst.msk [vmem:[%s684 + $0x30] sm:$0xff] %vm1732, %v3237
          %3254 = vst.msk [vmem:[%s684 + $0x38] sm:$0xff] %vm1732, %v3238
          %3255 = vst.msk [vmem:[%s684 + $0x40] sm:$0xff] %vm1732, %v3239
          %3256 = vst.msk [vmem:[%s684 + $0x48] sm:$0xff] %vm1732, %v3240
          %3257 = vst.msk [vmem:[%s684 + $0x50] sm:$0xff] %vm1732, %v3241
          %3258 = vst.msk [vmem:[%s684 + $0x58] sm:$0xff] %vm1732, %v3242
          %3259 = vst.msk [vmem:[%s684 + $0x60] sm:$0xff] %vm1732, %v3243
          %3260 = vst.msk [vmem:[%s684 + $0x68] sm:$0xff] %vm1732, %v3244
          %3261 = vst.msk [vmem:[%s684 + $0x70] sm:$0xff] %vm1732, %v3245
          %3262 = vst.msk [vmem:[%s684 + $0x78] sm:$0xff] %vm1732, %v3246
        $region195: #{spagat_forward.3} parent=170 // pred_fallthru
          _
        %s3263 = smul.u32 16, %s19
        %p3264 = scmp.lt.s32.totalorder %s3263, 31
        %s3265 = scalar_select %p3264, %s3263, 31
        %s3266 = smul.addr %s3265, 8
        %s3267 = scalar_lea.vmem %s4, %s3266
        // Predicated region
        $region196: #{spagat_forward.3} parent=170 // pred_check
          %p3268 = pneg %p151
        $region197: #{spagat_forward.3} parent=170 // pred_check_branch
          %3270 = sbr.rel (%p3268) target = $region199
        $region198: #{spagat_forward.3} parent=170 // pred_region
          %s3271 = smul.u32 16, %s19
        $region199: #{spagat_forward.3} parent=170 // pred_fallthru
          _
      $region171: #{spagat_forward.3} parent=5 // pred_fallthru
        _
      %p3272 = scmp.le.s32.totalorder 2, %s10
      // Predicated region
      $region200: #{spagat_forward.3} parent=5 // pred_check
        %p3273 = pneg %p3272
      $region201: #{spagat_forward.3} parent=5 // pred_check_branch
        %3275 = sbr.rel (%p3273) target = $region203
      $region202: #{spagat_forward.3} parent=5 // pred_region
        %s3276 = ssub.s32 %s10, 2
        // Predicated region
        $region204: #{spagat_forward.3} parent=202 // pred_check
          %p3277 = pneg %p157
        $region205: #{spagat_forward.3} parent=202 // pred_check_branch
          %3279 = sbr.rel (%p3277) target = $region207
        $region206: #{spagat_forward.3} parent=202 // pred_region
          %s3280 = smul.u32 16, %s21
          %p3281 = scmp.lt.s32.totalorder %s3280, 31
          %s3282 = scalar_select %p3281, %s3280, 31
          %s3283 = smul.addr %s3282, 8
          %s3284 = scalar_lea.vmem %s4, %s3283
        $region207: #{spagat_forward.3} parent=202 // pred_fallthru
          _
      $region203: #{spagat_forward.3} parent=5 // pred_fallthru
        _
    $region6: #{spagat_forward.3} parent=1 // loop_footer
      %s14 = sadd.s32 1, %s10
    $region7: #{spagat_forward.3} parent=1 // loop_footer_branch
      %9 = sbr.rel target = $region3
    $region8: #{spagat_forward.3} parent=1 // loop_exit
      _

// kernel: spagat_forward.2
$region0: #{spagat_forward.2}
  #allocation0 [shape = 'u32[]', space=smem, size = 0x4, offset = 0x4, fixed_abs, tag = 'smem constant byte address 0x4 - core index']
  #allocation1 [shape = 'u32[144,128]{1,0:T(1,128)}', space=vmem, size = 0x12000, scoped, tag = 'internal scratch']
  #allocation2 [shape = 'f32[2,128,1]{2,1,0:T(8,128)}', space=vmem, size = 0x20000, scoped, tag = 'scratch operand']
  #allocation3 [shape = 'f32[2,128,1]{2,1,0:T(8,128)}', space=vmem, size = 0x20000, scoped, tag = 'scratch operand']
  #allocation4 [shape = 'f32[2,128,16]{2,1,0:T(8,128)}', space=vmem, size = 0x20000, scoped, tag = 'scratch operand']
  %s0 = inlined_call_operand.vmem [shape: s8[256,256], index: 0, kind: input, shape index: {}]
  %s1 = inlined_call_operand.vmem [shape: bf16[2,256,16], index: 1, kind: input, shape index: {}]
  %s2 = inlined_call_operand.vmem [shape: f32[2,256,1], index: 2, kind: input, shape index: {}]
  %s3 = inlined_call_operand.vmem [shape: f32[2,1,256], index: 3, kind: input, shape index: {}]
  %s4 = inlined_call_operand.vmem [shape: f32[256,32], index: 4, kind: output, shape index: {}]
  %s5 = sld [smem:[#allocation0]]
  $region208: #{spagat_forward.2} parent=0
    _
  %s7 = ssub.s32 1, %s5
  %s8 = scalar_select 0, %s7, %s5
  $region1: #{spagat_forward.2} parent=0
    #allocation5 [shape = 'u8[32768]{0}', space=vmem, size = 0x8000, scoped, tag = 'input window, operand 0']
    #allocation6 [shape = 'u8[131072]{0}', space=vmem, size = 0x20000, scoped, tag = 'input window, operand 1']
    #allocation7 [shape = 'u8[262144]{0}', space=vmem, size = 0x40000, scoped, tag = 'input window, operand 2']
    #allocation8 [shape = 'u8[2048]{0}', space=vmem, size = 0x800, scoped, tag = 'input window, operand 3']
    loop: start=0, step=1, limit=6
    $region2: #{spagat_forward.2} parent=1 // loop_pre_header
      _
    $region3: #{spagat_forward.2} parent=1 // loop_header
      %s10 = sphi 0, %s14
      %p11 = scmp.ge.s32.totalorder %s10, 6
      %s17 = sphi 0, %s29
      %s18 = sphi 0, %s25
      %s19 = sphi 0, %s17
      %s20 = sphi 0, %s18
      %s21 = sphi 0, %s19
      %s22 = sphi 0, %s20
      %s34 = sphi 0, %s36
      %s37 = sphi 0, %s34
      %s38 = sphi 0, %s37
      %s54 = sphi 0, %s38
      %s60 = sphi 0, %s62
      %s63 = sphi 0, %s60
      %s64 = sphi 0, %s63
      %s80 = sphi 0, %s64
      %s86 = sphi 0, %s88
      %s89 = sphi 0, %s86
      %s90 = sphi 0, %s89
      %s106 = sphi 0, %s90
      %s112 = sphi 0, %s114
      %s115 = sphi 0, %s112
      %s116 = sphi 0, %s115
      %s132 = sphi 0, %s116
      %s138 = sphi 0, %s140
      %s141 = sphi 0, %s138
      %s142 = sphi 0, %s141
      %s158 = sphi 0, %s142
    $region4: #{spagat_forward.2} parent=1 // loop_header_branch
      %13 = sbr.rel (%p11) target = $region8
    $region5: #{spagat_forward.2} parent=1 // loop_body
      %s15 = ssub.s32 %s10, 1
      %s16 = ssub.s32 %s10, 2
      %s23 = sadd.s32 1, %s18
      %p24 = scmp.ge.s32.totalorder %s23, 2
      %s25 = scalar_select %p24, 0, %s23
      %s26 = sadd.s32 1, %s17
      %s27 = scalar_select %p24, %s26, %s17
      %p28 = scmp.ge.s32.totalorder %s27, 2
      %s29 = scalar_select %p28, 0, %s27
      %s30 = ssub.s32 %s17, %s29
      %s31 = ssub.s32 %s18, %s25
      %s32 = sor.u32 %s30, %s31
      %p33 = scmp.eq.s32.totalorder %s32, 0
      %s35 = sadd.s32 %s34, 1
      %s36 = scalar_select %p33, %s34, %s35
      %p39 = pneg %p33
      %p40 = scmp.eq.s32.totalorder %s10, 3
      %p41 = por %p39, %p40
      %p42 = scmp.ne.s32.totalorder %s34, %s37
      %p43 = scmp.eq.s32.totalorder %s10, 0
      %p44 = por %p42, %p43
      %p45 = scmp.ne.s32.totalorder %s34, %s37
      %p46 = scmp.eq.s32.totalorder %s15, 3
      %p47 = por %p45, %p46
      %p48 = scmp.ne.s32.totalorder %s37, %s38
      %p49 = scmp.eq.s32.totalorder %s15, 0
      %p50 = por %p48, %p49
      %p51 = scmp.ne.s32.totalorder %s37, %s38
      %p52 = scmp.eq.s32.totalorder %s16, 3
      %p53 = por %p51, %p52
      %p55 = scmp.ne.s32.totalorder %s38, %s54
      %p56 = scmp.eq.s32.totalorder %s16, 0
      %p57 = por %p55, %p56
      %s58 = ssub.s32 %s18, %s25
      %p59 = scmp.eq.s32.totalorder %s58, 0
      %s61 = sadd.s32 %s60, 1
      %s62 = scalar_select %p59, %s60, %s61
      %p65 = pneg %p59
      %p66 = scmp.eq.s32.totalorder %s10, 3
      %p67 = por %p65, %p66
      %p68 = scmp.ne.s32.totalorder %s60, %s63
      %p69 = scmp.eq.s32.totalorder %s10, 0
      %p70 = por %p68, %p69
      %p71 = scmp.ne.s32.totalorder %s60, %s63
      %p72 = scmp.eq.s32.totalorder %s15, 3
      %p73 = por %p71, %p72
      %p74 = scmp.ne.s32.totalorder %s63, %s64
      %p75 = scmp.eq.s32.totalorder %s15, 0
      %p76 = por %p74, %p75
      %p77 = scmp.ne.s32.totalorder %s63, %s64
      %p78 = scmp.eq.s32.totalorder %s16, 3
      %p79 = por %p77, %p78
      %p81 = scmp.ne.s32.totalorder %s64, %s80
      %p82 = scmp.eq.s32.totalorder %s16, 0
      %p83 = por %p81, %p82
      %s84 = ssub.s32 %s17, %s29
      %p85 = scmp.eq.s32.totalorder %s84, 0
      %s87 = sadd.s32 %s86, 1
      %s88 = scalar_select %p85, %s86, %s87
      %p91 = pneg %p85
      %p92 = scmp.eq.s32.totalorder %s10, 3
      %p93 = por %p91, %p92
      %p94 = scmp.ne.s32.totalorder %s86, %s89
      %p95 = scmp.eq.s32.totalorder %s10, 0
      %p96 = por %p94, %p95
      %p97 = scmp.ne.s32.totalorder %s86, %s89
      %p98 = scmp.eq.s32.totalorder %s15, 3
      %p99 = por %p97, %p98
      %p100 = scmp.ne.s32.totalorder %s89, %s90
      %p101 = scmp.eq.s32.totalorder %s15, 0
      %p102 = por %p100, %p101
      %p103 = scmp.ne.s32.totalorder %s89, %s90
      %p104 = scmp.eq.s32.totalorder %s16, 3
      %p105 = por %p103, %p104
      %p107 = scmp.ne.s32.totalorder %s90, %s106
      %p108 = scmp.eq.s32.totalorder %s16, 0
      %p109 = por %p107, %p108
      %s110 = ssub.s32 %s18, %s25
      %p111 = scmp.eq.s32.totalorder %s110, 0
      %s113 = sadd.s32 %s112, 1
      %s114 = scalar_select %p111, %s112, %s113
      %p117 = pneg %p111
      %p118 = scmp.eq.s32.totalorder %s10, 3
      %p119 = por %p117, %p118
      %p120 = scmp.ne.s32.totalorder %s112, %s115
      %p121 = scmp.eq.s32.totalorder %s10, 0
      %p122 = por %p120, %p121
      %p123 = scmp.ne.s32.totalorder %s112, %s115
      %p124 = scmp.eq.s32.totalorder %s15, 3
      %p125 = por %p123, %p124
      %p126 = scmp.ne.s32.totalorder %s115, %s116
      %p127 = scmp.eq.s32.totalorder %s15, 0
      %p128 = por %p126, %p127
      %p129 = scmp.ne.s32.totalorder %s115, %s116
      %p130 = scmp.eq.s32.totalorder %s16, 3
      %p131 = por %p129, %p130
      %p133 = scmp.ne.s32.totalorder %s116, %s132
      %p134 = scmp.eq.s32.totalorder %s16, 0
      %p135 = por %p133, %p134
      %s136 = ssub.s32 %s17, %s29
      %p137 = scmp.eq.s32.totalorder %s136, 0
      %s139 = sadd.s32 %s138, 1
      %s140 = scalar_select %p137, %s138, %s139
      %p143 = pneg %p137
      %p144 = scmp.eq.s32.totalorder %s10, 3
      %p145 = por %p143, %p144
      %p146 = scmp.ne.s32.totalorder %s138, %s141
      %p147 = scmp.eq.s32.totalorder %s10, 0
      %p148 = por %p146, %p147
      %p149 = scmp.ne.s32.totalorder %s138, %s141
      %p150 = scmp.eq.s32.totalorder %s15, 3
      %p151 = por %p149, %p150
      %p152 = scmp.ne.s32.totalorder %s141, %s142
      %p153 = scmp.eq.s32.totalorder %s15, 0
      %p154 = por %p152, %p153
      %p155 = scmp.ne.s32.totalorder %s141, %s142
      %p156 = scmp.eq.s32.totalorder %s16, 3
      %p157 = por %p155, %p156
      %p159 = scmp.ne.s32.totalorder %s142, %s158
      %p160 = scmp.eq.s32.totalorder %s16, 0
      %p161 = por %p159, %p160
      %p162 = scmp.le.s32.totalorder 1, %s10
      %p163 = scmp.lt.s32.totalorder %s10, 5
      %p164 = pnand %p162, %p163
      %p165 = pneg %p164
      // Predicated region
      $region9: #{spagat_forward.2} parent=5 // pred_check
        _
      $region10: #{spagat_forward.2} parent=5 // pred_check_branch
        %167 = sbr.rel (%p164) target = $region12
      $region11: #{spagat_forward.2} parent=5 // pred_region
        %s168 = ssub.s32 %s10, 1
      $region12: #{spagat_forward.2} parent=5 // pred_fallthru
        _
      %p169 = scmp.lt.s32.totalorder %s10, 4
      // Predicated region
      $region13: #{spagat_forward.2} parent=5 // pred_check
        %p170 = pneg %p169
      $region14: #{spagat_forward.2} parent=5 // pred_check_branch
        %172 = sbr.rel (%p170) target = $region16
      $region15: #{spagat_forward.2} parent=5 // pred_region
        // Predicated region
        $region17: #{spagat_forward.2} parent=15 // pred_check
          %p173 = pneg %p44
        $region18: #{spagat_forward.2} parent=15 // pred_check_branch
          %175 = sbr.rel (%p173) target = $region20
        $region19: #{spagat_forward.2} parent=15 // pred_region
          %s176 = sand.u32 %s34, 1
          %s177 = sand.u32 %s34, 1
          %s178 = smul.addr %s177, 32
          %s179 = scalar_lea.vmem [#allocation5], %s178
          %s180 = smul.u32 4, %s17
          %s181 = smul.addr %s180, 2
          %s182 = sadd.s32 %s18, %s181
          %s183 = smul.addr %s182, 8
          %s184 = scalar_lea.vmem %s0, %s183
          // Predicated region
          $region21: #{spagat_forward.2} parent=19 // pred_check
            _
          $region22: #{spagat_forward.2} parent=19 // pred_check_branch
            %186 = sbr.rel (0) target = $region24
          $region23: #{spagat_forward.2} parent=19 // pred_region
            // Predicated region
            $region25: #{spagat_forward.2} parent=23 // pred_check
              _
            $region26: #{spagat_forward.2} parent=23 // pred_check_branch
              %188 = sbr.rel (0) target = $region28
            $region27: #{spagat_forward.2} parent=23 // pred_region
              // Predicated region
              $region40: #{spagat_forward.2} parent=27 // pred_check
                _
              $region41: #{spagat_forward.2} parent=27 // pred_check_branch
                %209 = sbr.rel (0) target = $region43
              $region42: #{spagat_forward.2} parent=27 // pred_region
                loop: start=0, step=1, limit=1
                $region44: #{spagat_forward.2} parent=42 // loop_pre_header
                  _
                $region45: #{spagat_forward.2} parent=42 // loop_header
                  %s211 = sphi 0, %s215
                  %p212 = scmp.ge.s32.totalorder %s211, 1
                  %s216 = sphi %s184, %s184
                  %s217 = sphi %s179, %s179
                $region46: #{spagat_forward.2} parent=42 // loop_header_branch
                  %214 = sbr.rel (%p212) target = $region50
                $region47: #{spagat_forward.2} parent=42 // loop_body
                  %v218 = vld [vmem:[%s216] sm:$0xff]
                  %219 = vst [vmem:[%s217] sm:$0xff] %v218
                  %v220 = vld [vmem:[%s216 + $0x10] sm:$0xff]
                  %221 = vst [vmem:[%s217 + $0x8] sm:$0xff] %v220
                  %v222 = vld [vmem:[%s216 + $0x20] sm:$0xff]
                  %223 = vst [vmem:[%s217 + $0x10] sm:$0xff] %v222
                  %v224 = vld [vmem:[%s216 + $0x30] sm:$0xff]
                  %225 = vst [vmem:[%s217 + $0x18] sm:$0xff] %v224
                $region48: #{spagat_forward.2} parent=42 // loop_footer
                  %s215 = sadd.s32 1, %s211
                $region49: #{spagat_forward.2} parent=42 // loop_footer_branch
                  %210 = sbr.rel target = $region45
                $region50: #{spagat_forward.2} parent=42 // loop_exit
                  _
              $region43: #{spagat_forward.2} parent=27 // pred_fallthru
                _
              // Predicated region
              $region51: #{spagat_forward.2} parent=27 // pred_check
                _
              $region52: #{spagat_forward.2} parent=27 // pred_check_branch
                %227 = sbr.rel target = $region54
              $region53: #{spagat_forward.2} parent=27 // pred_region
                _
              $region54: #{spagat_forward.2} parent=27 // pred_fallthru
                _
            $region28: #{spagat_forward.2} parent=23 // pred_fallthru
              _
            // Predicated region
            $region29: #{spagat_forward.2} parent=23 // pred_check
              _
            $region30: #{spagat_forward.2} parent=23 // pred_check_branch
              %190 = sbr.rel target = $region32
            $region31: #{spagat_forward.2} parent=23 // pred_region
              loop: start=0, step=1, limit=1
              $region33: #{spagat_forward.2} parent=31 // loop_pre_header
                _
              $region34: #{spagat_forward.2} parent=31 // loop_header
                %s193 = sphi 0, %s197
                %p194 = scmp.ge.s32.totalorder %s193, 1
                %s198 = sphi %s184, %s184
                %s199 = sphi %s179, %s179
              $region35: #{spagat_forward.2} parent=31 // loop_header_branch
                %196 = sbr.rel (%p194) target = $region39
              $region36: #{spagat_forward.2} parent=31 // loop_body
                %v200 = vld [vmem:[%s198] sm:$0xff]
                %201 = vst [vmem:[%s199] sm:$0xff] %v200
                %v202 = vld [vmem:[%s198 + $0x10] sm:$0xff]
                %203 = vst [vmem:[%s199 + $0x8] sm:$0xff] %v202
                %v204 = vld [vmem:[%s198 + $0x20] sm:$0xff]
                %205 = vst [vmem:[%s199 + $0x10] sm:$0xff] %v204
                %v206 = vld [vmem:[%s198 + $0x30] sm:$0xff]
                %207 = vst [vmem:[%s199 + $0x18] sm:$0xff] %v206
              $region37: #{spagat_forward.2} parent=31 // loop_footer
                %s197 = sadd.s32 1, %s193
              $region38: #{spagat_forward.2} parent=31 // loop_footer_branch
                %192 = sbr.rel target = $region34
              $region39: #{spagat_forward.2} parent=31 // loop_exit
                _
            $region32: #{spagat_forward.2} parent=23 // pred_fallthru
              _
          $region24: #{spagat_forward.2} parent=19 // pred_fallthru
            _
          %228 = vnop
        $region20: #{spagat_forward.2} parent=15 // pred_fallthru
          _
        // Predicated region
        $region55: #{spagat_forward.2} parent=15 // pred_check
          %p229 = pneg %p70
        $region56: #{spagat_forward.2} parent=15 // pred_check_branch
          %231 = sbr.rel (%p229) target = $region58
        $region57: #{spagat_forward.2} parent=15 // pred_region
          %s232 = sand.u32 %s60, 1
          %s233 = sand.u32 %s60, 1
          %s234 = smul.addr %s233, 128
          %s235 = scalar_lea.vmem [#allocation6], %s234
          %s236 = smul.u32 16, %s18
          %s237 = smul.addr %s236, 4
          %s238 = scalar_lea.vmem %s1, %s237
          // Predicated region
          $region59: #{spagat_forward.2} parent=57 // pred_check
            _
          $region60: #{spagat_forward.2} parent=57 // pred_check_branch
            %240 = sbr.rel (0) target = $region62
          $region61: #{spagat_forward.2} parent=57 // pred_region
            // Predicated region
            $region63: #{spagat_forward.2} parent=61 // pred_check
              _
            $region64: #{spagat_forward.2} parent=61 // pred_check_branch
              %242 = sbr.rel target = $region66
            $region65: #{spagat_forward.2} parent=61 // pred_region
              // Predicated region
              $region78: #{spagat_forward.2} parent=65 // pred_check
                _
              $region79: #{spagat_forward.2} parent=65 // pred_check_branch
                %319 = sbr.rel (0) target = $region81
              $region80: #{spagat_forward.2} parent=65 // pred_region
                loop: start=0, step=1, limit=1
                $region82: #{spagat_forward.2} parent=80 // loop_pre_header
                  _
                $region83: #{spagat_forward.2} parent=80 // loop_header
                  %s321 = sphi 0, %s325
                  %p322 = scmp.ge.s32.totalorder %s321, 1
                  %s326 = sphi %s238, %s238
                  %s327 = sphi %s235, %s235
                $region84: #{spagat_forward.2} parent=80 // loop_header_branch
                  %324 = sbr.rel (%p322) target = $region88
                $region85: #{spagat_forward.2} parent=80 // loop_body
                  _
                $region86: #{spagat_forward.2} parent=80 // loop_footer
                  %s325 = sadd.s32 1, %s321
                $region87: #{spagat_forward.2} parent=80 // loop_footer_branch
                  %320 = sbr.rel target = $region83
                $region88: #{spagat_forward.2} parent=80 // loop_exit
                  _
                loop: start=0, step=1, limit=1
                $region89: #{spagat_forward.2} parent=80 // loop_pre_header
                  _
                $region90: #{spagat_forward.2} parent=80 // loop_header
                  %s330 = sphi 0, %s334
                  %p331 = scmp.ge.s32.totalorder %s330, 1
                  %s335 = sphi %s238, %s238
                  %s336 = sphi %s235, %s235
                $region91: #{spagat_forward.2} parent=80 // loop_header_branch
                  %333 = sbr.rel (%p331) target = $region95
                $region92: #{spagat_forward.2} parent=80 // loop_body
                  %v337 = vld [vmem:[%s335] sm:$0xf]
                  %338 = vst [vmem:[%s336] sm:$0xf] %v337
                  %v339 = vld [vmem:[%s335 + $0x4] sm:$0xf]
                  %340 = vst [vmem:[%s336 + $0x4] sm:$0xf] %v339
                  %v341 = vld [vmem:[%s335 + $0x8] sm:$0xf]
                  %342 = vst [vmem:[%s336 + $0x8] sm:$0xf] %v341
                  %v343 = vld [vmem:[%s335 + $0xc] sm:$0xf]
                  %344 = vst [vmem:[%s336 + $0xc] sm:$0xf] %v343
                  %v345 = vld [vmem:[%s335 + $0x10] sm:$0xf]
                  %346 = vst [vmem:[%s336 + $0x10] sm:$0xf] %v345
                  %v347 = vld [vmem:[%s335 + $0x14] sm:$0xf]
                  %348 = vst [vmem:[%s336 + $0x14] sm:$0xf] %v347
                  %v349 = vld [vmem:[%s335 + $0x18] sm:$0xf]
                  %350 = vst [vmem:[%s336 + $0x18] sm:$0xf] %v349
                  %v351 = vld [vmem:[%s335 + $0x1c] sm:$0xf]
                  %352 = vst [vmem:[%s336 + $0x1c] sm:$0xf] %v351
                  %v353 = vld [vmem:[%s335 + $0x20] sm:$0xf]
                  %354 = vst [vmem:[%s336 + $0x20] sm:$0xf] %v353
                  %v355 = vld [vmem:[%s335 + $0x24] sm:$0xf]
                  %356 = vst [vmem:[%s336 + $0x24] sm:$0xf] %v355
                  %v357 = vld [vmem:[%s335 + $0x28] sm:$0xf]
                  %358 = vst [vmem:[%s336 + $0x28] sm:$0xf] %v357
                  %v359 = vld [vmem:[%s335 + $0x2c] sm:$0xf]
                  %360 = vst [vmem:[%s336 + $0x2c] sm:$0xf] %v359
                  %v361 = vld [vmem:[%s335 + $0x30] sm:$0xf]
                  %362 = vst [vmem:[%s336 + $0x30] sm:$0xf] %v361
                  %v363 = vld [vmem:[%s335 + $0x34] sm:$0xf]
                  %364 = vst [vmem:[%s336 + $0x34] sm:$0xf] %v363
                  %v365 = vld [vmem:[%s335 + $0x38] sm:$0xf]
                  %366 = vst [vmem:[%s336 + $0x38] sm:$0xf] %v365
                  %v367 = vld [vmem:[%s335 + $0x3c] sm:$0xf]
                  %368 = vst [vmem:[%s336 + $0x3c] sm:$0xf] %v367
                  %v369 = vld [vmem:[%s335 + $0x80] sm:$0xf]
                  %370 = vst [vmem:[%s336 + $0x40] sm:$0xf] %v369
                  %v371 = vld [vmem:[%s335 + $0x84] sm:$0xf]
                  %372 = vst [vmem:[%s336 + $0x44] sm:$0xf] %v371
                  %v373 = vld [vmem:[%s335 + $0x88] sm:$0xf]
                  %374 = vst [vmem:[%s336 + $0x48] sm:$0xf] %v373
                  %v375 = vld [vmem:[%s335 + $0x8c] sm:$0xf]
                  %376 = vst [vmem:[%s336 + $0x4c] sm:$0xf] %v375
                  %v377 = vld [vmem:[%s335 + $0x90] sm:$0xf]
                  %378 = vst [vmem:[%s336 + $0x50] sm:$0xf] %v377
                  %v379 = vld [vmem:[%s335 + $0x94] sm:$0xf]
                  %380 = vst [vmem:[%s336 + $0x54] sm:$0xf] %v379
                  %v381 = vld [vmem:[%s335 + $0x98] sm:$0xf]
                  %382 = vst [vmem:[%s336 + $0x58] sm:$0xf] %v381
                  %v383 = vld [vmem:[%s335 + $0x9c] sm:$0xf]
                  %384 = vst [vmem:[%s336 + $0x5c] sm:$0xf] %v383
                  %v385 = vld [vmem:[%s335 + $0xa0] sm:$0xf]
                  %386 = vst [vmem:[%s336 + $0x60] sm:$0xf] %v385
                  %v387 = vld [vmem:[%s335 + $0xa4] sm:$0xf]
                  %388 = vst [vmem:[%s336 + $0x64] sm:$0xf] %v387
                  %v389 = vld [vmem:[%s335 + $0xa8] sm:$0xf]
                  %390 = vst [vmem:[%s336 + $0x68] sm:$0xf] %v389
                  %v391 = vld [vmem:[%s335 + $0xac] sm:$0xf]
                  %392 = vst [vmem:[%s336 + $0x6c] sm:$0xf] %v391
                  %v393 = vld [vmem:[%s335 + $0xb0] sm:$0xf]
                  %394 = vst [vmem:[%s336 + $0x70] sm:$0xf] %v393
                  %v395 = vld [vmem:[%s335 + $0xb4] sm:$0xf]
                  %396 = vst [vmem:[%s336 + $0x74] sm:$0xf] %v395
                  %v397 = vld [vmem:[%s335 + $0xb8] sm:$0xf]
                  %398 = vst [vmem:[%s336 + $0x78] sm:$0xf] %v397
                  %v399 = vld [vmem:[%s335 + $0xbc] sm:$0xf]
                  %400 = vst [vmem:[%s336 + $0x7c] sm:$0xf] %v399
                $region93: #{spagat_forward.2} parent=80 // loop_footer
                  %s334 = sadd.s32 1, %s330
                $region94: #{spagat_forward.2} parent=80 // loop_footer_branch
                  %329 = sbr.rel target = $region90
                $region95: #{spagat_forward.2} parent=80 // loop_exit
                  _
              $region81: #{spagat_forward.2} parent=65 // pred_fallthru
                _
            $region66: #{spagat_forward.2} parent=61 // pred_fallthru
              _
            // Predicated region
            $region67: #{spagat_forward.2} parent=61 // pred_check
              _
            $region68: #{spagat_forward.2} parent=61 // pred_check_branch
              %244 = sbr.rel (0) target = $region70
            $region69: #{spagat_forward.2} parent=61 // pred_region
              loop: start=0, step=1, limit=1
              $region71: #{spagat_forward.2} parent=69 // loop_pre_header
                _
              $region72: #{spagat_forward.2} parent=69 // loop_header
                %s247 = sphi 0, %s251
                %p248 = scmp.ge.s32.totalorder %s247, 1
                %s252 = sphi %s238, %s238
                %s253 = sphi %s235, %s235
              $region73: #{spagat_forward.2} parent=69 // loop_header_branch
                %250 = sbr.rel (%p248) target = $region77
              $region74: #{spagat_forward.2} parent=69 // loop_body
                %v254 = vld [vmem:[%s252] sm:$0xf]
                %255 = vst [vmem:[%s253] sm:$0xf] %v254
                %v256 = vld [vmem:[%s252 + $0x4] sm:$0xf]
                %257 = vst [vmem:[%s253 + $0x4] sm:$0xf] %v256
                %v258 = vld [vmem:[%s252 + $0x8] sm:$0xf]
                %259 = vst [vmem:[%s253 + $0x8] sm:$0xf] %v258
                %v260 = vld [vmem:[%s252 + $0xc] sm:$0xf]
                %261 = vst [vmem:[%s253 + $0xc] sm:$0xf] %v260
                %v262 = vld [vmem:[%s252 + $0x10] sm:$0xf]
                %263 = vst [vmem:[%s253 + $0x10] sm:$0xf] %v262
                %v264 = vld [vmem:[%s252 + $0x14] sm:$0xf]
                %265 = vst [vmem:[%s253 + $0x14] sm:$0xf] %v264
                %v266 = vld [vmem:[%s252 + $0x18] sm:$0xf]
                %267 = vst [vmem:[%s253 + $0x18] sm:$0xf] %v266
                %v268 = vld [vmem:[%s252 + $0x1c] sm:$0xf]
                %269 = vst [vmem:[%s253 + $0x1c] sm:$0xf] %v268
                %v270 = vld [vmem:[%s252 + $0x20] sm:$0xf]
                %271 = vst [vmem:[%s253 + $0x20] sm:$0xf] %v270
                %v272 = vld [vmem:[%s252 + $0x24] sm:$0xf]
                %273 = vst [vmem:[%s253 + $0x24] sm:$0xf] %v272
                %v274 = vld [vmem:[%s252 + $0x28] sm:$0xf]
                %275 = vst [vmem:[%s253 + $0x28] sm:$0xf] %v274
                %v276 = vld [vmem:[%s252 + $0x2c] sm:$0xf]
                %277 = vst [vmem:[%s253 + $0x2c] sm:$0xf] %v276
                %v278 = vld [vmem:[%s252 + $0x30] sm:$0xf]
                %279 = vst [vmem:[%s253 + $0x30] sm:$0xf] %v278
                %v280 = vld [vmem:[%s252 + $0x34] sm:$0xf]
                %281 = vst [vmem:[%s253 + $0x34] sm:$0xf] %v280
                %v282 = vld [vmem:[%s252 + $0x38] sm:$0xf]
                %283 = vst [vmem:[%s253 + $0x38] sm:$0xf] %v282
                %v284 = vld [vmem:[%s252 + $0x3c] sm:$0xf]
                %285 = vst [vmem:[%s253 + $0x3c] sm:$0xf] %v284
                %v286 = vld [vmem:[%s252 + $0x80] sm:$0xf]
                %287 = vst [vmem:[%s253 + $0x40] sm:$0xf] %v286
                %v288 = vld [vmem:[%s252 + $0x84] sm:$0xf]
                %289 = vst [vmem:[%s253 + $0x44] sm:$0xf] %v288
                %v290 = vld [vmem:[%s252 + $0x88] sm:$0xf]
                %291 = vst [vmem:[%s253 + $0x48] sm:$0xf] %v290
                %v292 = vld [vmem:[%s252 + $0x8c] sm:$0xf]
                %293 = vst [vmem:[%s253 + $0x4c] sm:$0xf] %v292
                %v294 = vld [vmem:[%s252 + $0x90] sm:$0xf]
                %295 = vst [vmem:[%s253 + $0x50] sm:$0xf] %v294
                %v296 = vld [vmem:[%s252 + $0x94] sm:$0xf]
                %297 = vst [vmem:[%s253 + $0x54] sm:$0xf] %v296
                %v298 = vld [vmem:[%s252 + $0x98] sm:$0xf]
                %299 = vst [vmem:[%s253 + $0x58] sm:$0xf] %v298
                %v300 = vld [vmem:[%s252 + $0x9c] sm:$0xf]
                %301 = vst [vmem:[%s253 + $0x5c] sm:$0xf] %v300
                %v302 = vld [vmem:[%s252 + $0xa0] sm:$0xf]
                %303 = vst [vmem:[%s253 + $0x60] sm:$0xf] %v302
                %v304 = vld [vmem:[%s252 + $0xa4] sm:$0xf]
                %305 = vst [vmem:[%s253 + $0x64] sm:$0xf] %v304
                %v306 = vld [vmem:[%s252 + $0xa8] sm:$0xf]
                %307 = vst [vmem:[%s253 + $0x68] sm:$0xf] %v306
                %v308 = vld [vmem:[%s252 + $0xac] sm:$0xf]
                %309 = vst [vmem:[%s253 + $0x6c] sm:$0xf] %v308
                %v310 = vld [vmem:[%s252 + $0xb0] sm:$0xf]
                %311 = vst [vmem:[%s253 + $0x70] sm:$0xf] %v310
                %v312 = vld [vmem:[%s252 + $0xb4] sm:$0xf]
                %313 = vst [vmem:[%s253 + $0x74] sm:$0xf] %v312
                %v314 = vld [vmem:[%s252 + $0xb8] sm:$0xf]
                %315 = vst [vmem:[%s253 + $0x78] sm:$0xf] %v314
                %v316 = vld [vmem:[%s252 + $0xbc] sm:$0xf]
                %317 = vst [vmem:[%s253 + $0x7c] sm:$0xf] %v316
              $region75: #{spagat_forward.2} parent=69 // loop_footer
                %s251 = sadd.s32 1, %s247
              $region76: #{spagat_forward.2} parent=69 // loop_footer_branch
                %246 = sbr.rel target = $region72
              $region77: #{spagat_forward.2} parent=69 // loop_exit
                _
            $region70: #{spagat_forward.2} parent=61 // pred_fallthru
              _
          $region62: #{spagat_forward.2} parent=57 // pred_fallthru
            _
          %401 = vnop
        $region58: #{spagat_forward.2} parent=15 // pred_fallthru
          _
        // Predicated region
        $region96: #{spagat_forward.2} parent=15 // pred_check
          %p402 = pneg %p96
        $region97: #{spagat_forward.2} parent=15 // pred_check_branch
          %404 = sbr.rel (%p402) target = $region99
        $region98: #{spagat_forward.2} parent=15 // pred_region
          %s405 = sand.u32 %s86, 1
          %s406 = sand.u32 %s86, 1
          %s407 = smul.addr %s406, 256
          %s408 = scalar_lea.vmem [#allocation7], %s407
          %s409 = smul.u32 16, %s17
          %s410 = smul.addr %s409, 8
          %s411 = scalar_lea.vmem %s2, %s410
          // Predicated region
          $region100: #{spagat_forward.2} parent=98 // pred_check
            _
          $region101: #{spagat_forward.2} parent=98 // pred_check_branch
            %413 = sbr.rel (0) target = $region103
          $region102: #{spagat_forward.2} parent=98 // pred_region
            // Predicated region
            $region104: #{spagat_forward.2} parent=102 // pred_check
              _
            $region105: #{spagat_forward.2} parent=102 // pred_check_branch
              %415 = sbr.rel (0) target = $region107
            $region106: #{spagat_forward.2} parent=102 // pred_region
              // Predicated region
              $region119: #{spagat_forward.2} parent=106 // pred_check
                _
              $region120: #{spagat_forward.2} parent=106 // pred_check_branch
                %492 = sbr.rel (0) target = $region122
              $region121: #{spagat_forward.2} parent=106 // pred_region
                loop: start=0, step=1, limit=1
                $region123: #{spagat_forward.2} parent=121 // loop_pre_header
                  _
                $region124: #{spagat_forward.2} parent=121 // loop_header
                  %s494 = sphi 0, %s498
                  %p495 = scmp.ge.s32.totalorder %s494, 1
                  %s499 = sphi %s411, %s411
                  %s500 = sphi %s408, %s408
                $region125: #{spagat_forward.2} parent=121 // loop_header_branch
                  %497 = sbr.rel (%p495) target = $region129
                $region126: #{spagat_forward.2} parent=121 // loop_body
                  %v501 = vld [vmem:[%s499] sm:$0xff]
                  %502 = vst [vmem:[%s500] sm:$0xff] %v501
                  %v503 = vld [vmem:[%s499 + $0x8] sm:$0xff]
                  %504 = vst [vmem:[%s500 + $0x8] sm:$0xff] %v503
                  %v505 = vld [vmem:[%s499 + $0x10] sm:$0xff]
                  %506 = vst [vmem:[%s500 + $0x10] sm:$0xff] %v505
                  %v507 = vld [vmem:[%s499 + $0x18] sm:$0xff]
                  %508 = vst [vmem:[%s500 + $0x18] sm:$0xff] %v507
                  %v509 = vld [vmem:[%s499 + $0x20] sm:$0xff]
                  %510 = vst [vmem:[%s500 + $0x20] sm:$0xff] %v509
                  %v511 = vld [vmem:[%s499 + $0x28] sm:$0xff]
                  %512 = vst [vmem:[%s500 + $0x28] sm:$0xff] %v511
                  %v513 = vld [vmem:[%s499 + $0x30] sm:$0xff]
                  %514 = vst [vmem:[%s500 + $0x30] sm:$0xff] %v513
                  %v515 = vld [vmem:[%s499 + $0x38] sm:$0xff]
                  %516 = vst [vmem:[%s500 + $0x38] sm:$0xff] %v515
                  %v517 = vld [vmem:[%s499 + $0x40] sm:$0xff]
                  %518 = vst [vmem:[%s500 + $0x40] sm:$0xff] %v517
                  %v519 = vld [vmem:[%s499 + $0x48] sm:$0xff]
                  %520 = vst [vmem:[%s500 + $0x48] sm:$0xff] %v519
                  %v521 = vld [vmem:[%s499 + $0x50] sm:$0xff]
                  %522 = vst [vmem:[%s500 + $0x50] sm:$0xff] %v521
                  %v523 = vld [vmem:[%s499 + $0x58] sm:$0xff]
                  %524 = vst [vmem:[%s500 + $0x58] sm:$0xff] %v523
                  %v525 = vld [vmem:[%s499 + $0x60] sm:$0xff]
                  %526 = vst [vmem:[%s500 + $0x60] sm:$0xff] %v525
                  %v527 = vld [vmem:[%s499 + $0x68] sm:$0xff]
                  %528 = vst [vmem:[%s500 + $0x68] sm:$0xff] %v527
                  %v529 = vld [vmem:[%s499 + $0x70] sm:$0xff]
                  %530 = vst [vmem:[%s500 + $0x70] sm:$0xff] %v529
                  %v531 = vld [vmem:[%s499 + $0x78] sm:$0xff]
                  %532 = vst [vmem:[%s500 + $0x78] sm:$0xff] %v531
                  %v533 = vld [vmem:[%s499 + $0x100] sm:$0xff]
                  %534 = vst [vmem:[%s500 + $0x80] sm:$0xff] %v533
                  %v535 = vld [vmem:[%s499 + $0x108] sm:$0xff]
                  %536 = vst [vmem:[%s500 + $0x88] sm:$0xff] %v535
                  %v537 = vld [vmem:[%s499 + $0x110] sm:$0xff]
                  %538 = vst [vmem:[%s500 + $0x90] sm:$0xff] %v537
                  %v539 = vld [vmem:[%s499 + $0x118] sm:$0xff]
                  %540 = vst [vmem:[%s500 + $0x98] sm:$0xff] %v539
                  %v541 = vld [vmem:[%s499 + $0x120] sm:$0xff]
                  %542 = vst [vmem:[%s500 + $0xa0] sm:$0xff] %v541
                  %v543 = vld [vmem:[%s499 + $0x128] sm:$0xff]
                  %544 = vst [vmem:[%s500 + $0xa8] sm:$0xff] %v543
                  %v545 = vld [vmem:[%s499 + $0x130] sm:$0xff]
                  %546 = vst [vmem:[%s500 + $0xb0] sm:$0xff] %v545
                  %v547 = vld [vmem:[%s499 + $0x138] sm:$0xff]
                  %548 = vst [vmem:[%s500 + $0xb8] sm:$0xff] %v547
                  %v549 = vld [vmem:[%s499 + $0x140] sm:$0xff]
                  %550 = vst [vmem:[%s500 + $0xc0] sm:$0xff] %v549
                  %v551 = vld [vmem:[%s499 + $0x148] sm:$0xff]
                  %552 = vst [vmem:[%s500 + $0xc8] sm:$0xff] %v551
                  %v553 = vld [vmem:[%s499 + $0x150] sm:$0xff]
                  %554 = vst [vmem:[%s500 + $0xd0] sm:$0xff] %v553
                  %v555 = vld [vmem:[%s499 + $0x158] sm:$0xff]
                  %556 = vst [vmem:[%s500 + $0xd8] sm:$0xff] %v555
                  %v557 = vld [vmem:[%s499 + $0x160] sm:$0xff]
                  %558 = vst [vmem:[%s500 + $0xe0] sm:$0xff] %v557
                  %v559 = vld [vmem:[%s499 + $0x168] sm:$0xff]
                  %560 = vst [vmem:[%s500 + $0xe8] sm:$0xff] %v559
                  %v561 = vld [vmem:[%s499 + $0x170] sm:$0xff]
                  %562 = vst [vmem:[%s500 + $0xf0] sm:$0xff] %v561
                  %v563 = vld [vmem:[%s499 + $0x178] sm:$0xff]
                  %564 = vst [vmem:[%s500 + $0xf8] sm:$0xff] %v563
                $region127: #{spagat_forward.2} parent=121 // loop_footer
                  %s498 = sadd.s32 1, %s494
                $region128: #{spagat_forward.2} parent=121 // loop_footer_branch
                  %493 = sbr.rel target = $region124
                $region129: #{spagat_forward.2} parent=121 // loop_exit
                  _
              $region122: #{spagat_forward.2} parent=106 // pred_fallthru
                _
              // Predicated region
              $region130: #{spagat_forward.2} parent=106 // pred_check
                _
              $region131: #{spagat_forward.2} parent=106 // pred_check_branch
                %566 = sbr.rel target = $region133
              $region132: #{spagat_forward.2} parent=106 // pred_region
                _
              $region133: #{spagat_forward.2} parent=106 // pred_fallthru
                _
            $region107: #{spagat_forward.2} parent=102 // pred_fallthru
              _
            // Predicated region
            $region108: #{spagat_forward.2} parent=102 // pred_check
              _
            $region109: #{spagat_forward.2} parent=102 // pred_check_branch
              %417 = sbr.rel target = $region111
            $region110: #{spagat_forward.2} parent=102 // pred_region
              loop: start=0, step=1, limit=1
              $region112: #{spagat_forward.2} parent=110 // loop_pre_header
                _
              $region113: #{spagat_forward.2} parent=110 // loop_header
                %s420 = sphi 0, %s424
                %p421 = scmp.ge.s32.totalorder %s420, 1
                %s425 = sphi %s411, %s411
                %s426 = sphi %s408, %s408
              $region114: #{spagat_forward.2} parent=110 // loop_header_branch
                %423 = sbr.rel (%p421) target = $region118
              $region115: #{spagat_forward.2} parent=110 // loop_body
                %v427 = vld [vmem:[%s425] sm:$0xff]
                %428 = vst [vmem:[%s426] sm:$0xff] %v427
                %v429 = vld [vmem:[%s425 + $0x8] sm:$0xff]
                %430 = vst [vmem:[%s426 + $0x8] sm:$0xff] %v429
                %v431 = vld [vmem:[%s425 + $0x10] sm:$0xff]
                %432 = vst [vmem:[%s426 + $0x10] sm:$0xff] %v431
                %v433 = vld [vmem:[%s425 + $0x18] sm:$0xff]
                %434 = vst [vmem:[%s426 + $0x18] sm:$0xff] %v433
                %v435 = vld [vmem:[%s425 + $0x20] sm:$0xff]
                %436 = vst [vmem:[%s426 + $0x20] sm:$0xff] %v435
                %v437 = vld [vmem:[%s425 + $0x28] sm:$0xff]
                %438 = vst [vmem:[%s426 + $0x28] sm:$0xff] %v437
                %v439 = vld [vmem:[%s425 + $0x30] sm:$0xff]
                %440 = vst [vmem:[%s426 + $0x30] sm:$0xff] %v439
                %v441 = vld [vmem:[%s425 + $0x38] sm:$0xff]
                %442 = vst [vmem:[%s426 + $0x38] sm:$0xff] %v441
                %v443 = vld [vmem:[%s425 + $0x40] sm:$0xff]
                %444 = vst [vmem:[%s426 + $0x40] sm:$0xff] %v443
                %v445 = vld [vmem:[%s425 + $0x48] sm:$0xff]
                %446 = vst [vmem:[%s426 + $0x48] sm:$0xff] %v445
                %v447 = vld [vmem:[%s425 + $0x50] sm:$0xff]
                %448 = vst [vmem:[%s426 + $0x50] sm:$0xff] %v447
                %v449 = vld [vmem:[%s425 + $0x58] sm:$0xff]
                %450 = vst [vmem:[%s426 + $0x58] sm:$0xff] %v449
                %v451 = vld [vmem:[%s425 + $0x60] sm:$0xff]
                %452 = vst [vmem:[%s426 + $0x60] sm:$0xff] %v451
                %v453 = vld [vmem:[%s425 + $0x68] sm:$0xff]
                %454 = vst [vmem:[%s426 + $0x68] sm:$0xff] %v453
                %v455 = vld [vmem:[%s425 + $0x70] sm:$0xff]
                %456 = vst [vmem:[%s426 + $0x70] sm:$0xff] %v455
                %v457 = vld [vmem:[%s425 + $0x78] sm:$0xff]
                %458 = vst [vmem:[%s426 + $0x78] sm:$0xff] %v457
                %v459 = vld [vmem:[%s425 + $0x100] sm:$0xff]
                %460 = vst [vmem:[%s426 + $0x80] sm:$0xff] %v459
                %v461 = vld [vmem:[%s425 + $0x108] sm:$0xff]
                %462 = vst [vmem:[%s426 + $0x88] sm:$0xff] %v461
                %v463 = vld [vmem:[%s425 + $0x110] sm:$0xff]
                %464 = vst [vmem:[%s426 + $0x90] sm:$0xff] %v463
                %v465 = vld [vmem:[%s425 + $0x118] sm:$0xff]
                %466 = vst [vmem:[%s426 + $0x98] sm:$0xff] %v465
                %v467 = vld [vmem:[%s425 + $0x120] sm:$0xff]
                %468 = vst [vmem:[%s426 + $0xa0] sm:$0xff] %v467
                %v469 = vld [vmem:[%s425 + $0x128] sm:$0xff]
                %470 = vst [vmem:[%s426 + $0xa8] sm:$0xff] %v469
                %v471 = vld [vmem:[%s425 + $0x130] sm:$0xff]
                %472 = vst [vmem:[%s426 + $0xb0] sm:$0xff] %v471
                %v473 = vld [vmem:[%s425 + $0x138] sm:$0xff]
                %474 = vst [vmem:[%s426 + $0xb8] sm:$0xff] %v473
                %v475 = vld [vmem:[%s425 + $0x140] sm:$0xff]
                %476 = vst [vmem:[%s426 + $0xc0] sm:$0xff] %v475
                %v477 = vld [vmem:[%s425 + $0x148] sm:$0xff]
                %478 = vst [vmem:[%s426 + $0xc8] sm:$0xff] %v477
                %v479 = vld [vmem:[%s425 + $0x150] sm:$0xff]
                %480 = vst [vmem:[%s426 + $0xd0] sm:$0xff] %v479
                %v481 = vld [vmem:[%s425 + $0x158] sm:$0xff]
                %482 = vst [vmem:[%s426 + $0xd8] sm:$0xff] %v481
                %v483 = vld [vmem:[%s425 + $0x160] sm:$0xff]
                %484 = vst [vmem:[%s426 + $0xe0] sm:$0xff] %v483
                %v485 = vld [vmem:[%s425 + $0x168] sm:$0xff]
                %486 = vst [vmem:[%s426 + $0xe8] sm:$0xff] %v485
                %v487 = vld [vmem:[%s425 + $0x170] sm:$0xff]
                %488 = vst [vmem:[%s426 + $0xf0] sm:$0xff] %v487
                %v489 = vld [vmem:[%s425 + $0x178] sm:$0xff]
                %490 = vst [vmem:[%s426 + $0xf8] sm:$0xff] %v489
              $region116: #{spagat_forward.2} parent=110 // loop_footer
                %s424 = sadd.s32 1, %s420
              $region117: #{spagat_forward.2} parent=110 // loop_footer_branch
                %419 = sbr.rel target = $region113
              $region118: #{spagat_forward.2} parent=110 // loop_exit
                _
            $region111: #{spagat_forward.2} parent=102 // pred_fallthru
              _
          $region103: #{spagat_forward.2} parent=98 // pred_fallthru
            _
          %567 = vnop
        $region99: #{spagat_forward.2} parent=15 // pred_fallthru
          _
        // Predicated region
        $region134: #{spagat_forward.2} parent=15 // pred_check
          %p568 = pneg %p122
        $region135: #{spagat_forward.2} parent=15 // pred_check_branch
          %570 = sbr.rel (%p568) target = $region137
        $region136: #{spagat_forward.2} parent=15 // pred_region
          %s571 = sand.u32 %s112, 1
          %s572 = sand.u32 %s112, 1
          %s573 = smul.addr %s572, 2
          %s574 = scalar_lea.vmem [#allocation8], %s573
          %s575 = scalar_lea.vmem %s3, %s18
          // Predicated region
          $region138: #{spagat_forward.2} parent=136 // pred_check
            _
          $region139: #{spagat_forward.2} parent=136 // pred_check_branch
            %577 = sbr.rel (0) target = $region141
          $region140: #{spagat_forward.2} parent=136 // pred_region
            // Predicated region
            $region142: #{spagat_forward.2} parent=140 // pred_check
              _
            $region143: #{spagat_forward.2} parent=140 // pred_check_branch
              %579 = sbr.rel target = $region145
            $region144: #{spagat_forward.2} parent=140 // pred_region
              // Predicated region
              $region157: #{spagat_forward.2} parent=144 // pred_check
                _
              $region158: #{spagat_forward.2} parent=144 // pred_check_branch
                %596 = sbr.rel (0) target = $region160
              $region159: #{spagat_forward.2} parent=144 // pred_region
                loop: start=0, step=1, limit=1
                $region161: #{spagat_forward.2} parent=159 // loop_pre_header
                  _
                $region162: #{spagat_forward.2} parent=159 // loop_header
                  %s599 = sphi 0, %s603
                  %p600 = scmp.ge.s32.totalorder %s599, 1
                  %s604 = sphi %s575, %s575
                  %s605 = sphi %s574, %s574
                $region163: #{spagat_forward.2} parent=159 // loop_header_branch
                  %602 = sbr.rel (%p600) target = $region167
                $region164: #{spagat_forward.2} parent=159 // loop_body
                  %v606 = vld [vmem:[%s604] sm:$0x1]
                  %607 = vst [vmem:[%s605] sm:$0x1] %v606
                  %v608 = vld [vmem:[%s604 + $0x2] sm:$0x1]
                  %609 = vst [vmem:[%s605 + $0x1] sm:$0x1] %v608
                $region165: #{spagat_forward.2} parent=159 // loop_footer
                  %s603 = sadd.s32 1, %s599
                $region166: #{spagat_forward.2} parent=159 // loop_footer_branch
                  %598 = sbr.rel target = $region162
                $region167: #{spagat_forward.2} parent=159 // loop_exit
                  _
              $region160: #{spagat_forward.2} parent=144 // pred_fallthru
                _
            $region145: #{spagat_forward.2} parent=140 // pred_fallthru
              _
            // Predicated region
            $region146: #{spagat_forward.2} parent=140 // pred_check
              _
            $region147: #{spagat_forward.2} parent=140 // pred_check_branch
              %581 = sbr.rel (0) target = $region149
            $region148: #{spagat_forward.2} parent=140 // pred_region
              loop: start=0, step=1, limit=1
              $region150: #{spagat_forward.2} parent=148 // loop_pre_header
                _
              $region151: #{spagat_forward.2} parent=148 // loop_header
                %s584 = sphi 0, %s588
                %p585 = scmp.ge.s32.totalorder %s584, 1
                %s589 = sphi %s575, %s575
                %s590 = sphi %s574, %s574
              $region152: #{spagat_forward.2} parent=148 // loop_header_branch
                %587 = sbr.rel (%p585) target = $region156
              $region153: #{spagat_forward.2} parent=148 // loop_body
                %v591 = vld [vmem:[%s589] sm:$0x1]
                %592 = vst [vmem:[%s590] sm:$0x1] %v591
                %v593 = vld [vmem:[%s589 + $0x2] sm:$0x1]
                %594 = vst [vmem:[%s590 + $0x1] sm:$0x1] %v593
              $region154: #{spagat_forward.2} parent=148 // loop_footer
                %s588 = sadd.s32 1, %s584
              $region155: #{spagat_forward.2} parent=148 // loop_footer_branch
                %583 = sbr.rel target = $region151
              $region156: #{spagat_forward.2} parent=148 // loop_exit
                _
            $region149: #{spagat_forward.2} parent=140 // pred_fallthru
              _
          $region141: #{spagat_forward.2} parent=136 // pred_fallthru
            _
          %610 = vnop
        $region137: #{spagat_forward.2} parent=15 // pred_fallthru
          _
      $region16: #{spagat_forward.2} parent=5 // pred_fallthru
        _
      %p611 = scmp.le.s32.totalorder 1, %s10
      %p612 = scmp.lt.s32.totalorder %s10, 5
      %p613 = pnand %p611, %p612
      %p614 = pneg %p613
      // Predicated region
      $region168: #{spagat_forward.2} parent=5 // pred_check
        _
      $region169: #{spagat_forward.2} parent=5 // pred_check_branch
        %616 = sbr.rel (%p613) target = $region171
      $region170: #{spagat_forward.2} parent=5 // pred_region
        %s617 = ssub.s32 %s10, 1
        %s618 = sand.u32 %s37, 1
        %s619 = sand.u32 %s37, 1
        %s620 = smul.addr %s619, 32
        %s621 = scalar_lea.vmem [#allocation5], %s620
        // Predicated region
        $region172: #{spagat_forward.2} parent=170 // pred_check
          %p622 = pneg %p50
        $region173: #{spagat_forward.2} parent=170 // pred_check_branch
          %624 = sbr.rel (%p622) target = $region175
        $region174: #{spagat_forward.2} parent=170 // pred_region
          _
        $region175: #{spagat_forward.2} parent=170 // pred_fallthru
          _
        %s625 = sand.u32 %s63, 1
        %s626 = sand.u32 %s63, 1
        %s627 = smul.addr %s626, 128
        %s628 = scalar_lea.vmem [#allocation6], %s627
        // Predicated region
        $region176: #{spagat_forward.2} parent=170 // pred_check
          %p629 = pneg %p76
        $region177: #{spagat_forward.2} parent=170 // pred_check_branch
          %631 = sbr.rel (%p629) target = $region179
        $region178: #{spagat_forward.2} parent=170 // pred_region
          _
        $region179: #{spagat_forward.2} parent=170 // pred_fallthru
          _
        %s632 = sand.u32 %s89, 1
        %s633 = sand.u32 %s89, 1
        %s634 = smul.addr %s633, 256
        %s635 = scalar_lea.vmem [#allocation7], %s634
        // Predicated region
        $region180: #{spagat_forward.2} parent=170 // pred_check
          %p636 = pneg %p102
        $region181: #{spagat_forward.2} parent=170 // pred_check_branch
          %638 = sbr.rel (%p636) target = $region183
        $region182: #{spagat_forward.2} parent=170 // pred_region
          _
        $region183: #{spagat_forward.2} parent=170 // pred_fallthru
          _
        %s639 = sand.u32 %s115, 1
        %s640 = sand.u32 %s115, 1
        %s641 = smul.addr %s640, 2
        %s642 = scalar_lea.vmem [#allocation8], %s641
        // Predicated region
        $region184: #{spagat_forward.2} parent=170 // pred_check
          %p643 = pneg %p128
        $region185: #{spagat_forward.2} parent=170 // pred_check_branch
          %645 = sbr.rel (%p643) target = $region187
        $region186: #{spagat_forward.2} parent=170 // pred_region
          _
        $region187: #{spagat_forward.2} parent=170 // pred_fallthru
          _
        %s646 = sand.u32 %s37, 1
        %s647 = sand.u32 %s37, 1
        %s648 = smul.addr %s647, 32
        %s649 = scalar_lea.vmem [#allocation5], %s648
        %p650 = pneg %p50
        %p651 = pneg %p47
        %s652 = sand.u32 %s63, 1
        %s653 = sand.u32 %s63, 1
        %s654 = smul.addr %s653, 128
        %s655 = scalar_lea.vmem [#allocation6], %s654
        %p656 = pneg %p76
        %p657 = pneg %p73
        %s658 = sand.u32 %s89, 1
        %s659 = sand.u32 %s89, 1
        %s660 = smul.addr %s659, 256
        %s661 = scalar_lea.vmem [#allocation7], %s660
        %p662 = pneg %p102
        %p663 = pneg %p99
        %s664 = sand.u32 %s115, 1
        %s665 = sand.u32 %s115, 1
        %s666 = smul.addr %s665, 2
        %s667 = scalar_lea.vmem [#allocation8], %s666
        %p668 = pneg %p128
        %p669 = pneg %p125
        %p670 = pneg %p154
        %p671 = pneg %p151
        %s672 = smul.u32 16, %s19
        %p673 = scmp.lt.s32.totalorder %s672, 31
        %s674 = scalar_select %p673, %s672, 31
        %s675 = smul.addr %s674, 8
        %s676 = scalar_lea.vmem %s4, %s675
        %s677 = smul.u32 4, %s19
        %s678 = smul.u32 16, %s20
        %s679 = smul.u32 16, %s19
        %s680 = smul.u32 16, %s19
        %p681 = scmp.lt.s32.totalorder %s680, 31
        %s682 = scalar_select %p681, %s680, 31
        %s683 = smul.addr %s682, 8
        %s684 = scalar_lea.vmem %s4, %s683
        %s685 = smul.u32 16, %s19
        %p689 = scmp.eq.s32.totalorder %s20, 0
        // Predicated region
        $region188: #{spagat_forward.2} parent=170 // pred_check
          %p690 = pneg %p689
        $region189: #{spagat_forward.2} parent=170 // pred_check_branch
          %692 = sbr.rel (%p690) target = $region191
        $region190: #{spagat_forward.2} parent=170 // pred_region
          %vm693 = vcmask 7168
          %694 = vst.msk [vmem:[#allocation2] sm:$0xff] %vm693, -1e+30
          %695 = vst.msk [vmem:[#allocation2 + $0x8] sm:$0xff] %vm693, -1e+30
          %696 = vst.msk [vmem:[#allocation2 + $0x10] sm:$0xff] %vm693, -1e+30
          %697 = vst.msk [vmem:[#allocation2 + $0x18] sm:$0xff] %vm693, -1e+30
          %698 = vst.msk [vmem:[#allocation2 + $0x20] sm:$0xff] %vm693, -1e+30
          %699 = vst.msk [vmem:[#allocation2 + $0x28] sm:$0xff] %vm693, -1e+30
          %700 = vst.msk [vmem:[#allocation2 + $0x30] sm:$0xff] %vm693, -1e+30
          %701 = vst.msk [vmem:[#allocation2 + $0x38] sm:$0xff] %vm693, -1e+30
          %702 = vst.msk [vmem:[#allocation2 + $0x40] sm:$0xff] %vm693, -1e+30
          %703 = vst.msk [vmem:[#allocation2 + $0x48] sm:$0xff] %vm693, -1e+30
          %704 = vst.msk [vmem:[#allocation2 + $0x50] sm:$0xff] %vm693, -1e+30
          %705 = vst.msk [vmem:[#allocation2 + $0x58] sm:$0xff] %vm693, -1e+30
          %706 = vst.msk [vmem:[#allocation2 + $0x60] sm:$0xff] %vm693, -1e+30
          %707 = vst.msk [vmem:[#allocation2 + $0x68] sm:$0xff] %vm693, -1e+30
          %708 = vst.msk [vmem:[#allocation2 + $0x70] sm:$0xff] %vm693, -1e+30
          %709 = vst.msk [vmem:[#allocation2 + $0x78] sm:$0xff] %vm693, -1e+30
          %710 = vst.msk [vmem:[#allocation2 + $0x80] sm:$0xff] %vm693, -1e+30
          %711 = vst.msk [vmem:[#allocation2 + $0x88] sm:$0xff] %vm693, -1e+30
          %712 = vst.msk [vmem:[#allocation2 + $0x90] sm:$0xff] %vm693, -1e+30
          %713 = vst.msk [vmem:[#allocation2 + $0x98] sm:$0xff] %vm693, -1e+30
          %714 = vst.msk [vmem:[#allocation2 + $0xa0] sm:$0xff] %vm693, -1e+30
          %715 = vst.msk [vmem:[#allocation2 + $0xa8] sm:$0xff] %vm693, -1e+30
          %716 = vst.msk [vmem:[#allocation2 + $0xb0] sm:$0xff] %vm693, -1e+30
          %717 = vst.msk [vmem:[#allocation2 + $0xb8] sm:$0xff] %vm693, -1e+30
          %718 = vst.msk [vmem:[#allocation2 + $0xc0] sm:$0xff] %vm693, -1e+30
          %719 = vst.msk [vmem:[#allocation2 + $0xc8] sm:$0xff] %vm693, -1e+30
          %720 = vst.msk [vmem:[#allocation2 + $0xd0] sm:$0xff] %vm693, -1e+30
          %721 = vst.msk [vmem:[#allocation2 + $0xd8] sm:$0xff] %vm693, -1e+30
          %722 = vst.msk [vmem:[#allocation2 + $0xe0] sm:$0xff] %vm693, -1e+30
          %723 = vst.msk [vmem:[#allocation2 + $0xe8] sm:$0xff] %vm693, -1e+30
          %724 = vst.msk [vmem:[#allocation2 + $0xf0] sm:$0xff] %vm693, -1e+30
          %725 = vst.msk [vmem:[#allocation2 + $0xf8] sm:$0xff] %vm693, -1e+30
          %726 = vst.msk [vmem:[#allocation3] sm:$0xff] %vm693, 0.0
          %727 = vst.msk [vmem:[#allocation3 + $0x8] sm:$0xff] %vm693, 0.0
          %728 = vst.msk [vmem:[#allocation3 + $0x10] sm:$0xff] %vm693, 0.0
          %729 = vst.msk [vmem:[#allocation3 + $0x18] sm:$0xff] %vm693, 0.0
          %730 = vst.msk [vmem:[#allocation3 + $0x20] sm:$0xff] %vm693, 0.0
          %731 = vst.msk [vmem:[#allocation3 + $0x28] sm:$0xff] %vm693, 0.0
          %732 = vst.msk [vmem:[#allocation3 + $0x30] sm:$0xff] %vm693, 0.0
          %733 = vst.msk [vmem:[#allocation3 + $0x38] sm:$0xff] %vm693, 0.0
          %734 = vst.msk [vmem:[#allocation3 + $0x40] sm:$0xff] %vm693, 0.0
          %735 = vst.msk [vmem:[#allocation3 + $0x48] sm:$0xff] %vm693, 0.0
          %736 = vst.msk [vmem:[#allocation3 + $0x50] sm:$0xff] %vm693, 0.0
          %737 = vst.msk [vmem:[#allocation3 + $0x58] sm:$0xff] %vm693, 0.0
          %738 = vst.msk [vmem:[#allocation3 + $0x60] sm:$0xff] %vm693, 0.0
          %739 = vst.msk [vmem:[#allocation3 + $0x68] sm:$0xff] %vm693, 0.0
          %740 = vst.msk [vmem:[#allocation3 + $0x70] sm:$0xff] %vm693, 0.0
          %741 = vst.msk [vmem:[#allocation3 + $0x78] sm:$0xff] %vm693, 0.0
          %742 = vst.msk [vmem:[#allocation3 + $0x80] sm:$0xff] %vm693, 0.0
          %743 = vst.msk [vmem:[#allocation3 + $0x88] sm:$0xff] %vm693, 0.0
          %744 = vst.msk [vmem:[#allocation3 + $0x90] sm:$0xff] %vm693, 0.0
          %745 = vst.msk [vmem:[#allocation3 + $0x98] sm:$0xff] %vm693, 0.0
          %746 = vst.msk [vmem:[#allocation3 + $0xa0] sm:$0xff] %vm693, 0.0
          %747 = vst.msk [vmem:[#allocation3 + $0xa8] sm:$0xff] %vm693, 0.0
          %748 = vst.msk [vmem:[#allocation3 + $0xb0] sm:$0xff] %vm693, 0.0
          %749 = vst.msk [vmem:[#allocation3 + $0xb8] sm:$0xff] %vm693, 0.0
          %750 = vst.msk [vmem:[#allocation3 + $0xc0] sm:$0xff] %vm693, 0.0
          %751 = vst.msk [vmem:[#allocation3 + $0xc8] sm:$0xff] %vm693, 0.0
          %752 = vst.msk [vmem:[#allocation3 + $0xd0] sm:$0xff] %vm693, 0.0
          %753 = vst.msk [vmem:[#allocation3 + $0xd8] sm:$0xff] %vm693, 0.0
          %754 = vst.msk [vmem:[#allocation3 + $0xe0] sm:$0xff] %vm693, 0.0
          %755 = vst.msk [vmem:[#allocation3 + $0xe8] sm:$0xff] %vm693, 0.0
          %756 = vst.msk [vmem:[#allocation3 + $0xf0] sm:$0xff] %vm693, 0.0
          %757 = vst.msk [vmem:[#allocation3 + $0xf8] sm:$0xff] %vm693, 0.0
          %vm758 = vcmask 130048
          %759 = vst.msk [vmem:[#allocation4] sm:$0xff] %vm758, 0.0
          %760 = vst.msk [vmem:[#allocation4 + $0x8] sm:$0xff] %vm758, 0.0
          %761 = vst.msk [vmem:[#allocation4 + $0x10] sm:$0xff] %vm758, 0.0
          %762 = vst.msk [vmem:[#allocation4 + $0x18] sm:$0xff] %vm758, 0.0
          %763 = vst.msk [vmem:[#allocation4 + $0x20] sm:$0xff] %vm758, 0.0
          %764 = vst.msk [vmem:[#allocation4 + $0x28] sm:$0xff] %vm758, 0.0
          %765 = vst.msk [vmem:[#allocation4 + $0x30] sm:$0xff] %vm758, 0.0
          %766 = vst.msk [vmem:[#allocation4 + $0x38] sm:$0xff] %vm758, 0.0
          %767 = vst.msk [vmem:[#allocation4 + $0x40] sm:$0xff] %vm758, 0.0
          %768 = vst.msk [vmem:[#allocation4 + $0x48] sm:$0xff] %vm758, 0.0
          %769 = vst.msk [vmem:[#allocation4 + $0x50] sm:$0xff] %vm758, 0.0
          %770 = vst.msk [vmem:[#allocation4 + $0x58] sm:$0xff] %vm758, 0.0
          %771 = vst.msk [vmem:[#allocation4 + $0x60] sm:$0xff] %vm758, 0.0
          %772 = vst.msk [vmem:[#allocation4 + $0x68] sm:$0xff] %vm758, 0.0
          %773 = vst.msk [vmem:[#allocation4 + $0x70] sm:$0xff] %vm758, 0.0
          %774 = vst.msk [vmem:[#allocation4 + $0x78] sm:$0xff] %vm758, 0.0
          %775 = vst.msk [vmem:[#allocation4 + $0x80] sm:$0xff] %vm758, 0.0
          %776 = vst.msk [vmem:[#allocation4 + $0x88] sm:$0xff] %vm758, 0.0
          %777 = vst.msk [vmem:[#allocation4 + $0x90] sm:$0xff] %vm758, 0.0
          %778 = vst.msk [vmem:[#allocation4 + $0x98] sm:$0xff] %vm758, 0.0
          %779 = vst.msk [vmem:[#allocation4 + $0xa0] sm:$0xff] %vm758, 0.0
          %780 = vst.msk [vmem:[#allocation4 + $0xa8] sm:$0xff] %vm758, 0.0
          %781 = vst.msk [vmem:[#allocation4 + $0xb0] sm:$0xff] %vm758, 0.0
          %782 = vst.msk [vmem:[#allocation4 + $0xb8] sm:$0xff] %vm758, 0.0
          %783 = vst.msk [vmem:[#allocation4 + $0xc0] sm:$0xff] %vm758, 0.0
          %784 = vst.msk [vmem:[#allocation4 + $0xc8] sm:$0xff] %vm758, 0.0
          %785 = vst.msk [vmem:[#allocation4 + $0xd0] sm:$0xff] %vm758, 0.0
          %786 = vst.msk [vmem:[#allocation4 + $0xd8] sm:$0xff] %vm758, 0.0
          %787 = vst.msk [vmem:[#allocation4 + $0xe0] sm:$0xff] %vm758, 0.0
          %788 = vst.msk [vmem:[#allocation4 + $0xe8] sm:$0xff] %vm758, 0.0
          %789 = vst.msk [vmem:[#allocation4 + $0xf0] sm:$0xff] %vm758, 0.0
          %790 = vst.msk [vmem:[#allocation4 + $0xf8] sm:$0xff] %vm758, 0.0
        $region191: #{spagat_forward.2} parent=170 // pred_fallthru
          _
        %v791 = vld [vmem:[%s621] sm:$0xff]
        %v792 = vld [vmem:[%s621 + $0x8] sm:$0xff]
        %v793 = vld [vmem:[%s621 + $0x10] sm:$0xff]
        %v794 = vld [vmem:[%s621 + $0x18] sm:$0xff]
        %vm795 = vnez %v791
        %vm796 = vnez %v792
        %vm797 = vnez %v793
        %vm798 = vnez %v794
        %v799 = vld [vmem:[%s635] sm:$0xff]
        %v800 = vld [vmem:[%s635 + $0x8] sm:$0xff]
        %v801 = vld [vmem:[%s635 + $0x10] sm:$0xff]
        %v802 = vld [vmem:[%s635 + $0x18] sm:$0xff]
        %v803 = vld [vmem:[%s635 + $0x20] sm:$0xff]
        %v804 = vld [vmem:[%s635 + $0x28] sm:$0xff]
        %v805 = vld [vmem:[%s635 + $0x30] sm:$0xff]
        %v806 = vld [vmem:[%s635 + $0x38] sm:$0xff]
        %v807 = vld [vmem:[%s635 + $0x40] sm:$0xff]
        %v808 = vld [vmem:[%s635 + $0x48] sm:$0xff]
        %v809 = vld [vmem:[%s635 + $0x50] sm:$0xff]
        %v810 = vld [vmem:[%s635 + $0x58] sm:$0xff]
        %v811 = vld [vmem:[%s635 + $0x60] sm:$0xff]
        %v812 = vld [vmem:[%s635 + $0x68] sm:$0xff]
        %v813 = vld [vmem:[%s635 + $0x70] sm:$0xff]
        %v814 = vld [vmem:[%s635 + $0x78] sm:$0xff]
        %v815 = vld [vmem:[%s642] sm:$0x1]
        %817 = vset.pattern.permute.xlu0 0
        %818 = vperm.xlu0 %817, %v799
        %v819 = vpop.permute.xlu0 %818
        %822 = vset.pattern.permute.xlu0 0
        %823 = vperm.xlu0 %822, %v800
        %v824 = vpop.permute.xlu0 %823
        %827 = vset.pattern.permute.xlu0 0
        %828 = vperm.xlu0 %827, %v801
        %v829 = vpop.permute.xlu0 %828
        %832 = vset.pattern.permute.xlu0 0
        %833 = vperm.xlu0 %832, %v802
        %v834 = vpop.permute.xlu0 %833
        %837 = vset.pattern.permute.xlu0 0
        %838 = vperm.xlu0 %837, %v803
        %v839 = vpop.permute.xlu0 %838
        %842 = vset.pattern.permute.xlu0 0
        %843 = vperm.xlu0 %842, %v804
        %v844 = vpop.permute.xlu0 %843
        %847 = vset.pattern.permute.xlu0 0
        %848 = vperm.xlu0 %847, %v805
        %v849 = vpop.permute.xlu0 %848
        %852 = vset.pattern.permute.xlu0 0
        %853 = vperm.xlu0 %852, %v806
        %v854 = vpop.permute.xlu0 %853
        %857 = vset.pattern.permute.xlu0 0
        %858 = vperm.xlu0 %857, %v807
        %v859 = vpop.permute.xlu0 %858
        %862 = vset.pattern.permute.xlu0 0
        %863 = vperm.xlu0 %862, %v808
        %v864 = vpop.permute.xlu0 %863
        %867 = vset.pattern.permute.xlu0 0
        %868 = vperm.xlu0 %867, %v809
        %v869 = vpop.permute.xlu0 %868
        %872 = vset.pattern.permute.xlu0 0
        %873 = vperm.xlu0 %872, %v810
        %v874 = vpop.permute.xlu0 %873
        %877 = vset.pattern.permute.xlu0 0
        %878 = vperm.xlu0 %877, %v811
        %v879 = vpop.permute.xlu0 %878
        %882 = vset.pattern.permute.xlu0 0
        %883 = vperm.xlu0 %882, %v812
        %v884 = vpop.permute.xlu0 %883
        %887 = vset.pattern.permute.xlu0 0
        %888 = vperm.xlu0 %887, %v813
        %v889 = vpop.permute.xlu0 %888
        %892 = vset.pattern.permute.xlu0 0
        %893 = vperm.xlu0 %892, %v814
        %v894 = vpop.permute.xlu0 %893
        %v897 = vlaneseq
        %v898 = vshrl.u32 %v897, 7
        %v899 = vsub.s32 0, %v898
        %v900 = vrot.slane %v815, %v899
        %v902 = vadd.f32 %v819, %v900
        %v903 = vadd.f32 %v824, %v900
        %v904 = vadd.f32 %v829, %v900
        %v905 = vadd.f32 %v834, %v900
        %v906 = vadd.f32 %v839, %v900
        %v907 = vadd.f32 %v844, %v900
        %v908 = vadd.f32 %v849, %v900
        %v909 = vadd.f32 %v854, %v900
        %v910 = vadd.f32 %v859, %v900
        %v911 = vadd.f32 %v864, %v900
        %v912 = vadd.f32 %v869, %v900
        %v913 = vadd.f32 %v874, %v900
        %v914 = vadd.f32 %v879, %v900
        %v915 = vadd.f32 %v884, %v900
        %v916 = vadd.f32 %v889, %v900
        %v917 = vadd.f32 %v894, %v900
        %v918 = vmul.f32 %v902, 0.2
        %v919 = vmul.f32 %v903, 0.2
        %v920 = vmul.f32 %v904, 0.2
        %v921 = vmul.f32 %v905, 0.2
        %v922 = vmul.f32 %v906, 0.2
        %v923 = vmul.f32 %v907, 0.2
        %v924 = vmul.f32 %v908, 0.2
        %v925 = vmul.f32 %v909, 0.2
        %v926 = vmul.f32 %v910, 0.2
        %v927 = vmul.f32 %v911, 0.2
        %v928 = vmul.f32 %v912, 0.2
        %v929 = vmul.f32 %v913, 0.2
        %v930 = vmul.f32 %v914, 0.2
        %v931 = vmul.f32 %v915, 0.2
        %v932 = vmul.f32 %v916, 0.2
        %v933 = vmul.f32 %v917, 0.2
        %v934 = vmax.f32 %v902, %v918
        %v935 = vmax.f32 %v903, %v919
        %v936 = vmax.f32 %v904, %v920
        %v937 = vmax.f32 %v905, %v921
        %v938 = vmax.f32 %v906, %v922
        %v939 = vmax.f32 %v907, %v923
        %v940 = vmax.f32 %v908, %v924
        %v941 = vmax.f32 %v909, %v925
        %v942 = vmax.f32 %v910, %v926
        %v943 = vmax.f32 %v911, %v927
        %v944 = vmax.f32 %v912, %v928
        %v945 = vmax.f32 %v913, %v929
        %v946 = vmax.f32 %v914, %v930
        %v947 = vmax.f32 %v915, %v931
        %v948 = vmax.f32 %v916, %v932
        %v949 = vmax.f32 %v917, %v933
        %v950 = vsub.f32 0.0, %v934
        %v951 = vsub.f32 0.0, %v935
        %v952 = vsub.f32 0.0, %v936
        %v953 = vsub.f32 0.0, %v937
        %v954 = vsub.f32 0.0, %v938
        %v955 = vsub.f32 0.0, %v939
        %v956 = vsub.f32 0.0, %v940
        %v957 = vsub.f32 0.0, %v941
        %v958 = vsub.f32 0.0, %v942
        %v959 = vsub.f32 0.0, %v943
        %v960 = vsub.f32 0.0, %v944
        %v961 = vsub.f32 0.0, %v945
        %v962 = vsub.f32 0.0, %v946
        %v963 = vsub.f32 0.0, %v947
        %v964 = vsub.f32 0.0, %v948
        %v965 = vsub.f32 0.0, %v949
        %v966 = vsel %vm795, 16843009, 0
        %v967 = vsel %vm796, 16843009, 0
        %v968 = vsel %vm797, 16843009, 0
        %v969 = vsel %vm798, 16843009, 0
        %v970 = vunpack.c.0.s8 %v966
        %v971 = vunpack.c.1.s8 %v966
        %v972 = vunpack.c.2.s8 %v966
        %v973 = vunpack.c.3.s8 %v966
        %v974 = vunpack.c.0.s8 %v967
        %v975 = vunpack.c.1.s8 %v967
        %v976 = vunpack.c.2.s8 %v967
        %v977 = vunpack.c.3.s8 %v967
        %v978 = vunpack.c.0.s8 %v968
        %v979 = vunpack.c.1.s8 %v968
        %v980 = vunpack.c.2.s8 %v968
        %v981 = vunpack.c.3.s8 %v968
        %v982 = vunpack.c.0.s8 %v969
        %v983 = vunpack.c.1.s8 %v969
        %v984 = vunpack.c.2.s8 %v969
        %v985 = vunpack.c.3.s8 %v969
        %v986 = vpack.c.b16 %v970, %v970
        %v987 = vpack.c.b8 %v986, %v986
        %v988 = vpack.c.b16 %v971, %v971
        %v989 = vpack.c.b8 %v988, %v988
        %v990 = vpack.c.b16 %v972, %v972
        %v991 = vpack.c.b8 %v990, %v990
        %v992 = vpack.c.b16 %v973, %v973
        %v993 = vpack.c.b8 %v992, %v992
        %v994 = vpack.c.b16 %v974, %v974
        %v995 = vpack.c.b8 %v994, %v994
        %v996 = vpack.c.b16 %v975, %v975
        %v997 = vpack.c.b8 %v996, %v996
        %v998 = vpack.c.b16 %v976, %v976
        %v999 = vpack.c.b8 %v998, %v998
        %v1000 = vpack.c.b16 %v977, %v977
        %v1001 = vpack.c.b8 %v1000, %v1000
        %v1002 = vpack.c.b16 %v978, %v978
        %v1003 = vpack.c.b8 %v1002, %v1002
        %v1004 = vpack.c.b16 %v979, %v979
        %v1005 = vpack.c.b8 %v1004, %v1004
        %v1006 = vpack.c.b16 %v980, %v980
        %v1007 = vpack.c.b8 %v1006, %v1006
        %v1008 = vpack.c.b16 %v981, %v981
        %v1009 = vpack.c.b8 %v1008, %v1008
        %v1010 = vpack.c.b16 %v982, %v982
        %v1011 = vpack.c.b8 %v1010, %v1010
        %v1012 = vpack.c.b16 %v983, %v983
        %v1013 = vpack.c.b8 %v1012, %v1012
        %v1014 = vpack.c.b16 %v984, %v984
        %v1015 = vpack.c.b8 %v1014, %v1014
        %v1016 = vpack.c.b16 %v985, %v985
        %v1017 = vpack.c.b8 %v1016, %v1016
        %vm1018 = vnez %v987
        %vm1019 = vnez %v989
        %vm1020 = vnez %v991
        %vm1021 = vnez %v993
        %vm1022 = vnez %v995
        %vm1023 = vnez %v997
        %vm1024 = vnez %v999
        %vm1025 = vnez %v1001
        %vm1026 = vnez %v1003
        %vm1027 = vnez %v1005
        %vm1028 = vnez %v1007
        %vm1029 = vnez %v1009
        %vm1030 = vnez %v1011
        %vm1031 = vnez %v1013
        %vm1032 = vnez %v1015
        %vm1033 = vnez %v1017
        %v1034 = vsel %vm1018, 16843009, 0
        %v1035 = vsel %vm1019, 16843009, 0
        %v1036 = vsel %vm1020, 16843009, 0
        %v1037 = vsel %vm1021, 16843009, 0
        %v1038 = vsel %vm1022, 16843009, 0
        %v1039 = vsel %vm1023, 16843009, 0
        %v1040 = vsel %vm1024, 16843009, 0
        %v1041 = vsel %vm1025, 16843009, 0
        %v1042 = vsel %vm1026, 16843009, 0
        %v1043 = vsel %vm1027, 16843009, 0
        %v1044 = vsel %vm1028, 16843009, 0
        %v1045 = vsel %vm1029, 16843009, 0
        %v1046 = vsel %vm1030, 16843009, 0
        %v1047 = vsel %vm1031, 16843009, 0
        %v1048 = vsel %vm1032, 16843009, 0
        %v1049 = vsel %vm1033, 16843009, 0
        %v1050 = vunpack.c.0.s8 %v1034
        %v1051 = vunpack.c.0.s8 %v1035
        %v1052 = vunpack.c.0.s8 %v1036
        %v1053 = vunpack.c.0.s8 %v1037
        %v1054 = vunpack.c.0.s8 %v1038
        %v1055 = vunpack.c.0.s8 %v1039
        %v1056 = vunpack.c.0.s8 %v1040
        %v1057 = vunpack.c.0.s8 %v1041
        %v1058 = vunpack.c.0.s8 %v1042
        %v1059 = vunpack.c.0.s8 %v1043
        %v1060 = vunpack.c.0.s8 %v1044
        %v1061 = vunpack.c.0.s8 %v1045
        %v1062 = vunpack.c.0.s8 %v1046
        %v1063 = vunpack.c.0.s8 %v1047
        %v1064 = vunpack.c.0.s8 %v1048
        %v1065 = vunpack.c.0.s8 %v1049
        %vm1066 = vcmp.ne.s32.totalorder %v1050, 0
        %vm1067 = vcmp.ne.s32.totalorder %v1051, 0
        %vm1068 = vcmp.ne.s32.totalorder %v1052, 0
        %vm1069 = vcmp.ne.s32.totalorder %v1053, 0
        %vm1070 = vcmp.ne.s32.totalorder %v1054, 0
        %vm1071 = vcmp.ne.s32.totalorder %v1055, 0
        %vm1072 = vcmp.ne.s32.totalorder %v1056, 0
        %vm1073 = vcmp.ne.s32.totalorder %v1057, 0
        %vm1074 = vcmp.ne.s32.totalorder %v1058, 0
        %vm1075 = vcmp.ne.s32.totalorder %v1059, 0
        %vm1076 = vcmp.ne.s32.totalorder %v1060, 0
        %vm1077 = vcmp.ne.s32.totalorder %v1061, 0
        %vm1078 = vcmp.ne.s32.totalorder %v1062, 0
        %vm1079 = vcmp.ne.s32.totalorder %v1063, 0
        %vm1080 = vcmp.ne.s32.totalorder %v1064, 0
        %vm1081 = vcmp.ne.s32.totalorder %v1065, 0
        %v1082 = vsel %vm1066, %v950, -1e+30
        %v1083 = vsel %vm1067, %v951, -1e+30
        %v1084 = vsel %vm1068, %v952, -1e+30
        %v1085 = vsel %vm1069, %v953, -1e+30
        %v1086 = vsel %vm1070, %v954, -1e+30
        %v1087 = vsel %vm1071, %v955, -1e+30
        %v1088 = vsel %vm1072, %v956, -1e+30
        %v1089 = vsel %vm1073, %v957, -1e+30
        %v1090 = vsel %vm1074, %v958, -1e+30
        %v1091 = vsel %vm1075, %v959, -1e+30
        %v1092 = vsel %vm1076, %v960, -1e+30
        %v1093 = vsel %vm1077, %v961, -1e+30
        %v1094 = vsel %vm1078, %v962, -1e+30
        %v1095 = vsel %vm1079, %v963, -1e+30
        %v1096 = vsel %vm1080, %v964, -1e+30
        %v1097 = vsel %vm1081, %v965, -1e+30
        %v1098 = vld [vmem:[#allocation2] sm:$0xff]
        %v1099 = vld [vmem:[#allocation2 + $0x8] sm:$0xff]
        %v1100 = vld [vmem:[#allocation2 + $0x10] sm:$0xff]
        %v1101 = vld [vmem:[#allocation2 + $0x18] sm:$0xff]
        %v1102 = vld [vmem:[#allocation2 + $0x20] sm:$0xff]
        %v1103 = vld [vmem:[#allocation2 + $0x28] sm:$0xff]
        %v1104 = vld [vmem:[#allocation2 + $0x30] sm:$0xff]
        %v1105 = vld [vmem:[#allocation2 + $0x38] sm:$0xff]
        %v1106 = vld [vmem:[#allocation2 + $0x40] sm:$0xff]
        %v1107 = vld [vmem:[#allocation2 + $0x48] sm:$0xff]
        %v1108 = vld [vmem:[#allocation2 + $0x50] sm:$0xff]
        %v1109 = vld [vmem:[#allocation2 + $0x58] sm:$0xff]
        %v1110 = vld [vmem:[#allocation2 + $0x60] sm:$0xff]
        %v1111 = vld [vmem:[#allocation2 + $0x68] sm:$0xff]
        %v1112 = vld [vmem:[#allocation2 + $0x70] sm:$0xff]
        %v1113 = vld [vmem:[#allocation2 + $0x78] sm:$0xff]
        %1114 = vmax.xlane.f32.xlu0 %v1082
        %v1115 = vpop.xlane.xlu0 %1114
        %1116 = vmax.xlane.f32.xlu0 %v1083
        %v1117 = vpop.xlane.xlu0 %1116
        %1118 = vmax.xlane.f32.xlu0 %v1084
        %v1119 = vpop.xlane.xlu0 %1118
        %1120 = vmax.xlane.f32.xlu0 %v1085
        %v1121 = vpop.xlane.xlu0 %1120
        %1122 = vmax.xlane.f32.xlu0 %v1086
        %v1123 = vpop.xlane.xlu0 %1122
        %1124 = vmax.xlane.f32.xlu0 %v1087
        %v1125 = vpop.xlane.xlu0 %1124
        %1126 = vmax.xlane.f32.xlu0 %v1088
        %v1127 = vpop.xlane.xlu0 %1126
        %1128 = vmax.xlane.f32.xlu0 %v1089
        %v1129 = vpop.xlane.xlu0 %1128
        %1130 = vmax.xlane.f32.xlu0 %v1090
        %v1131 = vpop.xlane.xlu0 %1130
        %1132 = vmax.xlane.f32.xlu0 %v1091
        %v1133 = vpop.xlane.xlu0 %1132
        %1134 = vmax.xlane.f32.xlu0 %v1092
        %v1135 = vpop.xlane.xlu0 %1134
        %1136 = vmax.xlane.f32.xlu0 %v1093
        %v1137 = vpop.xlane.xlu0 %1136
        %1138 = vmax.xlane.f32.xlu0 %v1094
        %v1139 = vpop.xlane.xlu0 %1138
        %1140 = vmax.xlane.f32.xlu0 %v1095
        %v1141 = vpop.xlane.xlu0 %1140
        %1142 = vmax.xlane.f32.xlu0 %v1096
        %v1143 = vpop.xlane.xlu0 %1142
        %1144 = vmax.xlane.f32.xlu0 %v1097
        %v1145 = vpop.xlane.xlu0 %1144
        %v1146 = vmax.f32 %v1098, %v1115
        %v1147 = vmax.f32 %v1099, %v1117
        %v1148 = vmax.f32 %v1100, %v1119
        %v1149 = vmax.f32 %v1101, %v1121
        %v1150 = vmax.f32 %v1102, %v1123
        %v1151 = vmax.f32 %v1103, %v1125
        %v1152 = vmax.f32 %v1104, %v1127
        %v1153 = vmax.f32 %v1105, %v1129
        %v1154 = vmax.f32 %v1106, %v1131
        %v1155 = vmax.f32 %v1107, %v1133
        %v1156 = vmax.f32 %v1108, %v1135
        %v1157 = vmax.f32 %v1109, %v1137
        %v1158 = vmax.f32 %v1110, %v1139
        %v1159 = vmax.f32 %v1111, %v1141
        %v1160 = vmax.f32 %v1112, %v1143
        %v1161 = vmax.f32 %v1113, %v1145
        %v1162 = vsub.f32 %v1098, %v1146
        %v1163 = vsub.f32 %v1099, %v1147
        %v1164 = vsub.f32 %v1100, %v1148
        %v1165 = vsub.f32 %v1101, %v1149
        %v1166 = vsub.f32 %v1102, %v1150
        %v1167 = vsub.f32 %v1103, %v1151
        %v1168 = vsub.f32 %v1104, %v1152
        %v1169 = vsub.f32 %v1105, %v1153
        %v1170 = vsub.f32 %v1106, %v1154
        %v1171 = vsub.f32 %v1107, %v1155
        %v1172 = vsub.f32 %v1108, %v1156
        %v1173 = vsub.f32 %v1109, %v1157
        %v1174 = vsub.f32 %v1110, %v1158
        %v1175 = vsub.f32 %v1111, %v1159
        %v1176 = vsub.f32 %v1112, %v1160
        %v1177 = vsub.f32 %v1113, %v1161
        %v1178 = vmul.f32 %v1162, 1.442695
        %v1179 = vpow.pop %v1178
        %v1180 = vmul.f32 %v1163, 1.442695
        %v1181 = vpow.pop %v1180
        %v1182 = vmul.f32 %v1164, 1.442695
        %v1183 = vpow.pop %v1182
        %v1184 = vmul.f32 %v1165, 1.442695
        %v1185 = vpow.pop %v1184
        %v1186 = vmul.f32 %v1166, 1.442695
        %v1187 = vpow.pop %v1186
        %v1188 = vmul.f32 %v1167, 1.442695
        %v1189 = vpow.pop %v1188
        %v1190 = vmul.f32 %v1168, 1.442695
        %v1191 = vpow.pop %v1190
        %v1192 = vmul.f32 %v1169, 1.442695
        %v1193 = vpow.pop %v1192
        %v1194 = vmul.f32 %v1170, 1.442695
        %v1195 = vpow.pop %v1194
        %v1196 = vmul.f32 %v1171, 1.442695
        %v1197 = vpow.pop %v1196
        %v1198 = vmul.f32 %v1172, 1.442695
        %v1199 = vpow.pop %v1198
        %v1200 = vmul.f32 %v1173, 1.442695
        %v1201 = vpow.pop %v1200
        %v1202 = vmul.f32 %v1174, 1.442695
        %v1203 = vpow.pop %v1202
        %v1204 = vmul.f32 %v1175, 1.442695
        %v1205 = vpow.pop %v1204
        %v1206 = vmul.f32 %v1176, 1.442695
        %v1207 = vpow.pop %v1206
        %v1208 = vmul.f32 %v1177, 1.442695
        %v1209 = vpow.pop %v1208
        %1211 = vset.pattern.permute.xlu0 0
        %1212 = vperm.xlu0 %1211, %v1146
        %v1213 = vpop.permute.xlu0 %1212
        %1216 = vset.pattern.permute.xlu0 0
        %1217 = vperm.xlu0 %1216, %v1147
        %v1218 = vpop.permute.xlu0 %1217
        %1221 = vset.pattern.permute.xlu0 0
        %1222 = vperm.xlu0 %1221, %v1148
        %v1223 = vpop.permute.xlu0 %1222
        %1226 = vset.pattern.permute.xlu0 0
        %1227 = vperm.xlu0 %1226, %v1149
        %v1228 = vpop.permute.xlu0 %1227
        %1231 = vset.pattern.permute.xlu0 0
        %1232 = vperm.xlu0 %1231, %v1150
        %v1233 = vpop.permute.xlu0 %1232
        %1236 = vset.pattern.permute.xlu0 0
        %1237 = vperm.xlu0 %1236, %v1151
        %v1238 = vpop.permute.xlu0 %1237
        %1241 = vset.pattern.permute.xlu0 0
        %1242 = vperm.xlu0 %1241, %v1152
        %v1243 = vpop.permute.xlu0 %1242
        %1246 = vset.pattern.permute.xlu0 0
        %1247 = vperm.xlu0 %1246, %v1153
        %v1248 = vpop.permute.xlu0 %1247
        %1251 = vset.pattern.permute.xlu0 0
        %1252 = vperm.xlu0 %1251, %v1154
        %v1253 = vpop.permute.xlu0 %1252
        %1256 = vset.pattern.permute.xlu0 0
        %1257 = vperm.xlu0 %1256, %v1155
        %v1258 = vpop.permute.xlu0 %1257
        %1261 = vset.pattern.permute.xlu0 0
        %1262 = vperm.xlu0 %1261, %v1156
        %v1263 = vpop.permute.xlu0 %1262
        %1266 = vset.pattern.permute.xlu0 0
        %1267 = vperm.xlu0 %1266, %v1157
        %v1268 = vpop.permute.xlu0 %1267
        %1271 = vset.pattern.permute.xlu0 0
        %1272 = vperm.xlu0 %1271, %v1158
        %v1273 = vpop.permute.xlu0 %1272
        %1276 = vset.pattern.permute.xlu0 0
        %1277 = vperm.xlu0 %1276, %v1159
        %v1278 = vpop.permute.xlu0 %1277
        %1281 = vset.pattern.permute.xlu0 0
        %1282 = vperm.xlu0 %1281, %v1160
        %v1283 = vpop.permute.xlu0 %1282
        %1286 = vset.pattern.permute.xlu0 0
        %1287 = vperm.xlu0 %1286, %v1161
        %v1288 = vpop.permute.xlu0 %1287
        %v1290 = vsub.f32 %v1082, %v1213
        %v1291 = vsub.f32 %v1083, %v1218
        %v1292 = vsub.f32 %v1084, %v1223
        %v1293 = vsub.f32 %v1085, %v1228
        %v1294 = vsub.f32 %v1086, %v1233
        %v1295 = vsub.f32 %v1087, %v1238
        %v1296 = vsub.f32 %v1088, %v1243
        %v1297 = vsub.f32 %v1089, %v1248
        %v1298 = vsub.f32 %v1090, %v1253
        %v1299 = vsub.f32 %v1091, %v1258
        %v1300 = vsub.f32 %v1092, %v1263
        %v1301 = vsub.f32 %v1093, %v1268
        %v1302 = vsub.f32 %v1094, %v1273
        %v1303 = vsub.f32 %v1095, %v1278
        %v1304 = vsub.f32 %v1096, %v1283
        %v1305 = vsub.f32 %v1097, %v1288
        %v1306 = vmul.f32 %v1290, 1.442695
        %v1307 = vpow.pop %v1306
        %v1308 = vmul.f32 %v1291, 1.442695
        %v1309 = vpow.pop %v1308
        %v1310 = vmul.f32 %v1292, 1.442695
        %v1311 = vpow.pop %v1310
        %v1312 = vmul.f32 %v1293, 1.442695
        %v1313 = vpow.pop %v1312
        %v1314 = vmul.f32 %v1294, 1.442695
        %v1315 = vpow.pop %v1314
        %v1316 = vmul.f32 %v1295, 1.442695
        %v1317 = vpow.pop %v1316
        %v1318 = vmul.f32 %v1296, 1.442695
        %v1319 = vpow.pop %v1318
        %v1320 = vmul.f32 %v1297, 1.442695
        %v1321 = vpow.pop %v1320
        %v1322 = vmul.f32 %v1298, 1.442695
        %v1323 = vpow.pop %v1322
        %v1324 = vmul.f32 %v1299, 1.442695
        %v1325 = vpow.pop %v1324
        %v1326 = vmul.f32 %v1300, 1.442695
        %v1327 = vpow.pop %v1326
        %v1328 = vmul.f32 %v1301, 1.442695
        %v1329 = vpow.pop %v1328
        %v1330 = vmul.f32 %v1302, 1.442695
        %v1331 = vpow.pop %v1330
        %v1332 = vmul.f32 %v1303, 1.442695
        %v1333 = vpow.pop %v1332
        %v1334 = vmul.f32 %v1304, 1.442695
        %v1335 = vpow.pop %v1334
        %v1336 = vmul.f32 %v1305, 1.442695
        %v1337 = vpow.pop %v1336
        %v1338 = vld [vmem:[#allocation3] sm:$0xff]
        %v1339 = vld [vmem:[#allocation3 + $0x8] sm:$0xff]
        %v1340 = vld [vmem:[#allocation3 + $0x10] sm:$0xff]
        %v1341 = vld [vmem:[#allocation3 + $0x18] sm:$0xff]
        %v1342 = vld [vmem:[#allocation3 + $0x20] sm:$0xff]
        %v1343 = vld [vmem:[#allocation3 + $0x28] sm:$0xff]
        %v1344 = vld [vmem:[#allocation3 + $0x30] sm:$0xff]
        %v1345 = vld [vmem:[#allocation3 + $0x38] sm:$0xff]
        %v1346 = vld [vmem:[#allocation3 + $0x40] sm:$0xff]
        %v1347 = vld [vmem:[#allocation3 + $0x48] sm:$0xff]
        %v1348 = vld [vmem:[#allocation3 + $0x50] sm:$0xff]
        %v1349 = vld [vmem:[#allocation3 + $0x58] sm:$0xff]
        %v1350 = vld [vmem:[#allocation3 + $0x60] sm:$0xff]
        %v1351 = vld [vmem:[#allocation3 + $0x68] sm:$0xff]
        %v1352 = vld [vmem:[#allocation3 + $0x70] sm:$0xff]
        %v1353 = vld [vmem:[#allocation3 + $0x78] sm:$0xff]
        %v1354 = vmul.f32 %v1179, %v1338
        %v1355 = vmul.f32 %v1181, %v1339
        %v1356 = vmul.f32 %v1183, %v1340
        %v1357 = vmul.f32 %v1185, %v1341
        %v1358 = vmul.f32 %v1187, %v1342
        %v1359 = vmul.f32 %v1189, %v1343
        %v1360 = vmul.f32 %v1191, %v1344
        %v1361 = vmul.f32 %v1193, %v1345
        %v1362 = vmul.f32 %v1195, %v1346
        %v1363 = vmul.f32 %v1197, %v1347
        %v1364 = vmul.f32 %v1199, %v1348
        %v1365 = vmul.f32 %v1201, %v1349
        %v1366 = vmul.f32 %v1203, %v1350
        %v1367 = vmul.f32 %v1205, %v1351
        %v1368 = vmul.f32 %v1207, %v1352
        %v1369 = vmul.f32 %v1209, %v1353
        %1370 = vadd.xlane.f32.xlu0 %v1307
        %v1371 = vpop.xlane.xlu0 %1370
        %1372 = vadd.xlane.f32.xlu0 %v1309
        %v1373 = vpop.xlane.xlu0 %1372
        %1374 = vadd.xlane.f32.xlu0 %v1311
        %v1375 = vpop.xlane.xlu0 %1374
        %1376 = vadd.xlane.f32.xlu0 %v1313
        %v1377 = vpop.xlane.xlu0 %1376
        %1378 = vadd.xlane.f32.xlu0 %v1315
        %v1379 = vpop.xlane.xlu0 %1378
        %1380 = vadd.xlane.f32.xlu0 %v1317
        %v1381 = vpop.xlane.xlu0 %1380
        %1382 = vadd.xlane.f32.xlu0 %v1319
        %v1383 = vpop.xlane.xlu0 %1382
        %1384 = vadd.xlane.f32.xlu0 %v1321
        %v1385 = vpop.xlane.xlu0 %1384
        %1386 = vadd.xlane.f32.xlu0 %v1323
        %v1387 = vpop.xlane.xlu0 %1386
        %1388 = vadd.xlane.f32.xlu0 %v1325
        %v1389 = vpop.xlane.xlu0 %1388
        %1390 = vadd.xlane.f32.xlu0 %v1327
        %v1391 = vpop.xlane.xlu0 %1390
        %1392 = vadd.xlane.f32.xlu0 %v1329
        %v1393 = vpop.xlane.xlu0 %1392
        %1394 = vadd.xlane.f32.xlu0 %v1331
        %v1395 = vpop.xlane.xlu0 %1394
        %1396 = vadd.xlane.f32.xlu0 %v1333
        %v1397 = vpop.xlane.xlu0 %1396
        %1398 = vadd.xlane.f32.xlu0 %v1335
        %v1399 = vpop.xlane.xlu0 %1398
        %1400 = vadd.xlane.f32.xlu0 %v1337
        %v1401 = vpop.xlane.xlu0 %1400
        %v1402 = vadd.f32 %v1354, %v1371
        %v1403 = vadd.f32 %v1355, %v1373
        %v1404 = vadd.f32 %v1356, %v1375
        %v1405 = vadd.f32 %v1357, %v1377
        %v1406 = vadd.f32 %v1358, %v1379
        %v1407 = vadd.f32 %v1359, %v1381
        %v1408 = vadd.f32 %v1360, %v1383
        %v1409 = vadd.f32 %v1361, %v1385
        %v1410 = vadd.f32 %v1362, %v1387
        %v1411 = vadd.f32 %v1363, %v1389
        %v1412 = vadd.f32 %v1364, %v1391
        %v1413 = vadd.f32 %v1365, %v1393
        %v1414 = vadd.f32 %v1366, %v1395
        %v1415 = vadd.f32 %v1367, %v1397
        %v1416 = vadd.f32 %v1368, %v1399
        %v1417 = vadd.f32 %v1369, %v1401
        %vm1418 = vcmask 7168
        %1419 = vst.msk [vmem:[#allocation3] sm:$0xff] %vm1418, %v1402
        %1420 = vst.msk [vmem:[#allocation3 + $0x8] sm:$0xff] %vm1418, %v1403
        %1421 = vst.msk [vmem:[#allocation3 + $0x10] sm:$0xff] %vm1418, %v1404
        %1422 = vst.msk [vmem:[#allocation3 + $0x18] sm:$0xff] %vm1418, %v1405
        %1423 = vst.msk [vmem:[#allocation3 + $0x20] sm:$0xff] %vm1418, %v1406
        %1424 = vst.msk [vmem:[#allocation3 + $0x28] sm:$0xff] %vm1418, %v1407
        %1425 = vst.msk [vmem:[#allocation3 + $0x30] sm:$0xff] %vm1418, %v1408
        %1426 = vst.msk [vmem:[#allocation3 + $0x38] sm:$0xff] %vm1418, %v1409
        %1427 = vst.msk [vmem:[#allocation3 + $0x40] sm:$0xff] %vm1418, %v1410
        %1428 = vst.msk [vmem:[#allocation3 + $0x48] sm:$0xff] %vm1418, %v1411
        %1429 = vst.msk [vmem:[#allocation3 + $0x50] sm:$0xff] %vm1418, %v1412
        %1430 = vst.msk [vmem:[#allocation3 + $0x58] sm:$0xff] %vm1418, %v1413
        %1431 = vst.msk [vmem:[#allocation3 + $0x60] sm:$0xff] %vm1418, %v1414
        %1432 = vst.msk [vmem:[#allocation3 + $0x68] sm:$0xff] %vm1418, %v1415
        %1433 = vst.msk [vmem:[#allocation3 + $0x70] sm:$0xff] %vm1418, %v1416
        %1434 = vst.msk [vmem:[#allocation3 + $0x78] sm:$0xff] %vm1418, %v1417
        %v1435 = vld [vmem:[#allocation4] sm:$0xff]
        %v1436 = vld [vmem:[#allocation4 + $0x8] sm:$0xff]
        %v1437 = vld [vmem:[#allocation4 + $0x10] sm:$0xff]
        %v1438 = vld [vmem:[#allocation4 + $0x18] sm:$0xff]
        %v1439 = vld [vmem:[#allocation4 + $0x20] sm:$0xff]
        %v1440 = vld [vmem:[#allocation4 + $0x28] sm:$0xff]
        %v1441 = vld [vmem:[#allocation4 + $0x30] sm:$0xff]
        %v1442 = vld [vmem:[#allocation4 + $0x38] sm:$0xff]
        %v1443 = vld [vmem:[#allocation4 + $0x40] sm:$0xff]
        %v1444 = vld [vmem:[#allocation4 + $0x48] sm:$0xff]
        %v1445 = vld [vmem:[#allocation4 + $0x50] sm:$0xff]
        %v1446 = vld [vmem:[#allocation4 + $0x58] sm:$0xff]
        %v1447 = vld [vmem:[#allocation4 + $0x60] sm:$0xff]
        %v1448 = vld [vmem:[#allocation4 + $0x68] sm:$0xff]
        %v1449 = vld [vmem:[#allocation4 + $0x70] sm:$0xff]
        %v1450 = vld [vmem:[#allocation4 + $0x78] sm:$0xff]
        %1452 = vset.pattern.permute.xlu0 0
        %1453 = vperm.xlu0 %1452, %v1179
        %v1454 = vpop.permute.xlu0 %1453
        %1457 = vset.pattern.permute.xlu0 0
        %1458 = vperm.xlu0 %1457, %v1181
        %v1459 = vpop.permute.xlu0 %1458
        %1462 = vset.pattern.permute.xlu0 0
        %1463 = vperm.xlu0 %1462, %v1183
        %v1464 = vpop.permute.xlu0 %1463
        %1467 = vset.pattern.permute.xlu0 0
        %1468 = vperm.xlu0 %1467, %v1185
        %v1469 = vpop.permute.xlu0 %1468
        %1472 = vset.pattern.permute.xlu0 0
        %1473 = vperm.xlu0 %1472, %v1187
        %v1474 = vpop.permute.xlu0 %1473
        %1477 = vset.pattern.permute.xlu0 0
        %1478 = vperm.xlu0 %1477, %v1189
        %v1479 = vpop.permute.xlu0 %1478
        %1482 = vset.pattern.permute.xlu0 0
        %1483 = vperm.xlu0 %1482, %v1191
        %v1484 = vpop.permute.xlu0 %1483
        %1487 = vset.pattern.permute.xlu0 0
        %1488 = vperm.xlu0 %1487, %v1193
        %v1489 = vpop.permute.xlu0 %1488
        %1492 = vset.pattern.permute.xlu0 0
        %1493 = vperm.xlu0 %1492, %v1195
        %v1494 = vpop.permute.xlu0 %1493
        %1497 = vset.pattern.permute.xlu0 0
        %1498 = vperm.xlu0 %1497, %v1197
        %v1499 = vpop.permute.xlu0 %1498
        %1502 = vset.pattern.permute.xlu0 0
        %1503 = vperm.xlu0 %1502, %v1199
        %v1504 = vpop.permute.xlu0 %1503
        %1507 = vset.pattern.permute.xlu0 0
        %1508 = vperm.xlu0 %1507, %v1201
        %v1509 = vpop.permute.xlu0 %1508
        %1512 = vset.pattern.permute.xlu0 0
        %1513 = vperm.xlu0 %1512, %v1203
        %v1514 = vpop.permute.xlu0 %1513
        %1517 = vset.pattern.permute.xlu0 0
        %1518 = vperm.xlu0 %1517, %v1205
        %v1519 = vpop.permute.xlu0 %1518
        %1522 = vset.pattern.permute.xlu0 0
        %1523 = vperm.xlu0 %1522, %v1207
        %v1524 = vpop.permute.xlu0 %1523
        %1527 = vset.pattern.permute.xlu0 0
        %1528 = vperm.xlu0 %1527, %v1209
        %v1529 = vpop.permute.xlu0 %1528
        %v1531 = vmul.f32 %v1454, %v1435
        %v1532 = vmul.f32 %v1459, %v1436
        %v1533 = vmul.f32 %v1464, %v1437
        %v1534 = vmul.f32 %v1469, %v1438
        %v1535 = vmul.f32 %v1474, %v1439
        %v1536 = vmul.f32 %v1479, %v1440
        %v1537 = vmul.f32 %v1484, %v1441
        %v1538 = vmul.f32 %v1489, %v1442
        %v1539 = vmul.f32 %v1494, %v1443
        %v1540 = vmul.f32 %v1499, %v1444
        %v1541 = vmul.f32 %v1504, %v1445
        %v1542 = vmul.f32 %v1509, %v1446
        %v1543 = vmul.f32 %v1514, %v1447
        %v1544 = vmul.f32 %v1519, %v1448
        %v1545 = vmul.f32 %v1524, %v1449
        %v1546 = vmul.f32 %v1529, %v1450
        %v1547 = vpack.c.bf16 %v1309, %v1307
        %v1548 = vpack.c.bf16 %v1313, %v1311
        %v1549 = vpack.c.bf16 %v1317, %v1315
        %v1550 = vpack.c.bf16 %v1321, %v1319
        %v1551 = vpack.c.bf16 %v1325, %v1323
        %v1552 = vpack.c.bf16 %v1329, %v1327
        %v1553 = vpack.c.bf16 %v1333, %v1331
        %v1554 = vpack.c.bf16 %v1337, %v1335
        %v1555 = vld [vmem:[%s628] sm:$0xf]
        %v1556 = vld [vmem:[%s628 + $0x4] sm:$0xf]
        %v1557 = vld [vmem:[%s628 + $0x8] sm:$0xf]
        %v1558 = vld [vmem:[%s628 + $0xc] sm:$0xf]
        %v1559 = vld [vmem:[%s628 + $0x10] sm:$0xf]
        %v1560 = vld [vmem:[%s628 + $0x14] sm:$0xf]
        %v1561 = vld [vmem:[%s628 + $0x18] sm:$0xf]
        %v1562 = vld [vmem:[%s628 + $0x1c] sm:$0xf]
        %v1563 = vld [vmem:[%s628 + $0x20] sm:$0xf]
        %v1564 = vld [vmem:[%s628 + $0x24] sm:$0xf]
        %v1565 = vld [vmem:[%s628 + $0x28] sm:$0xf]
        %v1566 = vld [vmem:[%s628 + $0x2c] sm:$0xf]
        %v1567 = vld [vmem:[%s628 + $0x30] sm:$0xf]
        %v1568 = vld [vmem:[%s628 + $0x34] sm:$0xf]
        %v1569 = vld [vmem:[%s628 + $0x38] sm:$0xf]
        %v1570 = vld [vmem:[%s628 + $0x3c] sm:$0xf]
        %v1587 = vunpack.c.l.b16 %v1555
        %v1588 = vunpack.c.l.b16 %v1556
        %v1589 = vunpack.c.l.b16 %v1557
        %v1590 = vunpack.c.l.b16 %v1558
        %v1591 = vunpack.c.l.b16 %v1559
        %v1592 = vunpack.c.l.b16 %v1560
        %v1593 = vunpack.c.l.b16 %v1561
        %v1594 = vunpack.c.l.b16 %v1562
        %v1595 = vunpack.c.l.b16 %v1563
        %v1596 = vunpack.c.l.b16 %v1564
        %v1597 = vunpack.c.l.b16 %v1565
        %v1598 = vunpack.c.l.b16 %v1566
        %v1599 = vunpack.c.l.b16 %v1567
        %v1600 = vunpack.c.l.b16 %v1568
        %v1601 = vunpack.c.l.b16 %v1569
        %v1602 = vunpack.c.l.b16 %v1570
        %v1603 = vpack.c.b16 %v1588, %v1587
        %v1604 = vpack.c.b16 %v1590, %v1589
        %v1605 = vpack.c.b16 %v1592, %v1591
        %v1606 = vpack.c.b16 %v1594, %v1593
        %v1607 = vpack.c.b16 %v1596, %v1595
        %v1608 = vpack.c.b16 %v1598, %v1597
        %v1609 = vpack.c.b16 %v1600, %v1599
        %v1610 = vpack.c.b16 %v1602, %v1601
        %1619 = vmatprep.subr.bf16.mxu0 0
        %1620 = vmatpush1.bf16.msra.mxu0 %v1603
        %1621 = vmatprep.subr.bf16.mxu0 0
        %1622 = vmatpush1.bf16.msra.mxu0 %v1604
        %1623 = vmatprep.subr.bf16.mxu0 0
        %1624 = vmatpush1.bf16.msra.mxu0 %v1605
        %1625 = vmatprep.subr.bf16.mxu0 0
        %1626 = vmatpush1.bf16.msra.mxu0 %v1606
        %1627 = vmatprep.subr.bf16.mxu0 0
        %1628 = vmatpush1.bf16.msra.mxu0 %v1607
        %1629 = vmatprep.subr.bf16.mxu0 0
        %1630 = vmatpush1.bf16.msra.mxu0 %v1608
        %1631 = vmatprep.subr.bf16.mxu0 0
        %1632 = vmatpush1.bf16.msra.mxu0 %v1609
        %1633 = vmatprep.subr.bf16.mxu0 0
        %1634 = vmatpush1.bf16.msra.mxu0 %v1610
        %1635 = vmatprep.subr.bf16.mxu0 0
        %1636 = vmatpush1.bf16.msra.mxu0 0
        %1637 = vmatprep.subr.bf16.mxu0 0
        %1638 = vmatpush1.bf16.msra.mxu0 0
        %1639 = vmatprep.subr.bf16.mxu0 0
        %1640 = vmatpush1.bf16.msra.mxu0 0
        %1641 = vmatprep.subr.bf16.mxu0 0
        %1642 = vmatpush1.bf16.msra.mxu0 0
        %1643 = vmatprep.subr.bf16.mxu0 0
        %1644 = vmatpush1.bf16.msra.mxu0 0
        %1645 = vmatprep.subr.bf16.mxu0 0
        %1646 = vmatpush1.bf16.msra.mxu0 0
        %1647 = vmatprep.subr.bf16.mxu0 0
        %1648 = vmatpush1.bf16.msra.mxu0 0
        %1649 = vmatprep.subr.bf16.mxu0 0
        %1650 = vmatpush1.bf16.msra.mxu0 0
        %1651 = vmatprep.mubr.bf16.mxu0 0
        %1652 = vmatmul.mubr.bf16.gmra.mrb[0].mxu0 %v1547
        %v1653 = vpop.f32.mrb[0].mxu0
        %v1654 = vadd.f32 0.0, %v1653
        %v1655 = vpop.f32.mrb[0].mxu0
        %v1656 = vpop.f32.mrb[0].mxu0
        %v1657 = vadd.f32 0.0, %v1656
        %v1658 = vpop.f32.mrb[0].mxu0
        %1659 = vmatprep.mubr.bf16.mxu0 0
        %1660 = vmatmul.mubr.bf16.gmra.mrb[0].mxu0 %v1548
        %v1661 = vpop.f32.mrb[0].mxu0
        %v1662 = vadd.f32 0.0, %v1661
        %v1663 = vpop.f32.mrb[0].mxu0
        %v1664 = vpop.f32.mrb[0].mxu0
        %v1665 = vadd.f32 0.0, %v1664
        %v1666 = vpop.f32.mrb[0].mxu0
        %1667 = vmatprep.mubr.bf16.mxu0 0
        %1668 = vmatmul.mubr.bf16.gmra.mrb[0].mxu0 %v1549
        %v1669 = vpop.f32.mrb[0].mxu0
        %v1670 = vadd.f32 0.0, %v1669
        %v1671 = vpop.f32.mrb[0].mxu0
        %v1672 = vpop.f32.mrb[0].mxu0
        %v1673 = vadd.f32 0.0, %v1672
        %v1674 = vpop.f32.mrb[0].mxu0
        %1675 = vmatprep.mubr.bf16.mxu0 0
        %1676 = vmatmul.mubr.bf16.gmra.mrb[0].mxu0 %v1550
        %v1677 = vpop.f32.mrb[0].mxu0
        %v1678 = vadd.f32 0.0, %v1677
        %v1679 = vpop.f32.mrb[0].mxu0
        %v1680 = vpop.f32.mrb[0].mxu0
        %v1681 = vadd.f32 0.0, %v1680
        %v1682 = vpop.f32.mrb[0].mxu0
        %1683 = vmatprep.mubr.bf16.mxu0 0
        %1684 = vmatmul.mubr.bf16.gmra.mrb[0].mxu0 %v1551
        %v1685 = vpop.f32.mrb[0].mxu0
        %v1686 = vadd.f32 0.0, %v1685
        %v1687 = vpop.f32.mrb[0].mxu0
        %v1688 = vpop.f32.mrb[0].mxu0
        %v1689 = vadd.f32 0.0, %v1688
        %v1690 = vpop.f32.mrb[0].mxu0
        %1691 = vmatprep.mubr.bf16.mxu0 0
        %1692 = vmatmul.mubr.bf16.gmra.mrb[0].mxu0 %v1552
        %v1693 = vpop.f32.mrb[0].mxu0
        %v1694 = vadd.f32 0.0, %v1693
        %v1695 = vpop.f32.mrb[0].mxu0
        %v1696 = vpop.f32.mrb[0].mxu0
        %v1697 = vadd.f32 0.0, %v1696
        %v1698 = vpop.f32.mrb[0].mxu0
        %1699 = vmatprep.mubr.bf16.mxu0 0
        %1700 = vmatmul.mubr.bf16.gmra.mrb[0].mxu0 %v1553
        %v1701 = vpop.f32.mrb[0].mxu0
        %v1702 = vadd.f32 0.0, %v1701
        %v1703 = vpop.f32.mrb[0].mxu0
        %v1704 = vpop.f32.mrb[0].mxu0
        %v1705 = vadd.f32 0.0, %v1704
        %v1706 = vpop.f32.mrb[0].mxu0
        %1707 = vmatprep.mubr.bf16.mxu0 0
        %1708 = vmatmul.mubr.bf16.gmra.mrb[0].mxu0 %v1554
        %v1709 = vpop.f32.mrb[0].mxu0
        %v1710 = vadd.f32 0.0, %v1709
        %v1711 = vpop.f32.mrb[0].mxu0
        %v1712 = vpop.f32.mrb[0].mxu0
        %v1713 = vadd.f32 0.0, %v1712
        %v1714 = vpop.f32.mrb[0].mxu0
        %1715 = vdwg.mxu0
        %v1716 = vadd.f32 %v1531, %v1654
        %v1717 = vadd.f32 %v1532, %v1657
        %v1718 = vadd.f32 %v1533, %v1662
        %v1719 = vadd.f32 %v1534, %v1665
        %v1720 = vadd.f32 %v1535, %v1670
        %v1721 = vadd.f32 %v1536, %v1673
        %v1722 = vadd.f32 %v1537, %v1678
        %v1723 = vadd.f32 %v1538, %v1681
        %v1724 = vadd.f32 %v1539, %v1686
        %v1725 = vadd.f32 %v1540, %v1689
        %v1726 = vadd.f32 %v1541, %v1694
        %v1727 = vadd.f32 %v1542, %v1697
        %v1728 = vadd.f32 %v1543, %v1702
        %v1729 = vadd.f32 %v1544, %v1705
        %v1730 = vadd.f32 %v1545, %v1710
        %v1731 = vadd.f32 %v1546, %v1713
        %vm1732 = vcmask 130048
        %1733 = vst.msk [vmem:[#allocation4] sm:$0xff] %vm1732, %v1716
        %1734 = vst.msk [vmem:[#allocation4 + $0x8] sm:$0xff] %vm1732, %v1717
        %1735 = vst.msk [vmem:[#allocation4 + $0x10] sm:$0xff] %vm1732, %v1718
        %1736 = vst.msk [vmem:[#allocation4 + $0x18] sm:$0xff] %vm1732, %v1719
        %1737 = vst.msk [vmem:[#allocation4 + $0x20] sm:$0xff] %vm1732, %v1720
        %1738 = vst.msk [vmem:[#allocation4 + $0x28] sm:$0xff] %vm1732, %v1721
        %1739 = vst.msk [vmem:[#allocation4 + $0x30] sm:$0xff] %vm1732, %v1722
        %1740 = vst.msk [vmem:[#allocation4 + $0x38] sm:$0xff] %vm1732, %v1723
        %1741 = vst.msk [vmem:[#allocation4 + $0x40] sm:$0xff] %vm1732, %v1724
        %1742 = vst.msk [vmem:[#allocation4 + $0x48] sm:$0xff] %vm1732, %v1725
        %1743 = vst.msk [vmem:[#allocation4 + $0x50] sm:$0xff] %vm1732, %v1726
        %1744 = vst.msk [vmem:[#allocation4 + $0x58] sm:$0xff] %vm1732, %v1727
        %1745 = vst.msk [vmem:[#allocation4 + $0x60] sm:$0xff] %vm1732, %v1728
        %1746 = vst.msk [vmem:[#allocation4 + $0x68] sm:$0xff] %vm1732, %v1729
        %1747 = vst.msk [vmem:[#allocation4 + $0x70] sm:$0xff] %vm1732, %v1730
        %1748 = vst.msk [vmem:[#allocation4 + $0x78] sm:$0xff] %vm1732, %v1731
        %1749 = vst.msk [vmem:[#allocation2] sm:$0xff] %vm1418, %v1146
        %1750 = vst.msk [vmem:[#allocation2 + $0x8] sm:$0xff] %vm1418, %v1147
        %1751 = vst.msk [vmem:[#allocation2 + $0x10] sm:$0xff] %vm1418, %v1148
        %1752 = vst.msk [vmem:[#allocation2 + $0x18] sm:$0xff] %vm1418, %v1149
        %1753 = vst.msk [vmem:[#allocation2 + $0x20] sm:$0xff] %vm1418, %v1150
        %1754 = vst.msk [vmem:[#allocation2 + $0x28] sm:$0xff] %vm1418, %v1151
        %1755 = vst.msk [vmem:[#allocation2 + $0x30] sm:$0xff] %vm1418, %v1152
        %1756 = vst.msk [vmem:[#allocation2 + $0x38] sm:$0xff] %vm1418, %v1153
        %1757 = vst.msk [vmem:[#allocation2 + $0x40] sm:$0xff] %vm1418, %v1154
        %1758 = vst.msk [vmem:[#allocation2 + $0x48] sm:$0xff] %vm1418, %v1155
        %1759 = vst.msk [vmem:[#allocation2 + $0x50] sm:$0xff] %vm1418, %v1156
        %1760 = vst.msk [vmem:[#allocation2 + $0x58] sm:$0xff] %vm1418, %v1157
        %1761 = vst.msk [vmem:[#allocation2 + $0x60] sm:$0xff] %vm1418, %v1158
        %1762 = vst.msk [vmem:[#allocation2 + $0x68] sm:$0xff] %vm1418, %v1159
        %1763 = vst.msk [vmem:[#allocation2 + $0x70] sm:$0xff] %vm1418, %v1160
        %1764 = vst.msk [vmem:[#allocation2 + $0x78] sm:$0xff] %vm1418, %v1161
        %s1765 = scalar_lea.vmem %s635, 128 [#allocation7]
        %v1766 = vld [vmem:[%s1765] sm:$0xff]
        %v1767 = vld [vmem:[%s1765 + $0x8] sm:$0xff]
        %v1768 = vld [vmem:[%s1765 + $0x10] sm:$0xff]
        %v1769 = vld [vmem:[%s1765 + $0x18] sm:$0xff]
        %v1770 = vld [vmem:[%s1765 + $0x20] sm:$0xff]
        %v1771 = vld [vmem:[%s1765 + $0x28] sm:$0xff]
        %v1772 = vld [vmem:[%s1765 + $0x30] sm:$0xff]
        %v1773 = vld [vmem:[%s1765 + $0x38] sm:$0xff]
        %v1774 = vld [vmem:[%s1765 + $0x40] sm:$0xff]
        %v1775 = vld [vmem:[%s1765 + $0x48] sm:$0xff]
        %v1776 = vld [vmem:[%s1765 + $0x50] sm:$0xff]
        %v1777 = vld [vmem:[%s1765 + $0x58] sm:$0xff]
        %v1778 = vld [vmem:[%s1765 + $0x60] sm:$0xff]
        %v1779 = vld [vmem:[%s1765 + $0x68] sm:$0xff]
        %v1780 = vld [vmem:[%s1765 + $0x70] sm:$0xff]
        %v1781 = vld [vmem:[%s1765 + $0x78] sm:$0xff]
        %s1782 = scalar_lea.vmem %s642, 1 [#allocation8]
        %v1783 = vld [vmem:[%s1782] sm:$0x1]
        %1785 = vset.pattern.permute.xlu0 0
        %1786 = vperm.xlu0 %1785, %v1766
        %v1787 = vpop.permute.xlu0 %1786
        %1790 = vset.pattern.permute.xlu0 0
        %1791 = vperm.xlu0 %1790, %v1767
        %v1792 = vpop.permute.xlu0 %1791
        %1795 = vset.pattern.permute.xlu0 0
        %1796 = vperm.xlu0 %1795, %v1768
        %v1797 = vpop.permute.xlu0 %1796
        %1800 = vset.pattern.permute.xlu0 0
        %1801 = vperm.xlu0 %1800, %v1769
        %v1802 = vpop.permute.xlu0 %1801
        %1805 = vset.pattern.permute.xlu0 0
        %1806 = vperm.xlu0 %1805, %v1770
        %v1807 = vpop.permute.xlu0 %1806
        %1810 = vset.pattern.permute.xlu0 0
        %1811 = vperm.xlu0 %1810, %v1771
        %v1812 = vpop.permute.xlu0 %1811
        %1815 = vset.pattern.permute.xlu0 0
        %1816 = vperm.xlu0 %1815, %v1772
        %v1817 = vpop.permute.xlu0 %1816
        %1820 = vset.pattern.permute.xlu0 0
        %1821 = vperm.xlu0 %1820, %v1773
        %v1822 = vpop.permute.xlu0 %1821
        %1825 = vset.pattern.permute.xlu0 0
        %1826 = vperm.xlu0 %1825, %v1774
        %v1827 = vpop.permute.xlu0 %1826
        %1830 = vset.pattern.permute.xlu0 0
        %1831 = vperm.xlu0 %1830, %v1775
        %v1832 = vpop.permute.xlu0 %1831
        %1835 = vset.pattern.permute.xlu0 0
        %1836 = vperm.xlu0 %1835, %v1776
        %v1837 = vpop.permute.xlu0 %1836
        %1840 = vset.pattern.permute.xlu0 0
        %1841 = vperm.xlu0 %1840, %v1777
        %v1842 = vpop.permute.xlu0 %1841
        %1845 = vset.pattern.permute.xlu0 0
        %1846 = vperm.xlu0 %1845, %v1778
        %v1847 = vpop.permute.xlu0 %1846
        %1850 = vset.pattern.permute.xlu0 0
        %1851 = vperm.xlu0 %1850, %v1779
        %v1852 = vpop.permute.xlu0 %1851
        %1855 = vset.pattern.permute.xlu0 0
        %1856 = vperm.xlu0 %1855, %v1780
        %v1857 = vpop.permute.xlu0 %1856
        %1860 = vset.pattern.permute.xlu0 0
        %1861 = vperm.xlu0 %1860, %v1781
        %v1862 = vpop.permute.xlu0 %1861
        %v1865 = vlaneseq
        %v1866 = vshrl.u32 %v1865, 7
        %v1867 = vsub.s32 0, %v1866
        %v1868 = vrot.slane %v1783, %v1867
        %v1870 = vadd.f32 %v1787, %v1868
        %v1871 = vadd.f32 %v1792, %v1868
        %v1872 = vadd.f32 %v1797, %v1868
        %v1873 = vadd.f32 %v1802, %v1868
        %v1874 = vadd.f32 %v1807, %v1868
        %v1875 = vadd.f32 %v1812, %v1868
        %v1876 = vadd.f32 %v1817, %v1868
        %v1877 = vadd.f32 %v1822, %v1868
        %v1878 = vadd.f32 %v1827, %v1868
        %v1879 = vadd.f32 %v1832, %v1868
        %v1880 = vadd.f32 %v1837, %v1868
        %v1881 = vadd.f32 %v1842, %v1868
        %v1882 = vadd.f32 %v1847, %v1868
        %v1883 = vadd.f32 %v1852, %v1868
        %v1884 = vadd.f32 %v1857, %v1868
        %v1885 = vadd.f32 %v1862, %v1868
        %v1886 = vmul.f32 %v1870, 0.2
        %v1887 = vmul.f32 %v1871, 0.2
        %v1888 = vmul.f32 %v1872, 0.2
        %v1889 = vmul.f32 %v1873, 0.2
        %v1890 = vmul.f32 %v1874, 0.2
        %v1891 = vmul.f32 %v1875, 0.2
        %v1892 = vmul.f32 %v1876, 0.2
        %v1893 = vmul.f32 %v1877, 0.2
        %v1894 = vmul.f32 %v1878, 0.2
        %v1895 = vmul.f32 %v1879, 0.2
        %v1896 = vmul.f32 %v1880, 0.2
        %v1897 = vmul.f32 %v1881, 0.2
        %v1898 = vmul.f32 %v1882, 0.2
        %v1899 = vmul.f32 %v1883, 0.2
        %v1900 = vmul.f32 %v1884, 0.2
        %v1901 = vmul.f32 %v1885, 0.2
        %v1902 = vmax.f32 %v1870, %v1886
        %v1903 = vmax.f32 %v1871, %v1887
        %v1904 = vmax.f32 %v1872, %v1888
        %v1905 = vmax.f32 %v1873, %v1889
        %v1906 = vmax.f32 %v1874, %v1890
        %v1907 = vmax.f32 %v1875, %v1891
        %v1908 = vmax.f32 %v1876, %v1892
        %v1909 = vmax.f32 %v1877, %v1893
        %v1910 = vmax.f32 %v1878, %v1894
        %v1911 = vmax.f32 %v1879, %v1895
        %v1912 = vmax.f32 %v1880, %v1896
        %v1913 = vmax.f32 %v1881, %v1897
        %v1914 = vmax.f32 %v1882, %v1898
        %v1915 = vmax.f32 %v1883, %v1899
        %v1916 = vmax.f32 %v1884, %v1900
        %v1917 = vmax.f32 %v1885, %v1901
        %v1918 = vsub.f32 0.0, %v1902
        %v1919 = vsub.f32 0.0, %v1903
        %v1920 = vsub.f32 0.0, %v1904
        %v1921 = vsub.f32 0.0, %v1905
        %v1922 = vsub.f32 0.0, %v1906
        %v1923 = vsub.f32 0.0, %v1907
        %v1924 = vsub.f32 0.0, %v1908
        %v1925 = vsub.f32 0.0, %v1909
        %v1926 = vsub.f32 0.0, %v1910
        %v1927 = vsub.f32 0.0, %v1911
        %v1928 = vsub.f32 0.0, %v1912
        %v1929 = vsub.f32 0.0, %v1913
        %v1930 = vsub.f32 0.0, %v1914
        %v1931 = vsub.f32 0.0, %v1915
        %v1932 = vsub.f32 0.0, %v1916
        %v1933 = vsub.f32 0.0, %v1917
        %v1934 = vsel %vm1066, %v1918, -1e+30
        %v1935 = vsel %vm1067, %v1919, -1e+30
        %v1936 = vsel %vm1068, %v1920, -1e+30
        %v1937 = vsel %vm1069, %v1921, -1e+30
        %v1938 = vsel %vm1070, %v1922, -1e+30
        %v1939 = vsel %vm1071, %v1923, -1e+30
        %v1940 = vsel %vm1072, %v1924, -1e+30
        %v1941 = vsel %vm1073, %v1925, -1e+30
        %v1942 = vsel %vm1074, %v1926, -1e+30
        %v1943 = vsel %vm1075, %v1927, -1e+30
        %v1944 = vsel %vm1076, %v1928, -1e+30
        %v1945 = vsel %vm1077, %v1929, -1e+30
        %v1946 = vsel %vm1078, %v1930, -1e+30
        %v1947 = vsel %vm1079, %v1931, -1e+30
        %v1948 = vsel %vm1080, %v1932, -1e+30
        %v1949 = vsel %vm1081, %v1933, -1e+30
        %s1950 = scalar_lea.vmem [#allocation2], 128
        %v1951 = vld [vmem:[%s1950] sm:$0xff]
        %v1952 = vld [vmem:[%s1950 + $0x8] sm:$0xff]
        %v1953 = vld [vmem:[%s1950 + $0x10] sm:$0xff]
        %v1954 = vld [vmem:[%s1950 + $0x18] sm:$0xff]
        %v1955 = vld [vmem:[%s1950 + $0x20] sm:$0xff]
        %v1956 = vld [vmem:[%s1950 + $0x28] sm:$0xff]
        %v1957 = vld [vmem:[%s1950 + $0x30] sm:$0xff]
        %v1958 = vld [vmem:[%s1950 + $0x38] sm:$0xff]
        %v1959 = vld [vmem:[%s1950 + $0x40] sm:$0xff]
        %v1960 = vld [vmem:[%s1950 + $0x48] sm:$0xff]
        %v1961 = vld [vmem:[%s1950 + $0x50] sm:$0xff]
        %v1962 = vld [vmem:[%s1950 + $0x58] sm:$0xff]
        %v1963 = vld [vmem:[%s1950 + $0x60] sm:$0xff]
        %v1964 = vld [vmem:[%s1950 + $0x68] sm:$0xff]
        %v1965 = vld [vmem:[%s1950 + $0x70] sm:$0xff]
        %v1966 = vld [vmem:[%s1950 + $0x78] sm:$0xff]
        %1967 = vmax.xlane.f32.xlu0 %v1934
        %v1968 = vpop.xlane.xlu0 %1967
        %1969 = vmax.xlane.f32.xlu0 %v1935
        %v1970 = vpop.xlane.xlu0 %1969
        %1971 = vmax.xlane.f32.xlu0 %v1936
        %v1972 = vpop.xlane.xlu0 %1971
        %1973 = vmax.xlane.f32.xlu0 %v1937
        %v1974 = vpop.xlane.xlu0 %1973
        %1975 = vmax.xlane.f32.xlu0 %v1938
        %v1976 = vpop.xlane.xlu0 %1975
        %1977 = vmax.xlane.f32.xlu0 %v1939
        %v1978 = vpop.xlane.xlu0 %1977
        %1979 = vmax.xlane.f32.xlu0 %v1940
        %v1980 = vpop.xlane.xlu0 %1979
        %1981 = vmax.xlane.f32.xlu0 %v1941
        %v1982 = vpop.xlane.xlu0 %1981
        %1983 = vmax.xlane.f32.xlu0 %v1942
        %v1984 = vpop.xlane.xlu0 %1983
        %1985 = vmax.xlane.f32.xlu0 %v1943
        %v1986 = vpop.xlane.xlu0 %1985
        %1987 = vmax.xlane.f32.xlu0 %v1944
        %v1988 = vpop.xlane.xlu0 %1987
        %1989 = vmax.xlane.f32.xlu0 %v1945
        %v1990 = vpop.xlane.xlu0 %1989
        %1991 = vmax.xlane.f32.xlu0 %v1946
        %v1992 = vpop.xlane.xlu0 %1991
        %1993 = vmax.xlane.f32.xlu0 %v1947
        %v1994 = vpop.xlane.xlu0 %1993
        %1995 = vmax.xlane.f32.xlu0 %v1948
        %v1996 = vpop.xlane.xlu0 %1995
        %1997 = vmax.xlane.f32.xlu0 %v1949
        %v1998 = vpop.xlane.xlu0 %1997
        %v1999 = vmax.f32 %v1951, %v1968
        %v2000 = vmax.f32 %v1952, %v1970
        %v2001 = vmax.f32 %v1953, %v1972
        %v2002 = vmax.f32 %v1954, %v1974
        %v2003 = vmax.f32 %v1955, %v1976
        %v2004 = vmax.f32 %v1956, %v1978
        %v2005 = vmax.f32 %v1957, %v1980
        %v2006 = vmax.f32 %v1958, %v1982
        %v2007 = vmax.f32 %v1959, %v1984
        %v2008 = vmax.f32 %v1960, %v1986
        %v2009 = vmax.f32 %v1961, %v1988
        %v2010 = vmax.f32 %v1962, %v1990
        %v2011 = vmax.f32 %v1963, %v1992
        %v2012 = vmax.f32 %v1964, %v1994
        %v2013 = vmax.f32 %v1965, %v1996
        %v2014 = vmax.f32 %v1966, %v1998
        %v2015 = vsub.f32 %v1951, %v1999
        %v2016 = vsub.f32 %v1952, %v2000
        %v2017 = vsub.f32 %v1953, %v2001
        %v2018 = vsub.f32 %v1954, %v2002
        %v2019 = vsub.f32 %v1955, %v2003
        %v2020 = vsub.f32 %v1956, %v2004
        %v2021 = vsub.f32 %v1957, %v2005
        %v2022 = vsub.f32 %v1958, %v2006
        %v2023 = vsub.f32 %v1959, %v2007
        %v2024 = vsub.f32 %v1960, %v2008
        %v2025 = vsub.f32 %v1961, %v2009
        %v2026 = vsub.f32 %v1962, %v2010
        %v2027 = vsub.f32 %v1963, %v2011
        %v2028 = vsub.f32 %v1964, %v2012
        %v2029 = vsub.f32 %v1965, %v2013
        %v2030 = vsub.f32 %v1966, %v2014
        %v2031 = vmul.f32 %v2015, 1.442695
        %v2032 = vpow.pop %v2031
        %v2033 = vmul.f32 %v2016, 1.442695
        %v2034 = vpow.pop %v2033
        %v2035 = vmul.f32 %v2017, 1.442695
        %v2036 = vpow.pop %v2035
        %v2037 = vmul.f32 %v2018, 1.442695
        %v2038 = vpow.pop %v2037
        %v2039 = vmul.f32 %v2019, 1.442695
        %v2040 = vpow.pop %v2039
        %v2041 = vmul.f32 %v2020, 1.442695
        %v2042 = vpow.pop %v2041
        %v2043 = vmul.f32 %v2021, 1.442695
        %v2044 = vpow.pop %v2043
        %v2045 = vmul.f32 %v2022, 1.442695
        %v2046 = vpow.pop %v2045
        %v2047 = vmul.f32 %v2023, 1.442695
        %v2048 = vpow.pop %v2047
        %v2049 = vmul.f32 %v2024, 1.442695
        %v2050 = vpow.pop %v2049
        %v2051 = vmul.f32 %v2025, 1.442695
        %v2052 = vpow.pop %v2051
        %v2053 = vmul.f32 %v2026, 1.442695
        %v2054 = vpow.pop %v2053
        %v2055 = vmul.f32 %v2027, 1.442695
        %v2056 = vpow.pop %v2055
        %v2057 = vmul.f32 %v2028, 1.442695
        %v2058 = vpow.pop %v2057
        %v2059 = vmul.f32 %v2029, 1.442695
        %v2060 = vpow.pop %v2059
        %v2061 = vmul.f32 %v2030, 1.442695
        %v2062 = vpow.pop %v2061
        %2064 = vset.pattern.permute.xlu0 0
        %2065 = vperm.xlu0 %2064, %v1999
        %v2066 = vpop.permute.xlu0 %2065
        %2069 = vset.pattern.permute.xlu0 0
        %2070 = vperm.xlu0 %2069, %v2000
        %v2071 = vpop.permute.xlu0 %2070
        %2074 = vset.pattern.permute.xlu0 0
        %2075 = vperm.xlu0 %2074, %v2001
        %v2076 = vpop.permute.xlu0 %2075
        %2079 = vset.pattern.permute.xlu0 0
        %2080 = vperm.xlu0 %2079, %v2002
        %v2081 = vpop.permute.xlu0 %2080
        %2084 = vset.pattern.permute.xlu0 0
        %2085 = vperm.xlu0 %2084, %v2003
        %v2086 = vpop.permute.xlu0 %2085
        %2089 = vset.pattern.permute.xlu0 0
        %2090 = vperm.xlu0 %2089, %v2004
        %v2091 = vpop.permute.xlu0 %2090
        %2094 = vset.pattern.permute.xlu0 0
        %2095 = vperm.xlu0 %2094, %v2005
        %v2096 = vpop.permute.xlu0 %2095
        %2099 = vset.pattern.permute.xlu0 0
        %2100 = vperm.xlu0 %2099, %v2006
        %v2101 = vpop.permute.xlu0 %2100
        %2104 = vset.pattern.permute.xlu0 0
        %2105 = vperm.xlu0 %2104, %v2007
        %v2106 = vpop.permute.xlu0 %2105
        %2109 = vset.pattern.permute.xlu0 0
        %2110 = vperm.xlu0 %2109, %v2008
        %v2111 = vpop.permute.xlu0 %2110
        %2114 = vset.pattern.permute.xlu0 0
        %2115 = vperm.xlu0 %2114, %v2009
        %v2116 = vpop.permute.xlu0 %2115
        %2119 = vset.pattern.permute.xlu0 0
        %2120 = vperm.xlu0 %2119, %v2010
        %v2121 = vpop.permute.xlu0 %2120
        %2124 = vset.pattern.permute.xlu0 0
        %2125 = vperm.xlu0 %2124, %v2011
        %v2126 = vpop.permute.xlu0 %2125
        %2129 = vset.pattern.permute.xlu0 0
        %2130 = vperm.xlu0 %2129, %v2012
        %v2131 = vpop.permute.xlu0 %2130
        %2134 = vset.pattern.permute.xlu0 0
        %2135 = vperm.xlu0 %2134, %v2013
        %v2136 = vpop.permute.xlu0 %2135
        %2139 = vset.pattern.permute.xlu0 0
        %2140 = vperm.xlu0 %2139, %v2014
        %v2141 = vpop.permute.xlu0 %2140
        %v2143 = vsub.f32 %v1934, %v2066
        %v2144 = vsub.f32 %v1935, %v2071
        %v2145 = vsub.f32 %v1936, %v2076
        %v2146 = vsub.f32 %v1937, %v2081
        %v2147 = vsub.f32 %v1938, %v2086
        %v2148 = vsub.f32 %v1939, %v2091
        %v2149 = vsub.f32 %v1940, %v2096
        %v2150 = vsub.f32 %v1941, %v2101
        %v2151 = vsub.f32 %v1942, %v2106
        %v2152 = vsub.f32 %v1943, %v2111
        %v2153 = vsub.f32 %v1944, %v2116
        %v2154 = vsub.f32 %v1945, %v2121
        %v2155 = vsub.f32 %v1946, %v2126
        %v2156 = vsub.f32 %v1947, %v2131
        %v2157 = vsub.f32 %v1948, %v2136
        %v2158 = vsub.f32 %v1949, %v2141
        %v2159 = vmul.f32 %v2143, 1.442695
        %v2160 = vpow.pop %v2159
        %v2161 = vmul.f32 %v2144, 1.442695
        %v2162 = vpow.pop %v2161
        %v2163 = vmul.f32 %v2145, 1.442695
        %v2164 = vpow.pop %v2163
        %v2165 = vmul.f32 %v2146, 1.442695
        %v2166 = vpow.pop %v2165
        %v2167 = vmul.f32 %v2147, 1.442695
        %v2168 = vpow.pop %v2167
        %v2169 = vmul.f32 %v2148, 1.442695
        %v2170 = vpow.pop %v2169
        %v2171 = vmul.f32 %v2149, 1.442695
        %v2172 = vpow.pop %v2171
        %v2173 = vmul.f32 %v2150, 1.442695
        %v2174 = vpow.pop %v2173
        %v2175 = vmul.f32 %v2151, 1.442695
        %v2176 = vpow.pop %v2175
        %v2177 = vmul.f32 %v2152, 1.442695
        %v2178 = vpow.pop %v2177
        %v2179 = vmul.f32 %v2153, 1.442695
        %v2180 = vpow.pop %v2179
        %v2181 = vmul.f32 %v2154, 1.442695
        %v2182 = vpow.pop %v2181
        %v2183 = vmul.f32 %v2155, 1.442695
        %v2184 = vpow.pop %v2183
        %v2185 = vmul.f32 %v2156, 1.442695
        %v2186 = vpow.pop %v2185
        %v2187 = vmul.f32 %v2157, 1.442695
        %v2188 = vpow.pop %v2187
        %v2189 = vmul.f32 %v2158, 1.442695
        %v2190 = vpow.pop %v2189
        %s2191 = scalar_lea.vmem [#allocation3], 128
        %v2192 = vld [vmem:[%s2191] sm:$0xff]
        %v2193 = vld [vmem:[%s2191 + $0x8] sm:$0xff]
        %v2194 = vld [vmem:[%s2191 + $0x10] sm:$0xff]
        %v2195 = vld [vmem:[%s2191 + $0x18] sm:$0xff]
        %v2196 = vld [vmem:[%s2191 + $0x20] sm:$0xff]
        %v2197 = vld [vmem:[%s2191 + $0x28] sm:$0xff]
        %v2198 = vld [vmem:[%s2191 + $0x30] sm:$0xff]
        %v2199 = vld [vmem:[%s2191 + $0x38] sm:$0xff]
        %v2200 = vld [vmem:[%s2191 + $0x40] sm:$0xff]
        %v2201 = vld [vmem:[%s2191 + $0x48] sm:$0xff]
        %v2202 = vld [vmem:[%s2191 + $0x50] sm:$0xff]
        %v2203 = vld [vmem:[%s2191 + $0x58] sm:$0xff]
        %v2204 = vld [vmem:[%s2191 + $0x60] sm:$0xff]
        %v2205 = vld [vmem:[%s2191 + $0x68] sm:$0xff]
        %v2206 = vld [vmem:[%s2191 + $0x70] sm:$0xff]
        %v2207 = vld [vmem:[%s2191 + $0x78] sm:$0xff]
        %v2208 = vmul.f32 %v2032, %v2192
        %v2209 = vmul.f32 %v2034, %v2193
        %v2210 = vmul.f32 %v2036, %v2194
        %v2211 = vmul.f32 %v2038, %v2195
        %v2212 = vmul.f32 %v2040, %v2196
        %v2213 = vmul.f32 %v2042, %v2197
        %v2214 = vmul.f32 %v2044, %v2198
        %v2215 = vmul.f32 %v2046, %v2199
        %v2216 = vmul.f32 %v2048, %v2200
        %v2217 = vmul.f32 %v2050, %v2201
        %v2218 = vmul.f32 %v2052, %v2202
        %v2219 = vmul.f32 %v2054, %v2203
        %v2220 = vmul.f32 %v2056, %v2204
        %v2221 = vmul.f32 %v2058, %v2205
        %v2222 = vmul.f32 %v2060, %v2206
        %v2223 = vmul.f32 %v2062, %v2207
        %2224 = vadd.xlane.f32.xlu0 %v2160
        %v2225 = vpop.xlane.xlu0 %2224
        %2226 = vadd.xlane.f32.xlu0 %v2162
        %v2227 = vpop.xlane.xlu0 %2226
        %2228 = vadd.xlane.f32.xlu0 %v2164
        %v2229 = vpop.xlane.xlu0 %2228
        %2230 = vadd.xlane.f32.xlu0 %v2166
        %v2231 = vpop.xlane.xlu0 %2230
        %2232 = vadd.xlane.f32.xlu0 %v2168
        %v2233 = vpop.xlane.xlu0 %2232
        %2234 = vadd.xlane.f32.xlu0 %v2170
        %v2235 = vpop.xlane.xlu0 %2234
        %2236 = vadd.xlane.f32.xlu0 %v2172
        %v2237 = vpop.xlane.xlu0 %2236
        %2238 = vadd.xlane.f32.xlu0 %v2174
        %v2239 = vpop.xlane.xlu0 %2238
        %2240 = vadd.xlane.f32.xlu0 %v2176
        %v2241 = vpop.xlane.xlu0 %2240
        %2242 = vadd.xlane.f32.xlu0 %v2178
        %v2243 = vpop.xlane.xlu0 %2242
        %2244 = vadd.xlane.f32.xlu0 %v2180
        %v2245 = vpop.xlane.xlu0 %2244
        %2246 = vadd.xlane.f32.xlu0 %v2182
        %v2247 = vpop.xlane.xlu0 %2246
        %2248 = vadd.xlane.f32.xlu0 %v2184
        %v2249 = vpop.xlane.xlu0 %2248
        %2250 = vadd.xlane.f32.xlu0 %v2186
        %v2251 = vpop.xlane.xlu0 %2250
        %2252 = vadd.xlane.f32.xlu0 %v2188
        %v2253 = vpop.xlane.xlu0 %2252
        %2254 = vadd.xlane.f32.xlu0 %v2190
        %v2255 = vpop.xlane.xlu0 %2254
        %v2256 = vadd.f32 %v2208, %v2225
        %v2257 = vadd.f32 %v2209, %v2227
        %v2258 = vadd.f32 %v2210, %v2229
        %v2259 = vadd.f32 %v2211, %v2231
        %v2260 = vadd.f32 %v2212, %v2233
        %v2261 = vadd.f32 %v2213, %v2235
        %v2262 = vadd.f32 %v2214, %v2237
        %v2263 = vadd.f32 %v2215, %v2239
        %v2264 = vadd.f32 %v2216, %v2241
        %v2265 = vadd.f32 %v2217, %v2243
        %v2266 = vadd.f32 %v2218, %v2245
        %v2267 = vadd.f32 %v2219, %v2247
        %v2268 = vadd.f32 %v2220, %v2249
        %v2269 = vadd.f32 %v2221, %v2251
        %v2270 = vadd.f32 %v2222, %v2253
        %v2271 = vadd.f32 %v2223, %v2255
        %2272 = vst.msk [vmem:[%s2191] sm:$0xff] %vm1418, %v2256
        %2273 = vst.msk [vmem:[%s2191 + $0x8] sm:$0xff] %vm1418, %v2257
        %2274 = vst.msk [vmem:[%s2191 + $0x10] sm:$0xff] %vm1418, %v2258
        %2275 = vst.msk [vmem:[%s2191 + $0x18] sm:$0xff] %vm1418, %v2259
        %2276 = vst.msk [vmem:[%s2191 + $0x20] sm:$0xff] %vm1418, %v2260
        %2277 = vst.msk [vmem:[%s2191 + $0x28] sm:$0xff] %vm1418, %v2261
        %2278 = vst.msk [vmem:[%s2191 + $0x30] sm:$0xff] %vm1418, %v2262
        %2279 = vst.msk [vmem:[%s2191 + $0x38] sm:$0xff] %vm1418, %v2263
        %2280 = vst.msk [vmem:[%s2191 + $0x40] sm:$0xff] %vm1418, %v2264
        %2281 = vst.msk [vmem:[%s2191 + $0x48] sm:$0xff] %vm1418, %v2265
        %2282 = vst.msk [vmem:[%s2191 + $0x50] sm:$0xff] %vm1418, %v2266
        %2283 = vst.msk [vmem:[%s2191 + $0x58] sm:$0xff] %vm1418, %v2267
        %2284 = vst.msk [vmem:[%s2191 + $0x60] sm:$0xff] %vm1418, %v2268
        %2285 = vst.msk [vmem:[%s2191 + $0x68] sm:$0xff] %vm1418, %v2269
        %2286 = vst.msk [vmem:[%s2191 + $0x70] sm:$0xff] %vm1418, %v2270
        %2287 = vst.msk [vmem:[%s2191 + $0x78] sm:$0xff] %vm1418, %v2271
        %s2288 = scalar_lea.vmem [#allocation4], 128
        %v2289 = vld [vmem:[%s2288] sm:$0xff]
        %v2290 = vld [vmem:[%s2288 + $0x8] sm:$0xff]
        %v2291 = vld [vmem:[%s2288 + $0x10] sm:$0xff]
        %v2292 = vld [vmem:[%s2288 + $0x18] sm:$0xff]
        %v2293 = vld [vmem:[%s2288 + $0x20] sm:$0xff]
        %v2294 = vld [vmem:[%s2288 + $0x28] sm:$0xff]
        %v2295 = vld [vmem:[%s2288 + $0x30] sm:$0xff]
        %v2296 = vld [vmem:[%s2288 + $0x38] sm:$0xff]
        %v2297 = vld [vmem:[%s2288 + $0x40] sm:$0xff]
        %v2298 = vld [vmem:[%s2288 + $0x48] sm:$0xff]
        %v2299 = vld [vmem:[%s2288 + $0x50] sm:$0xff]
        %v2300 = vld [vmem:[%s2288 + $0x58] sm:$0xff]
        %v2301 = vld [vmem:[%s2288 + $0x60] sm:$0xff]
        %v2302 = vld [vmem:[%s2288 + $0x68] sm:$0xff]
        %v2303 = vld [vmem:[%s2288 + $0x70] sm:$0xff]
        %v2304 = vld [vmem:[%s2288 + $0x78] sm:$0xff]
        %2306 = vset.pattern.permute.xlu0 0
        %2307 = vperm.xlu0 %2306, %v2032
        %v2308 = vpop.permute.xlu0 %2307
        %2311 = vset.pattern.permute.xlu0 0
        %2312 = vperm.xlu0 %2311, %v2034
        %v2313 = vpop.permute.xlu0 %2312
        %2316 = vset.pattern.permute.xlu0 0
        %2317 = vperm.xlu0 %2316, %v2036
        %v2318 = vpop.permute.xlu0 %2317
        %2321 = vset.pattern.permute.xlu0 0
        %2322 = vperm.xlu0 %2321, %v2038
        %v2323 = vpop.permute.xlu0 %2322
        %2326 = vset.pattern.permute.xlu0 0
        %2327 = vperm.xlu0 %2326, %v2040
        %v2328 = vpop.permute.xlu0 %2327
        %2331 = vset.pattern.permute.xlu0 0
        %2332 = vperm.xlu0 %2331, %v2042
        %v2333 = vpop.permute.xlu0 %2332
        %2336 = vset.pattern.permute.xlu0 0
        %2337 = vperm.xlu0 %2336, %v2044
        %v2338 = vpop.permute.xlu0 %2337
        %2341 = vset.pattern.permute.xlu0 0
        %2342 = vperm.xlu0 %2341, %v2046
        %v2343 = vpop.permute.xlu0 %2342
        %2346 = vset.pattern.permute.xlu0 0
        %2347 = vperm.xlu0 %2346, %v2048
        %v2348 = vpop.permute.xlu0 %2347
        %2351 = vset.pattern.permute.xlu0 0
        %2352 = vperm.xlu0 %2351, %v2050
        %v2353 = vpop.permute.xlu0 %2352
        %2356 = vset.pattern.permute.xlu0 0
        %2357 = vperm.xlu0 %2356, %v2052
        %v2358 = vpop.permute.xlu0 %2357
        %2361 = vset.pattern.permute.xlu0 0
        %2362 = vperm.xlu0 %2361, %v2054
        %v2363 = vpop.permute.xlu0 %2362
        %2366 = vset.pattern.permute.xlu0 0
        %2367 = vperm.xlu0 %2366, %v2056
        %v2368 = vpop.permute.xlu0 %2367
        %2371 = vset.pattern.permute.xlu0 0
        %2372 = vperm.xlu0 %2371, %v2058
        %v2373 = vpop.permute.xlu0 %2372
        %2376 = vset.pattern.permute.xlu0 0
        %2377 = vperm.xlu0 %2376, %v2060
        %v2378 = vpop.permute.xlu0 %2377
        %2381 = vset.pattern.permute.xlu0 0
        %2382 = vperm.xlu0 %2381, %v2062
        %v2383 = vpop.permute.xlu0 %2382
        %v2385 = vmul.f32 %v2308, %v2289
        %v2386 = vmul.f32 %v2313, %v2290
        %v2387 = vmul.f32 %v2318, %v2291
        %v2388 = vmul.f32 %v2323, %v2292
        %v2389 = vmul.f32 %v2328, %v2293
        %v2390 = vmul.f32 %v2333, %v2294
        %v2391 = vmul.f32 %v2338, %v2295
        %v2392 = vmul.f32 %v2343, %v2296
        %v2393 = vmul.f32 %v2348, %v2297
        %v2394 = vmul.f32 %v2353, %v2298
        %v2395 = vmul.f32 %v2358, %v2299
        %v2396 = vmul.f32 %v2363, %v2300
        %v2397 = vmul.f32 %v2368, %v2301
        %v2398 = vmul.f32 %v2373, %v2302
        %v2399 = vmul.f32 %v2378, %v2303
        %v2400 = vmul.f32 %v2383, %v2304
        %v2401 = vpack.c.bf16 %v2162, %v2160
        %v2402 = vpack.c.bf16 %v2166, %v2164
        %v2403 = vpack.c.bf16 %v2170, %v2168
        %v2404 = vpack.c.bf16 %v2174, %v2172
        %v2405 = vpack.c.bf16 %v2178, %v2176
        %v2406 = vpack.c.bf16 %v2182, %v2180
        %v2407 = vpack.c.bf16 %v2186, %v2184
        %v2408 = vpack.c.bf16 %v2190, %v2188
        %s2409 = scalar_lea.vmem %s628, 64 [#allocation6]
        %v2410 = vld [vmem:[%s2409] sm:$0xf]
        %v2411 = vld [vmem:[%s2409 + $0x4] sm:$0xf]
        %v2412 = vld [vmem:[%s2409 + $0x8] sm:$0xf]
        %v2413 = vld [vmem:[%s2409 + $0xc] sm:$0xf]
        %v2414 = vld [vmem:[%s2409 + $0x10] sm:$0xf]
        %v2415 = vld [vmem:[%s2409 + $0x14] sm:$0xf]
        %v2416 = vld [vmem:[%s2409 + $0x18] sm:$0xf]
        %v2417 = vld [vmem:[%s2409 + $0x1c] sm:$0xf]
        %v2418 = vld [vmem:[%s2409 + $0x20] sm:$0xf]
        %v2419 = vld [vmem:[%s2409 + $0x24] sm:$0xf]
        %v2420 = vld [vmem:[%s2409 + $0x28] sm:$0xf]
        %v2421 = vld [vmem:[%s2409 + $0x2c] sm:$0xf]
        %v2422 = vld [vmem:[%s2409 + $0x30] sm:$0xf]
        %v2423 = vld [vmem:[%s2409 + $0x34] sm:$0xf]
        %v2424 = vld [vmem:[%s2409 + $0x38] sm:$0xf]
        %v2425 = vld [vmem:[%s2409 + $0x3c] sm:$0xf]
        %v2442 = vunpack.c.l.b16 %v2410
        %v2443 = vunpack.c.l.b16 %v2411
        %v2444 = vunpack.c.l.b16 %v2412
        %v2445 = vunpack.c.l.b16 %v2413
        %v2446 = vunpack.c.l.b16 %v2414
        %v2447 = vunpack.c.l.b16 %v2415
        %v2448 = vunpack.c.l.b16 %v2416
        %v2449 = vunpack.c.l.b16 %v2417
        %v2450 = vunpack.c.l.b16 %v2418
        %v2451 = vunpack.c.l.b16 %v2419
        %v2452 = vunpack.c.l.b16 %v2420
        %v2453 = vunpack.c.l.b16 %v2421
        %v2454 = vunpack.c.l.b16 %v2422
        %v2455 = vunpack.c.l.b16 %v2423
        %v2456 = vunpack.c.l.b16 %v2424
        %v2457 = vunpack.c.l.b16 %v2425
        %v2458 = vpack.c.b16 %v2443, %v2442
        %v2459 = vpack.c.b16 %v2445, %v2444
        %v2460 = vpack.c.b16 %v2447, %v2446
        %v2461 = vpack.c.b16 %v2449, %v2448
        %v2462 = vpack.c.b16 %v2451, %v2450
        %v2463 = vpack.c.b16 %v2453, %v2452
        %v2464 = vpack.c.b16 %v2455, %v2454
        %v2465 = vpack.c.b16 %v2457, %v2456
        %2474 = vmatprep.subr.bf16.mxu0 0
        %2475 = vmatpush1.bf16.msra.mxu0 %v2458
        %2476 = vmatprep.subr.bf16.mxu0 0
        %2477 = vmatpush1.bf16.msra.mxu0 %v2459
        %2478 = vmatprep.subr.bf16.mxu0 0
        %2479 = vmatpush1.bf16.msra.mxu0 %v2460
        %2480 = vmatprep.subr.bf16.mxu0 0
        %2481 = vmatpush1.bf16.msra.mxu0 %v2461
        %2482 = vmatprep.subr.bf16.mxu0 0
        %2483 = vmatpush1.bf16.msra.mxu0 %v2462
        %2484 = vmatprep.subr.bf16.mxu0 0
        %2485 = vmatpush1.bf16.msra.mxu0 %v2463
        %2486 = vmatprep.subr.bf16.mxu0 0
        %2487 = vmatpush1.bf16.msra.mxu0 %v2464
        %2488 = vmatprep.subr.bf16.mxu0 0
        %2489 = vmatpush1.bf16.msra.mxu0 %v2465
        %2490 = vmatprep.subr.bf16.mxu0 0
        %2491 = vmatpush1.bf16.msra.mxu0 0
        %2492 = vmatprep.subr.bf16.mxu0 0
        %2493 = vmatpush1.bf16.msra.mxu0 0
        %2494 = vmatprep.subr.bf16.mxu0 0
        %2495 = vmatpush1.bf16.msra.mxu0 0
        %2496 = vmatprep.subr.bf16.mxu0 0
        %2497 = vmatpush1.bf16.msra.mxu0 0
        %2498 = vmatprep.subr.bf16.mxu0 0
        %2499 = vmatpush1.bf16.msra.mxu0 0
        %2500 = vmatprep.subr.bf16.mxu0 0
        %2501 = vmatpush1.bf16.msra.mxu0 0
        %2502 = vmatprep.subr.bf16.mxu0 0
        %2503 = vmatpush1.bf16.msra.mxu0 0
        %2504 = vmatprep.subr.bf16.mxu0 0
        %2505 = vmatpush1.bf16.msra.mxu0 0
        %2506 = vmatprep.mubr.bf16.mxu0 0
        %2507 = vmatmul.mubr.bf16.gmra.mrb[0].mxu0 %v2401
        %v2508 = vpop.f32.mrb[0].mxu0
        %v2509 = vadd.f32 0.0, %v2508
        %v2510 = vpop.f32.mrb[0].mxu0
        %v2511 = vpop.f32.mrb[0].mxu0
        %v2512 = vadd.f32 0.0, %v2511
        %v2513 = vpop.f32.mrb[0].mxu0
        %2514 = vmatprep.mubr.bf16.mxu0 0
        %2515 = vmatmul.mubr.bf16.gmra.mrb[0].mxu0 %v2402
        %v2516 = vpop.f32.mrb[0].mxu0
        %v2517 = vadd.f32 0.0, %v2516
        %v2518 = vpop.f32.mrb[0].mxu0
        %v2519 = vpop.f32.mrb[0].mxu0
        %v2520 = vadd.f32 0.0, %v2519
        %v2521 = vpop.f32.mrb[0].mxu0
        %2522 = vmatprep.mubr.bf16.mxu0 0
        %2523 = vmatmul.mubr.bf16.gmra.mrb[0].mxu0 %v2403
        %v2524 = vpop.f32.mrb[0].mxu0
        %v2525 = vadd.f32 0.0, %v2524
        %v2526 = vpop.f32.mrb[0].mxu0
        %v2527 = vpop.f32.mrb[0].mxu0
        %v2528 = vadd.f32 0.0, %v2527
        %v2529 = vpop.f32.mrb[0].mxu0
        %2530 = vmatprep.mubr.bf16.mxu0 0
        %2531 = vmatmul.mubr.bf16.gmra.mrb[0].mxu0 %v2404
        %v2532 = vpop.f32.mrb[0].mxu0
        %v2533 = vadd.f32 0.0, %v2532
        %v2534 = vpop.f32.mrb[0].mxu0
        %v2535 = vpop.f32.mrb[0].mxu0
        %v2536 = vadd.f32 0.0, %v2535
        %v2537 = vpop.f32.mrb[0].mxu0
        %2538 = vmatprep.mubr.bf16.mxu0 0
        %2539 = vmatmul.mubr.bf16.gmra.mrb[0].mxu0 %v2405
        %v2540 = vpop.f32.mrb[0].mxu0
        %v2541 = vadd.f32 0.0, %v2540
        %v2542 = vpop.f32.mrb[0].mxu0
        %v2543 = vpop.f32.mrb[0].mxu0
        %v2544 = vadd.f32 0.0, %v2543
        %v2545 = vpop.f32.mrb[0].mxu0
        %2546 = vmatprep.mubr.bf16.mxu0 0
        %2547 = vmatmul.mubr.bf16.gmra.mrb[0].mxu0 %v2406
        %v2548 = vpop.f32.mrb[0].mxu0
        %v2549 = vadd.f32 0.0, %v2548
        %v2550 = vpop.f32.mrb[0].mxu0
        %v2551 = vpop.f32.mrb[0].mxu0
        %v2552 = vadd.f32 0.0, %v2551
        %v2553 = vpop.f32.mrb[0].mxu0
        %2554 = vmatprep.mubr.bf16.mxu0 0
        %2555 = vmatmul.mubr.bf16.gmra.mrb[0].mxu0 %v2407
        %v2556 = vpop.f32.mrb[0].mxu0
        %v2557 = vadd.f32 0.0, %v2556
        %v2558 = vpop.f32.mrb[0].mxu0
        %v2559 = vpop.f32.mrb[0].mxu0
        %v2560 = vadd.f32 0.0, %v2559
        %v2561 = vpop.f32.mrb[0].mxu0
        %2562 = vmatprep.mubr.bf16.mxu0 0
        %2563 = vmatmul.mubr.bf16.gmra.mrb[0].mxu0 %v2408
        %v2564 = vpop.f32.mrb[0].mxu0
        %v2565 = vadd.f32 0.0, %v2564
        %v2566 = vpop.f32.mrb[0].mxu0
        %v2567 = vpop.f32.mrb[0].mxu0
        %v2568 = vadd.f32 0.0, %v2567
        %v2569 = vpop.f32.mrb[0].mxu0
        %2570 = vdwg.mxu0
        %v2571 = vadd.f32 %v2385, %v2509
        %v2572 = vadd.f32 %v2386, %v2512
        %v2573 = vadd.f32 %v2387, %v2517
        %v2574 = vadd.f32 %v2388, %v2520
        %v2575 = vadd.f32 %v2389, %v2525
        %v2576 = vadd.f32 %v2390, %v2528
        %v2577 = vadd.f32 %v2391, %v2533
        %v2578 = vadd.f32 %v2392, %v2536
        %v2579 = vadd.f32 %v2393, %v2541
        %v2580 = vadd.f32 %v2394, %v2544
        %v2581 = vadd.f32 %v2395, %v2549
        %v2582 = vadd.f32 %v2396, %v2552
        %v2583 = vadd.f32 %v2397, %v2557
        %v2584 = vadd.f32 %v2398, %v2560
        %v2585 = vadd.f32 %v2399, %v2565
        %v2586 = vadd.f32 %v2400, %v2568
        %2587 = vst.msk [vmem:[%s2288] sm:$0xff] %vm1732, %v2571
        %2588 = vst.msk [vmem:[%s2288 + $0x8] sm:$0xff] %vm1732, %v2572
        %2589 = vst.msk [vmem:[%s2288 + $0x10] sm:$0xff] %vm1732, %v2573
        %2590 = vst.msk [vmem:[%s2288 + $0x18] sm:$0xff] %vm1732, %v2574
        %2591 = vst.msk [vmem:[%s2288 + $0x20] sm:$0xff] %vm1732, %v2575
        %2592 = vst.msk [vmem:[%s2288 + $0x28] sm:$0xff] %vm1732, %v2576
        %2593 = vst.msk [vmem:[%s2288 + $0x30] sm:$0xff] %vm1732, %v2577
        %2594 = vst.msk [vmem:[%s2288 + $0x38] sm:$0xff] %vm1732, %v2578
        %2595 = vst.msk [vmem:[%s2288 + $0x40] sm:$0xff] %vm1732, %v2579
        %2596 = vst.msk [vmem:[%s2288 + $0x48] sm:$0xff] %vm1732, %v2580
        %2597 = vst.msk [vmem:[%s2288 + $0x50] sm:$0xff] %vm1732, %v2581
        %2598 = vst.msk [vmem:[%s2288 + $0x58] sm:$0xff] %vm1732, %v2582
        %2599 = vst.msk [vmem:[%s2288 + $0x60] sm:$0xff] %vm1732, %v2583
        %2600 = vst.msk [vmem:[%s2288 + $0x68] sm:$0xff] %vm1732, %v2584
        %2601 = vst.msk [vmem:[%s2288 + $0x70] sm:$0xff] %vm1732, %v2585
        %2602 = vst.msk [vmem:[%s2288 + $0x78] sm:$0xff] %vm1732, %v2586
        %2603 = vst.msk [vmem:[%s1950] sm:$0xff] %vm1418, %v1999
        %2604 = vst.msk [vmem:[%s1950 + $0x8] sm:$0xff] %vm1418, %v2000
        %2605 = vst.msk [vmem:[%s1950 + $0x10] sm:$0xff] %vm1418, %v2001
        %2606 = vst.msk [vmem:[%s1950 + $0x18] sm:$0xff] %vm1418, %v2002
        %2607 = vst.msk [vmem:[%s1950 + $0x20] sm:$0xff] %vm1418, %v2003
        %2608 = vst.msk [vmem:[%s1950 + $0x28] sm:$0xff] %vm1418, %v2004
        %2609 = vst.msk [vmem:[%s1950 + $0x30] sm:$0xff] %vm1418, %v2005
        %2610 = vst.msk [vmem:[%s1950 + $0x38] sm:$0xff] %vm1418, %v2006
        %2611 = vst.msk [vmem:[%s1950 + $0x40] sm:$0xff] %vm1418, %v2007
        %2612 = vst.msk [vmem:[%s1950 + $0x48] sm:$0xff] %vm1418, %v2008
        %2613 = vst.msk [vmem:[%s1950 + $0x50] sm:$0xff] %vm1418, %v2009
        %2614 = vst.msk [vmem:[%s1950 + $0x58] sm:$0xff] %vm1418, %v2010
        %2615 = vst.msk [vmem:[%s1950 + $0x60] sm:$0xff] %vm1418, %v2011
        %2616 = vst.msk [vmem:[%s1950 + $0x68] sm:$0xff] %vm1418, %v2012
        %2617 = vst.msk [vmem:[%s1950 + $0x70] sm:$0xff] %vm1418, %v2013
        %2618 = vst.msk [vmem:[%s1950 + $0x78] sm:$0xff] %vm1418, %v2014
        %p2619 = scmp.eq.s32.totalorder %s20, 1
        // Predicated region
        $region192: #{spagat_forward.2} parent=170 // pred_check
          %p2620 = pneg %p2619
        $region193: #{spagat_forward.2} parent=170 // pred_check_branch
          %2622 = sbr.rel (%p2620) target = $region195
        $region194: #{spagat_forward.2} parent=170 // pred_region
          %v2623 = vld [vmem:[#allocation4] sm:$0xff]
          %v2624 = vld [vmem:[#allocation4 + $0x8] sm:$0xff]
          %v2625 = vld [vmem:[#allocation4 + $0x10] sm:$0xff]
          %v2626 = vld [vmem:[#allocation4 + $0x18] sm:$0xff]
          %v2627 = vld [vmem:[#allocation4 + $0x20] sm:$0xff]
          %v2628 = vld [vmem:[#allocation4 + $0x28] sm:$0xff]
          %v2629 = vld [vmem:[#allocation4 + $0x30] sm:$0xff]
          %v2630 = vld [vmem:[#allocation4 + $0x38] sm:$0xff]
          %v2631 = vld [vmem:[#allocation4 + $0x40] sm:$0xff]
          %v2632 = vld [vmem:[#allocation4 + $0x48] sm:$0xff]
          %v2633 = vld [vmem:[#allocation4 + $0x50] sm:$0xff]
          %v2634 = vld [vmem:[#allocation4 + $0x58] sm:$0xff]
          %v2635 = vld [vmem:[#allocation4 + $0x60] sm:$0xff]
          %v2636 = vld [vmem:[#allocation4 + $0x68] sm:$0xff]
          %v2637 = vld [vmem:[#allocation4 + $0x70] sm:$0xff]
          %v2638 = vld [vmem:[#allocation4 + $0x78] sm:$0xff]
          %v2639 = vld [vmem:[#allocation3] sm:$0xff]
          %v2640 = vld [vmem:[#allocation3 + $0x8] sm:$0xff]
          %v2641 = vld [vmem:[#allocation3 + $0x10] sm:$0xff]
          %v2642 = vld [vmem:[#allocation3 + $0x18] sm:$0xff]
          %v2643 = vld [vmem:[#allocation3 + $0x20] sm:$0xff]
          %v2644 = vld [vmem:[#allocation3 + $0x28] sm:$0xff]
          %v2645 = vld [vmem:[#allocation3 + $0x30] sm:$0xff]
          %v2646 = vld [vmem:[#allocation3 + $0x38] sm:$0xff]
          %v2647 = vld [vmem:[#allocation3 + $0x40] sm:$0xff]
          %v2648 = vld [vmem:[#allocation3 + $0x48] sm:$0xff]
          %v2649 = vld [vmem:[#allocation3 + $0x50] sm:$0xff]
          %v2650 = vld [vmem:[#allocation3 + $0x58] sm:$0xff]
          %v2651 = vld [vmem:[#allocation3 + $0x60] sm:$0xff]
          %v2652 = vld [vmem:[#allocation3 + $0x68] sm:$0xff]
          %v2653 = vld [vmem:[#allocation3 + $0x70] sm:$0xff]
          %v2654 = vld [vmem:[#allocation3 + $0x78] sm:$0xff]
          %v2655 = vmax.f32 %v2639, 1e-12
          %v2656 = vmax.f32 %v2640, 1e-12
          %v2657 = vmax.f32 %v2641, 1e-12
          %v2658 = vmax.f32 %v2642, 1e-12
          %v2659 = vmax.f32 %v2643, 1e-12
          %v2660 = vmax.f32 %v2644, 1e-12
          %v2661 = vmax.f32 %v2645, 1e-12
          %v2662 = vmax.f32 %v2646, 1e-12
          %v2663 = vmax.f32 %v2647, 1e-12
          %v2664 = vmax.f32 %v2648, 1e-12
          %v2665 = vmax.f32 %v2649, 1e-12
          %v2666 = vmax.f32 %v2650, 1e-12
          %v2667 = vmax.f32 %v2651, 1e-12
          %v2668 = vmax.f32 %v2652, 1e-12
          %v2669 = vmax.f32 %v2653, 1e-12
          %v2670 = vmax.f32 %v2654, 1e-12
          %2672 = vset.pattern.permute.xlu0 0
          %2673 = vperm.xlu0 %2672, %v2655
          %v2674 = vpop.permute.xlu0 %2673
          %2677 = vset.pattern.permute.xlu0 0
          %2678 = vperm.xlu0 %2677, %v2656
          %v2679 = vpop.permute.xlu0 %2678
          %2682 = vset.pattern.permute.xlu0 0
          %2683 = vperm.xlu0 %2682, %v2657
          %v2684 = vpop.permute.xlu0 %2683
          %2687 = vset.pattern.permute.xlu0 0
          %2688 = vperm.xlu0 %2687, %v2658
          %v2689 = vpop.permute.xlu0 %2688
          %2692 = vset.pattern.permute.xlu0 0
          %2693 = vperm.xlu0 %2692, %v2659
          %v2694 = vpop.permute.xlu0 %2693
          %2697 = vset.pattern.permute.xlu0 0
          %2698 = vperm.xlu0 %2697, %v2660
          %v2699 = vpop.permute.xlu0 %2698
          %2702 = vset.pattern.permute.xlu0 0
          %2703 = vperm.xlu0 %2702, %v2661
          %v2704 = vpop.permute.xlu0 %2703
          %2707 = vset.pattern.permute.xlu0 0
          %2708 = vperm.xlu0 %2707, %v2662
          %v2709 = vpop.permute.xlu0 %2708
          %2712 = vset.pattern.permute.xlu0 0
          %2713 = vperm.xlu0 %2712, %v2663
          %v2714 = vpop.permute.xlu0 %2713
          %2717 = vset.pattern.permute.xlu0 0
          %2718 = vperm.xlu0 %2717, %v2664
          %v2719 = vpop.permute.xlu0 %2718
          %2722 = vset.pattern.permute.xlu0 0
          %2723 = vperm.xlu0 %2722, %v2665
          %v2724 = vpop.permute.xlu0 %2723
          %2727 = vset.pattern.permute.xlu0 0
          %2728 = vperm.xlu0 %2727, %v2666
          %v2729 = vpop.permute.xlu0 %2728
          %2732 = vset.pattern.permute.xlu0 0
          %2733 = vperm.xlu0 %2732, %v2667
          %v2734 = vpop.permute.xlu0 %2733
          %2737 = vset.pattern.permute.xlu0 0
          %2738 = vperm.xlu0 %2737, %v2668
          %v2739 = vpop.permute.xlu0 %2738
          %2742 = vset.pattern.permute.xlu0 0
          %2743 = vperm.xlu0 %2742, %v2669
          %v2744 = vpop.permute.xlu0 %2743
          %2747 = vset.pattern.permute.xlu0 0
          %2748 = vperm.xlu0 %2747, %v2670
          %v2749 = vpop.permute.xlu0 %2748
          %v2751 = vrcp.pop %v2674
          %v2752 = vmul.f32 %v2623, %v2751
          %v2753 = vrcp.pop %v2679
          %v2754 = vmul.f32 %v2624, %v2753
          %v2755 = vrcp.pop %v2684
          %v2756 = vmul.f32 %v2625, %v2755
          %v2757 = vrcp.pop %v2689
          %v2758 = vmul.f32 %v2626, %v2757
          %v2759 = vrcp.pop %v2694
          %v2760 = vmul.f32 %v2627, %v2759
          %v2761 = vrcp.pop %v2699
          %v2762 = vmul.f32 %v2628, %v2761
          %v2763 = vrcp.pop %v2704
          %v2764 = vmul.f32 %v2629, %v2763
          %v2765 = vrcp.pop %v2709
          %v2766 = vmul.f32 %v2630, %v2765
          %v2767 = vrcp.pop %v2714
          %v2768 = vmul.f32 %v2631, %v2767
          %v2769 = vrcp.pop %v2719
          %v2770 = vmul.f32 %v2632, %v2769
          %v2771 = vrcp.pop %v2724
          %v2772 = vmul.f32 %v2633, %v2771
          %v2773 = vrcp.pop %v2729
          %v2774 = vmul.f32 %v2634, %v2773
          %v2775 = vrcp.pop %v2734
          %v2776 = vmul.f32 %v2635, %v2775
          %v2777 = vrcp.pop %v2739
          %v2778 = vmul.f32 %v2636, %v2777
          %v2779 = vrcp.pop %v2744
          %v2780 = vmul.f32 %v2637, %v2779
          %v2781 = vrcp.pop %v2749
          %v2782 = vmul.f32 %v2638, %v2781
          %vm2783 = vcmp.gt.f32.partialorder %v2752, 0.0
          %vm2784 = vcmp.gt.f32.partialorder %v2754, 0.0
          %vm2785 = vcmp.gt.f32.partialorder %v2756, 0.0
          %vm2786 = vcmp.gt.f32.partialorder %v2758, 0.0
          %vm2787 = vcmp.gt.f32.partialorder %v2760, 0.0
          %vm2788 = vcmp.gt.f32.partialorder %v2762, 0.0
          %vm2789 = vcmp.gt.f32.partialorder %v2764, 0.0
          %vm2790 = vcmp.gt.f32.partialorder %v2766, 0.0
          %vm2791 = vcmp.gt.f32.partialorder %v2768, 0.0
          %vm2792 = vcmp.gt.f32.partialorder %v2770, 0.0
          %vm2793 = vcmp.gt.f32.partialorder %v2772, 0.0
          %vm2794 = vcmp.gt.f32.partialorder %v2774, 0.0
          %vm2795 = vcmp.gt.f32.partialorder %v2776, 0.0
          %vm2796 = vcmp.gt.f32.partialorder %v2778, 0.0
          %vm2797 = vcmp.gt.f32.partialorder %v2780, 0.0
          %vm2798 = vcmp.gt.f32.partialorder %v2782, 0.0
          %v2799 = vmul.f32 %v2752, 1.442695
          %v2800 = vpow.pop %v2799
          %v2801 = vmul.f32 %v2754, 1.442695
          %v2802 = vpow.pop %v2801
          %v2803 = vmul.f32 %v2756, 1.442695
          %v2804 = vpow.pop %v2803
          %v2805 = vmul.f32 %v2758, 1.442695
          %v2806 = vpow.pop %v2805
          %v2807 = vmul.f32 %v2760, 1.442695
          %v2808 = vpow.pop %v2807
          %v2809 = vmul.f32 %v2762, 1.442695
          %v2810 = vpow.pop %v2809
          %v2811 = vmul.f32 %v2764, 1.442695
          %v2812 = vpow.pop %v2811
          %v2813 = vmul.f32 %v2766, 1.442695
          %v2814 = vpow.pop %v2813
          %v2815 = vmul.f32 %v2768, 1.442695
          %v2816 = vpow.pop %v2815
          %v2817 = vmul.f32 %v2770, 1.442695
          %v2818 = vpow.pop %v2817
          %v2819 = vmul.f32 %v2772, 1.442695
          %v2820 = vpow.pop %v2819
          %v2821 = vmul.f32 %v2774, 1.442695
          %v2822 = vpow.pop %v2821
          %v2823 = vmul.f32 %v2776, 1.442695
          %v2824 = vpow.pop %v2823
          %v2825 = vmul.f32 %v2778, 1.442695
          %v2826 = vpow.pop %v2825
          %v2827 = vmul.f32 %v2780, 1.442695
          %v2828 = vpow.pop %v2827
          %v2829 = vmul.f32 %v2782, 1.442695
          %v2830 = vpow.pop %v2829
          %v2831 = vsub.f32 %v2800, 1.0
          %v2832 = vsub.f32 %v2802, 1.0
          %v2833 = vsub.f32 %v2804, 1.0
          %v2834 = vsub.f32 %v2806, 1.0
          %v2835 = vsub.f32 %v2808, 1.0
          %v2836 = vsub.f32 %v2810, 1.0
          %v2837 = vsub.f32 %v2812, 1.0
          %v2838 = vsub.f32 %v2814, 1.0
          %v2839 = vsub.f32 %v2816, 1.0
          %v2840 = vsub.f32 %v2818, 1.0
          %v2841 = vsub.f32 %v2820, 1.0
          %v2842 = vsub.f32 %v2822, 1.0
          %v2843 = vsub.f32 %v2824, 1.0
          %v2844 = vsub.f32 %v2826, 1.0
          %v2845 = vsub.f32 %v2828, 1.0
          %v2846 = vsub.f32 %v2830, 1.0
          %v2847 = vsel %vm2783, %v2752, %v2831
          %v2848 = vsel %vm2784, %v2754, %v2832
          %v2849 = vsel %vm2785, %v2756, %v2833
          %v2850 = vsel %vm2786, %v2758, %v2834
          %v2851 = vsel %vm2787, %v2760, %v2835
          %v2852 = vsel %vm2788, %v2762, %v2836
          %v2853 = vsel %vm2789, %v2764, %v2837
          %v2854 = vsel %vm2790, %v2766, %v2838
          %v2855 = vsel %vm2791, %v2768, %v2839
          %v2856 = vsel %vm2792, %v2770, %v2840
          %v2857 = vsel %vm2793, %v2772, %v2841
          %v2858 = vsel %vm2794, %v2774, %v2842
          %v2859 = vsel %vm2795, %v2776, %v2843
          %v2860 = vsel %vm2796, %v2778, %v2844
          %v2861 = vsel %vm2797, %v2780, %v2845
          %v2862 = vsel %vm2798, %v2782, %v2846
          %2863 = vst.msk [vmem:[%s684] sm:$0xff] %vm1732, %v2847
          %2864 = vst.msk [vmem:[%s684 + $0x8] sm:$0xff] %vm1732, %v2848
          %2865 = vst.msk [vmem:[%s684 + $0x10] sm:$0xff] %vm1732, %v2849
          %2866 = vst.msk [vmem:[%s684 + $0x18] sm:$0xff] %vm1732, %v2850
          %2867 = vst.msk [vmem:[%s684 + $0x20] sm:$0xff] %vm1732, %v2851
          %2868 = vst.msk [vmem:[%s684 + $0x28] sm:$0xff] %vm1732, %v2852
          %2869 = vst.msk [vmem:[%s684 + $0x30] sm:$0xff] %vm1732, %v2853
          %2870 = vst.msk [vmem:[%s684 + $0x38] sm:$0xff] %vm1732, %v2854
          %2871 = vst.msk [vmem:[%s684 + $0x40] sm:$0xff] %vm1732, %v2855
          %2872 = vst.msk [vmem:[%s684 + $0x48] sm:$0xff] %vm1732, %v2856
          %2873 = vst.msk [vmem:[%s684 + $0x50] sm:$0xff] %vm1732, %v2857
          %2874 = vst.msk [vmem:[%s684 + $0x58] sm:$0xff] %vm1732, %v2858
          %2875 = vst.msk [vmem:[%s684 + $0x60] sm:$0xff] %vm1732, %v2859
          %2876 = vst.msk [vmem:[%s684 + $0x68] sm:$0xff] %vm1732, %v2860
          %2877 = vst.msk [vmem:[%s684 + $0x70] sm:$0xff] %vm1732, %v2861
          %2878 = vst.msk [vmem:[%s684 + $0x78] sm:$0xff] %vm1732, %v2862
          %v2879 = vld [vmem:[%s2288] sm:$0xff]
          %v2880 = vld [vmem:[%s2288 + $0x8] sm:$0xff]
          %v2881 = vld [vmem:[%s2288 + $0x10] sm:$0xff]
          %v2882 = vld [vmem:[%s2288 + $0x18] sm:$0xff]
          %v2883 = vld [vmem:[%s2288 + $0x20] sm:$0xff]
          %v2884 = vld [vmem:[%s2288 + $0x28] sm:$0xff]
          %v2885 = vld [vmem:[%s2288 + $0x30] sm:$0xff]
          %v2886 = vld [vmem:[%s2288 + $0x38] sm:$0xff]
          %v2887 = vld [vmem:[%s2288 + $0x40] sm:$0xff]
          %v2888 = vld [vmem:[%s2288 + $0x48] sm:$0xff]
          %v2889 = vld [vmem:[%s2288 + $0x50] sm:$0xff]
          %v2890 = vld [vmem:[%s2288 + $0x58] sm:$0xff]
          %v2891 = vld [vmem:[%s2288 + $0x60] sm:$0xff]
          %v2892 = vld [vmem:[%s2288 + $0x68] sm:$0xff]
          %v2893 = vld [vmem:[%s2288 + $0x70] sm:$0xff]
          %v2894 = vld [vmem:[%s2288 + $0x78] sm:$0xff]
          %v2895 = vld [vmem:[%s2191] sm:$0xff]
          %v2896 = vld [vmem:[%s2191 + $0x8] sm:$0xff]
          %v2897 = vld [vmem:[%s2191 + $0x10] sm:$0xff]
          %v2898 = vld [vmem:[%s2191 + $0x18] sm:$0xff]
          %v2899 = vld [vmem:[%s2191 + $0x20] sm:$0xff]
          %v2900 = vld [vmem:[%s2191 + $0x28] sm:$0xff]
          %v2901 = vld [vmem:[%s2191 + $0x30] sm:$0xff]
          %v2902 = vld [vmem:[%s2191 + $0x38] sm:$0xff]
          %v2903 = vld [vmem:[%s2191 + $0x40] sm:$0xff]
          %v2904 = vld [vmem:[%s2191 + $0x48] sm:$0xff]
          %v2905 = vld [vmem:[%s2191 + $0x50] sm:$0xff]
          %v2906 = vld [vmem:[%s2191 + $0x58] sm:$0xff]
          %v2907 = vld [vmem:[%s2191 + $0x60] sm:$0xff]
          %v2908 = vld [vmem:[%s2191 + $0x68] sm:$0xff]
          %v2909 = vld [vmem:[%s2191 + $0x70] sm:$0xff]
          %v2910 = vld [vmem:[%s2191 + $0x78] sm:$0xff]
          %v2911 = vmax.f32 %v2895, 1e-12
          %v2912 = vmax.f32 %v2896, 1e-12
          %v2913 = vmax.f32 %v2897, 1e-12
          %v2914 = vmax.f32 %v2898, 1e-12
          %v2915 = vmax.f32 %v2899, 1e-12
          %v2916 = vmax.f32 %v2900, 1e-12
          %v2917 = vmax.f32 %v2901, 1e-12
          %v2918 = vmax.f32 %v2902, 1e-12
          %v2919 = vmax.f32 %v2903, 1e-12
          %v2920 = vmax.f32 %v2904, 1e-12
          %v2921 = vmax.f32 %v2905, 1e-12
          %v2922 = vmax.f32 %v2906, 1e-12
          %v2923 = vmax.f32 %v2907, 1e-12
          %v2924 = vmax.f32 %v2908, 1e-12
          %v2925 = vmax.f32 %v2909, 1e-12
          %v2926 = vmax.f32 %v2910, 1e-12
          %2928 = vset.pattern.permute.xlu0 0
          %2929 = vperm.xlu0 %2928, %v2911
          %v2930 = vpop.permute.xlu0 %2929
          %2933 = vset.pattern.permute.xlu0 0
          %2934 = vperm.xlu0 %2933, %v2912
          %v2935 = vpop.permute.xlu0 %2934
          %2938 = vset.pattern.permute.xlu0 0
          %2939 = vperm.xlu0 %2938, %v2913
          %v2940 = vpop.permute.xlu0 %2939
          %2943 = vset.pattern.permute.xlu0 0
          %2944 = vperm.xlu0 %2943, %v2914
          %v2945 = vpop.permute.xlu0 %2944
          %2948 = vset.pattern.permute.xlu0 0
          %2949 = vperm.xlu0 %2948, %v2915
          %v2950 = vpop.permute.xlu0 %2949
          %2953 = vset.pattern.permute.xlu0 0
          %2954 = vperm.xlu0 %2953, %v2916
          %v2955 = vpop.permute.xlu0 %2954
          %2958 = vset.pattern.permute.xlu0 0
          %2959 = vperm.xlu0 %2958, %v2917
          %v2960 = vpop.permute.xlu0 %2959
          %2963 = vset.pattern.permute.xlu0 0
          %2964 = vperm.xlu0 %2963, %v2918
          %v2965 = vpop.permute.xlu0 %2964
          %2968 = vset.pattern.permute.xlu0 0
          %2969 = vperm.xlu0 %2968, %v2919
          %v2970 = vpop.permute.xlu0 %2969
          %2973 = vset.pattern.permute.xlu0 0
          %2974 = vperm.xlu0 %2973, %v2920
          %v2975 = vpop.permute.xlu0 %2974
          %2978 = vset.pattern.permute.xlu0 0
          %2979 = vperm.xlu0 %2978, %v2921
          %v2980 = vpop.permute.xlu0 %2979
          %2983 = vset.pattern.permute.xlu0 0
          %2984 = vperm.xlu0 %2983, %v2922
          %v2985 = vpop.permute.xlu0 %2984
          %2988 = vset.pattern.permute.xlu0 0
          %2989 = vperm.xlu0 %2988, %v2923
          %v2990 = vpop.permute.xlu0 %2989
          %2993 = vset.pattern.permute.xlu0 0
          %2994 = vperm.xlu0 %2993, %v2924
          %v2995 = vpop.permute.xlu0 %2994
          %2998 = vset.pattern.permute.xlu0 0
          %2999 = vperm.xlu0 %2998, %v2925
          %v3000 = vpop.permute.xlu0 %2999
          %3003 = vset.pattern.permute.xlu0 0
          %3004 = vperm.xlu0 %3003, %v2926
          %v3005 = vpop.permute.xlu0 %3004
          %v3007 = vrcp.pop %v2930
          %v3008 = vmul.f32 %v2879, %v3007
          %v3009 = vrcp.pop %v2935
          %v3010 = vmul.f32 %v2880, %v3009
          %v3011 = vrcp.pop %v2940
          %v3012 = vmul.f32 %v2881, %v3011
          %v3013 = vrcp.pop %v2945
          %v3014 = vmul.f32 %v2882, %v3013
          %v3015 = vrcp.pop %v2950
          %v3016 = vmul.f32 %v2883, %v3015
          %v3017 = vrcp.pop %v2955
          %v3018 = vmul.f32 %v2884, %v3017
          %v3019 = vrcp.pop %v2960
          %v3020 = vmul.f32 %v2885, %v3019
          %v3021 = vrcp.pop %v2965
          %v3022 = vmul.f32 %v2886, %v3021
          %v3023 = vrcp.pop %v2970
          %v3024 = vmul.f32 %v2887, %v3023
          %v3025 = vrcp.pop %v2975
          %v3026 = vmul.f32 %v2888, %v3025
          %v3027 = vrcp.pop %v2980
          %v3028 = vmul.f32 %v2889, %v3027
          %v3029 = vrcp.pop %v2985
          %v3030 = vmul.f32 %v2890, %v3029
          %v3031 = vrcp.pop %v2990
          %v3032 = vmul.f32 %v2891, %v3031
          %v3033 = vrcp.pop %v2995
          %v3034 = vmul.f32 %v2892, %v3033
          %v3035 = vrcp.pop %v3000
          %v3036 = vmul.f32 %v2893, %v3035
          %v3037 = vrcp.pop %v3005
          %v3038 = vmul.f32 %v2894, %v3037
          %vm3039 = vcmp.gt.f32.partialorder %v3008, 0.0
          %vm3040 = vcmp.gt.f32.partialorder %v3010, 0.0
          %vm3041 = vcmp.gt.f32.partialorder %v3012, 0.0
          %vm3042 = vcmp.gt.f32.partialorder %v3014, 0.0
          %vm3043 = vcmp.gt.f32.partialorder %v3016, 0.0
          %vm3044 = vcmp.gt.f32.partialorder %v3018, 0.0
          %vm3045 = vcmp.gt.f32.partialorder %v3020, 0.0
          %vm3046 = vcmp.gt.f32.partialorder %v3022, 0.0
          %vm3047 = vcmp.gt.f32.partialorder %v3024, 0.0
          %vm3048 = vcmp.gt.f32.partialorder %v3026, 0.0
          %vm3049 = vcmp.gt.f32.partialorder %v3028, 0.0
          %vm3050 = vcmp.gt.f32.partialorder %v3030, 0.0
          %vm3051 = vcmp.gt.f32.partialorder %v3032, 0.0
          %vm3052 = vcmp.gt.f32.partialorder %v3034, 0.0
          %vm3053 = vcmp.gt.f32.partialorder %v3036, 0.0
          %vm3054 = vcmp.gt.f32.partialorder %v3038, 0.0
          %v3055 = vmul.f32 %v3008, 1.442695
          %v3056 = vpow.pop %v3055
          %v3057 = vmul.f32 %v3010, 1.442695
          %v3058 = vpow.pop %v3057
          %v3059 = vmul.f32 %v3012, 1.442695
          %v3060 = vpow.pop %v3059
          %v3061 = vmul.f32 %v3014, 1.442695
          %v3062 = vpow.pop %v3061
          %v3063 = vmul.f32 %v3016, 1.442695
          %v3064 = vpow.pop %v3063
          %v3065 = vmul.f32 %v3018, 1.442695
          %v3066 = vpow.pop %v3065
          %v3067 = vmul.f32 %v3020, 1.442695
          %v3068 = vpow.pop %v3067
          %v3069 = vmul.f32 %v3022, 1.442695
          %v3070 = vpow.pop %v3069
          %v3071 = vmul.f32 %v3024, 1.442695
          %v3072 = vpow.pop %v3071
          %v3073 = vmul.f32 %v3026, 1.442695
          %v3074 = vpow.pop %v3073
          %v3075 = vmul.f32 %v3028, 1.442695
          %v3076 = vpow.pop %v3075
          %v3077 = vmul.f32 %v3030, 1.442695
          %v3078 = vpow.pop %v3077
          %v3079 = vmul.f32 %v3032, 1.442695
          %v3080 = vpow.pop %v3079
          %v3081 = vmul.f32 %v3034, 1.442695
          %v3082 = vpow.pop %v3081
          %v3083 = vmul.f32 %v3036, 1.442695
          %v3084 = vpow.pop %v3083
          %v3085 = vmul.f32 %v3038, 1.442695
          %v3086 = vpow.pop %v3085
          %v3087 = vsub.f32 %v3056, 1.0
          %v3088 = vsub.f32 %v3058, 1.0
          %v3089 = vsub.f32 %v3060, 1.0
          %v3090 = vsub.f32 %v3062, 1.0
          %v3091 = vsub.f32 %v3064, 1.0
          %v3092 = vsub.f32 %v3066, 1.0
          %v3093 = vsub.f32 %v3068, 1.0
          %v3094 = vsub.f32 %v3070, 1.0
          %v3095 = vsub.f32 %v3072, 1.0
          %v3096 = vsub.f32 %v3074, 1.0
          %v3097 = vsub.f32 %v3076, 1.0
          %v3098 = vsub.f32 %v3078, 1.0
          %v3099 = vsub.f32 %v3080, 1.0
          %v3100 = vsub.f32 %v3082, 1.0
          %v3101 = vsub.f32 %v3084, 1.0
          %v3102 = vsub.f32 %v3086, 1.0
          %v3103 = vsel %vm3039, %v3008, %v3087
          %v3104 = vsel %vm3040, %v3010, %v3088
          %v3105 = vsel %vm3041, %v3012, %v3089
          %v3106 = vsel %vm3042, %v3014, %v3090
          %v3107 = vsel %vm3043, %v3016, %v3091
          %v3108 = vsel %vm3044, %v3018, %v3092
          %v3109 = vsel %vm3045, %v3020, %v3093
          %v3110 = vsel %vm3046, %v3022, %v3094
          %v3111 = vsel %vm3047, %v3024, %v3095
          %v3112 = vsel %vm3048, %v3026, %v3096
          %v3113 = vsel %vm3049, %v3028, %v3097
          %v3114 = vsel %vm3050, %v3030, %v3098
          %v3115 = vsel %vm3051, %v3032, %v3099
          %v3116 = vsel %vm3052, %v3034, %v3100
          %v3117 = vsel %vm3053, %v3036, %v3101
          %v3118 = vsel %vm3054, %v3038, %v3102
          %3135 = vrot.lane.b32.xlu0 %v3103, 16
          %v3136 = vpop.permute.xlu0 %3135
          %3137 = vrot.lane.b32.xlu0 %v3104, 16
          %v3138 = vpop.permute.xlu0 %3137
          %3139 = vrot.lane.b32.xlu0 %v3105, 16
          %v3140 = vpop.permute.xlu0 %3139
          %3141 = vrot.lane.b32.xlu0 %v3106, 16
          %v3142 = vpop.permute.xlu0 %3141
          %3143 = vrot.lane.b32.xlu0 %v3107, 16
          %v3144 = vpop.permute.xlu0 %3143
          %3145 = vrot.lane.b32.xlu0 %v3108, 16
          %v3146 = vpop.permute.xlu0 %3145
          %3147 = vrot.lane.b32.xlu0 %v3109, 16
          %v3148 = vpop.permute.xlu0 %3147
          %3149 = vrot.lane.b32.xlu0 %v3110, 16
          %v3150 = vpop.permute.xlu0 %3149
          %3151 = vrot.lane.b32.xlu0 %v3111, 16
          %v3152 = vpop.permute.xlu0 %3151
          %3153 = vrot.lane.b32.xlu0 %v3112, 16
          %v3154 = vpop.permute.xlu0 %3153
          %3155 = vrot.lane.b32.xlu0 %v3113, 16
          %v3156 = vpop.permute.xlu0 %3155
          %3157 = vrot.lane.b32.xlu0 %v3114, 16
          %v3158 = vpop.permute.xlu0 %3157
          %3159 = vrot.lane.b32.xlu0 %v3115, 16
          %v3160 = vpop.permute.xlu0 %3159
          %3161 = vrot.lane.b32.xlu0 %v3116, 16
          %v3162 = vpop.permute.xlu0 %3161
          %3163 = vrot.lane.b32.xlu0 %v3117, 16
          %v3164 = vpop.permute.xlu0 %3163
          %3165 = vrot.lane.b32.xlu0 %v3118, 16
          %v3166 = vpop.permute.xlu0 %3165
          %vm3183 = vcmask 261248
          %3184 = vst.msk [vmem:[%s684] sm:$0xff] %vm3183, %v3136
          %3185 = vst.msk [vmem:[%s684 + $0x8] sm:$0xff] %vm3183, %v3138
          %3186 = vst.msk [vmem:[%s684 + $0x10] sm:$0xff] %vm3183, %v3140
          %3187 = vst.msk [vmem:[%s684 + $0x18] sm:$0xff] %vm3183, %v3142
          %3188 = vst.msk [vmem:[%s684 + $0x20] sm:$0xff] %vm3183, %v3144
          %3189 = vst.msk [vmem:[%s684 + $0x28] sm:$0xff] %vm3183, %v3146
          %3190 = vst.msk [vmem:[%s684 + $0x30] sm:$0xff] %vm3183, %v3148
          %3191 = vst.msk [vmem:[%s684 + $0x38] sm:$0xff] %vm3183, %v3150
          %3192 = vst.msk [vmem:[%s684 + $0x40] sm:$0xff] %vm3183, %v3152
          %3193 = vst.msk [vmem:[%s684 + $0x48] sm:$0xff] %vm3183, %v3154
          %3194 = vst.msk [vmem:[%s684 + $0x50] sm:$0xff] %vm3183, %v3156
          %3195 = vst.msk [vmem:[%s684 + $0x58] sm:$0xff] %vm3183, %v3158
          %3196 = vst.msk [vmem:[%s684 + $0x60] sm:$0xff] %vm3183, %v3160
          %3197 = vst.msk [vmem:[%s684 + $0x68] sm:$0xff] %vm3183, %v3162
          %3198 = vst.msk [vmem:[%s684 + $0x70] sm:$0xff] %vm3183, %v3164
          %3199 = vst.msk [vmem:[%s684 + $0x78] sm:$0xff] %vm3183, %v3166
        $region195: #{spagat_forward.2} parent=170 // pred_fallthru
          _
        %s3200 = smul.u32 16, %s19
        %p3201 = scmp.lt.s32.totalorder %s3200, 31
        %s3202 = scalar_select %p3201, %s3200, 31
        %s3203 = smul.addr %s3202, 8
        %s3204 = scalar_lea.vmem %s4, %s3203
        // Predicated region
        $region196: #{spagat_forward.2} parent=170 // pred_check
          %p3205 = pneg %p151
        $region197: #{spagat_forward.2} parent=170 // pred_check_branch
          %3207 = sbr.rel (%p3205) target = $region199
        $region198: #{spagat_forward.2} parent=170 // pred_region
          %s3208 = smul.u32 16, %s19
        $region199: #{spagat_forward.2} parent=170 // pred_fallthru
          _
      $region171: #{spagat_forward.2} parent=5 // pred_fallthru
        _
      %p3209 = scmp.le.s32.totalorder 2, %s10
      // Predicated region
      $region200: #{spagat_forward.2} parent=5 // pred_check
        %p3210 = pneg %p3209
      $region201: #{spagat_forward.2} parent=5 // pred_check_branch
        %3212 = sbr.rel (%p3210) target = $region203
      $region202: #{spagat_forward.2} parent=5 // pred_region
        %s3213 = ssub.s32 %s10, 2
        // Predicated region
        $region204: #{spagat_forward.2} parent=202 // pred_check
          %p3214 = pneg %p157
        $region205: #{spagat_forward.2} parent=202 // pred_check_branch
          %3216 = sbr.rel (%p3214) target = $region207
        $region206: #{spagat_forward.2} parent=202 // pred_region
          %s3217 = smul.u32 16, %s21
          %p3218 = scmp.lt.s32.totalorder %s3217, 31
          %s3219 = scalar_select %p3218, %s3217, 31
          %s3220 = smul.addr %s3219, 8
          %s3221 = scalar_lea.vmem %s4, %s3220
        $region207: #{spagat_forward.2} parent=202 // pred_fallthru
          _
      $region203: #{spagat_forward.2} parent=5 // pred_fallthru
        _
    $region6: #{spagat_forward.2} parent=1 // loop_footer
      %s14 = sadd.s32 1, %s10
    $region7: #{spagat_forward.2} parent=1 // loop_footer_branch
      %9 = sbr.rel target = $region3
    $region8: #{spagat_forward.2} parent=1 // loop_exit
      _

</llo_original>
